<compile_context>
chip_gen: v6e
topology: v6e:2x2x1
jax: 0.10.0
libtpu: 0.0.40
codegen_flags: <defaults>
</compile_context>

<pallas_src>
import jax
import jax.numpy as jnp
import numpy as np
from jax.experimental import pallas as pl
from jax.experimental.pallas import tpu as pltpu


# -----------------------------------------------------------------------------
# Static network geometry (16x16 input).  (H, W, Cin, Cout) per conv.
# -----------------------------------------------------------------------------
_CONV_CFGS = [
    (16, 16, 8, 64),     # enc conv1 (+ReLU +maxpool)
    (8, 8, 64, 32),      # enc conv2 (+ReLU +maxpool)
    (4, 4, 32, 16),      # enc conv3 (+ReLU +maxpool)
    (2, 2, 16, 32),      # dec conv1 (+ReLU, then 2x upsample)
    (4, 4, 32, 64),      # dec conv2 (+ReLU, then 2x upsample)
    (8, 8, 64, 128),     # dec conv3 (+ReLU, then 2x upsample)
    (16, 16, 128, 8),    # dec conv4 (+Sigmoid)
]
_POOL_CFGS = [(16, 16, 64), (8, 8, 32), (4, 4, 16)]   # (H, W, C) before pool
_UP_CFGS = [(2, 2), (4, 4), (8, 8)]                   # (H, W) before upsample

_ENC_SPECS = [(3, 64), (64, 32), (32, 16)]
_DEC_SPECS = [(16, 32), (32, 64), (64, 128), (128, 3)]


def _conv_pad(W):
    # top zero-halo rows in the flat staging buffer (>= W+1, 8-aligned)
    return ((W + 1 + 7) // 8) * 8


def _conv_scr_rows(H, W):
    return _conv_pad(W) + H * W + W + 1


# -----------------------------------------------------------------------------
# In-kernel building blocks (all operate on flattened (H*W, C) slabs).
# -----------------------------------------------------------------------------
def _conv_block(x_val, scr, w_ref, b_ref, H, W, Cin, Cout, act):
    """3x3 SAME conv + bias + activation as ONE MXU matmul (K = 9*Cin)."""
    HW = H * W
    off = _conv_pad(W)
    # zero halo + stage the activation (f32 staging keeps the +/-1 row offset
    # reads on the standard 32-bit sublane path)
    scr[pl.ds(0, off), :] = jnp.zeros((off, Cin), jnp.float32)
    scr[pl.ds(off + HW, W + 1), :] = jnp.zeros((W + 1, Cin), jnp.float32)
    scr[pl.ds(off, HW), :] = x_val.astype(jnp.float32)

    wcol = jax.lax.broadcasted_iota(jnp.int32, (HW, Cin), 0) % W
    left = wcol == 0
    right = wcol == (W - 1)

    taps = []
    for ky in range(3):
        base = off + (ky - 1) * W
        for kx in range(3):
            t = scr[pl.ds(base + (kx - 1), HW), :].astype(jnp.bfloat16)
            if kx == 0:        # tap reaches column w-1: zero at the left edge
                t = jnp.where(left, 0.0, t)
            elif kx == 2:      # tap reaches column w+1: zero at the right edge
                t = jnp.where(right, 0.0, t)
            taps.append(t)
    lhs = jnp.concatenate(taps, axis=1)                    # (HW, 9*Cin) bf16

    acc = jnp.dot(lhs, w_ref[...], preferred_element_type=jnp.float32)
    acc = acc + b_ref[...]                                  # f32 bias
    if act == "relu":
        acc = jnp.maximum(acc, 0.0)
    else:  # sigmoid
        acc = 1.0 / (1.0 + jnp.exp(-acc))
    return acc                                              # (HW, Cout) f32


def _pool_block(a, scr, sel_ref, H, W, C):
    """Fused 2x2 / stride-2 max-pool on a flattened (H*W, C) f32 activation."""
    HW = H * W
    scr[pl.ds(0, HW), :] = a
    scr[pl.ds(HW, W + 1), :] = jnp.zeros((W + 1, C), jnp.float32)
    m01 = jnp.maximum(a, scr[pl.ds(1, HW), :])
    m23 = jnp.maximum(scr[pl.ds(W, HW), :], scr[pl.ds(W + 1, HW), :])
    vmax = jnp.maximum(m01, m23)
    # compact the even-row/even-col lattice with an exact 0/1 selection matmul
    pooled = jnp.dot(sel_ref[...], vmax.astype(jnp.bfloat16),
                     preferred_element_type=jnp.float32)
    return pooled.astype(jnp.bfloat16)                      # (H*W/4, C)


def _up_block(a_bf16, exp_ref):
    """Nearest-neighbour 2x upsample as an exact 0/1 expansion matmul."""
    return jnp.dot(exp_ref[...], a_bf16,
                   preferred_element_type=jnp.float32).astype(jnp.bfloat16)


def _cae_kernel(x_ref,
                w1, b1, w2, b2, w3, b3, w4, b4, w5, b5, w6, b6, w7, b7,
                s1, s2, s3, u1, u2, u3,
                o_ref,
                c1, c2, c3, c4, c5, c6, c7, p1, p2, p3):
    a = x_ref[0]                                                # (256, 8) bf16
    a = _conv_block(a, c1, w1, b1, 16, 16, 8, 64, "relu")
    a = _pool_block(a, p1, s1, 16, 16, 64)                      # (64, 64)
    a = _conv_block(a, c2, w2, b2, 8, 8, 64, 32, "relu")
    a = _pool_block(a, p2, s2, 8, 8, 32)                        # (16, 32)
    a = _conv_block(a, c3, w3, b3, 4, 4, 32, 16, "relu")
    a = _pool_block(a, p3, s3, 4, 4, 16)                        # (4, 16)
    a = _conv_block(a, c4, w4, b4, 2, 2, 16, 32, "relu")
    a = _up_block(a.astype(jnp.bfloat16), u1)                   # (16, 32)
    a = _conv_block(a, c5, w5, b5, 4, 4, 32, 64, "relu")
    a = _up_block(a.astype(jnp.bfloat16), u2)                   # (64, 64)
    a = _conv_block(a, c6, w6, b6, 8, 8, 64, 128, "relu")
    a = _up_block(a.astype(jnp.bfloat16), u3)                   # (256, 128)
    a = _conv_block(a, c7, w7, b7, 16, 16, 128, 8, "sigmoid")   # (256, 8) f32
    o_ref[0] = a


# -----------------------------------------------------------------------------
# Host-side constant matrices (0/1 selection / expansion), weight packing.
# -----------------------------------------------------------------------------
def _pool_selector(H, W):
    Hp, Wp = H // 2, W // 2
    M, K = Hp * Wp, H * W
    sel = np.zeros((M, K), np.float32)
    m = np.arange(M)
    sel[m, 2 * (m // Wp) * W + 2 * (m % Wp)] = 1.0
    return jnp.asarray(sel, dtype=jnp.bfloat16)


def _up_expander(H, W):
    M, K = 4 * H * W, H * W
    mat = np.zeros((M, K), np.float32)
    m = np.arange(M)
    p, q = m // (2 * W), m % (2 * W)
    mat[m, (p // 2) * W + (q // 2)] = 1.0
    return jnp.asarray(mat, dtype=jnp.bfloat16)


def _pack_conv(w, b):
    # (3,3,Cin,Cout) -> (9*Cin, Cout): rows ordered (ky, kx, ci), matching the
    # in-kernel tap concatenation order.
    cin, cout = w.shape[2], w.shape[3]
    return (w.reshape(9 * cin, cout).astype(jnp.bfloat16),
            b.reshape(1, cout).astype(jnp.float32))


def _cae_pallas(x_flat, wbs, sels, exps):
    """x_flat: (N, 256, 8) bf16 flattened NHWC input."""
    N = x_flat.shape[0]

    inputs = [x_flat]
    in_specs = [pl.BlockSpec((1, 256, 8), lambda n: (n, 0, 0))]
    for w9, b in wbs:
        inputs += [w9, b]
        in_specs += [pl.BlockSpec(w9.shape, lambda n: (0, 0)),
                     pl.BlockSpec(b.shape, lambda n: (0, 0))]
    for m in sels + exps:
        inputs.append(m)
        in_specs.append(pl.BlockSpec(m.shape, lambda n: (0, 0)))

    scratch = [pltpu.VMEM((_conv_scr_rows(H, W), Cin), jnp.float32)
               for (H, W, Cin, _) in _CONV_CFGS]
    scratch += [pltpu.VMEM((H * W + W + 1, C), jnp.float32)
                for (H, W, C) in _POOL_CFGS]

    flops = 2 * N * sum(H * W * 9 * Cin * Cout
                        for (H, W, Cin, Cout) in _CONV_CFGS)
    bytes_accessed = (x_flat.size * 2 + N * 256 * 8 * 4
                      + sum(w.size * 2 + b.size * 4 for w, b in wbs)
                      + sum(m.size * 2 for m in sels + exps))

    return pl.pallas_call(
        _cae_kernel,
        out_shape=jax.ShapeDtypeStruct((N, 256, 8), jnp.float32),
        grid=(N,),
        in_specs=in_specs,
        out_specs=pl.BlockSpec((1, 256, 8), lambda n: (n, 0, 0)),
        scratch_shapes=scratch,
        compiler_params=pltpu.CompilerParams(
            dimension_semantics=("parallel",),
            vmem_limit_bytes=32 * 1024 * 1024),
        cost_estimate=pl.CostEstimate(
            flops=flops, transcendentals=N * 256 * 8,
            bytes_accessed=bytes_accessed),
    )(*inputs)


# -----------------------------------------------------------------------------
# Parameters (deterministic synthetic init) and the public forward pass.
# -----------------------------------------------------------------------------
def init_params(key):
    def make(k, cin, cout):
        kw, kb = jax.random.split(k)
        w = 0.05 * jax.random.normal(kw, (3, 3, cin, cout), jnp.float32)
        b = 0.05 * jax.random.normal(kb, (cout,), jnp.float32)
        return w, b

    keys = jax.random.split(key, len(_ENC_SPECS) + len(_DEC_SPECS))
    enc = [make(keys[i], *s) for i, s in enumerate(_ENC_SPECS)]
    dec = [make(keys[len(_ENC_SPECS) + i], *s) for i, s in enumerate(_DEC_SPECS)]
    return {"enc": enc, "dec": dec}


def celeba_cae_forward(params, x_nchw):
    N = x_nchw.shape[0]
    enc, dec = params["enc"], params["dec"]

    # pad first conv Cin 3->8 and last conv Cout 3->8 (zeros -> identical math)
    w1, b1 = enc[0]
    w1 = jnp.pad(w1, ((0, 0), (0, 0), (0, 5), (0, 0)))
    w7, b7 = dec[3]
    w7 = jnp.pad(w7, ((0, 0), (0, 0), (0, 0), (0, 5)))
    b7 = jnp.pad(b7, (0, 5))
    layers = [(w1, b1), enc[1], enc[2], dec[0], dec[1], dec[2], (w7, b7)]
    wbs = [_pack_conv(w, b) for w, b in layers]

    sels = [_pool_selector(H, W) for (H, W, _) in _POOL_CFGS]
    exps = [_up_expander(H, W) for (H, W) in _UP_CFGS]

    # NCHW -> NHWC -> pad C 3->8 -> flatten spatial -> bf16
    x = jnp.transpose(x_nchw, (0, 2, 3, 1))
    x = jnp.pad(x, ((0, 0), (0, 0), (0, 0), (0, 5)))
    x = x.reshape(N, 16 * 16, 8).astype(jnp.bfloat16)

    out = _cae_pallas(x, wbs, sels, exps)                 # (N, 256, 8) f32
    out = out.reshape(N, 16, 16, 8)[..., :3]
    return jnp.transpose(out, (0, 3, 1, 2)).astype(jnp.float32)


# -----------------------------------------------------------------------------
# Pure-JAX reference (mirrors the bf16 pipeline) for a silent correctness check
# -----------------------------------------------------------------------------
def _upsample2x(x):
    return jnp.repeat(jnp.repeat(x, 2, axis=1), 2, axis=2)


def _ref_layer(x, w, b, act, pool):
    y = jax.lax.conv_general_dilated(
        x, w.astype(jnp.bfloat16), window_strides=(1, 1), padding="SAME",
        dimension_numbers=("NHWC", "HWIO", "NHWC"),
        preferred_element_type=jnp.float32)
    y = y + b.astype(jnp.float32)
    if act == "relu":
        y = jnp.maximum(y, 0.0)
    else:
        y = jax.nn.sigmoid(y)
    if pool:
        n, h, w_, c = y.shape
        y = y.reshape(n, h // 2, 2, w_ // 2, 2, c).max(axis=(2, 4))
    return y.astype(jnp.bfloat16)


def reference_forward(params, x_nchw):
    x = jnp.transpose(x_nchw, (0, 2, 3, 1)).astype(jnp.bfloat16)
    enc, dec = params["enc"], params["dec"]
    x = _ref_layer(x, *enc[0], "relu", True)
    x = _ref_layer(x, *enc[1], "relu", True)
    x = _ref_layer(x, *enc[2], "relu", True)
    x = _ref_layer(x, *dec[0], "relu", False)
    x = _upsample2x(x)
    x = _ref_layer(x, *dec[1], "relu", False)
    x = _upsample2x(x)
    x = _ref_layer(x, *dec[2], "relu", False)
    x = _upsample2x(x)
    x = _ref_layer(x, *dec[3], "sigmoid", False)
    return jnp.transpose(x.astype(jnp.float32), (0, 3, 1, 2))


if __name__ == "__main__":
    key = jax.random.PRNGKey(0)
    kp, kx = jax.random.split(key)
    params = init_params(kp)
    # CelebA-like toy input: batch=2, 3 channels, 16x16 spatial
    x = jax.random.uniform(kx, (2, 3, 16, 16), jnp.float32)

    fwd = jax.jit(celeba_cae_forward)
    out = fwd(params, x)
    jax.block_until_ready(out)
    assert out.shape == (2, 3, 16, 16), out.shape

    ref = jax.jit(reference_forward)(params, x)
    jax.block_until_ready(ref)
    err = float(jnp.max(jnp.abs(out - ref)))
    assert err < 2e-2, f"max abs err {err}"

    print("KERNEL_OK")
</pallas_src>

<mosaic_0001>
module attributes {stable_mosaic.version = 11 : i64} {
  func.func @_cae_kernel(%arg0: i32, %arg1: memref<1x256x8xbf16, #tpu.memory_space<vmem>>, %arg2: memref<72x64xbf16, #tpu.memory_space<vmem>>, %arg3: memref<1x64xf32, #tpu.memory_space<vmem>>, %arg4: memref<576x32xbf16, #tpu.memory_space<vmem>>, %arg5: memref<1x32xf32, #tpu.memory_space<vmem>>, %arg6: memref<288x16xbf16, #tpu.memory_space<vmem>>, %arg7: memref<1x16xf32, #tpu.memory_space<vmem>>, %arg8: memref<144x32xbf16, #tpu.memory_space<vmem>>, %arg9: memref<1x32xf32, #tpu.memory_space<vmem>>, %arg10: memref<288x64xbf16, #tpu.memory_space<vmem>>, %arg11: memref<1x64xf32, #tpu.memory_space<vmem>>, %arg12: memref<576x128xbf16, #tpu.memory_space<vmem>>, %arg13: memref<1x128xf32, #tpu.memory_space<vmem>>, %arg14: memref<1152x8xbf16, #tpu.memory_space<vmem>>, %arg15: memref<1x8xf32, #tpu.memory_space<vmem>>, %arg16: memref<64x256xbf16, #tpu.memory_space<vmem>>, %arg17: memref<16x64xbf16, #tpu.memory_space<vmem>>, %arg18: memref<4x16xbf16, #tpu.memory_space<vmem>>, %arg19: memref<16x4xbf16, #tpu.memory_space<vmem>>, %arg20: memref<64x16xbf16, #tpu.memory_space<vmem>>, %arg21: memref<256x64xbf16, #tpu.memory_space<vmem>>, %arg22: memref<1x256x8xf32, #tpu.memory_space<vmem>>, %arg23: memref<297x8xf32, #tpu.memory_space<vmem>>, %arg24: memref<89x64xf32, #tpu.memory_space<vmem>>, %arg25: memref<29x32xf32, #tpu.memory_space<vmem>>, %arg26: memref<15x16xf32, #tpu.memory_space<vmem>>, %arg27: memref<29x32xf32, #tpu.memory_space<vmem>>, %arg28: memref<89x64xf32, #tpu.memory_space<vmem>>, %arg29: memref<297x128xf32, #tpu.memory_space<vmem>>, %arg30: memref<273x64xf32, #tpu.memory_space<vmem>>, %arg31: memref<73x32xf32, #tpu.memory_space<vmem>>, %arg32: memref<21x16xf32, #tpu.memory_space<vmem>>) attributes {dimension_semantics = [#tpu.dimension_semantics<parallel>], iteration_bounds = array<i64: 2>, scalar_prefetch = 0 : i64, scratch_operands = 10 : i64, tpu.core_type = #tpu.core_type<tc>, window_params = [{transform_indices = @transform_0, window_bounds = array<i64: 1, 256, 8>}, {pipeline_mode = #tpu.pipeline_mode<synchronous>, transform_indices = @transform_1, window_bounds = array<i64: 72, 64>}, {pipeline_mode = #tpu.pipeline_mode<synchronous>, transform_indices = @transform_2, window_bounds = array<i64: 1, 64>}, {pipeline_mode = #tpu.pipeline_mode<synchronous>, transform_indices = @transform_3, window_bounds = array<i64: 576, 32>}, {pipeline_mode = #tpu.pipeline_mode<synchronous>, transform_indices = @transform_4, window_bounds = array<i64: 1, 32>}, {pipeline_mode = #tpu.pipeline_mode<synchronous>, transform_indices = @transform_5, window_bounds = array<i64: 288, 16>}, {pipeline_mode = #tpu.pipeline_mode<synchronous>, transform_indices = @transform_6, window_bounds = array<i64: 1, 16>}, {pipeline_mode = #tpu.pipeline_mode<synchronous>, transform_indices = @transform_7, window_bounds = array<i64: 144, 32>}, {pipeline_mode = #tpu.pipeline_mode<synchronous>, transform_indices = @transform_8, window_bounds = array<i64: 1, 32>}, {pipeline_mode = #tpu.pipeline_mode<synchronous>, transform_indices = @transform_9, window_bounds = array<i64: 288, 64>}, {pipeline_mode = #tpu.pipeline_mode<synchronous>, transform_indices = @transform_10, window_bounds = array<i64: 1, 64>}, {pipeline_mode = #tpu.pipeline_mode<synchronous>, transform_indices = @transform_11, window_bounds = array<i64: 576, 128>}, {pipeline_mode = #tpu.pipeline_mode<synchronous>, transform_indices = @transform_12, window_bounds = array<i64: 1, 128>}, {pipeline_mode = #tpu.pipeline_mode<synchronous>, transform_indices = @transform_13, window_bounds = array<i64: 1152, 8>}, {pipeline_mode = #tpu.pipeline_mode<synchronous>, transform_indices = @transform_14, window_bounds = array<i64: 1, 8>}, {pipeline_mode = #tpu.pipeline_mode<synchronous>, transform_indices = @transform_15, window_bounds = array<i64: 64, 256>}, {pipeline_mode = #tpu.pipeline_mode<synchronous>, transform_indices = @transform_16, window_bounds = array<i64: 16, 64>}, {pipeline_mode = #tpu.pipeline_mode<synchronous>, transform_indices = @transform_17, window_bounds = array<i64: 4, 16>}, {pipeline_mode = #tpu.pipeline_mode<synchronous>, transform_indices = @transform_18, window_bounds = array<i64: 16, 4>}, {pipeline_mode = #tpu.pipeline_mode<synchronous>, transform_indices = @transform_19, window_bounds = array<i64: 64, 16>}, {pipeline_mode = #tpu.pipeline_mode<synchronous>, transform_indices = @transform_20, window_bounds = array<i64: 256, 64>}, {transform_indices = @transform_21, window_bounds = array<i64: 1, 256, 8>}]} {
    %c0 = arith.constant 0 : index
    %c0_0 = arith.constant 0 : index
    %c0_1 = arith.constant 0 : index
    %0 = vector.load %arg1[%c0, %c0_0, %c0_1] : memref<1x256x8xbf16, #tpu.memory_space<vmem>>, vector<1x256x8xbf16>
    %1 = vector.shape_cast %0 : vector<1x256x8xbf16> to vector<256x8xbf16>
    %cst = arith.constant 0.000000e+00 : f32
    %2 = vector.broadcast %cst : f32 to vector<24x8xf32>
    %c0_2 = arith.constant 0 : index
    %c0_3 = arith.constant 0 : index
    %3 = vector.load %arg23[%c0_2, %c0_3] : memref<297x8xf32, #tpu.memory_space<vmem>>, vector<24x8xf32>
    tpu.vector_store %arg23[%c0_2, %c0_3], %2 {strides = array<i32>} : memref<297x8xf32, #tpu.memory_space<vmem>>, vector<24x8xf32>,
    %cst_4 = arith.constant 0.000000e+00 : f32
    %4 = vector.broadcast %cst_4 : f32 to vector<17x8xf32>
    %c280 = arith.constant 280 : index
    %c0_5 = arith.constant 0 : index
    %5 = vector.load %arg23[%c280, %c0_5] : memref<297x8xf32, #tpu.memory_space<vmem>>, vector<17x8xf32>
    tpu.vector_store %arg23[%c280, %c0_5], %4 {strides = array<i32>} : memref<297x8xf32, #tpu.memory_space<vmem>>, vector<17x8xf32>,
    %6 = arith.extf %1 : vector<256x8xbf16> to vector<256x8xf32>
    %c24 = arith.constant 24 : index
    %c0_6 = arith.constant 0 : index
    %7 = vector.load %arg23[%c24, %c0_6] : memref<297x8xf32, #tpu.memory_space<vmem>>, vector<256x8xf32>
    tpu.vector_store %arg23[%c24, %c0_6], %6 {strides = array<i32>} : memref<297x8xf32, #tpu.memory_space<vmem>>, vector<256x8xf32>,
    %8 = tpu.iota {dimensions = array<i32: 0>} : vector<256x8xi32>
    %c16_i32 = arith.constant 16 : i32
    %c0_i32 = arith.constant 0 : i32
    %9 = arith.cmpi eq, %c16_i32, %c0_i32 : i32
    %c1_i32 = arith.constant 1 : i32
    %10 = arith.select %9, %c1_i32, %c16_i32 : i32
    %11 = vector.broadcast %10 : i32 to vector<256x8xi32>
    %12 = arith.remsi %8, %11 : vector<256x8xi32>
    %c0_i32_7 = arith.constant 0 : i32
    %13 = vector.broadcast %c0_i32_7 : i32 to vector<256x8xi32>
    %14 = arith.cmpi ne, %12, %13 : vector<256x8xi32>
    %c0_i32_8 = arith.constant 0 : i32
    %15 = vector.broadcast %c0_i32_8 : i32 to vector<256x8xi32>
    %16 = arith.cmpi slt, %12, %15 : vector<256x8xi32>
    %c0_i32_9 = arith.constant 0 : i32
    %17 = arith.cmpi slt, %10, %c0_i32_9 : i32
    %18 = vector.broadcast %17 : i1 to vector<256x8xi1>
    %19 = vector.broadcast %18 : vector<256x8xi1> to vector<256x8xi1>
    %20 = arith.xori %16, %19 : vector<256x8xi1>
    %21 = arith.andi %20, %14 : vector<256x8xi1>
    %22 = vector.broadcast %10 : i32 to vector<256x8xi32>
    %23 = arith.addi %12, %22 : vector<256x8xi32>
    %24 = arith.select %21, %23, %12 : vector<256x8xi1>, vector<256x8xi32>
    %c0_i32_10 = arith.constant 0 : i32
    %25 = vector.broadcast %c0_i32_10 : i32 to vector<256x8xi32>
    %26 = arith.cmpi eq, %24, %25 : vector<256x8xi32>
    %c15_i32 = arith.constant 15 : i32
    %27 = vector.broadcast %c15_i32 : i32 to vector<256x8xi32>
    %28 = arith.cmpi eq, %24, %27 : vector<256x8xi32>
    %c7 = arith.constant 7 : index
    %c0_11 = arith.constant 0 : index
    %29 = vector.load %arg23[%c7, %c0_11] : memref<297x8xf32, #tpu.memory_space<vmem>>, vector<256x8xf32>
    %30 = arith.truncf %29 : vector<256x8xf32> to vector<256x8xbf16>
    %cst_12 = arith.constant 0.000000e+00 : f32
    %31 = arith.truncf %cst_12 : f32 to bf16
    %32 = vector.broadcast %31 : bf16 to vector<256x8xbf16>
    %33 = arith.select %26, %32, %30 : vector<256x8xi1>, vector<256x8xbf16>
    %c8 = arith.constant 8 : index
    %c0_13 = arith.constant 0 : index
    %34 = vector.load %arg23[%c8, %c0_13] : memref<297x8xf32, #tpu.memory_space<vmem>>, vector<256x8xf32>
    %35 = arith.truncf %34 : vector<256x8xf32> to vector<256x8xbf16>
    %c9 = arith.constant 9 : index
    %c0_14 = arith.constant 0 : index
    %36 = vector.load %arg23[%c9, %c0_14] : memref<297x8xf32, #tpu.memory_space<vmem>>, vector<256x8xf32>
    %37 = arith.truncf %36 : vector<256x8xf32> to vector<256x8xbf16>
    %cst_15 = arith.constant 0.000000e+00 : f32
    %38 = arith.truncf %cst_15 : f32 to bf16
    %39 = vector.broadcast %38 : bf16 to vector<256x8xbf16>
    %40 = arith.select %28, %39, %37 : vector<256x8xi1>, vector<256x8xbf16>
    %c23 = arith.constant 23 : index
    %c0_16 = arith.constant 0 : index
    %41 = vector.load %arg23[%c23, %c0_16] : memref<297x8xf32, #tpu.memory_space<vmem>>, vector<256x8xf32>
    %42 = arith.truncf %41 : vector<256x8xf32> to vector<256x8xbf16>
    %cst_17 = arith.constant 0.000000e+00 : f32
    %43 = arith.truncf %cst_17 : f32 to bf16
    %44 = vector.broadcast %43 : bf16 to vector<256x8xbf16>
    %45 = arith.select %26, %44, %42 : vector<256x8xi1>, vector<256x8xbf16>
    %c24_18 = arith.constant 24 : index
    %c0_19 = arith.constant 0 : index
    %46 = vector.load %arg23[%c24_18, %c0_19] : memref<297x8xf32, #tpu.memory_space<vmem>>, vector<256x8xf32>
    %47 = arith.truncf %46 : vector<256x8xf32> to vector<256x8xbf16>
    %c25 = arith.constant 25 : index
    %c0_20 = arith.constant 0 : index
    %48 = vector.load %arg23[%c25, %c0_20] : memref<297x8xf32, #tpu.memory_space<vmem>>, vector<256x8xf32>
    %49 = arith.truncf %48 : vector<256x8xf32> to vector<256x8xbf16>
    %cst_21 = arith.constant 0.000000e+00 : f32
    %50 = arith.truncf %cst_21 : f32 to bf16
    %51 = vector.broadcast %50 : bf16 to vector<256x8xbf16>
    %52 = arith.select %28, %51, %49 : vector<256x8xi1>, vector<256x8xbf16>
    %c39 = arith.constant 39 : index
    %c0_22 = arith.constant 0 : index
    %53 = vector.load %arg23[%c39, %c0_22] : memref<297x8xf32, #tpu.memory_space<vmem>>, vector<256x8xf32>
    %54 = arith.truncf %53 : vector<256x8xf32> to vector<256x8xbf16>
    %cst_23 = arith.constant 0.000000e+00 : f32
    %55 = arith.truncf %cst_23 : f32 to bf16
    %56 = vector.broadcast %55 : bf16 to vector<256x8xbf16>
    %57 = arith.select %26, %56, %54 : vector<256x8xi1>, vector<256x8xbf16>
    %c40 = arith.constant 40 : index
    %c0_24 = arith.constant 0 : index
    %58 = vector.load %arg23[%c40, %c0_24] : memref<297x8xf32, #tpu.memory_space<vmem>>, vector<256x8xf32>
    %59 = arith.truncf %58 : vector<256x8xf32> to vector<256x8xbf16>
    %c41 = arith.constant 41 : index
    %c0_25 = arith.constant 0 : index
    %60 = vector.load %arg23[%c41, %c0_25] : memref<297x8xf32, #tpu.memory_space<vmem>>, vector<256x8xf32>
    %61 = arith.truncf %60 : vector<256x8xf32> to vector<256x8xbf16>
    %cst_26 = arith.constant 0.000000e+00 : f32
    %62 = arith.truncf %cst_26 : f32 to bf16
    %63 = vector.broadcast %62 : bf16 to vector<256x8xbf16>
    %64 = arith.select %28, %63, %61 : vector<256x8xi1>, vector<256x8xbf16>
    %65 = tpu.concatenate %33, %35, %40, %45, %47, %52, %57, %59, %64 in 1 : vector<256x8xbf16>, vector<256x8xbf16>, vector<256x8xbf16>, vector<256x8xbf16>, vector<256x8xbf16>, vector<256x8xbf16>, vector<256x8xbf16>, vector<256x8xbf16>, vector<256x8xbf16> -> vector<256x72xbf16>
    %c0_27 = arith.constant 0 : index
    %c0_28 = arith.constant 0 : index
    %66 = vector.load %arg2[%c0_27, %c0_28] : memref<72x64xbf16, #tpu.memory_space<vmem>>, vector<72x64xbf16>
    %cst_29 = arith.constant dense<0.000000e+00> : vector<256x64xf32>
    %67 = tpu.matmul %65, %66, %cst_29 {dimension_numbers = #tpu.dot_dimension_numbers<[1], [0], [0], [1], [0, 0, 1, 1], [], []>} : vector<256x72xbf16>, vector<72x64xbf16>, vector<256x64xf32> -> vector<256x64xf32>
    %c0_30 = arith.constant 0 : index
    %c0_31 = arith.constant 0 : index
    %68 = vector.load %arg3[%c0_30, %c0_31] : memref<1x64xf32, #tpu.memory_space<vmem>>, vector<1x64xf32>
    %69 = vector.broadcast %68 : vector<1x64xf32> to vector<256x64xf32>
    %70 = arith.addf %67, %69 : vector<256x64xf32>
    %cst_32 = arith.constant 0.000000e+00 : f32
    %71 = vector.broadcast %cst_32 : f32 to vector<256x64xf32>
    %72 = arith.maximumf %70, %71 : vector<256x64xf32>
    %c0_33 = arith.constant 0 : index
    %c0_34 = arith.constant 0 : index
    %73 = vector.load %arg30[%c0_33, %c0_34] : memref<273x64xf32, #tpu.memory_space<vmem>>, vector<256x64xf32>
    tpu.vector_store %arg30[%c0_33, %c0_34], %72 {strides = array<i32>} : memref<273x64xf32, #tpu.memory_space<vmem>>, vector<256x64xf32>,
    %cst_35 = arith.constant 0.000000e+00 : f32
    %74 = vector.broadcast %cst_35 : f32 to vector<17x64xf32>
    %c256 = arith.constant 256 : index
    %c0_36 = arith.constant 0 : index
    %75 = vector.load %arg30[%c256, %c0_36] : memref<273x64xf32, #tpu.memory_space<vmem>>, vector<17x64xf32>
    tpu.vector_store %arg30[%c256, %c0_36], %74 {strides = array<i32>} : memref<273x64xf32, #tpu.memory_space<vmem>>, vector<17x64xf32>,
    %c1 = arith.constant 1 : index
    %c0_37 = arith.constant 0 : index
    %76 = vector.load %arg30[%c1, %c0_37] : memref<273x64xf32, #tpu.memory_space<vmem>>, vector<256x64xf32>
    %77 = arith.maximumf %72, %76 : vector<256x64xf32>
    %c16 = arith.constant 16 : index
    %c0_38 = arith.constant 0 : index
    %78 = vector.load %arg30[%c16, %c0_38] : memref<273x64xf32, #tpu.memory_space<vmem>>, vector<256x64xf32>
    %c17 = arith.constant 17 : index
    %c0_39 = arith.constant 0 : index
    %79 = vector.load %arg30[%c17, %c0_39] : memref<273x64xf32, #tpu.memory_space<vmem>>, vector<256x64xf32>
    %80 = arith.maximumf %78, %79 : vector<256x64xf32>
    %81 = arith.maximumf %77, %80 : vector<256x64xf32>
    %c0_40 = arith.constant 0 : index
    %c0_41 = arith.constant 0 : index
    %82 = vector.load %arg16[%c0_40, %c0_41] : memref<64x256xbf16, #tpu.memory_space<vmem>>, vector<64x256xbf16>
    %83 = arith.truncf %81 : vector<256x64xf32> to vector<256x64xbf16>
    %cst_42 = arith.constant dense<0.000000e+00> : vector<64x64xf32>
    %84 = tpu.matmul %82, %83, %cst_42 {dimension_numbers = #tpu.dot_dimension_numbers<[1], [0], [0], [1], [0, 0, 1, 1], [], []>} : vector<64x256xbf16>, vector<256x64xbf16>, vector<64x64xf32> -> vector<64x64xf32>
    %85 = arith.truncf %84 : vector<64x64xf32> to vector<64x64xbf16>
    %cst_43 = arith.constant 0.000000e+00 : f32
    %86 = vector.broadcast %cst_43 : f32 to vector<16x64xf32>
    %c0_44 = arith.constant 0 : index
    %c0_45 = arith.constant 0 : index
    %87 = vector.load %arg24[%c0_44, %c0_45] : memref<89x64xf32, #tpu.memory_space<vmem>>, vector<16x64xf32>
    tpu.vector_store %arg24[%c0_44, %c0_45], %86 {strides = array<i32>} : memref<89x64xf32, #tpu.memory_space<vmem>>, vector<16x64xf32>,
    %cst_46 = arith.constant 0.000000e+00 : f32
    %88 = vector.broadcast %cst_46 : f32 to vector<9x64xf32>
    %c80 = arith.constant 80 : index
    %c0_47 = arith.constant 0 : index
    %89 = vector.load %arg24[%c80, %c0_47] : memref<89x64xf32, #tpu.memory_space<vmem>>, vector<9x64xf32>
    tpu.vector_store %arg24[%c80, %c0_47], %88 {strides = array<i32>} : memref<89x64xf32, #tpu.memory_space<vmem>>, vector<9x64xf32>,
    %90 = arith.extf %85 : vector<64x64xbf16> to vector<64x64xf32>
    %c16_48 = arith.constant 16 : index
    %c0_49 = arith.constant 0 : index
    %91 = vector.load %arg24[%c16_48, %c0_49] : memref<89x64xf32, #tpu.memory_space<vmem>>, vector<64x64xf32>
    tpu.vector_store %arg24[%c16_48, %c0_49], %90 {strides = array<i32>} : memref<89x64xf32, #tpu.memory_space<vmem>>, vector<64x64xf32>,
    %92 = tpu.iota {dimensions = array<i32: 0>} : vector<64x64xi32>
    %c8_i32 = arith.constant 8 : i32
    %c0_i32_50 = arith.constant 0 : i32
    %93 = arith.cmpi eq, %c8_i32, %c0_i32_50 : i32
    %c1_i32_51 = arith.constant 1 : i32
    %94 = arith.select %93, %c1_i32_51, %c8_i32 : i32
    %95 = vector.broadcast %94 : i32 to vector<64x64xi32>
    %96 = arith.remsi %92, %95 : vector<64x64xi32>
    %c0_i32_52 = arith.constant 0 : i32
    %97 = vector.broadcast %c0_i32_52 : i32 to vector<64x64xi32>
    %98 = arith.cmpi ne, %96, %97 : vector<64x64xi32>
    %c0_i32_53 = arith.constant 0 : i32
    %99 = vector.broadcast %c0_i32_53 : i32 to vector<64x64xi32>
    %100 = arith.cmpi slt, %96, %99 : vector<64x64xi32>
    %c0_i32_54 = arith.constant 0 : i32
    %101 = arith.cmpi slt, %94, %c0_i32_54 : i32
    %102 = vector.broadcast %101 : i1 to vector<64x64xi1>
    %103 = vector.broadcast %102 : vector<64x64xi1> to vector<64x64xi1>
    %104 = arith.xori %100, %103 : vector<64x64xi1>
    %105 = arith.andi %104, %98 : vector<64x64xi1>
    %106 = vector.broadcast %94 : i32 to vector<64x64xi32>
    %107 = arith.addi %96, %106 : vector<64x64xi32>
    %108 = arith.select %105, %107, %96 : vector<64x64xi1>, vector<64x64xi32>
    %c0_i32_55 = arith.constant 0 : i32
    %109 = vector.broadcast %c0_i32_55 : i32 to vector<64x64xi32>
    %110 = arith.cmpi eq, %108, %109 : vector<64x64xi32>
    %c7_i32 = arith.constant 7 : i32
    %111 = vector.broadcast %c7_i32 : i32 to vector<64x64xi32>
    %112 = arith.cmpi eq, %108, %111 : vector<64x64xi32>
    %c7_56 = arith.constant 7 : index
    %c0_57 = arith.constant 0 : index
    %113 = vector.load %arg24[%c7_56, %c0_57] : memref<89x64xf32, #tpu.memory_space<vmem>>, vector<64x64xf32>
    %114 = arith.truncf %113 : vector<64x64xf32> to vector<64x64xbf16>
    %cst_58 = arith.constant 0.000000e+00 : f32
    %115 = arith.truncf %cst_58 : f32 to bf16
    %116 = vector.broadcast %115 : bf16 to vector<64x64xbf16>
    %117 = arith.select %110, %116, %114 : vector<64x64xi1>, vector<64x64xbf16>
    %c8_59 = arith.constant 8 : index
    %c0_60 = arith.constant 0 : index
    %118 = vector.load %arg24[%c8_59, %c0_60] : memref<89x64xf32, #tpu.memory_space<vmem>>, vector<64x64xf32>
    %119 = arith.truncf %118 : vector<64x64xf32> to vector<64x64xbf16>
    %c9_61 = arith.constant 9 : index
    %c0_62 = arith.constant 0 : index
    %120 = vector.load %arg24[%c9_61, %c0_62] : memref<89x64xf32, #tpu.memory_space<vmem>>, vector<64x64xf32>
    %121 = arith.truncf %120 : vector<64x64xf32> to vector<64x64xbf16>
    %cst_63 = arith.constant 0.000000e+00 : f32
    %122 = arith.truncf %cst_63 : f32 to bf16
    %123 = vector.broadcast %122 : bf16 to vector<64x64xbf16>
    %124 = arith.select %112, %123, %121 : vector<64x64xi1>, vector<64x64xbf16>
    %c15 = arith.constant 15 : index
    %c0_64 = arith.constant 0 : index
    %125 = vector.load %arg24[%c15, %c0_64] : memref<89x64xf32, #tpu.memory_space<vmem>>, vector<64x64xf32>
    %126 = arith.truncf %125 : vector<64x64xf32> to vector<64x64xbf16>
    %cst_65 = arith.constant 0.000000e+00 : f32
    %127 = arith.truncf %cst_65 : f32 to bf16
    %128 = vector.broadcast %127 : bf16 to vector<64x64xbf16>
    %129 = arith.select %110, %128, %126 : vector<64x64xi1>, vector<64x64xbf16>
    %c16_66 = arith.constant 16 : index
    %c0_67 = arith.constant 0 : index
    %130 = vector.load %arg24[%c16_66, %c0_67] : memref<89x64xf32, #tpu.memory_space<vmem>>, vector<64x64xf32>
    %131 = arith.truncf %130 : vector<64x64xf32> to vector<64x64xbf16>
    %c17_68 = arith.constant 17 : index
    %c0_69 = arith.constant 0 : index
    %132 = vector.load %arg24[%c17_68, %c0_69] : memref<89x64xf32, #tpu.memory_space<vmem>>, vector<64x64xf32>
    %133 = arith.truncf %132 : vector<64x64xf32> to vector<64x64xbf16>
    %cst_70 = arith.constant 0.000000e+00 : f32
    %134 = arith.truncf %cst_70 : f32 to bf16
    %135 = vector.broadcast %134 : bf16 to vector<64x64xbf16>
    %136 = arith.select %112, %135, %133 : vector<64x64xi1>, vector<64x64xbf16>
    %c23_71 = arith.constant 23 : index
    %c0_72 = arith.constant 0 : index
    %137 = vector.load %arg24[%c23_71, %c0_72] : memref<89x64xf32, #tpu.memory_space<vmem>>, vector<64x64xf32>
    %138 = arith.truncf %137 : vector<64x64xf32> to vector<64x64xbf16>
    %cst_73 = arith.constant 0.000000e+00 : f32
    %139 = arith.truncf %cst_73 : f32 to bf16
    %140 = vector.broadcast %139 : bf16 to vector<64x64xbf16>
    %141 = arith.select %110, %140, %138 : vector<64x64xi1>, vector<64x64xbf16>
    %c24_74 = arith.constant 24 : index
    %c0_75 = arith.constant 0 : index
    %142 = vector.load %arg24[%c24_74, %c0_75] : memref<89x64xf32, #tpu.memory_space<vmem>>, vector<64x64xf32>
    %143 = arith.truncf %142 : vector<64x64xf32> to vector<64x64xbf16>
    %c25_76 = arith.constant 25 : index
    %c0_77 = arith.constant 0 : index
    %144 = vector.load %arg24[%c25_76, %c0_77] : memref<89x64xf32, #tpu.memory_space<vmem>>, vector<64x64xf32>
    %145 = arith.truncf %144 : vector<64x64xf32> to vector<64x64xbf16>
    %cst_78 = arith.constant 0.000000e+00 : f32
    %146 = arith.truncf %cst_78 : f32 to bf16
    %147 = vector.broadcast %146 : bf16 to vector<64x64xbf16>
    %148 = arith.select %112, %147, %145 : vector<64x64xi1>, vector<64x64xbf16>
    %149 = tpu.concatenate %117, %119, %124, %129, %131, %136, %141, %143, %148 in 1 : vector<64x64xbf16>, vector<64x64xbf16>, vector<64x64xbf16>, vector<64x64xbf16>, vector<64x64xbf16>, vector<64x64xbf16>, vector<64x64xbf16>, vector<64x64xbf16>, vector<64x64xbf16> -> vector<64x576xbf16>
    %c0_79 = arith.constant 0 : index
    %c0_80 = arith.constant 0 : index
    %150 = vector.load %arg4[%c0_79, %c0_80] : memref<576x32xbf16, #tpu.memory_space<vmem>>, vector<576x32xbf16>
    %cst_81 = arith.constant dense<0.000000e+00> : vector<64x32xf32>
    %151 = tpu.matmul %149, %150, %cst_81 {dimension_numbers = #tpu.dot_dimension_numbers<[1], [0], [0], [1], [0, 0, 1, 1], [], []>} : vector<64x576xbf16>, vector<576x32xbf16>, vector<64x32xf32> -> vector<64x32xf32>
    %c0_82 = arith.constant 0 : index
    %c0_83 = arith.constant 0 : index
    %152 = vector.load %arg5[%c0_82, %c0_83] : memref<1x32xf32, #tpu.memory_space<vmem>>, vector<1x32xf32>
    %153 = vector.broadcast %152 : vector<1x32xf32> to vector<64x32xf32>
    %154 = arith.addf %151, %153 : vector<64x32xf32>
    %cst_84 = arith.constant 0.000000e+00 : f32
    %155 = vector.broadcast %cst_84 : f32 to vector<64x32xf32>
    %156 = arith.maximumf %154, %155 : vector<64x32xf32>
    %c0_85 = arith.constant 0 : index
    %c0_86 = arith.constant 0 : index
    %157 = vector.load %arg31[%c0_85, %c0_86] : memref<73x32xf32, #tpu.memory_space<vmem>>, vector<64x32xf32>
    tpu.vector_store %arg31[%c0_85, %c0_86], %156 {strides = array<i32>} : memref<73x32xf32, #tpu.memory_space<vmem>>, vector<64x32xf32>,
    %cst_87 = arith.constant 0.000000e+00 : f32
    %158 = vector.broadcast %cst_87 : f32 to vector<9x32xf32>
    %c64 = arith.constant 64 : index
    %c0_88 = arith.constant 0 : index
    %159 = vector.load %arg31[%c64, %c0_88] : memref<73x32xf32, #tpu.memory_space<vmem>>, vector<9x32xf32>
    tpu.vector_store %arg31[%c64, %c0_88], %158 {strides = array<i32>} : memref<73x32xf32, #tpu.memory_space<vmem>>, vector<9x32xf32>,
    %c1_89 = arith.constant 1 : index
    %c0_90 = arith.constant 0 : index
    %160 = vector.load %arg31[%c1_89, %c0_90] : memref<73x32xf32, #tpu.memory_space<vmem>>, vector<64x32xf32>
    %161 = arith.maximumf %156, %160 : vector<64x32xf32>
    %c8_91 = arith.constant 8 : index
    %c0_92 = arith.constant 0 : index
    %162 = vector.load %arg31[%c8_91, %c0_92] : memref<73x32xf32, #tpu.memory_space<vmem>>, vector<64x32xf32>
    %c9_93 = arith.constant 9 : index
    %c0_94 = arith.constant 0 : index
    %163 = vector.load %arg31[%c9_93, %c0_94] : memref<73x32xf32, #tpu.memory_space<vmem>>, vector<64x32xf32>
    %164 = arith.maximumf %162, %163 : vector<64x32xf32>
    %165 = arith.maximumf %161, %164 : vector<64x32xf32>
    %c0_95 = arith.constant 0 : index
    %c0_96 = arith.constant 0 : index
    %166 = vector.load %arg17[%c0_95, %c0_96] : memref<16x64xbf16, #tpu.memory_space<vmem>>, vector<16x64xbf16>
    %167 = arith.truncf %165 : vector<64x32xf32> to vector<64x32xbf16>
    %cst_97 = arith.constant dense<0.000000e+00> : vector<16x32xf32>
    %168 = tpu.matmul %166, %167, %cst_97 {dimension_numbers = #tpu.dot_dimension_numbers<[1], [0], [0], [1], [0, 0, 1, 1], [], []>} : vector<16x64xbf16>, vector<64x32xbf16>, vector<16x32xf32> -> vector<16x32xf32>
    %169 = arith.truncf %168 : vector<16x32xf32> to vector<16x32xbf16>
    %cst_98 = arith.constant 0.000000e+00 : f32
    %170 = vector.broadcast %cst_98 : f32 to vector<8x32xf32>
    %c0_99 = arith.constant 0 : index
    %c0_100 = arith.constant 0 : index
    %171 = vector.load %arg25[%c0_99, %c0_100] : memref<29x32xf32, #tpu.memory_space<vmem>>, vector<8x32xf32>
    tpu.vector_store %arg25[%c0_99, %c0_100], %170 {strides = array<i32>} : memref<29x32xf32, #tpu.memory_space<vmem>>, vector<8x32xf32>,
    %cst_101 = arith.constant 0.000000e+00 : f32
    %172 = vector.broadcast %cst_101 : f32 to vector<5x32xf32>
    %c24_102 = arith.constant 24 : index
    %c0_103 = arith.constant 0 : index
    %173 = vector.load %arg25[%c24_102, %c0_103] : memref<29x32xf32, #tpu.memory_space<vmem>>, vector<5x32xf32>
    tpu.vector_store %arg25[%c24_102, %c0_103], %172 {strides = array<i32>} : memref<29x32xf32, #tpu.memory_space<vmem>>, vector<5x32xf32>,
    %174 = arith.extf %169 : vector<16x32xbf16> to vector<16x32xf32>
    %c8_104 = arith.constant 8 : index
    %c0_105 = arith.constant 0 : index
    %175 = vector.load %arg25[%c8_104, %c0_105] : memref<29x32xf32, #tpu.memory_space<vmem>>, vector<16x32xf32>
    tpu.vector_store %arg25[%c8_104, %c0_105], %174 {strides = array<i32>} : memref<29x32xf32, #tpu.memory_space<vmem>>, vector<16x32xf32>,
    %176 = tpu.iota {dimensions = array<i32: 0>} : vector<16x32xi32>
    %c4_i32 = arith.constant 4 : i32
    %c0_i32_106 = arith.constant 0 : i32
    %177 = arith.cmpi eq, %c4_i32, %c0_i32_106 : i32
    %c1_i32_107 = arith.constant 1 : i32
    %178 = arith.select %177, %c1_i32_107, %c4_i32 : i32
    %179 = vector.broadcast %178 : i32 to vector<16x32xi32>
    %180 = arith.remsi %176, %179 : vector<16x32xi32>
    %c0_i32_108 = arith.constant 0 : i32
    %181 = vector.broadcast %c0_i32_108 : i32 to vector<16x32xi32>
    %182 = arith.cmpi ne, %180, %181 : vector<16x32xi32>
    %c0_i32_109 = arith.constant 0 : i32
    %183 = vector.broadcast %c0_i32_109 : i32 to vector<16x32xi32>
    %184 = arith.cmpi slt, %180, %183 : vector<16x32xi32>
    %c0_i32_110 = arith.constant 0 : i32
    %185 = arith.cmpi slt, %178, %c0_i32_110 : i32
    %186 = vector.broadcast %185 : i1 to vector<16x32xi1>
    %187 = vector.broadcast %186 : vector<16x32xi1> to vector<16x32xi1>
    %188 = arith.xori %184, %187 : vector<16x32xi1>
    %189 = arith.andi %188, %182 : vector<16x32xi1>
    %190 = vector.broadcast %178 : i32 to vector<16x32xi32>
    %191 = arith.addi %180, %190 : vector<16x32xi32>
    %192 = arith.select %189, %191, %180 : vector<16x32xi1>, vector<16x32xi32>
    %c0_i32_111 = arith.constant 0 : i32
    %193 = vector.broadcast %c0_i32_111 : i32 to vector<16x32xi32>
    %194 = arith.cmpi eq, %192, %193 : vector<16x32xi32>
    %c3_i32 = arith.constant 3 : i32
    %195 = vector.broadcast %c3_i32 : i32 to vector<16x32xi32>
    %196 = arith.cmpi eq, %192, %195 : vector<16x32xi32>
    %c3 = arith.constant 3 : index
    %c0_112 = arith.constant 0 : index
    %197 = vector.load %arg25[%c3, %c0_112] : memref<29x32xf32, #tpu.memory_space<vmem>>, vector<16x32xf32>
    %198 = arith.truncf %197 : vector<16x32xf32> to vector<16x32xbf16>
    %cst_113 = arith.constant 0.000000e+00 : f32
    %199 = arith.truncf %cst_113 : f32 to bf16
    %200 = vector.broadcast %199 : bf16 to vector<16x32xbf16>
    %201 = arith.select %194, %200, %198 : vector<16x32xi1>, vector<16x32xbf16>
    %c4 = arith.constant 4 : index
    %c0_114 = arith.constant 0 : index
    %202 = vector.load %arg25[%c4, %c0_114] : memref<29x32xf32, #tpu.memory_space<vmem>>, vector<16x32xf32>
    %203 = arith.truncf %202 : vector<16x32xf32> to vector<16x32xbf16>
    %c5 = arith.constant 5 : index
    %c0_115 = arith.constant 0 : index
    %204 = vector.load %arg25[%c5, %c0_115] : memref<29x32xf32, #tpu.memory_space<vmem>>, vector<16x32xf32>
    %205 = arith.truncf %204 : vector<16x32xf32> to vector<16x32xbf16>
    %cst_116 = arith.constant 0.000000e+00 : f32
    %206 = arith.truncf %cst_116 : f32 to bf16
    %207 = vector.broadcast %206 : bf16 to vector<16x32xbf16>
    %208 = arith.select %196, %207, %205 : vector<16x32xi1>, vector<16x32xbf16>
    %c7_117 = arith.constant 7 : index
    %c0_118 = arith.constant 0 : index
    %209 = vector.load %arg25[%c7_117, %c0_118] : memref<29x32xf32, #tpu.memory_space<vmem>>, vector<16x32xf32>
    %210 = arith.truncf %209 : vector<16x32xf32> to vector<16x32xbf16>
    %cst_119 = arith.constant 0.000000e+00 : f32
    %211 = arith.truncf %cst_119 : f32 to bf16
    %212 = vector.broadcast %211 : bf16 to vector<16x32xbf16>
    %213 = arith.select %194, %212, %210 : vector<16x32xi1>, vector<16x32xbf16>
    %c8_120 = arith.constant 8 : index
    %c0_121 = arith.constant 0 : index
    %214 = vector.load %arg25[%c8_120, %c0_121] : memref<29x32xf32, #tpu.memory_space<vmem>>, vector<16x32xf32>
    %215 = arith.truncf %214 : vector<16x32xf32> to vector<16x32xbf16>
    %c9_122 = arith.constant 9 : index
    %c0_123 = arith.constant 0 : index
    %216 = vector.load %arg25[%c9_122, %c0_123] : memref<29x32xf32, #tpu.memory_space<vmem>>, vector<16x32xf32>
    %217 = arith.truncf %216 : vector<16x32xf32> to vector<16x32xbf16>
    %cst_124 = arith.constant 0.000000e+00 : f32
    %218 = arith.truncf %cst_124 : f32 to bf16
    %219 = vector.broadcast %218 : bf16 to vector<16x32xbf16>
    %220 = arith.select %196, %219, %217 : vector<16x32xi1>, vector<16x32xbf16>
    %c11 = arith.constant 11 : index
    %c0_125 = arith.constant 0 : index
    %221 = vector.load %arg25[%c11, %c0_125] : memref<29x32xf32, #tpu.memory_space<vmem>>, vector<16x32xf32>
    %222 = arith.truncf %221 : vector<16x32xf32> to vector<16x32xbf16>
    %cst_126 = arith.constant 0.000000e+00 : f32
    %223 = arith.truncf %cst_126 : f32 to bf16
    %224 = vector.broadcast %223 : bf16 to vector<16x32xbf16>
    %225 = arith.select %194, %224, %222 : vector<16x32xi1>, vector<16x32xbf16>
    %c12 = arith.constant 12 : index
    %c0_127 = arith.constant 0 : index
    %226 = vector.load %arg25[%c12, %c0_127] : memref<29x32xf32, #tpu.memory_space<vmem>>, vector<16x32xf32>
    %227 = arith.truncf %226 : vector<16x32xf32> to vector<16x32xbf16>
    %c13 = arith.constant 13 : index
    %c0_128 = arith.constant 0 : index
    %228 = vector.load %arg25[%c13, %c0_128] : memref<29x32xf32, #tpu.memory_space<vmem>>, vector<16x32xf32>
    %229 = arith.truncf %228 : vector<16x32xf32> to vector<16x32xbf16>
    %cst_129 = arith.constant 0.000000e+00 : f32
    %230 = arith.truncf %cst_129 : f32 to bf16
    %231 = vector.broadcast %230 : bf16 to vector<16x32xbf16>
    %232 = arith.select %196, %231, %229 : vector<16x32xi1>, vector<16x32xbf16>
    %233 = tpu.concatenate %201, %203, %208, %213, %215, %220, %225, %227, %232 in 1 : vector<16x32xbf16>, vector<16x32xbf16>, vector<16x32xbf16>, vector<16x32xbf16>, vector<16x32xbf16>, vector<16x32xbf16>, vector<16x32xbf16>, vector<16x32xbf16>, vector<16x32xbf16> -> vector<16x288xbf16>
    %c0_130 = arith.constant 0 : index
    %c0_131 = arith.constant 0 : index
    %234 = vector.load %arg6[%c0_130, %c0_131] : memref<288x16xbf16, #tpu.memory_space<vmem>>, vector<288x16xbf16>
    %cst_132 = arith.constant dense<0.000000e+00> : vector<16x16xf32>
    %235 = tpu.matmul %233, %234, %cst_132 {dimension_numbers = #tpu.dot_dimension_numbers<[1], [0], [0], [1], [0, 0, 1, 1], [], []>} : vector<16x288xbf16>, vector<288x16xbf16>, vector<16x16xf32> -> vector<16x16xf32>
    %c0_133 = arith.constant 0 : index
    %c0_134 = arith.constant 0 : index
    %236 = vector.load %arg7[%c0_133, %c0_134] : memref<1x16xf32, #tpu.memory_space<vmem>>, vector<1x16xf32>
    %237 = vector.broadcast %236 : vector<1x16xf32> to vector<16x16xf32>
    %238 = arith.addf %235, %237 : vector<16x16xf32>
    %cst_135 = arith.constant 0.000000e+00 : f32
    %239 = vector.broadcast %cst_135 : f32 to vector<16x16xf32>
    %240 = arith.maximumf %238, %239 : vector<16x16xf32>
    %c0_136 = arith.constant 0 : index
    %c0_137 = arith.constant 0 : index
    %241 = vector.load %arg32[%c0_136, %c0_137] : memref<21x16xf32, #tpu.memory_space<vmem>>, vector<16x16xf32>
    tpu.vector_store %arg32[%c0_136, %c0_137], %240 {strides = array<i32>} : memref<21x16xf32, #tpu.memory_space<vmem>>, vector<16x16xf32>,
    %cst_138 = arith.constant 0.000000e+00 : f32
    %242 = vector.broadcast %cst_138 : f32 to vector<5x16xf32>
    %c16_139 = arith.constant 16 : index
    %c0_140 = arith.constant 0 : index
    %243 = vector.load %arg32[%c16_139, %c0_140] : memref<21x16xf32, #tpu.memory_space<vmem>>, vector<5x16xf32>
    tpu.vector_store %arg32[%c16_139, %c0_140], %242 {strides = array<i32>} : memref<21x16xf32, #tpu.memory_space<vmem>>, vector<5x16xf32>,
    %c1_141 = arith.constant 1 : index
    %c0_142 = arith.constant 0 : index
    %244 = vector.load %arg32[%c1_141, %c0_142] : memref<21x16xf32, #tpu.memory_space<vmem>>, vector<16x16xf32>
    %245 = arith.maximumf %240, %244 : vector<16x16xf32>
    %c4_143 = arith.constant 4 : index
    %c0_144 = arith.constant 0 : index
    %246 = vector.load %arg32[%c4_143, %c0_144] : memref<21x16xf32, #tpu.memory_space<vmem>>, vector<16x16xf32>
    %c5_145 = arith.constant 5 : index
    %c0_146 = arith.constant 0 : index
    %247 = vector.load %arg32[%c5_145, %c0_146] : memref<21x16xf32, #tpu.memory_space<vmem>>, vector<16x16xf32>
    %248 = arith.maximumf %246, %247 : vector<16x16xf32>
    %249 = arith.maximumf %245, %248 : vector<16x16xf32>
    %c0_147 = arith.constant 0 : index
    %c0_148 = arith.constant 0 : index
    %250 = vector.load %arg18[%c0_147, %c0_148] : memref<4x16xbf16, #tpu.memory_space<vmem>>, vector<4x16xbf16>
    %251 = arith.truncf %249 : vector<16x16xf32> to vector<16x16xbf16>
    %cst_149 = arith.constant dense<0.000000e+00> : vector<4x16xf32>
    %252 = tpu.matmul %250, %251, %cst_149 {dimension_numbers = #tpu.dot_dimension_numbers<[1], [0], [0], [1], [0, 0, 1, 1], [], []>} : vector<4x16xbf16>, vector<16x16xbf16>, vector<4x16xf32> -> vector<4x16xf32>
    %253 = arith.truncf %252 : vector<4x16xf32> to vector<4x16xbf16>
    %cst_150 = arith.constant 0.000000e+00 : f32
    %254 = vector.broadcast %cst_150 : f32 to vector<8x16xf32>
    %c0_151 = arith.constant 0 : index
    %c0_152 = arith.constant 0 : index
    %255 = vector.load %arg26[%c0_151, %c0_152] : memref<15x16xf32, #tpu.memory_space<vmem>>, vector<8x16xf32>
    tpu.vector_store %arg26[%c0_151, %c0_152], %254 {strides = array<i32>} : memref<15x16xf32, #tpu.memory_space<vmem>>, vector<8x16xf32>,
    %cst_153 = arith.constant 0.000000e+00 : f32
    %256 = vector.broadcast %cst_153 : f32 to vector<3x16xf32>
    %c12_154 = arith.constant 12 : index
    %c0_155 = arith.constant 0 : index
    %257 = vector.load %arg26[%c12_154, %c0_155] : memref<15x16xf32, #tpu.memory_space<vmem>>, vector<3x16xf32>
    tpu.vector_store %arg26[%c12_154, %c0_155], %256 {strides = array<i32>} : memref<15x16xf32, #tpu.memory_space<vmem>>, vector<3x16xf32>,
    %258 = arith.extf %253 : vector<4x16xbf16> to vector<4x16xf32>
    %c8_156 = arith.constant 8 : index
    %c0_157 = arith.constant 0 : index
    %259 = vector.load %arg26[%c8_156, %c0_157] : memref<15x16xf32, #tpu.memory_space<vmem>>, vector<4x16xf32>
    tpu.vector_store %arg26[%c8_156, %c0_157], %258 {strides = array<i32>} : memref<15x16xf32, #tpu.memory_space<vmem>>, vector<4x16xf32>,
    %260 = tpu.iota {dimensions = array<i32: 0>} : vector<4x16xi32>
    %c2_i32 = arith.constant 2 : i32
    %c0_i32_158 = arith.constant 0 : i32
    %261 = arith.cmpi eq, %c2_i32, %c0_i32_158 : i32
    %c1_i32_159 = arith.constant 1 : i32
    %262 = arith.select %261, %c1_i32_159, %c2_i32 : i32
    %263 = vector.broadcast %262 : i32 to vector<4x16xi32>
    %264 = arith.remsi %260, %263 : vector<4x16xi32>
    %c0_i32_160 = arith.constant 0 : i32
    %265 = vector.broadcast %c0_i32_160 : i32 to vector<4x16xi32>
    %266 = arith.cmpi ne, %264, %265 : vector<4x16xi32>
    %c0_i32_161 = arith.constant 0 : i32
    %267 = vector.broadcast %c0_i32_161 : i32 to vector<4x16xi32>
    %268 = arith.cmpi slt, %264, %267 : vector<4x16xi32>
    %c0_i32_162 = arith.constant 0 : i32
    %269 = arith.cmpi slt, %262, %c0_i32_162 : i32
    %270 = vector.broadcast %269 : i1 to vector<4x16xi1>
    %271 = vector.broadcast %270 : vector<4x16xi1> to vector<4x16xi1>
    %272 = arith.xori %268, %271 : vector<4x16xi1>
    %273 = arith.andi %272, %266 : vector<4x16xi1>
    %274 = vector.broadcast %262 : i32 to vector<4x16xi32>
    %275 = arith.addi %264, %274 : vector<4x16xi32>
    %276 = arith.select %273, %275, %264 : vector<4x16xi1>, vector<4x16xi32>
    %c0_i32_163 = arith.constant 0 : i32
    %277 = vector.broadcast %c0_i32_163 : i32 to vector<4x16xi32>
    %278 = arith.cmpi eq, %276, %277 : vector<4x16xi32>
    %c1_i32_164 = arith.constant 1 : i32
    %279 = vector.broadcast %c1_i32_164 : i32 to vector<4x16xi32>
    %280 = arith.cmpi eq, %276, %279 : vector<4x16xi32>
    %c5_165 = arith.constant 5 : index
    %c0_166 = arith.constant 0 : index
    %281 = vector.load %arg26[%c5_165, %c0_166] : memref<15x16xf32, #tpu.memory_space<vmem>>, vector<4x16xf32>
    %282 = arith.truncf %281 : vector<4x16xf32> to vector<4x16xbf16>
    %cst_167 = arith.constant 0.000000e+00 : f32
    %283 = arith.truncf %cst_167 : f32 to bf16
    %284 = vector.broadcast %283 : bf16 to vector<4x16xbf16>
    %285 = arith.select %278, %284, %282 : vector<4x16xi1>, vector<4x16xbf16>
    %c6 = arith.constant 6 : index
    %c0_168 = arith.constant 0 : index
    %286 = vector.load %arg26[%c6, %c0_168] : memref<15x16xf32, #tpu.memory_space<vmem>>, vector<4x16xf32>
    %287 = arith.truncf %286 : vector<4x16xf32> to vector<4x16xbf16>
    %c7_169 = arith.constant 7 : index
    %c0_170 = arith.constant 0 : index
    %288 = vector.load %arg26[%c7_169, %c0_170] : memref<15x16xf32, #tpu.memory_space<vmem>>, vector<4x16xf32>
    %289 = arith.truncf %288 : vector<4x16xf32> to vector<4x16xbf16>
    %cst_171 = arith.constant 0.000000e+00 : f32
    %290 = arith.truncf %cst_171 : f32 to bf16
    %291 = vector.broadcast %290 : bf16 to vector<4x16xbf16>
    %292 = arith.select %280, %291, %289 : vector<4x16xi1>, vector<4x16xbf16>
    %c7_172 = arith.constant 7 : index
    %c0_173 = arith.constant 0 : index
    %293 = vector.load %arg26[%c7_172, %c0_173] : memref<15x16xf32, #tpu.memory_space<vmem>>, vector<4x16xf32>
    %294 = arith.truncf %293 : vector<4x16xf32> to vector<4x16xbf16>
    %cst_174 = arith.constant 0.000000e+00 : f32
    %295 = arith.truncf %cst_174 : f32 to bf16
    %296 = vector.broadcast %295 : bf16 to vector<4x16xbf16>
    %297 = arith.select %278, %296, %294 : vector<4x16xi1>, vector<4x16xbf16>
    %c8_175 = arith.constant 8 : index
    %c0_176 = arith.constant 0 : index
    %298 = vector.load %arg26[%c8_175, %c0_176] : memref<15x16xf32, #tpu.memory_space<vmem>>, vector<4x16xf32>
    %299 = arith.truncf %298 : vector<4x16xf32> to vector<4x16xbf16>
    %c9_177 = arith.constant 9 : index
    %c0_178 = arith.constant 0 : index
    %300 = vector.load %arg26[%c9_177, %c0_178] : memref<15x16xf32, #tpu.memory_space<vmem>>, vector<4x16xf32>
    %301 = arith.truncf %300 : vector<4x16xf32> to vector<4x16xbf16>
    %cst_179 = arith.constant 0.000000e+00 : f32
    %302 = arith.truncf %cst_179 : f32 to bf16
    %303 = vector.broadcast %302 : bf16 to vector<4x16xbf16>
    %304 = arith.select %280, %303, %301 : vector<4x16xi1>, vector<4x16xbf16>
    %c9_180 = arith.constant 9 : index
    %c0_181 = arith.constant 0 : index
    %305 = vector.load %arg26[%c9_180, %c0_181] : memref<15x16xf32, #tpu.memory_space<vmem>>, vector<4x16xf32>
    %306 = arith.truncf %305 : vector<4x16xf32> to vector<4x16xbf16>
    %cst_182 = arith.constant 0.000000e+00 : f32
    %307 = arith.truncf %cst_182 : f32 to bf16
    %308 = vector.broadcast %307 : bf16 to vector<4x16xbf16>
    %309 = arith.select %278, %308, %306 : vector<4x16xi1>, vector<4x16xbf16>
    %c10 = arith.constant 10 : index
    %c0_183 = arith.constant 0 : index
    %310 = vector.load %arg26[%c10, %c0_183] : memref<15x16xf32, #tpu.memory_space<vmem>>, vector<4x16xf32>
    %311 = arith.truncf %310 : vector<4x16xf32> to vector<4x16xbf16>
    %c11_184 = arith.constant 11 : index
    %c0_185 = arith.constant 0 : index
    %312 = vector.load %arg26[%c11_184, %c0_185] : memref<15x16xf32, #tpu.memory_space<vmem>>, vector<4x16xf32>
    %313 = arith.truncf %312 : vector<4x16xf32> to vector<4x16xbf16>
    %cst_186 = arith.constant 0.000000e+00 : f32
    %314 = arith.truncf %cst_186 : f32 to bf16
    %315 = vector.broadcast %314 : bf16 to vector<4x16xbf16>
    %316 = arith.select %280, %315, %313 : vector<4x16xi1>, vector<4x16xbf16>
    %317 = tpu.concatenate %285, %287, %292, %297, %299, %304, %309, %311, %316 in 1 : vector<4x16xbf16>, vector<4x16xbf16>, vector<4x16xbf16>, vector<4x16xbf16>, vector<4x16xbf16>, vector<4x16xbf16>, vector<4x16xbf16>, vector<4x16xbf16>, vector<4x16xbf16> -> vector<4x144xbf16>
    %c0_187 = arith.constant 0 : index
    %c0_188 = arith.constant 0 : index
    %318 = vector.load %arg8[%c0_187, %c0_188] : memref<144x32xbf16, #tpu.memory_space<vmem>>, vector<144x32xbf16>
    %cst_189 = arith.constant dense<0.000000e+00> : vector<4x32xf32>
    %319 = tpu.matmul %317, %318, %cst_189 {dimension_numbers = #tpu.dot_dimension_numbers<[1], [0], [0], [1], [0, 0, 1, 1], [], []>} : vector<4x144xbf16>, vector<144x32xbf16>, vector<4x32xf32> -> vector<4x32xf32>
    %c0_190 = arith.constant 0 : index
    %c0_191 = arith.constant 0 : index
    %320 = vector.load %arg9[%c0_190, %c0_191] : memref<1x32xf32, #tpu.memory_space<vmem>>, vector<1x32xf32>
    %321 = vector.broadcast %320 : vector<1x32xf32> to vector<4x32xf32>
    %322 = arith.addf %319, %321 : vector<4x32xf32>
    %cst_192 = arith.constant 0.000000e+00 : f32
    %323 = vector.broadcast %cst_192 : f32 to vector<4x32xf32>
    %324 = arith.maximumf %322, %323 : vector<4x32xf32>
    %325 = arith.truncf %324 : vector<4x32xf32> to vector<4x32xbf16>
    %c0_193 = arith.constant 0 : index
    %c0_194 = arith.constant 0 : index
    %326 = vector.load %arg19[%c0_193, %c0_194] : memref<16x4xbf16, #tpu.memory_space<vmem>>, vector<16x4xbf16>
    %cst_195 = arith.constant dense<0.000000e+00> : vector<16x32xf32>
    %327 = tpu.matmul %326, %325, %cst_195 {dimension_numbers = #tpu.dot_dimension_numbers<[1], [0], [0], [1], [0, 0, 1, 1], [], []>} : vector<16x4xbf16>, vector<4x32xbf16>, vector<16x32xf32> -> vector<16x32xf32>
    %328 = arith.truncf %327 : vector<16x32xf32> to vector<16x32xbf16>
    %cst_196 = arith.constant 0.000000e+00 : f32
    %329 = vector.broadcast %cst_196 : f32 to vector<8x32xf32>
    %c0_197 = arith.constant 0 : index
    %c0_198 = arith.constant 0 : index
    %330 = vector.load %arg27[%c0_197, %c0_198] : memref<29x32xf32, #tpu.memory_space<vmem>>, vector<8x32xf32>
    tpu.vector_store %arg27[%c0_197, %c0_198], %329 {strides = array<i32>} : memref<29x32xf32, #tpu.memory_space<vmem>>, vector<8x32xf32>,
    %cst_199 = arith.constant 0.000000e+00 : f32
    %331 = vector.broadcast %cst_199 : f32 to vector<5x32xf32>
    %c24_200 = arith.constant 24 : index
    %c0_201 = arith.constant 0 : index
    %332 = vector.load %arg27[%c24_200, %c0_201] : memref<29x32xf32, #tpu.memory_space<vmem>>, vector<5x32xf32>
    tpu.vector_store %arg27[%c24_200, %c0_201], %331 {strides = array<i32>} : memref<29x32xf32, #tpu.memory_space<vmem>>, vector<5x32xf32>,
    %333 = arith.extf %328 : vector<16x32xbf16> to vector<16x32xf32>
    %c8_202 = arith.constant 8 : index
    %c0_203 = arith.constant 0 : index
    %334 = vector.load %arg27[%c8_202, %c0_203] : memref<29x32xf32, #tpu.memory_space<vmem>>, vector<16x32xf32>
    tpu.vector_store %arg27[%c8_202, %c0_203], %333 {strides = array<i32>} : memref<29x32xf32, #tpu.memory_space<vmem>>, vector<16x32xf32>,
    %335 = tpu.iota {dimensions = array<i32: 0>} : vector<16x32xi32>
    %c4_i32_204 = arith.constant 4 : i32
    %c0_i32_205 = arith.constant 0 : i32
    %336 = arith.cmpi eq, %c4_i32_204, %c0_i32_205 : i32
    %c1_i32_206 = arith.constant 1 : i32
    %337 = arith.select %336, %c1_i32_206, %c4_i32_204 : i32
    %338 = vector.broadcast %337 : i32 to vector<16x32xi32>
    %339 = arith.remsi %335, %338 : vector<16x32xi32>
    %c0_i32_207 = arith.constant 0 : i32
    %340 = vector.broadcast %c0_i32_207 : i32 to vector<16x32xi32>
    %341 = arith.cmpi ne, %339, %340 : vector<16x32xi32>
    %c0_i32_208 = arith.constant 0 : i32
    %342 = vector.broadcast %c0_i32_208 : i32 to vector<16x32xi32>
    %343 = arith.cmpi slt, %339, %342 : vector<16x32xi32>
    %c0_i32_209 = arith.constant 0 : i32
    %344 = arith.cmpi slt, %337, %c0_i32_209 : i32
    %345 = vector.broadcast %344 : i1 to vector<16x32xi1>
    %346 = vector.broadcast %345 : vector<16x32xi1> to vector<16x32xi1>
    %347 = arith.xori %343, %346 : vector<16x32xi1>
    %348 = arith.andi %347, %341 : vector<16x32xi1>
    %349 = vector.broadcast %337 : i32 to vector<16x32xi32>
    %350 = arith.addi %339, %349 : vector<16x32xi32>
    %351 = arith.select %348, %350, %339 : vector<16x32xi1>, vector<16x32xi32>
    %c0_i32_210 = arith.constant 0 : i32
    %352 = vector.broadcast %c0_i32_210 : i32 to vector<16x32xi32>
    %353 = arith.cmpi eq, %351, %352 : vector<16x32xi32>
    %c3_i32_211 = arith.constant 3 : i32
    %354 = vector.broadcast %c3_i32_211 : i32 to vector<16x32xi32>
    %355 = arith.cmpi eq, %351, %354 : vector<16x32xi32>
    %c3_212 = arith.constant 3 : index
    %c0_213 = arith.constant 0 : index
    %356 = vector.load %arg27[%c3_212, %c0_213] : memref<29x32xf32, #tpu.memory_space<vmem>>, vector<16x32xf32>
    %357 = arith.truncf %356 : vector<16x32xf32> to vector<16x32xbf16>
    %cst_214 = arith.constant 0.000000e+00 : f32
    %358 = arith.truncf %cst_214 : f32 to bf16
    %359 = vector.broadcast %358 : bf16 to vector<16x32xbf16>
    %360 = arith.select %353, %359, %357 : vector<16x32xi1>, vector<16x32xbf16>
    %c4_215 = arith.constant 4 : index
    %c0_216 = arith.constant 0 : index
    %361 = vector.load %arg27[%c4_215, %c0_216] : memref<29x32xf32, #tpu.memory_space<vmem>>, vector<16x32xf32>
    %362 = arith.truncf %361 : vector<16x32xf32> to vector<16x32xbf16>
    %c5_217 = arith.constant 5 : index
    %c0_218 = arith.constant 0 : index
    %363 = vector.load %arg27[%c5_217, %c0_218] : memref<29x32xf32, #tpu.memory_space<vmem>>, vector<16x32xf32>
    %364 = arith.truncf %363 : vector<16x32xf32> to vector<16x32xbf16>
    %cst_219 = arith.constant 0.000000e+00 : f32
    %365 = arith.truncf %cst_219 : f32 to bf16
    %366 = vector.broadcast %365 : bf16 to vector<16x32xbf16>
    %367 = arith.select %355, %366, %364 : vector<16x32xi1>, vector<16x32xbf16>
    %c7_220 = arith.constant 7 : index
    %c0_221 = arith.constant 0 : index
    %368 = vector.load %arg27[%c7_220, %c0_221] : memref<29x32xf32, #tpu.memory_space<vmem>>, vector<16x32xf32>
    %369 = arith.truncf %368 : vector<16x32xf32> to vector<16x32xbf16>
    %cst_222 = arith.constant 0.000000e+00 : f32
    %370 = arith.truncf %cst_222 : f32 to bf16
    %371 = vector.broadcast %370 : bf16 to vector<16x32xbf16>
    %372 = arith.select %353, %371, %369 : vector<16x32xi1>, vector<16x32xbf16>
    %c8_223 = arith.constant 8 : index
    %c0_224 = arith.constant 0 : index
    %373 = vector.load %arg27[%c8_223, %c0_224] : memref<29x32xf32, #tpu.memory_space<vmem>>, vector<16x32xf32>
    %374 = arith.truncf %373 : vector<16x32xf32> to vector<16x32xbf16>
    %c9_225 = arith.constant 9 : index
    %c0_226 = arith.constant 0 : index
    %375 = vector.load %arg27[%c9_225, %c0_226] : memref<29x32xf32, #tpu.memory_space<vmem>>, vector<16x32xf32>
    %376 = arith.truncf %375 : vector<16x32xf32> to vector<16x32xbf16>
    %cst_227 = arith.constant 0.000000e+00 : f32
    %377 = arith.truncf %cst_227 : f32 to bf16
    %378 = vector.broadcast %377 : bf16 to vector<16x32xbf16>
    %379 = arith.select %355, %378, %376 : vector<16x32xi1>, vector<16x32xbf16>
    %c11_228 = arith.constant 11 : index
    %c0_229 = arith.constant 0 : index
    %380 = vector.load %arg27[%c11_228, %c0_229] : memref<29x32xf32, #tpu.memory_space<vmem>>, vector<16x32xf32>
    %381 = arith.truncf %380 : vector<16x32xf32> to vector<16x32xbf16>
    %cst_230 = arith.constant 0.000000e+00 : f32
    %382 = arith.truncf %cst_230 : f32 to bf16
    %383 = vector.broadcast %382 : bf16 to vector<16x32xbf16>
    %384 = arith.select %353, %383, %381 : vector<16x32xi1>, vector<16x32xbf16>
    %c12_231 = arith.constant 12 : index
    %c0_232 = arith.constant 0 : index
    %385 = vector.load %arg27[%c12_231, %c0_232] : memref<29x32xf32, #tpu.memory_space<vmem>>, vector<16x32xf32>
    %386 = arith.truncf %385 : vector<16x32xf32> to vector<16x32xbf16>
    %c13_233 = arith.constant 13 : index
    %c0_234 = arith.constant 0 : index
    %387 = vector.load %arg27[%c13_233, %c0_234] : memref<29x32xf32, #tpu.memory_space<vmem>>, vector<16x32xf32>
    %388 = arith.truncf %387 : vector<16x32xf32> to vector<16x32xbf16>
    %cst_235 = arith.constant 0.000000e+00 : f32
    %389 = arith.truncf %cst_235 : f32 to bf16
    %390 = vector.broadcast %389 : bf16 to vector<16x32xbf16>
    %391 = arith.select %355, %390, %388 : vector<16x32xi1>, vector<16x32xbf16>
    %392 = tpu.concatenate %360, %362, %367, %372, %374, %379, %384, %386, %391 in 1 : vector<16x32xbf16>, vector<16x32xbf16>, vector<16x32xbf16>, vector<16x32xbf16>, vector<16x32xbf16>, vector<16x32xbf16>, vector<16x32xbf16>, vector<16x32xbf16>, vector<16x32xbf16> -> vector<16x288xbf16>
    %c0_236 = arith.constant 0 : index
    %c0_237 = arith.constant 0 : index
    %393 = vector.load %arg10[%c0_236, %c0_237] : memref<288x64xbf16, #tpu.memory_space<vmem>>, vector<288x64xbf16>
    %cst_238 = arith.constant dense<0.000000e+00> : vector<16x64xf32>
    %394 = tpu.matmul %392, %393, %cst_238 {dimension_numbers = #tpu.dot_dimension_numbers<[1], [0], [0], [1], [0, 0, 1, 1], [], []>} : vector<16x288xbf16>, vector<288x64xbf16>, vector<16x64xf32> -> vector<16x64xf32>
    %c0_239 = arith.constant 0 : index
    %c0_240 = arith.constant 0 : index
    %395 = vector.load %arg11[%c0_239, %c0_240] : memref<1x64xf32, #tpu.memory_space<vmem>>, vector<1x64xf32>
    %396 = vector.broadcast %395 : vector<1x64xf32> to vector<16x64xf32>
    %397 = arith.addf %394, %396 : vector<16x64xf32>
    %cst_241 = arith.constant 0.000000e+00 : f32
    %398 = vector.broadcast %cst_241 : f32 to vector<16x64xf32>
    %399 = arith.maximumf %397, %398 : vector<16x64xf32>
    %400 = arith.truncf %399 : vector<16x64xf32> to vector<16x64xbf16>
    %c0_242 = arith.constant 0 : index
    %c0_243 = arith.constant 0 : index
    %401 = vector.load %arg20[%c0_242, %c0_243] : memref<64x16xbf16, #tpu.memory_space<vmem>>, vector<64x16xbf16>
    %cst_244 = arith.constant dense<0.000000e+00> : vector<64x64xf32>
    %402 = tpu.matmul %401, %400, %cst_244 {dimension_numbers = #tpu.dot_dimension_numbers<[1], [0], [0], [1], [0, 0, 1, 1], [], []>} : vector<64x16xbf16>, vector<16x64xbf16>, vector<64x64xf32> -> vector<64x64xf32>
    %403 = arith.truncf %402 : vector<64x64xf32> to vector<64x64xbf16>
    %cst_245 = arith.constant 0.000000e+00 : f32
    %404 = vector.broadcast %cst_245 : f32 to vector<16x64xf32>
    %c0_246 = arith.constant 0 : index
    %c0_247 = arith.constant 0 : index
    %405 = vector.load %arg28[%c0_246, %c0_247] : memref<89x64xf32, #tpu.memory_space<vmem>>, vector<16x64xf32>
    tpu.vector_store %arg28[%c0_246, %c0_247], %404 {strides = array<i32>} : memref<89x64xf32, #tpu.memory_space<vmem>>, vector<16x64xf32>,
    %cst_248 = arith.constant 0.000000e+00 : f32
    %406 = vector.broadcast %cst_248 : f32 to vector<9x64xf32>
    %c80_249 = arith.constant 80 : index
    %c0_250 = arith.constant 0 : index
    %407 = vector.load %arg28[%c80_249, %c0_250] : memref<89x64xf32, #tpu.memory_space<vmem>>, vector<9x64xf32>
    tpu.vector_store %arg28[%c80_249, %c0_250], %406 {strides = array<i32>} : memref<89x64xf32, #tpu.memory_space<vmem>>, vector<9x64xf32>,
    %408 = arith.extf %403 : vector<64x64xbf16> to vector<64x64xf32>
    %c16_251 = arith.constant 16 : index
    %c0_252 = arith.constant 0 : index
    %409 = vector.load %arg28[%c16_251, %c0_252] : memref<89x64xf32, #tpu.memory_space<vmem>>, vector<64x64xf32>
    tpu.vector_store %arg28[%c16_251, %c0_252], %408 {strides = array<i32>} : memref<89x64xf32, #tpu.memory_space<vmem>>, vector<64x64xf32>,
    %410 = tpu.iota {dimensions = array<i32: 0>} : vector<64x64xi32>
    %c8_i32_253 = arith.constant 8 : i32
    %c0_i32_254 = arith.constant 0 : i32
    %411 = arith.cmpi eq, %c8_i32_253, %c0_i32_254 : i32
    %c1_i32_255 = arith.constant 1 : i32
    %412 = arith.select %411, %c1_i32_255, %c8_i32_253 : i32
    %413 = vector.broadcast %412 : i32 to vector<64x64xi32>
    %414 = arith.remsi %410, %413 : vector<64x64xi32>
    %c0_i32_256 = arith.constant 0 : i32
    %415 = vector.broadcast %c0_i32_256 : i32 to vector<64x64xi32>
    %416 = arith.cmpi ne, %414, %415 : vector<64x64xi32>
    %c0_i32_257 = arith.constant 0 : i32
    %417 = vector.broadcast %c0_i32_257 : i32 to vector<64x64xi32>
    %418 = arith.cmpi slt, %414, %417 : vector<64x64xi32>
    %c0_i32_258 = arith.constant 0 : i32
    %419 = arith.cmpi slt, %412, %c0_i32_258 : i32
    %420 = vector.broadcast %419 : i1 to vector<64x64xi1>
    %421 = vector.broadcast %420 : vector<64x64xi1> to vector<64x64xi1>
    %422 = arith.xori %418, %421 : vector<64x64xi1>
    %423 = arith.andi %422, %416 : vector<64x64xi1>
    %424 = vector.broadcast %412 : i32 to vector<64x64xi32>
    %425 = arith.addi %414, %424 : vector<64x64xi32>
    %426 = arith.select %423, %425, %414 : vector<64x64xi1>, vector<64x64xi32>
    %c0_i32_259 = arith.constant 0 : i32
    %427 = vector.broadcast %c0_i32_259 : i32 to vector<64x64xi32>
    %428 = arith.cmpi eq, %426, %427 : vector<64x64xi32>
    %c7_i32_260 = arith.constant 7 : i32
    %429 = vector.broadcast %c7_i32_260 : i32 to vector<64x64xi32>
    %430 = arith.cmpi eq, %426, %429 : vector<64x64xi32>
    %c7_261 = arith.constant 7 : index
    %c0_262 = arith.constant 0 : index
    %431 = vector.load %arg28[%c7_261, %c0_262] : memref<89x64xf32, #tpu.memory_space<vmem>>, vector<64x64xf32>
    %432 = arith.truncf %431 : vector<64x64xf32> to vector<64x64xbf16>
    %cst_263 = arith.constant 0.000000e+00 : f32
    %433 = arith.truncf %cst_263 : f32 to bf16
    %434 = vector.broadcast %433 : bf16 to vector<64x64xbf16>
    %435 = arith.select %428, %434, %432 : vector<64x64xi1>, vector<64x64xbf16>
    %c8_264 = arith.constant 8 : index
    %c0_265 = arith.constant 0 : index
    %436 = vector.load %arg28[%c8_264, %c0_265] : memref<89x64xf32, #tpu.memory_space<vmem>>, vector<64x64xf32>
    %437 = arith.truncf %436 : vector<64x64xf32> to vector<64x64xbf16>
    %c9_266 = arith.constant 9 : index
    %c0_267 = arith.constant 0 : index
    %438 = vector.load %arg28[%c9_266, %c0_267] : memref<89x64xf32, #tpu.memory_space<vmem>>, vector<64x64xf32>
    %439 = arith.truncf %438 : vector<64x64xf32> to vector<64x64xbf16>
    %cst_268 = arith.constant 0.000000e+00 : f32
    %440 = arith.truncf %cst_268 : f32 to bf16
    %441 = vector.broadcast %440 : bf16 to vector<64x64xbf16>
    %442 = arith.select %430, %441, %439 : vector<64x64xi1>, vector<64x64xbf16>
    %c15_269 = arith.constant 15 : index
    %c0_270 = arith.constant 0 : index
    %443 = vector.load %arg28[%c15_269, %c0_270] : memref<89x64xf32, #tpu.memory_space<vmem>>, vector<64x64xf32>
    %444 = arith.truncf %443 : vector<64x64xf32> to vector<64x64xbf16>
    %cst_271 = arith.constant 0.000000e+00 : f32
    %445 = arith.truncf %cst_271 : f32 to bf16
    %446 = vector.broadcast %445 : bf16 to vector<64x64xbf16>
    %447 = arith.select %428, %446, %444 : vector<64x64xi1>, vector<64x64xbf16>
    %c16_272 = arith.constant 16 : index
    %c0_273 = arith.constant 0 : index
    %448 = vector.load %arg28[%c16_272, %c0_273] : memref<89x64xf32, #tpu.memory_space<vmem>>, vector<64x64xf32>
    %449 = arith.truncf %448 : vector<64x64xf32> to vector<64x64xbf16>
    %c17_274 = arith.constant 17 : index
    %c0_275 = arith.constant 0 : index
    %450 = vector.load %arg28[%c17_274, %c0_275] : memref<89x64xf32, #tpu.memory_space<vmem>>, vector<64x64xf32>
    %451 = arith.truncf %450 : vector<64x64xf32> to vector<64x64xbf16>
    %cst_276 = arith.constant 0.000000e+00 : f32
    %452 = arith.truncf %cst_276 : f32 to bf16
    %453 = vector.broadcast %452 : bf16 to vector<64x64xbf16>
    %454 = arith.select %430, %453, %451 : vector<64x64xi1>, vector<64x64xbf16>
    %c23_277 = arith.constant 23 : index
    %c0_278 = arith.constant 0 : index
    %455 = vector.load %arg28[%c23_277, %c0_278] : memref<89x64xf32, #tpu.memory_space<vmem>>, vector<64x64xf32>
    %456 = arith.truncf %455 : vector<64x64xf32> to vector<64x64xbf16>
    %cst_279 = arith.constant 0.000000e+00 : f32
    %457 = arith.truncf %cst_279 : f32 to bf16
    %458 = vector.broadcast %457 : bf16 to vector<64x64xbf16>
    %459 = arith.select %428, %458, %456 : vector<64x64xi1>, vector<64x64xbf16>
    %c24_280 = arith.constant 24 : index
    %c0_281 = arith.constant 0 : index
    %460 = vector.load %arg28[%c24_280, %c0_281] : memref<89x64xf32, #tpu.memory_space<vmem>>, vector<64x64xf32>
    %461 = arith.truncf %460 : vector<64x64xf32> to vector<64x64xbf16>
    %c25_282 = arith.constant 25 : index
    %c0_283 = arith.constant 0 : index
    %462 = vector.load %arg28[%c25_282, %c0_283] : memref<89x64xf32, #tpu.memory_space<vmem>>, vector<64x64xf32>
    %463 = arith.truncf %462 : vector<64x64xf32> to vector<64x64xbf16>
    %cst_284 = arith.constant 0.000000e+00 : f32
    %464 = arith.truncf %cst_284 : f32 to bf16
    %465 = vector.broadcast %464 : bf16 to vector<64x64xbf16>
    %466 = arith.select %430, %465, %463 : vector<64x64xi1>, vector<64x64xbf16>
    %467 = tpu.concatenate %435, %437, %442, %447, %449, %454, %459, %461, %466 in 1 : vector<64x64xbf16>, vector<64x64xbf16>, vector<64x64xbf16>, vector<64x64xbf16>, vector<64x64xbf16>, vector<64x64xbf16>, vector<64x64xbf16>, vector<64x64xbf16>, vector<64x64xbf16> -> vector<64x576xbf16>
    %c0_285 = arith.constant 0 : index
    %c0_286 = arith.constant 0 : index
    %468 = vector.load %arg12[%c0_285, %c0_286] : memref<576x128xbf16, #tpu.memory_space<vmem>>, vector<576x128xbf16>
    %cst_287 = arith.constant dense<0.000000e+00> : vector<64x128xf32>
    %469 = tpu.matmul %467, %468, %cst_287 {dimension_numbers = #tpu.dot_dimension_numbers<[1], [0], [0], [1], [0, 0, 1, 1], [], []>} : vector<64x576xbf16>, vector<576x128xbf16>, vector<64x128xf32> -> vector<64x128xf32>
    %c0_288 = arith.constant 0 : index
    %c0_289 = arith.constant 0 : index
    %470 = vector.load %arg13[%c0_288, %c0_289] : memref<1x128xf32, #tpu.memory_space<vmem>>, vector<1x128xf32>
    %471 = vector.broadcast %470 : vector<1x128xf32> to vector<64x128xf32>
    %472 = arith.addf %469, %471 : vector<64x128xf32>
    %cst_290 = arith.constant 0.000000e+00 : f32
    %473 = vector.broadcast %cst_290 : f32 to vector<64x128xf32>
    %474 = arith.maximumf %472, %473 : vector<64x128xf32>
    %475 = arith.truncf %474 : vector<64x128xf32> to vector<64x128xbf16>
    %c0_291 = arith.constant 0 : index
    %c0_292 = arith.constant 0 : index
    %476 = vector.load %arg21[%c0_291, %c0_292] : memref<256x64xbf16, #tpu.memory_space<vmem>>, vector<256x64xbf16>
    %cst_293 = arith.constant dense<0.000000e+00> : vector<256x128xf32>
    %477 = tpu.matmul %476, %475, %cst_293 {dimension_numbers = #tpu.dot_dimension_numbers<[1], [0], [0], [1], [0, 0, 1, 1], [], []>} : vector<256x64xbf16>, vector<64x128xbf16>, vector<256x128xf32> -> vector<256x128xf32>
    %478 = arith.truncf %477 : vector<256x128xf32> to vector<256x128xbf16>
    %cst_294 = arith.constant 0.000000e+00 : f32
    %479 = vector.broadcast %cst_294 : f32 to vector<24x128xf32>
    %c0_295 = arith.constant 0 : index
    %c0_296 = arith.constant 0 : index
    %480 = vector.load %arg29[%c0_295, %c0_296] : memref<297x128xf32, #tpu.memory_space<vmem>>, vector<24x128xf32>
    tpu.vector_store %arg29[%c0_295, %c0_296], %479 {strides = array<i32>} : memref<297x128xf32, #tpu.memory_space<vmem>>, vector<24x128xf32>,
    %cst_297 = arith.constant 0.000000e+00 : f32
    %481 = vector.broadcast %cst_297 : f32 to vector<17x128xf32>
    %c280_298 = arith.constant 280 : index
    %c0_299 = arith.constant 0 : index
    %482 = vector.load %arg29[%c280_298, %c0_299] : memref<297x128xf32, #tpu.memory_space<vmem>>, vector<17x128xf32>
    tpu.vector_store %arg29[%c280_298, %c0_299], %481 {strides = array<i32>} : memref<297x128xf32, #tpu.memory_space<vmem>>, vector<17x128xf32>,
    %483 = arith.extf %478 : vector<256x128xbf16> to vector<256x128xf32>
    %c24_300 = arith.constant 24 : index
    %c0_301 = arith.constant 0 : index
    %484 = vector.load %arg29[%c24_300, %c0_301] : memref<297x128xf32, #tpu.memory_space<vmem>>, vector<256x128xf32>
    tpu.vector_store %arg29[%c24_300, %c0_301], %483 {strides = array<i32>} : memref<297x128xf32, #tpu.memory_space<vmem>>, vector<256x128xf32>,
    %485 = tpu.iota {dimensions = array<i32: 0>} : vector<256x128xi32>
    %c16_i32_302 = arith.constant 16 : i32
    %c0_i32_303 = arith.constant 0 : i32
    %486 = arith.cmpi eq, %c16_i32_302, %c0_i32_303 : i32
    %c1_i32_304 = arith.constant 1 : i32
    %487 = arith.select %486, %c1_i32_304, %c16_i32_302 : i32
    %488 = vector.broadcast %487 : i32 to vector<256x128xi32>
    %489 = arith.remsi %485, %488 : vector<256x128xi32>
    %c0_i32_305 = arith.constant 0 : i32
    %490 = vector.broadcast %c0_i32_305 : i32 to vector<256x128xi32>
    %491 = arith.cmpi ne, %489, %490 : vector<256x128xi32>
    %c0_i32_306 = arith.constant 0 : i32
    %492 = vector.broadcast %c0_i32_306 : i32 to vector<256x128xi32>
    %493 = arith.cmpi slt, %489, %492 : vector<256x128xi32>
    %c0_i32_307 = arith.constant 0 : i32
    %494 = arith.cmpi slt, %487, %c0_i32_307 : i32
    %495 = vector.broadcast %494 : i1 to vector<256x128xi1>
    %496 = vector.broadcast %495 : vector<256x128xi1> to vector<256x128xi1>
    %497 = arith.xori %493, %496 : vector<256x128xi1>
    %498 = arith.andi %497, %491 : vector<256x128xi1>
    %499 = vector.broadcast %487 : i32 to vector<256x128xi32>
    %500 = arith.addi %489, %499 : vector<256x128xi32>
    %501 = arith.select %498, %500, %489 : vector<256x128xi1>, vector<256x128xi32>
    %c0_i32_308 = arith.constant 0 : i32
    %502 = vector.broadcast %c0_i32_308 : i32 to vector<256x128xi32>
    %503 = arith.cmpi eq, %501, %502 : vector<256x128xi32>
    %c15_i32_309 = arith.constant 15 : i32
    %504 = vector.broadcast %c15_i32_309 : i32 to vector<256x128xi32>
    %505 = arith.cmpi eq, %501, %504 : vector<256x128xi32>
    %c7_310 = arith.constant 7 : index
    %c0_311 = arith.constant 0 : index
    %506 = vector.load %arg29[%c7_310, %c0_311] : memref<297x128xf32, #tpu.memory_space<vmem>>, vector<256x128xf32>
    %507 = arith.truncf %506 : vector<256x128xf32> to vector<256x128xbf16>
    %cst_312 = arith.constant 0.000000e+00 : f32
    %508 = arith.truncf %cst_312 : f32 to bf16
    %509 = vector.broadcast %508 : bf16 to vector<256x128xbf16>
    %510 = arith.select %503, %509, %507 : vector<256x128xi1>, vector<256x128xbf16>
    %c8_313 = arith.constant 8 : index
    %c0_314 = arith.constant 0 : index
    %511 = vector.load %arg29[%c8_313, %c0_314] : memref<297x128xf32, #tpu.memory_space<vmem>>, vector<256x128xf32>
    %512 = arith.truncf %511 : vector<256x128xf32> to vector<256x128xbf16>
    %c9_315 = arith.constant 9 : index
    %c0_316 = arith.constant 0 : index
    %513 = vector.load %arg29[%c9_315, %c0_316] : memref<297x128xf32, #tpu.memory_space<vmem>>, vector<256x128xf32>
    %514 = arith.truncf %513 : vector<256x128xf32> to vector<256x128xbf16>
    %cst_317 = arith.constant 0.000000e+00 : f32
    %515 = arith.truncf %cst_317 : f32 to bf16
    %516 = vector.broadcast %515 : bf16 to vector<256x128xbf16>
    %517 = arith.select %505, %516, %514 : vector<256x128xi1>, vector<256x128xbf16>
    %c23_318 = arith.constant 23 : index
    %c0_319 = arith.constant 0 : index
    %518 = vector.load %arg29[%c23_318, %c0_319] : memref<297x128xf32, #tpu.memory_space<vmem>>, vector<256x128xf32>
    %519 = arith.truncf %518 : vector<256x128xf32> to vector<256x128xbf16>
    %cst_320 = arith.constant 0.000000e+00 : f32
    %520 = arith.truncf %cst_320 : f32 to bf16
    %521 = vector.broadcast %520 : bf16 to vector<256x128xbf16>
    %522 = arith.select %503, %521, %519 : vector<256x128xi1>, vector<256x128xbf16>
    %c24_321 = arith.constant 24 : index
    %c0_322 = arith.constant 0 : index
    %523 = vector.load %arg29[%c24_321, %c0_322] : memref<297x128xf32, #tpu.memory_space<vmem>>, vector<256x128xf32>
    %524 = arith.truncf %523 : vector<256x128xf32> to vector<256x128xbf16>
    %c25_323 = arith.constant 25 : index
    %c0_324 = arith.constant 0 : index
    %525 = vector.load %arg29[%c25_323, %c0_324] : memref<297x128xf32, #tpu.memory_space<vmem>>, vector<256x128xf32>
    %526 = arith.truncf %525 : vector<256x128xf32> to vector<256x128xbf16>
    %cst_325 = arith.constant 0.000000e+00 : f32
    %527 = arith.truncf %cst_325 : f32 to bf16
    %528 = vector.broadcast %527 : bf16 to vector<256x128xbf16>
    %529 = arith.select %505, %528, %526 : vector<256x128xi1>, vector<256x128xbf16>
    %c39_326 = arith.constant 39 : index
    %c0_327 = arith.constant 0 : index
    %530 = vector.load %arg29[%c39_326, %c0_327] : memref<297x128xf32, #tpu.memory_space<vmem>>, vector<256x128xf32>
    %531 = arith.truncf %530 : vector<256x128xf32> to vector<256x128xbf16>
    %cst_328 = arith.constant 0.000000e+00 : f32
    %532 = arith.truncf %cst_328 : f32 to bf16
    %533 = vector.broadcast %532 : bf16 to vector<256x128xbf16>
    %534 = arith.select %503, %533, %531 : vector<256x128xi1>, vector<256x128xbf16>
    %c40_329 = arith.constant 40 : index
    %c0_330 = arith.constant 0 : index
    %535 = vector.load %arg29[%c40_329, %c0_330] : memref<297x128xf32, #tpu.memory_space<vmem>>, vector<256x128xf32>
    %536 = arith.truncf %535 : vector<256x128xf32> to vector<256x128xbf16>
    %c41_331 = arith.constant 41 : index
    %c0_332 = arith.constant 0 : index
    %537 = vector.load %arg29[%c41_331, %c0_332] : memref<297x128xf32, #tpu.memory_space<vmem>>, vector<256x128xf32>
    %538 = arith.truncf %537 : vector<256x128xf32> to vector<256x128xbf16>
    %cst_333 = arith.constant 0.000000e+00 : f32
    %539 = arith.truncf %cst_333 : f32 to bf16
    %540 = vector.broadcast %539 : bf16 to vector<256x128xbf16>
    %541 = arith.select %505, %540, %538 : vector<256x128xi1>, vector<256x128xbf16>
    %542 = tpu.concatenate %510, %512, %517, %522, %524, %529, %534, %536, %541 in 1 : vector<256x128xbf16>, vector<256x128xbf16>, vector<256x128xbf16>, vector<256x128xbf16>, vector<256x128xbf16>, vector<256x128xbf16>, vector<256x128xbf16>, vector<256x128xbf16>, vector<256x128xbf16> -> vector<256x1152xbf16>
    %c0_334 = arith.constant 0 : index
    %c0_335 = arith.constant 0 : index
    %543 = vector.load %arg14[%c0_334, %c0_335] : memref<1152x8xbf16, #tpu.memory_space<vmem>>, vector<1152x8xbf16>
    %cst_336 = arith.constant dense<0.000000e+00> : vector<256x8xf32>
    %544 = tpu.matmul %542, %543, %cst_336 {dimension_numbers = #tpu.dot_dimension_numbers<[1], [0], [0], [1], [0, 0, 1, 1], [], []>} : vector<256x1152xbf16>, vector<1152x8xbf16>, vector<256x8xf32> -> vector<256x8xf32>
    %c0_337 = arith.constant 0 : index
    %c0_338 = arith.constant 0 : index
    %545 = vector.load %arg15[%c0_337, %c0_338] : memref<1x8xf32, #tpu.memory_space<vmem>>, vector<1x8xf32>
    %546 = vector.broadcast %545 : vector<1x8xf32> to vector<256x8xf32>
    %547 = arith.addf %544, %546 : vector<256x8xf32>
    %cst_339 = arith.constant 0.000000e+00 : f32
    %548 = vector.broadcast %cst_339 : f32 to vector<256x8xf32>
    %549 = arith.subf %548, %547 : vector<256x8xf32>
    %550 = math.exp %549 : vector<256x8xf32>
    %cst_340 = arith.constant 1.000000e+00 : f32
    %551 = vector.broadcast %cst_340 : f32 to vector<256x8xf32>
    %552 = arith.addf %551, %550 : vector<256x8xf32>
    %cst_341 = arith.constant 1.000000e+00 : f32
    %553 = vector.broadcast %cst_341 : f32 to vector<256x8xf32>
    %554 = arith.divf %553, %552 : vector<256x8xf32>
    %c0_342 = arith.constant 0 : index
    %c0_343 = arith.constant 0 : index
    %c0_344 = arith.constant 0 : index
    %555 = vector.load %arg22[%c0_342, %c0_343, %c0_344] : memref<1x256x8xf32, #tpu.memory_space<vmem>>, vector<1x256x8xf32>
    %556 = vector.shape_cast %555 : vector<1x256x8xf32> to vector<256x8xf32>
    %557 = vector.shape_cast %554 : vector<256x8xf32> to vector<1x256x8xf32>
    tpu.vector_store %arg22[%c0_342, %c0_343, %c0_344], %557 {strides = array<i32>} : memref<1x256x8xf32, #tpu.memory_space<vmem>>, vector<1x256x8xf32>,
    return
  }
  func.func @transform_0(%arg0: i32) -> (i32, i32, i32) {
    %c0_i32 = arith.constant 0 : i32
    %c0_i32_0 = arith.constant 0 : i32
    %c0_i32_1 = arith.constant 0 : i32
    return %arg0, %c0_i32, %c0_i32_0 : i32, i32, i32
  }
  func.func @transform_1(%arg0: i32) -> (i32, i32) {
    %c0_i32 = arith.constant 0 : i32
    %c0_i32_0 = arith.constant 0 : i32
    %c0_i32_1 = arith.constant 0 : i32
    return %c0_i32, %c0_i32_0 : i32, i32
  }
  func.func @transform_2(%arg0: i32) -> (i32, i32) {
    %c0_i32 = arith.constant 0 : i32
    %c0_i32_0 = arith.constant 0 : i32
    %c0_i32_1 = arith.constant 0 : i32
    return %c0_i32, %c0_i32_0 : i32, i32
  }
  func.func @transform_3(%arg0: i32) -> (i32, i32) {
    %c0_i32 = arith.constant 0 : i32
    %c0_i32_0 = arith.constant 0 : i32
    %c0_i32_1 = arith.constant 0 : i32
    return %c0_i32, %c0_i32_0 : i32, i32
  }
  func.func @transform_4(%arg0: i32) -> (i32, i32) {
    %c0_i32 = arith.constant 0 : i32
    %c0_i32_0 = arith.constant 0 : i32
    %c0_i32_1 = arith.constant 0 : i32
    return %c0_i32, %c0_i32_0 : i32, i32
  }
  func.func @transform_5(%arg0: i32) -> (i32, i32) {
    %c0_i32 = arith.constant 0 : i32
    %c0_i32_0 = arith.constant 0 : i32
    %c0_i32_1 = arith.constant 0 : i32
    return %c0_i32, %c0_i32_0 : i32, i32
  }
  func.func @transform_6(%arg0: i32) -> (i32, i32) {
    %c0_i32 = arith.constant 0 : i32
    %c0_i32_0 = arith.constant 0 : i32
    %c0_i32_1 = arith.constant 0 : i32
    return %c0_i32, %c0_i32_0 : i32, i32
  }
  func.func @transform_7(%arg0: i32) -> (i32, i32) {
    %c0_i32 = arith.constant 0 : i32
    %c0_i32_0 = arith.constant 0 : i32
    %c0_i32_1 = arith.constant 0 : i32
    return %c0_i32, %c0_i32_0 : i32, i32
  }
  func.func @transform_8(%arg0: i32) -> (i32, i32) {
    %c0_i32 = arith.constant 0 : i32
    %c0_i32_0 = arith.constant 0 : i32
    %c0_i32_1 = arith.constant 0 : i32
    return %c0_i32, %c0_i32_0 : i32, i32
  }
  func.func @transform_9(%arg0: i32) -> (i32, i32) {
    %c0_i32 = arith.constant 0 : i32
    %c0_i32_0 = arith.constant 0 : i32
    %c0_i32_1 = arith.constant 0 : i32
    return %c0_i32, %c0_i32_0 : i32, i32
  }
  func.func @transform_10(%arg0: i32) -> (i32, i32) {
    %c0_i32 = arith.constant 0 : i32
    %c0_i32_0 = arith.constant 0 : i32
    %c0_i32_1 = arith.constant 0 : i32
    return %c0_i32, %c0_i32_0 : i32, i32
  }
  func.func @transform_11(%arg0: i32) -> (i32, i32) {
    %c0_i32 = arith.constant 0 : i32
    %c0_i32_0 = arith.constant 0 : i32
    %c0_i32_1 = arith.constant 0 : i32
    return %c0_i32, %c0_i32_0 : i32, i32
  }
  func.func @transform_12(%arg0: i32) -> (i32, i32) {
    %c0_i32 = arith.constant 0 : i32
    %c0_i32_0 = arith.constant 0 : i32
    %c0_i32_1 = arith.constant 0 : i32
    return %c0_i32, %c0_i32_0 : i32, i32
  }
  func.func @transform_13(%arg0: i32) -> (i32, i32) {
    %c0_i32 = arith.constant 0 : i32
    %c0_i32_0 = arith.constant 0 : i32
    %c0_i32_1 = arith.constant 0 : i32
    return %c0_i32, %c0_i32_0 : i32, i32
  }
  func.func @transform_14(%arg0: i32) -> (i32, i32) {
    %c0_i32 = arith.constant 0 : i32
    %c0_i32_0 = arith.constant 0 : i32
    %c0_i32_1 = arith.constant 0 : i32
    return %c0_i32, %c0_i32_0 : i32, i32
  }
  func.func @transform_15(%arg0: i32) -> (i32, i32) {
    %c0_i32 = arith.constant 0 : i32
    %c0_i32_0 = arith.constant 0 : i32
    %c0_i32_1 = arith.constant 0 : i32
    return %c0_i32, %c0_i32_0 : i32, i32
  }
  func.func @transform_16(%arg0: i32) -> (i32, i32) {
    %c0_i32 = arith.constant 0 : i32
    %c0_i32_0 = arith.constant 0 : i32
    %c0_i32_1 = arith.constant 0 : i32
    return %c0_i32, %c0_i32_0 : i32, i32
  }
  func.func @transform_17(%arg0: i32) -> (i32, i32) {
    %c0_i32 = arith.constant 0 : i32
    %c0_i32_0 = arith.constant 0 : i32
    %c0_i32_1 = arith.constant 0 : i32
    return %c0_i32, %c0_i32_0 : i32, i32
  }
  func.func @transform_18(%arg0: i32) -> (i32, i32) {
    %c0_i32 = arith.constant 0 : i32
    %c0_i32_0 = arith.constant 0 : i32
    %c0_i32_1 = arith.constant 0 : i32
    return %c0_i32, %c0_i32_0 : i32, i32
  }
  func.func @transform_19(%arg0: i32) -> (i32, i32) {
    %c0_i32 = arith.constant 0 : i32
    %c0_i32_0 = arith.constant 0 : i32
    %c0_i32_1 = arith.constant 0 : i32
    return %c0_i32, %c0_i32_0 : i32, i32
  }
  func.func @transform_20(%arg0: i32) -> (i32, i32) {
    %c0_i32 = arith.constant 0 : i32
    %c0_i32_0 = arith.constant 0 : i32
    %c0_i32_1 = arith.constant 0 : i32
    return %c0_i32, %c0_i32_0 : i32, i32
  }
  func.func @transform_21(%arg0: i32) -> (i32, i32, i32) {
    %c0_i32 = arith.constant 0 : i32
    %c0_i32_0 = arith.constant 0 : i32
    %c0_i32_1 = arith.constant 0 : i32
    return %arg0, %c0_i32, %c0_i32_0 : i32, i32, i32
  }
}

</mosaic_0001>

<llo_original>
// kernel: celeba_cae_forward.1
$region0: #{celeba_cae_forward.1}
  #allocation0 [shape = 'u32[]', space=smem, size = 0x4, offset = 0x4, fixed_abs, tag = 'smem constant byte address 0x4 - core index']
  #allocation1 [shape = 'u32[144,128]{1,0:T(1,128)}', space=vmem, size = 0x12000, scoped, tag = 'internal scratch']
  #allocation2 [shape = 'f32[297,8]{1,0:T(8,128)}', space=vmem, size = 0x26000, scoped, tag = 'scratch operand']
  #allocation3 [shape = 'f32[89,64]{1,0:T(8,128)}', space=vmem, size = 0xc000, scoped, tag = 'scratch operand']
  #allocation4 [shape = 'f32[29,32]{1,0:T(8,128)}', space=vmem, size = 0x4000, scoped, tag = 'scratch operand']
  #allocation5 [shape = 'f32[15,16]{1,0:T(8,128)}', space=vmem, size = 0x2000, scoped, tag = 'scratch operand']
  #allocation6 [shape = 'f32[29,32]{1,0:T(8,128)}', space=vmem, size = 0x4000, scoped, tag = 'scratch operand']
  #allocation7 [shape = 'f32[89,64]{1,0:T(8,128)}', space=vmem, size = 0xc000, scoped, tag = 'scratch operand']
  #allocation8 [shape = 'f32[297,128]{1,0:T(8,128)}', space=vmem, size = 0x26000, scoped, tag = 'scratch operand']
  #allocation9 [shape = 'f32[273,64]{1,0:T(8,128)}', space=vmem, size = 0x23000, scoped, tag = 'scratch operand']
  #allocation10 [shape = 'f32[73,32]{1,0:T(8,128)}', space=vmem, size = 0xa000, scoped, tag = 'scratch operand']
  #allocation11 [shape = 'f32[21,16]{1,0:T(8,128)}', space=vmem, size = 0x3000, scoped, tag = 'scratch operand']
  %s0 = inlined_call_operand.vmem [shape: bf16[2,256,8], index: 0, kind: input, shape index: {}]
  %s1 = inlined_call_operand.vmem [shape: bf16[72,64], index: 1, kind: input, shape index: {}]
  %s2 = inlined_call_operand.vmem [shape: f32[1,64], index: 2, kind: input, shape index: {}]
  %s3 = inlined_call_operand.vmem [shape: bf16[576,32], index: 3, kind: input, shape index: {}]
  %s4 = inlined_call_operand.vmem [shape: f32[1,32], index: 4, kind: input, shape index: {}]
  %s5 = inlined_call_operand.vmem [shape: bf16[288,16], index: 5, kind: input, shape index: {}]
  %s6 = inlined_call_operand.vmem [shape: f32[1,16], index: 6, kind: input, shape index: {}]
  %s7 = inlined_call_operand.vmem [shape: bf16[144,32], index: 7, kind: input, shape index: {}]
  %s8 = inlined_call_operand.vmem [shape: f32[1,32], index: 8, kind: input, shape index: {}]
  %s9 = inlined_call_operand.vmem [shape: bf16[288,64], index: 9, kind: input, shape index: {}]
  %s10 = inlined_call_operand.vmem [shape: f32[1,64], index: 10, kind: input, shape index: {}]
  %s11 = inlined_call_operand.vmem [shape: bf16[576,128], index: 11, kind: input, shape index: {}]
  %s12 = inlined_call_operand.vmem [shape: f32[1,128], index: 12, kind: input, shape index: {}]
  %s13 = inlined_call_operand.vmem [shape: bf16[1152,8], index: 13, kind: input, shape index: {}]
  %s14 = inlined_call_operand.vmem [shape: f32[1,8], index: 14, kind: input, shape index: {}]
  %s15 = inlined_call_operand.vmem [shape: bf16[64,256], index: 15, kind: input, shape index: {}]
  %s16 = inlined_call_operand.vmem [shape: bf16[16,64], index: 16, kind: input, shape index: {}]
  %s17 = inlined_call_operand.vmem [shape: bf16[4,16], index: 17, kind: input, shape index: {}]
  %s18 = inlined_call_operand.vmem [shape: bf16[16,4], index: 18, kind: input, shape index: {}]
  %s19 = inlined_call_operand.vmem [shape: bf16[64,16], index: 19, kind: input, shape index: {}]
  %s20 = inlined_call_operand.vmem [shape: bf16[256,64], index: 20, kind: input, shape index: {}]
  %s21 = inlined_call_operand.vmem [shape: f32[2,256,8], index: 21, kind: output, shape index: {}]
  %s22 = sld [smem:[#allocation0]]
  $region117: #{celeba_cae_forward.1} parent=0
    _
  %s24 = ssub.s32 1, %s22
  %s25 = scalar_select 0, %s24, %s22
  loop: start=0, step=1, limit=4
  $region2: #{celeba_cae_forward.1} parent=0 // loop_pre_header
    _
  $region3: #{celeba_cae_forward.1} parent=0 // loop_header
    %s27 = sphi 0, %s31
    %p28 = scmp.ge.s32.totalorder %s27, 4
    %s37 = sphi 0, %s39
    %s40 = sphi 0, %s37
    %s41 = sphi 0, %s40
    %s57 = sphi 0, %s41
    %s61 = sphi 0, %s61
    %s63 = sphi 0, %s61
    %s64 = sphi 0, %s63
    %s78 = sphi 0, %s64
    %s82 = sphi 0, %s82
    %s84 = sphi 0, %s82
    %s85 = sphi 0, %s84
    %s99 = sphi 0, %s85
    %s103 = sphi 0, %s103
    %s105 = sphi 0, %s103
    %s106 = sphi 0, %s105
    %s120 = sphi 0, %s106
    %s124 = sphi 0, %s124
    %s126 = sphi 0, %s124
    %s127 = sphi 0, %s126
    %s141 = sphi 0, %s127
    %s145 = sphi 0, %s145
    %s147 = sphi 0, %s145
    %s148 = sphi 0, %s147
    %s162 = sphi 0, %s148
    %s166 = sphi 0, %s166
    %s168 = sphi 0, %s166
    %s169 = sphi 0, %s168
    %s183 = sphi 0, %s169
    %s187 = sphi 0, %s187
    %s189 = sphi 0, %s187
    %s190 = sphi 0, %s189
    %s204 = sphi 0, %s190
    %s208 = sphi 0, %s208
    %s210 = sphi 0, %s208
    %s211 = sphi 0, %s210
    %s225 = sphi 0, %s211
    %s229 = sphi 0, %s229
    %s231 = sphi 0, %s229
    %s232 = sphi 0, %s231
    %s246 = sphi 0, %s232
    %s250 = sphi 0, %s250
    %s252 = sphi 0, %s250
    %s253 = sphi 0, %s252
    %s267 = sphi 0, %s253
    %s271 = sphi 0, %s271
    %s273 = sphi 0, %s271
    %s274 = sphi 0, %s273
    %s288 = sphi 0, %s274
    %s292 = sphi 0, %s292
    %s294 = sphi 0, %s292
    %s295 = sphi 0, %s294
    %s309 = sphi 0, %s295
    %s313 = sphi 0, %s313
    %s315 = sphi 0, %s313
    %s316 = sphi 0, %s315
    %s330 = sphi 0, %s316
    %s334 = sphi 0, %s334
    %s336 = sphi 0, %s334
    %s337 = sphi 0, %s336
    %s351 = sphi 0, %s337
    %s355 = sphi 0, %s355
    %s357 = sphi 0, %s355
    %s358 = sphi 0, %s357
    %s372 = sphi 0, %s358
    %s376 = sphi 0, %s376
    %s378 = sphi 0, %s376
    %s379 = sphi 0, %s378
    %s393 = sphi 0, %s379
    %s397 = sphi 0, %s397
    %s399 = sphi 0, %s397
    %s400 = sphi 0, %s399
    %s414 = sphi 0, %s400
    %s418 = sphi 0, %s418
    %s420 = sphi 0, %s418
    %s421 = sphi 0, %s420
    %s435 = sphi 0, %s421
    %s439 = sphi 0, %s439
    %s441 = sphi 0, %s439
    %s442 = sphi 0, %s441
    %s456 = sphi 0, %s442
    %s460 = sphi 0, %s460
    %s462 = sphi 0, %s460
    %s463 = sphi 0, %s462
    %s477 = sphi 0, %s463
    %s483 = sphi 0, %s485
    %s486 = sphi 0, %s483
    %s487 = sphi 0, %s486
    %s503 = sphi 0, %s487
  $region4: #{celeba_cae_forward.1} parent=0 // loop_header_branch
    %30 = sbr.rel (%p28) target = $region8
  $region5: #{celeba_cae_forward.1} parent=0 // loop_body
    %s32 = ssub.s32 %s27, 1
    %s33 = ssub.s32 %s27, 2
    %s34 = sadd.s32 %s27, 1
    %s35 = ssub.s32 %s27, %s34
    %p36 = scmp.eq.s32.totalorder %s35, 0
    %s38 = sadd.s32 %s37, 1
    %s39 = scalar_select %p36, %s37, %s38
    %p42 = pneg %p36
    %p43 = scmp.eq.s32.totalorder %s27, 1
    %p44 = por %p42, %p43
    %p45 = scmp.ne.s32.totalorder %s37, %s40
    %p46 = scmp.eq.s32.totalorder %s27, 0
    %p47 = por %p45, %p46
    %p48 = scmp.ne.s32.totalorder %s37, %s40
    %p49 = scmp.eq.s32.totalorder %s32, 1
    %p50 = por %p48, %p49
    %p51 = scmp.ne.s32.totalorder %s40, %s41
    %p52 = scmp.eq.s32.totalorder %s32, 0
    %p53 = por %p51, %p52
    %p54 = scmp.ne.s32.totalorder %s40, %s41
    %p55 = scmp.eq.s32.totalorder %s33, 1
    %p56 = por %p54, %p55
    %p58 = scmp.ne.s32.totalorder %s41, %s57
    %p59 = scmp.eq.s32.totalorder %s33, 0
    %p60 = por %p58, %p59
    %s62 = sadd.s32 %s61, 1
    %p65 = scmp.eq.s32.totalorder %s27, 1
    %p66 = scmp.ne.s32.totalorder %s61, %s63
    %p67 = scmp.eq.s32.totalorder %s27, 0
    %p68 = por %p66, %p67
    %p69 = scmp.ne.s32.totalorder %s61, %s63
    %p70 = scmp.eq.s32.totalorder %s32, 1
    %p71 = por %p69, %p70
    %p72 = scmp.ne.s32.totalorder %s63, %s64
    %p73 = scmp.eq.s32.totalorder %s32, 0
    %p74 = por %p72, %p73
    %p75 = scmp.ne.s32.totalorder %s63, %s64
    %p76 = scmp.eq.s32.totalorder %s33, 1
    %p77 = por %p75, %p76
    %p79 = scmp.ne.s32.totalorder %s64, %s78
    %p80 = scmp.eq.s32.totalorder %s33, 0
    %p81 = por %p79, %p80
    %s83 = sadd.s32 %s82, 1
    %p86 = scmp.eq.s32.totalorder %s27, 1
    %p87 = scmp.ne.s32.totalorder %s82, %s84
    %p88 = scmp.eq.s32.totalorder %s27, 0
    %p89 = por %p87, %p88
    %p90 = scmp.ne.s32.totalorder %s82, %s84
    %p91 = scmp.eq.s32.totalorder %s32, 1
    %p92 = por %p90, %p91
    %p93 = scmp.ne.s32.totalorder %s84, %s85
    %p94 = scmp.eq.s32.totalorder %s32, 0
    %p95 = por %p93, %p94
    %p96 = scmp.ne.s32.totalorder %s84, %s85
    %p97 = scmp.eq.s32.totalorder %s33, 1
    %p98 = por %p96, %p97
    %p100 = scmp.ne.s32.totalorder %s85, %s99
    %p101 = scmp.eq.s32.totalorder %s33, 0
    %p102 = por %p100, %p101
    %s104 = sadd.s32 %s103, 1
    %p107 = scmp.eq.s32.totalorder %s27, 1
    %p108 = scmp.ne.s32.totalorder %s103, %s105
    %p109 = scmp.eq.s32.totalorder %s27, 0
    %p110 = por %p108, %p109
    %p111 = scmp.ne.s32.totalorder %s103, %s105
    %p112 = scmp.eq.s32.totalorder %s32, 1
    %p113 = por %p111, %p112
    %p114 = scmp.ne.s32.totalorder %s105, %s106
    %p115 = scmp.eq.s32.totalorder %s32, 0
    %p116 = por %p114, %p115
    %p117 = scmp.ne.s32.totalorder %s105, %s106
    %p118 = scmp.eq.s32.totalorder %s33, 1
    %p119 = por %p117, %p118
    %p121 = scmp.ne.s32.totalorder %s106, %s120
    %p122 = scmp.eq.s32.totalorder %s33, 0
    %p123 = por %p121, %p122
    %s125 = sadd.s32 %s124, 1
    %p128 = scmp.eq.s32.totalorder %s27, 1
    %p129 = scmp.ne.s32.totalorder %s124, %s126
    %p130 = scmp.eq.s32.totalorder %s27, 0
    %p131 = por %p129, %p130
    %p132 = scmp.ne.s32.totalorder %s124, %s126
    %p133 = scmp.eq.s32.totalorder %s32, 1
    %p134 = por %p132, %p133
    %p135 = scmp.ne.s32.totalorder %s126, %s127
    %p136 = scmp.eq.s32.totalorder %s32, 0
    %p137 = por %p135, %p136
    %p138 = scmp.ne.s32.totalorder %s126, %s127
    %p139 = scmp.eq.s32.totalorder %s33, 1
    %p140 = por %p138, %p139
    %p142 = scmp.ne.s32.totalorder %s127, %s141
    %p143 = scmp.eq.s32.totalorder %s33, 0
    %p144 = por %p142, %p143
    %s146 = sadd.s32 %s145, 1
    %p149 = scmp.eq.s32.totalorder %s27, 1
    %p150 = scmp.ne.s32.totalorder %s145, %s147
    %p151 = scmp.eq.s32.totalorder %s27, 0
    %p152 = por %p150, %p151
    %p153 = scmp.ne.s32.totalorder %s145, %s147
    %p154 = scmp.eq.s32.totalorder %s32, 1
    %p155 = por %p153, %p154
    %p156 = scmp.ne.s32.totalorder %s147, %s148
    %p157 = scmp.eq.s32.totalorder %s32, 0
    %p158 = por %p156, %p157
    %p159 = scmp.ne.s32.totalorder %s147, %s148
    %p160 = scmp.eq.s32.totalorder %s33, 1
    %p161 = por %p159, %p160
    %p163 = scmp.ne.s32.totalorder %s148, %s162
    %p164 = scmp.eq.s32.totalorder %s33, 0
    %p165 = por %p163, %p164
    %s167 = sadd.s32 %s166, 1
    %p170 = scmp.eq.s32.totalorder %s27, 1
    %p171 = scmp.ne.s32.totalorder %s166, %s168
    %p172 = scmp.eq.s32.totalorder %s27, 0
    %p173 = por %p171, %p172
    %p174 = scmp.ne.s32.totalorder %s166, %s168
    %p175 = scmp.eq.s32.totalorder %s32, 1
    %p176 = por %p174, %p175
    %p177 = scmp.ne.s32.totalorder %s168, %s169
    %p178 = scmp.eq.s32.totalorder %s32, 0
    %p179 = por %p177, %p178
    %p180 = scmp.ne.s32.totalorder %s168, %s169
    %p181 = scmp.eq.s32.totalorder %s33, 1
    %p182 = por %p180, %p181
    %p184 = scmp.ne.s32.totalorder %s169, %s183
    %p185 = scmp.eq.s32.totalorder %s33, 0
    %p186 = por %p184, %p185
    %s188 = sadd.s32 %s187, 1
    %p191 = scmp.eq.s32.totalorder %s27, 1
    %p192 = scmp.ne.s32.totalorder %s187, %s189
    %p193 = scmp.eq.s32.totalorder %s27, 0
    %p194 = por %p192, %p193
    %p195 = scmp.ne.s32.totalorder %s187, %s189
    %p196 = scmp.eq.s32.totalorder %s32, 1
    %p197 = por %p195, %p196
    %p198 = scmp.ne.s32.totalorder %s189, %s190
    %p199 = scmp.eq.s32.totalorder %s32, 0
    %p200 = por %p198, %p199
    %p201 = scmp.ne.s32.totalorder %s189, %s190
    %p202 = scmp.eq.s32.totalorder %s33, 1
    %p203 = por %p201, %p202
    %p205 = scmp.ne.s32.totalorder %s190, %s204
    %p206 = scmp.eq.s32.totalorder %s33, 0
    %p207 = por %p205, %p206
    %s209 = sadd.s32 %s208, 1
    %p212 = scmp.eq.s32.totalorder %s27, 1
    %p213 = scmp.ne.s32.totalorder %s208, %s210
    %p214 = scmp.eq.s32.totalorder %s27, 0
    %p215 = por %p213, %p214
    %p216 = scmp.ne.s32.totalorder %s208, %s210
    %p217 = scmp.eq.s32.totalorder %s32, 1
    %p218 = por %p216, %p217
    %p219 = scmp.ne.s32.totalorder %s210, %s211
    %p220 = scmp.eq.s32.totalorder %s32, 0
    %p221 = por %p219, %p220
    %p222 = scmp.ne.s32.totalorder %s210, %s211
    %p223 = scmp.eq.s32.totalorder %s33, 1
    %p224 = por %p222, %p223
    %p226 = scmp.ne.s32.totalorder %s211, %s225
    %p227 = scmp.eq.s32.totalorder %s33, 0
    %p228 = por %p226, %p227
    %s230 = sadd.s32 %s229, 1
    %p233 = scmp.eq.s32.totalorder %s27, 1
    %p234 = scmp.ne.s32.totalorder %s229, %s231
    %p235 = scmp.eq.s32.totalorder %s27, 0
    %p236 = por %p234, %p235
    %p237 = scmp.ne.s32.totalorder %s229, %s231
    %p238 = scmp.eq.s32.totalorder %s32, 1
    %p239 = por %p237, %p238
    %p240 = scmp.ne.s32.totalorder %s231, %s232
    %p241 = scmp.eq.s32.totalorder %s32, 0
    %p242 = por %p240, %p241
    %p243 = scmp.ne.s32.totalorder %s231, %s232
    %p244 = scmp.eq.s32.totalorder %s33, 1
    %p245 = por %p243, %p244
    %p247 = scmp.ne.s32.totalorder %s232, %s246
    %p248 = scmp.eq.s32.totalorder %s33, 0
    %p249 = por %p247, %p248
    %s251 = sadd.s32 %s250, 1
    %p254 = scmp.eq.s32.totalorder %s27, 1
    %p255 = scmp.ne.s32.totalorder %s250, %s252
    %p256 = scmp.eq.s32.totalorder %s27, 0
    %p257 = por %p255, %p256
    %p258 = scmp.ne.s32.totalorder %s250, %s252
    %p259 = scmp.eq.s32.totalorder %s32, 1
    %p260 = por %p258, %p259
    %p261 = scmp.ne.s32.totalorder %s252, %s253
    %p262 = scmp.eq.s32.totalorder %s32, 0
    %p263 = por %p261, %p262
    %p264 = scmp.ne.s32.totalorder %s252, %s253
    %p265 = scmp.eq.s32.totalorder %s33, 1
    %p266 = por %p264, %p265
    %p268 = scmp.ne.s32.totalorder %s253, %s267
    %p269 = scmp.eq.s32.totalorder %s33, 0
    %p270 = por %p268, %p269
    %s272 = sadd.s32 %s271, 1
    %p275 = scmp.eq.s32.totalorder %s27, 1
    %p276 = scmp.ne.s32.totalorder %s271, %s273
    %p277 = scmp.eq.s32.totalorder %s27, 0
    %p278 = por %p276, %p277
    %p279 = scmp.ne.s32.totalorder %s271, %s273
    %p280 = scmp.eq.s32.totalorder %s32, 1
    %p281 = por %p279, %p280
    %p282 = scmp.ne.s32.totalorder %s273, %s274
    %p283 = scmp.eq.s32.totalorder %s32, 0
    %p284 = por %p282, %p283
    %p285 = scmp.ne.s32.totalorder %s273, %s274
    %p286 = scmp.eq.s32.totalorder %s33, 1
    %p287 = por %p285, %p286
    %p289 = scmp.ne.s32.totalorder %s274, %s288
    %p290 = scmp.eq.s32.totalorder %s33, 0
    %p291 = por %p289, %p290
    %s293 = sadd.s32 %s292, 1
    %p296 = scmp.eq.s32.totalorder %s27, 1
    %p297 = scmp.ne.s32.totalorder %s292, %s294
    %p298 = scmp.eq.s32.totalorder %s27, 0
    %p299 = por %p297, %p298
    %p300 = scmp.ne.s32.totalorder %s292, %s294
    %p301 = scmp.eq.s32.totalorder %s32, 1
    %p302 = por %p300, %p301
    %p303 = scmp.ne.s32.totalorder %s294, %s295
    %p304 = scmp.eq.s32.totalorder %s32, 0
    %p305 = por %p303, %p304
    %p306 = scmp.ne.s32.totalorder %s294, %s295
    %p307 = scmp.eq.s32.totalorder %s33, 1
    %p308 = por %p306, %p307
    %p310 = scmp.ne.s32.totalorder %s295, %s309
    %p311 = scmp.eq.s32.totalorder %s33, 0
    %p312 = por %p310, %p311
    %s314 = sadd.s32 %s313, 1
    %p317 = scmp.eq.s32.totalorder %s27, 1
    %p318 = scmp.ne.s32.totalorder %s313, %s315
    %p319 = scmp.eq.s32.totalorder %s27, 0
    %p320 = por %p318, %p319
    %p321 = scmp.ne.s32.totalorder %s313, %s315
    %p322 = scmp.eq.s32.totalorder %s32, 1
    %p323 = por %p321, %p322
    %p324 = scmp.ne.s32.totalorder %s315, %s316
    %p325 = scmp.eq.s32.totalorder %s32, 0
    %p326 = por %p324, %p325
    %p327 = scmp.ne.s32.totalorder %s315, %s316
    %p328 = scmp.eq.s32.totalorder %s33, 1
    %p329 = por %p327, %p328
    %p331 = scmp.ne.s32.totalorder %s316, %s330
    %p332 = scmp.eq.s32.totalorder %s33, 0
    %p333 = por %p331, %p332
    %s335 = sadd.s32 %s334, 1
    %p338 = scmp.eq.s32.totalorder %s27, 1
    %p339 = scmp.ne.s32.totalorder %s334, %s336
    %p340 = scmp.eq.s32.totalorder %s27, 0
    %p341 = por %p339, %p340
    %p342 = scmp.ne.s32.totalorder %s334, %s336
    %p343 = scmp.eq.s32.totalorder %s32, 1
    %p344 = por %p342, %p343
    %p345 = scmp.ne.s32.totalorder %s336, %s337
    %p346 = scmp.eq.s32.totalorder %s32, 0
    %p347 = por %p345, %p346
    %p348 = scmp.ne.s32.totalorder %s336, %s337
    %p349 = scmp.eq.s32.totalorder %s33, 1
    %p350 = por %p348, %p349
    %p352 = scmp.ne.s32.totalorder %s337, %s351
    %p353 = scmp.eq.s32.totalorder %s33, 0
    %p354 = por %p352, %p353
    %s356 = sadd.s32 %s355, 1
    %p359 = scmp.eq.s32.totalorder %s27, 1
    %p360 = scmp.ne.s32.totalorder %s355, %s357
    %p361 = scmp.eq.s32.totalorder %s27, 0
    %p362 = por %p360, %p361
    %p363 = scmp.ne.s32.totalorder %s355, %s357
    %p364 = scmp.eq.s32.totalorder %s32, 1
    %p365 = por %p363, %p364
    %p366 = scmp.ne.s32.totalorder %s357, %s358
    %p367 = scmp.eq.s32.totalorder %s32, 0
    %p368 = por %p366, %p367
    %p369 = scmp.ne.s32.totalorder %s357, %s358
    %p370 = scmp.eq.s32.totalorder %s33, 1
    %p371 = por %p369, %p370
    %p373 = scmp.ne.s32.totalorder %s358, %s372
    %p374 = scmp.eq.s32.totalorder %s33, 0
    %p375 = por %p373, %p374
    %s377 = sadd.s32 %s376, 1
    %p380 = scmp.eq.s32.totalorder %s27, 1
    %p381 = scmp.ne.s32.totalorder %s376, %s378
    %p382 = scmp.eq.s32.totalorder %s27, 0
    %p383 = por %p381, %p382
    %p384 = scmp.ne.s32.totalorder %s376, %s378
    %p385 = scmp.eq.s32.totalorder %s32, 1
    %p386 = por %p384, %p385
    %p387 = scmp.ne.s32.totalorder %s378, %s379
    %p388 = scmp.eq.s32.totalorder %s32, 0
    %p389 = por %p387, %p388
    %p390 = scmp.ne.s32.totalorder %s378, %s379
    %p391 = scmp.eq.s32.totalorder %s33, 1
    %p392 = por %p390, %p391
    %p394 = scmp.ne.s32.totalorder %s379, %s393
    %p395 = scmp.eq.s32.totalorder %s33, 0
    %p396 = por %p394, %p395
    %s398 = sadd.s32 %s397, 1
    %p401 = scmp.eq.s32.totalorder %s27, 1
    %p402 = scmp.ne.s32.totalorder %s397, %s399
    %p403 = scmp.eq.s32.totalorder %s27, 0
    %p404 = por %p402, %p403
    %p405 = scmp.ne.s32.totalorder %s397, %s399
    %p406 = scmp.eq.s32.totalorder %s32, 1
    %p407 = por %p405, %p406
    %p408 = scmp.ne.s32.totalorder %s399, %s400
    %p409 = scmp.eq.s32.totalorder %s32, 0
    %p410 = por %p408, %p409
    %p411 = scmp.ne.s32.totalorder %s399, %s400
    %p412 = scmp.eq.s32.totalorder %s33, 1
    %p413 = por %p411, %p412
    %p415 = scmp.ne.s32.totalorder %s400, %s414
    %p416 = scmp.eq.s32.totalorder %s33, 0
    %p417 = por %p415, %p416
    %s419 = sadd.s32 %s418, 1
    %p422 = scmp.eq.s32.totalorder %s27, 1
    %p423 = scmp.ne.s32.totalorder %s418, %s420
    %p424 = scmp.eq.s32.totalorder %s27, 0
    %p425 = por %p423, %p424
    %p426 = scmp.ne.s32.totalorder %s418, %s420
    %p427 = scmp.eq.s32.totalorder %s32, 1
    %p428 = por %p426, %p427
    %p429 = scmp.ne.s32.totalorder %s420, %s421
    %p430 = scmp.eq.s32.totalorder %s32, 0
    %p431 = por %p429, %p430
    %p432 = scmp.ne.s32.totalorder %s420, %s421
    %p433 = scmp.eq.s32.totalorder %s33, 1
    %p434 = por %p432, %p433
    %p436 = scmp.ne.s32.totalorder %s421, %s435
    %p437 = scmp.eq.s32.totalorder %s33, 0
    %p438 = por %p436, %p437
    %s440 = sadd.s32 %s439, 1
    %p443 = scmp.eq.s32.totalorder %s27, 1
    %p444 = scmp.ne.s32.totalorder %s439, %s441
    %p445 = scmp.eq.s32.totalorder %s27, 0
    %p446 = por %p444, %p445
    %p447 = scmp.ne.s32.totalorder %s439, %s441
    %p448 = scmp.eq.s32.totalorder %s32, 1
    %p449 = por %p447, %p448
    %p450 = scmp.ne.s32.totalorder %s441, %s442
    %p451 = scmp.eq.s32.totalorder %s32, 0
    %p452 = por %p450, %p451
    %p453 = scmp.ne.s32.totalorder %s441, %s442
    %p454 = scmp.eq.s32.totalorder %s33, 1
    %p455 = por %p453, %p454
    %p457 = scmp.ne.s32.totalorder %s442, %s456
    %p458 = scmp.eq.s32.totalorder %s33, 0
    %p459 = por %p457, %p458
    %s461 = sadd.s32 %s460, 1
    %p464 = scmp.eq.s32.totalorder %s27, 1
    %p465 = scmp.ne.s32.totalorder %s460, %s462
    %p466 = scmp.eq.s32.totalorder %s27, 0
    %p467 = por %p465, %p466
    %p468 = scmp.ne.s32.totalorder %s460, %s462
    %p469 = scmp.eq.s32.totalorder %s32, 1
    %p470 = por %p468, %p469
    %p471 = scmp.ne.s32.totalorder %s462, %s463
    %p472 = scmp.eq.s32.totalorder %s32, 0
    %p473 = por %p471, %p472
    %p474 = scmp.ne.s32.totalorder %s462, %s463
    %p475 = scmp.eq.s32.totalorder %s33, 1
    %p476 = por %p474, %p475
    %p478 = scmp.ne.s32.totalorder %s463, %s477
    %p479 = scmp.eq.s32.totalorder %s33, 0
    %p480 = por %p478, %p479
    %s481 = ssub.s32 %s27, %s34
    %p482 = scmp.eq.s32.totalorder %s481, 0
    %s484 = sadd.s32 %s483, 1
    %s485 = scalar_select %p482, %s483, %s484
    %p488 = pneg %p482
    %p489 = scmp.eq.s32.totalorder %s27, 1
    %p490 = por %p488, %p489
    %p491 = scmp.ne.s32.totalorder %s483, %s486
    %p492 = scmp.eq.s32.totalorder %s27, 0
    %p493 = por %p491, %p492
    %p494 = scmp.ne.s32.totalorder %s483, %s486
    %p495 = scmp.eq.s32.totalorder %s32, 1
    %p496 = por %p494, %p495
    %p497 = scmp.ne.s32.totalorder %s486, %s487
    %p498 = scmp.eq.s32.totalorder %s32, 0
    %p499 = por %p497, %p498
    %p500 = scmp.ne.s32.totalorder %s486, %s487
    %p501 = scmp.eq.s32.totalorder %s33, 1
    %p502 = por %p500, %p501
    %p504 = scmp.ne.s32.totalorder %s487, %s503
    %p505 = scmp.eq.s32.totalorder %s33, 0
    %p506 = por %p504, %p505
    %p507 = scmp.le.s32.totalorder 1, %s27
    %p508 = scmp.lt.s32.totalorder %s27, 3
    %p509 = pnand %p507, %p508
    %p510 = pneg %p509
    // Predicated region
    $region9: #{celeba_cae_forward.1} parent=5 // pred_check
      _
    $region10: #{celeba_cae_forward.1} parent=5 // pred_check_branch
      %512 = sbr.rel (%p509) target = $region12
    $region11: #{celeba_cae_forward.1} parent=5 // pred_region
      %s513 = ssub.s32 %s27, 1
      // Predicated region
      $region13: #{celeba_cae_forward.1} parent=11 // pred_check
        %p514 = pneg %p74
      $region14: #{celeba_cae_forward.1} parent=11 // pred_check_branch
        %516 = sbr.rel (%p514) target = $region16
      $region15: #{celeba_cae_forward.1} parent=11 // pred_region
        _
      $region16: #{celeba_cae_forward.1} parent=11 // pred_fallthru
        _
      // Predicated region
      $region17: #{celeba_cae_forward.1} parent=11 // pred_check
        %p517 = pneg %p95
      $region18: #{celeba_cae_forward.1} parent=11 // pred_check_branch
        %519 = sbr.rel (%p517) target = $region20
      $region19: #{celeba_cae_forward.1} parent=11 // pred_region
        _
      $region20: #{celeba_cae_forward.1} parent=11 // pred_fallthru
        _
      // Predicated region
      $region21: #{celeba_cae_forward.1} parent=11 // pred_check
        %p520 = pneg %p116
      $region22: #{celeba_cae_forward.1} parent=11 // pred_check_branch
        %522 = sbr.rel (%p520) target = $region24
      $region23: #{celeba_cae_forward.1} parent=11 // pred_region
        _
      $region24: #{celeba_cae_forward.1} parent=11 // pred_fallthru
        _
      // Predicated region
      $region25: #{celeba_cae_forward.1} parent=11 // pred_check
        %p523 = pneg %p137
      $region26: #{celeba_cae_forward.1} parent=11 // pred_check_branch
        %525 = sbr.rel (%p523) target = $region28
      $region27: #{celeba_cae_forward.1} parent=11 // pred_region
        _
      $region28: #{celeba_cae_forward.1} parent=11 // pred_fallthru
        _
      // Predicated region
      $region29: #{celeba_cae_forward.1} parent=11 // pred_check
        %p526 = pneg %p158
      $region30: #{celeba_cae_forward.1} parent=11 // pred_check_branch
        %528 = sbr.rel (%p526) target = $region32
      $region31: #{celeba_cae_forward.1} parent=11 // pred_region
        _
      $region32: #{celeba_cae_forward.1} parent=11 // pred_fallthru
        _
      // Predicated region
      $region33: #{celeba_cae_forward.1} parent=11 // pred_check
        %p529 = pneg %p179
      $region34: #{celeba_cae_forward.1} parent=11 // pred_check_branch
        %531 = sbr.rel (%p529) target = $region36
      $region35: #{celeba_cae_forward.1} parent=11 // pred_region
        _
      $region36: #{celeba_cae_forward.1} parent=11 // pred_fallthru
        _
      // Predicated region
      $region37: #{celeba_cae_forward.1} parent=11 // pred_check
        %p532 = pneg %p200
      $region38: #{celeba_cae_forward.1} parent=11 // pred_check_branch
        %534 = sbr.rel (%p532) target = $region40
      $region39: #{celeba_cae_forward.1} parent=11 // pred_region
        _
      $region40: #{celeba_cae_forward.1} parent=11 // pred_fallthru
        _
      // Predicated region
      $region41: #{celeba_cae_forward.1} parent=11 // pred_check
        %p535 = pneg %p221
      $region42: #{celeba_cae_forward.1} parent=11 // pred_check_branch
        %537 = sbr.rel (%p535) target = $region44
      $region43: #{celeba_cae_forward.1} parent=11 // pred_region
        _
      $region44: #{celeba_cae_forward.1} parent=11 // pred_fallthru
        _
      // Predicated region
      $region45: #{celeba_cae_forward.1} parent=11 // pred_check
        %p538 = pneg %p242
      $region46: #{celeba_cae_forward.1} parent=11 // pred_check_branch
        %540 = sbr.rel (%p538) target = $region48
      $region47: #{celeba_cae_forward.1} parent=11 // pred_region
        _
      $region48: #{celeba_cae_forward.1} parent=11 // pred_fallthru
        _
      // Predicated region
      $region49: #{celeba_cae_forward.1} parent=11 // pred_check
        %p541 = pneg %p263
      $region50: #{celeba_cae_forward.1} parent=11 // pred_check_branch
        %543 = sbr.rel (%p541) target = $region52
      $region51: #{celeba_cae_forward.1} parent=11 // pred_region
        _
      $region52: #{celeba_cae_forward.1} parent=11 // pred_fallthru
        _
      // Predicated region
      $region53: #{celeba_cae_forward.1} parent=11 // pred_check
        %p544 = pneg %p284
      $region54: #{celeba_cae_forward.1} parent=11 // pred_check_branch
        %546 = sbr.rel (%p544) target = $region56
      $region55: #{celeba_cae_forward.1} parent=11 // pred_region
        _
      $region56: #{celeba_cae_forward.1} parent=11 // pred_fallthru
        _
      // Predicated region
      $region57: #{celeba_cae_forward.1} parent=11 // pred_check
        %p547 = pneg %p305
      $region58: #{celeba_cae_forward.1} parent=11 // pred_check_branch
        %549 = sbr.rel (%p547) target = $region60
      $region59: #{celeba_cae_forward.1} parent=11 // pred_region
        _
      $region60: #{celeba_cae_forward.1} parent=11 // pred_fallthru
        _
      // Predicated region
      $region61: #{celeba_cae_forward.1} parent=11 // pred_check
        %p550 = pneg %p326
      $region62: #{celeba_cae_forward.1} parent=11 // pred_check_branch
        %552 = sbr.rel (%p550) target = $region64
      $region63: #{celeba_cae_forward.1} parent=11 // pred_region
        _
      $region64: #{celeba_cae_forward.1} parent=11 // pred_fallthru
        _
      // Predicated region
      $region65: #{celeba_cae_forward.1} parent=11 // pred_check
        %p553 = pneg %p347
      $region66: #{celeba_cae_forward.1} parent=11 // pred_check_branch
        %555 = sbr.rel (%p553) target = $region68
      $region67: #{celeba_cae_forward.1} parent=11 // pred_region
        _
      $region68: #{celeba_cae_forward.1} parent=11 // pred_fallthru
        _
      // Predicated region
      $region69: #{celeba_cae_forward.1} parent=11 // pred_check
        %p556 = pneg %p368
      $region70: #{celeba_cae_forward.1} parent=11 // pred_check_branch
        %558 = sbr.rel (%p556) target = $region72
      $region71: #{celeba_cae_forward.1} parent=11 // pred_region
        _
      $region72: #{celeba_cae_forward.1} parent=11 // pred_fallthru
        _
      // Predicated region
      $region73: #{celeba_cae_forward.1} parent=11 // pred_check
        %p559 = pneg %p389
      $region74: #{celeba_cae_forward.1} parent=11 // pred_check_branch
        %561 = sbr.rel (%p559) target = $region76
      $region75: #{celeba_cae_forward.1} parent=11 // pred_region
        _
      $region76: #{celeba_cae_forward.1} parent=11 // pred_fallthru
        _
      // Predicated region
      $region77: #{celeba_cae_forward.1} parent=11 // pred_check
        %p562 = pneg %p410
      $region78: #{celeba_cae_forward.1} parent=11 // pred_check_branch
        %564 = sbr.rel (%p562) target = $region80
      $region79: #{celeba_cae_forward.1} parent=11 // pred_region
        _
      $region80: #{celeba_cae_forward.1} parent=11 // pred_fallthru
        _
      // Predicated region
      $region81: #{celeba_cae_forward.1} parent=11 // pred_check
        %p565 = pneg %p431
      $region82: #{celeba_cae_forward.1} parent=11 // pred_check_branch
        %567 = sbr.rel (%p565) target = $region84
      $region83: #{celeba_cae_forward.1} parent=11 // pred_region
        _
      $region84: #{celeba_cae_forward.1} parent=11 // pred_fallthru
        _
      // Predicated region
      $region85: #{celeba_cae_forward.1} parent=11 // pred_check
        %p568 = pneg %p452
      $region86: #{celeba_cae_forward.1} parent=11 // pred_check_branch
        %570 = sbr.rel (%p568) target = $region88
      $region87: #{celeba_cae_forward.1} parent=11 // pred_region
        _
      $region88: #{celeba_cae_forward.1} parent=11 // pred_fallthru
        _
      // Predicated region
      $region89: #{celeba_cae_forward.1} parent=11 // pred_check
        %p571 = pneg %p473
      $region90: #{celeba_cae_forward.1} parent=11 // pred_check_branch
        %573 = sbr.rel (%p571) target = $region92
      $region91: #{celeba_cae_forward.1} parent=11 // pred_region
        _
      $region92: #{celeba_cae_forward.1} parent=11 // pred_fallthru
        _
    $region12: #{celeba_cae_forward.1} parent=5 // pred_fallthru
      _
    %p574 = scmp.lt.s32.totalorder %s27, 2
    // Predicated region
    $region93: #{celeba_cae_forward.1} parent=5 // pred_check
      %p575 = pneg %p574
    $region94: #{celeba_cae_forward.1} parent=5 // pred_check_branch
      %577 = sbr.rel (%p575) target = $region96
    $region95: #{celeba_cae_forward.1} parent=5 // pred_region
      // Predicated region
      $region97: #{celeba_cae_forward.1} parent=95 // pred_check
        %p578 = pneg %p47
      $region98: #{celeba_cae_forward.1} parent=95 // pred_check_branch
        %580 = sbr.rel (%p578) target = $region100
      $region99: #{celeba_cae_forward.1} parent=95 // pred_region
        %p581 = scmp.lt.s32.totalorder %s27, 1
        %s582 = scalar_select %p581, %s27, 1
        %s583 = smul.addr %s582, 32
        %s584 = smul.addr %s583, 4
        %s585 = scalar_lea.vmem %s0, %s584
      $region100: #{celeba_cae_forward.1} parent=95 // pred_fallthru
        _
    $region96: #{celeba_cae_forward.1} parent=5 // pred_fallthru
      _
    %p586 = scmp.le.s32.totalorder 1, %s27
    %p587 = scmp.lt.s32.totalorder %s27, 3
    %p588 = pnand %p586, %p587
    %p589 = pneg %p588
    // Predicated region
    $region101: #{celeba_cae_forward.1} parent=5 // pred_check
      _
    $region102: #{celeba_cae_forward.1} parent=5 // pred_check_branch
      %591 = sbr.rel (%p588) target = $region104
    $region103: #{celeba_cae_forward.1} parent=5 // pred_region
      %s592 = ssub.s32 %s27, 1
      %p593 = scmp.lt.s32.totalorder %s32, 1
      %s594 = scalar_select %p593, %s32, 1
      %s595 = smul.addr %s594, 32
      %s596 = smul.addr %s595, 4
      %s597 = scalar_lea.vmem %s0, %s596
      %p598 = pneg %p53
      %p599 = pneg %p50
      %p600 = pneg %p74
      %p601 = pneg %p71
      %p602 = pneg %p95
      %p603 = pneg %p92
      %p604 = pneg %p116
      %p605 = pneg %p113
      %p606 = pneg %p137
      %p607 = pneg %p134
      %p608 = pneg %p158
      %p609 = pneg %p155
      %p610 = pneg %p179
      %p611 = pneg %p176
      %p612 = pneg %p200
      %p613 = pneg %p197
      %p614 = pneg %p221
      %p615 = pneg %p218
      %p616 = pneg %p242
      %p617 = pneg %p239
      %p618 = pneg %p263
      %p619 = pneg %p260
      %p620 = pneg %p284
      %p621 = pneg %p281
      %p622 = pneg %p305
      %p623 = pneg %p302
      %p624 = pneg %p326
      %p625 = pneg %p323
      %p626 = pneg %p347
      %p627 = pneg %p344
      %p628 = pneg %p368
      %p629 = pneg %p365
      %p630 = pneg %p389
      %p631 = pneg %p386
      %p632 = pneg %p410
      %p633 = pneg %p407
      %p634 = pneg %p431
      %p635 = pneg %p428
      %p636 = pneg %p452
      %p637 = pneg %p449
      %p638 = pneg %p473
      %p639 = pneg %p470
      %p640 = pneg %p499
      %p641 = pneg %p496
      %p642 = scmp.lt.s32.totalorder %s32, 1
      %s643 = scalar_select %p642, %s32, 1
      %s644 = smul.addr %s643, 32
      %s645 = smul.addr %s644, 8
      %s646 = scalar_lea.vmem %s21, %s645
      %p647 = scmp.lt.s32.totalorder %s32, 1
      %s648 = scalar_select %p647, %s32, 1
      %s649 = smul.addr %s648, 32
      %s650 = smul.addr %s649, 4
      %s651 = scalar_lea.vmem %s0, %s650
      %p652 = scmp.lt.s32.totalorder %s32, 1
      %s653 = scalar_select %p652, %s32, 1
      %s654 = smul.addr %s653, 32
      %s655 = smul.addr %s654, 8
      %s656 = scalar_lea.vmem %s21, %s655
      %v660 = vld [vmem:[%s651] sm:$0xf]
      %v661 = vld [vmem:[%s651 + $0x4] sm:$0xf]
      %v662 = vld [vmem:[%s651 + $0x8] sm:$0xf]
      %v663 = vld [vmem:[%s651 + $0xc] sm:$0xf]
      %v664 = vld [vmem:[%s651 + $0x10] sm:$0xf]
      %v665 = vld [vmem:[%s651 + $0x14] sm:$0xf]
      %v666 = vld [vmem:[%s651 + $0x18] sm:$0xf]
      %v667 = vld [vmem:[%s651 + $0x1c] sm:$0xf]
      %v668 = vld [vmem:[%s651 + $0x20] sm:$0xf]
      %v669 = vld [vmem:[%s651 + $0x24] sm:$0xf]
      %v670 = vld [vmem:[%s651 + $0x28] sm:$0xf]
      %v671 = vld [vmem:[%s651 + $0x2c] sm:$0xf]
      %v672 = vld [vmem:[%s651 + $0x30] sm:$0xf]
      %v673 = vld [vmem:[%s651 + $0x34] sm:$0xf]
      %v674 = vld [vmem:[%s651 + $0x38] sm:$0xf]
      %v675 = vld [vmem:[%s651 + $0x3c] sm:$0xf]
      %v676 = vld [vmem:[%s651 + $0x40] sm:$0xf]
      %v677 = vld [vmem:[%s651 + $0x44] sm:$0xf]
      %v678 = vld [vmem:[%s651 + $0x48] sm:$0xf]
      %v679 = vld [vmem:[%s651 + $0x4c] sm:$0xf]
      %v680 = vld [vmem:[%s651 + $0x50] sm:$0xf]
      %v681 = vld [vmem:[%s651 + $0x54] sm:$0xf]
      %v682 = vld [vmem:[%s651 + $0x58] sm:$0xf]
      %v683 = vld [vmem:[%s651 + $0x5c] sm:$0xf]
      %v684 = vld [vmem:[%s651 + $0x60] sm:$0xf]
      %v685 = vld [vmem:[%s651 + $0x64] sm:$0xf]
      %v686 = vld [vmem:[%s651 + $0x68] sm:$0xf]
      %v687 = vld [vmem:[%s651 + $0x6c] sm:$0xf]
      %v688 = vld [vmem:[%s651 + $0x70] sm:$0xf]
      %v689 = vld [vmem:[%s651 + $0x74] sm:$0xf]
      %v690 = vld [vmem:[%s651 + $0x78] sm:$0xf]
      %v691 = vld [vmem:[%s651 + $0x7c] sm:$0xf]
      %vm692 = vcmask 64512
      %693 = vst.msk [vmem:[#allocation2] sm:$0xff] %vm692, 0.0
      %694 = vst.msk [vmem:[#allocation2 + $0x8] sm:$0xff] %vm692, 0.0
      %695 = vst.msk [vmem:[#allocation2 + $0x10] sm:$0xff] %vm692, 0.0
      %696 = vst.msk [vmem:[#allocation2 + $0x118] sm:$0xff] %vm692, 0.0
      %697 = vst.msk [vmem:[#allocation2 + $0x120] sm:$0xff] %vm692, 0.0
      %vm698 = vcmask 57344
      %699 = vst.msk [vmem:[#allocation2 + $0x128] sm:$0x1] %vm698, 0.0
      %v700 = vunpack.c.l.bf16 %v660
      %v701 = vunpack.c.l.bf16 %v661
      %v702 = vunpack.c.l.bf16 %v662
      %v703 = vunpack.c.l.bf16 %v663
      %v704 = vunpack.c.l.bf16 %v664
      %v705 = vunpack.c.l.bf16 %v665
      %v706 = vunpack.c.l.bf16 %v666
      %v707 = vunpack.c.l.bf16 %v667
      %v708 = vunpack.c.l.bf16 %v668
      %v709 = vunpack.c.l.bf16 %v669
      %v710 = vunpack.c.l.bf16 %v670
      %v711 = vunpack.c.l.bf16 %v671
      %v712 = vunpack.c.l.bf16 %v672
      %v713 = vunpack.c.l.bf16 %v673
      %v714 = vunpack.c.l.bf16 %v674
      %v715 = vunpack.c.l.bf16 %v675
      %v716 = vunpack.c.l.bf16 %v676
      %v717 = vunpack.c.l.bf16 %v677
      %v718 = vunpack.c.l.bf16 %v678
      %v719 = vunpack.c.l.bf16 %v679
      %v720 = vunpack.c.l.bf16 %v680
      %v721 = vunpack.c.l.bf16 %v681
      %v722 = vunpack.c.l.bf16 %v682
      %v723 = vunpack.c.l.bf16 %v683
      %v724 = vunpack.c.l.bf16 %v684
      %v725 = vunpack.c.l.bf16 %v685
      %v726 = vunpack.c.l.bf16 %v686
      %v727 = vunpack.c.l.bf16 %v687
      %v728 = vunpack.c.l.bf16 %v688
      %v729 = vunpack.c.l.bf16 %v689
      %v730 = vunpack.c.l.bf16 %v690
      %v731 = vunpack.c.l.bf16 %v691
      %732 = vst.msk [vmem:[#allocation2 + $0x18] sm:$0xff] %vm692, %v700
      %733 = vst.msk [vmem:[#allocation2 + $0x20] sm:$0xff] %vm692, %v701
      %734 = vst.msk [vmem:[#allocation2 + $0x28] sm:$0xff] %vm692, %v702
      %735 = vst.msk [vmem:[#allocation2 + $0x30] sm:$0xff] %vm692, %v703
      %736 = vst.msk [vmem:[#allocation2 + $0x38] sm:$0xff] %vm692, %v704
      %737 = vst.msk [vmem:[#allocation2 + $0x40] sm:$0xff] %vm692, %v705
      %738 = vst.msk [vmem:[#allocation2 + $0x48] sm:$0xff] %vm692, %v706
      %739 = vst.msk [vmem:[#allocation2 + $0x50] sm:$0xff] %vm692, %v707
      %740 = vst.msk [vmem:[#allocation2 + $0x58] sm:$0xff] %vm692, %v708
      %741 = vst.msk [vmem:[#allocation2 + $0x60] sm:$0xff] %vm692, %v709
      %742 = vst.msk [vmem:[#allocation2 + $0x68] sm:$0xff] %vm692, %v710
      %743 = vst.msk [vmem:[#allocation2 + $0x70] sm:$0xff] %vm692, %v711
      %744 = vst.msk [vmem:[#allocation2 + $0x78] sm:$0xff] %vm692, %v712
      %745 = vst.msk [vmem:[#allocation2 + $0x80] sm:$0xff] %vm692, %v713
      %746 = vst.msk [vmem:[#allocation2 + $0x88] sm:$0xff] %vm692, %v714
      %747 = vst.msk [vmem:[#allocation2 + $0x90] sm:$0xff] %vm692, %v715
      %748 = vst.msk [vmem:[#allocation2 + $0x98] sm:$0xff] %vm692, %v716
      %749 = vst.msk [vmem:[#allocation2 + $0xa0] sm:$0xff] %vm692, %v717
      %750 = vst.msk [vmem:[#allocation2 + $0xa8] sm:$0xff] %vm692, %v718
      %751 = vst.msk [vmem:[#allocation2 + $0xb0] sm:$0xff] %vm692, %v719
      %752 = vst.msk [vmem:[#allocation2 + $0xb8] sm:$0xff] %vm692, %v720
      %753 = vst.msk [vmem:[#allocation2 + $0xc0] sm:$0xff] %vm692, %v721
      %754 = vst.msk [vmem:[#allocation2 + $0xc8] sm:$0xff] %vm692, %v722
      %755 = vst.msk [vmem:[#allocation2 + $0xd0] sm:$0xff] %vm692, %v723
      %756 = vst.msk [vmem:[#allocation2 + $0xd8] sm:$0xff] %vm692, %v724
      %757 = vst.msk [vmem:[#allocation2 + $0xe0] sm:$0xff] %vm692, %v725
      %758 = vst.msk [vmem:[#allocation2 + $0xe8] sm:$0xff] %vm692, %v726
      %759 = vst.msk [vmem:[#allocation2 + $0xf0] sm:$0xff] %vm692, %v727
      %760 = vst.msk [vmem:[#allocation2 + $0xf8] sm:$0xff] %vm692, %v728
      %761 = vst.msk [vmem:[#allocation2 + $0x100] sm:$0xff] %vm692, %v729
      %762 = vst.msk [vmem:[#allocation2 + $0x108] sm:$0xff] %vm692, %v730
      %763 = vst.msk [vmem:[#allocation2 + $0x110] sm:$0xff] %vm692, %v731
      %v764 = vlaneseq
      %v765 = vshrl.u32 %v764, 7
      %v766 = vadd.s32 %v765, 8
      %v767 = vadd.s32 %v765, 16
      %v768 = vadd.s32 %v765, 24
      %v769 = vadd.s32 %v765, 32
      %v770 = vadd.s32 %v765, 40
      %v771 = vadd.s32 %v765, 48
      %v772 = vadd.s32 %v765, 56
      %v773 = vadd.s32 %v765, 64
      %v774 = vadd.s32 %v765, 72
      %v775 = vadd.s32 %v765, 80
      %v776 = vadd.s32 %v765, 88
      %v777 = vadd.s32 %v765, 96
      %v778 = vadd.s32 %v765, 104
      %v779 = vadd.s32 %v765, 112
      %v780 = vadd.s32 %v765, 120
      %v781 = vadd.s32 %v765, 128
      %v782 = vadd.s32 %v765, 136
      %v783 = vadd.s32 %v765, 144
      %v784 = vadd.s32 %v765, 152
      %v785 = vadd.s32 %v765, 160
      %v786 = vadd.s32 %v765, 168
      %v787 = vadd.s32 %v765, 176
      %v788 = vadd.s32 %v765, 184
      %v789 = vadd.s32 %v765, 192
      %v790 = vadd.s32 %v765, 200
      %v791 = vadd.s32 %v765, 208
      %v792 = vadd.s32 %v765, 216
      %v793 = vadd.s32 %v765, 224
      %v794 = vadd.s32 %v765, 232
      %v795 = vadd.s32 %v765, 240
      %v796 = vadd.s32 %v765, 248
      %vm797 = vcmp.lt.s32.totalorder %v765, 0
      %v798 = vsub.s32 0, %v765
      %v799 = vsel %vm797, %v798, %v765
      %v800 = vshrl.u32 %v799, 4
      %v801 = vand.u32 %v799, 15
      %v802 = vsub.s32 0, %v801
      %v803 = vsel %vm797, %v802, %v801
      %vm804 = vcmp.lt.s32.totalorder %v766, 0
      %v805 = vsub.s32 0, %v766
      %v806 = vsel %vm804, %v805, %v766
      %v807 = vshrl.u32 %v806, 4
      %v808 = vand.u32 %v806, 15
      %v809 = vsub.s32 0, %v808
      %v810 = vsel %vm804, %v809, %v808
      %vm811 = vcmp.lt.s32.totalorder %v767, 0
      %v812 = vsub.s32 0, %v767
      %v813 = vsel %vm811, %v812, %v767
      %v814 = vshrl.u32 %v813, 4
      %v815 = vand.u32 %v813, 15
      %v816 = vsub.s32 0, %v815
      %v817 = vsel %vm811, %v816, %v815
      %vm818 = vcmp.lt.s32.totalorder %v768, 0
      %v819 = vsub.s32 0, %v768
      %v820 = vsel %vm818, %v819, %v768
      %v821 = vshrl.u32 %v820, 4
      %v822 = vand.u32 %v820, 15
      %v823 = vsub.s32 0, %v822
      %v824 = vsel %vm818, %v823, %v822
      %vm825 = vcmp.lt.s32.totalorder %v769, 0
      %v826 = vsub.s32 0, %v769
      %v827 = vsel %vm825, %v826, %v769
      %v828 = vshrl.u32 %v827, 4
      %v829 = vand.u32 %v827, 15
      %v830 = vsub.s32 0, %v829
      %v831 = vsel %vm825, %v830, %v829
      %vm832 = vcmp.lt.s32.totalorder %v770, 0
      %v833 = vsub.s32 0, %v770
      %v834 = vsel %vm832, %v833, %v770
      %v835 = vshrl.u32 %v834, 4
      %v836 = vand.u32 %v834, 15
      %v837 = vsub.s32 0, %v836
      %v838 = vsel %vm832, %v837, %v836
      %vm839 = vcmp.lt.s32.totalorder %v771, 0
      %v840 = vsub.s32 0, %v771
      %v841 = vsel %vm839, %v840, %v771
      %v842 = vshrl.u32 %v841, 4
      %v843 = vand.u32 %v841, 15
      %v844 = vsub.s32 0, %v843
      %v845 = vsel %vm839, %v844, %v843
      %vm846 = vcmp.lt.s32.totalorder %v772, 0
      %v847 = vsub.s32 0, %v772
      %v848 = vsel %vm846, %v847, %v772
      %v849 = vshrl.u32 %v848, 4
      %v850 = vand.u32 %v848, 15
      %v851 = vsub.s32 0, %v850
      %v852 = vsel %vm846, %v851, %v850
      %vm853 = vcmp.lt.s32.totalorder %v773, 0
      %v854 = vsub.s32 0, %v773
      %v855 = vsel %vm853, %v854, %v773
      %v856 = vshrl.u32 %v855, 4
      %v857 = vand.u32 %v855, 15
      %v858 = vsub.s32 0, %v857
      %v859 = vsel %vm853, %v858, %v857
      %vm860 = vcmp.lt.s32.totalorder %v774, 0
      %v861 = vsub.s32 0, %v774
      %v862 = vsel %vm860, %v861, %v774
      %v863 = vshrl.u32 %v862, 4
      %v864 = vand.u32 %v862, 15
      %v865 = vsub.s32 0, %v864
      %v866 = vsel %vm860, %v865, %v864
      %vm867 = vcmp.lt.s32.totalorder %v775, 0
      %v868 = vsub.s32 0, %v775
      %v869 = vsel %vm867, %v868, %v775
      %v870 = vshrl.u32 %v869, 4
      %v871 = vand.u32 %v869, 15
      %v872 = vsub.s32 0, %v871
      %v873 = vsel %vm867, %v872, %v871
      %vm874 = vcmp.lt.s32.totalorder %v776, 0
      %v875 = vsub.s32 0, %v776
      %v876 = vsel %vm874, %v875, %v776
      %v877 = vshrl.u32 %v876, 4
      %v878 = vand.u32 %v876, 15
      %v879 = vsub.s32 0, %v878
      %v880 = vsel %vm874, %v879, %v878
      %vm881 = vcmp.lt.s32.totalorder %v777, 0
      %v882 = vsub.s32 0, %v777
      %v883 = vsel %vm881, %v882, %v777
      %v884 = vshrl.u32 %v883, 4
      %v885 = vand.u32 %v883, 15
      %v886 = vsub.s32 0, %v885
      %v887 = vsel %vm881, %v886, %v885
      %vm888 = vcmp.lt.s32.totalorder %v778, 0
      %v889 = vsub.s32 0, %v778
      %v890 = vsel %vm888, %v889, %v778
      %v891 = vshrl.u32 %v890, 4
      %v892 = vand.u32 %v890, 15
      %v893 = vsub.s32 0, %v892
      %v894 = vsel %vm888, %v893, %v892
      %vm895 = vcmp.lt.s32.totalorder %v779, 0
      %v896 = vsub.s32 0, %v779
      %v897 = vsel %vm895, %v896, %v779
      %v898 = vshrl.u32 %v897, 4
      %v899 = vand.u32 %v897, 15
      %v900 = vsub.s32 0, %v899
      %v901 = vsel %vm895, %v900, %v899
      %vm902 = vcmp.lt.s32.totalorder %v780, 0
      %v903 = vsub.s32 0, %v780
      %v904 = vsel %vm902, %v903, %v780
      %v905 = vshrl.u32 %v904, 4
      %v906 = vand.u32 %v904, 15
      %v907 = vsub.s32 0, %v906
      %v908 = vsel %vm902, %v907, %v906
      %vm909 = vcmp.lt.s32.totalorder %v781, 0
      %v910 = vsub.s32 0, %v781
      %v911 = vsel %vm909, %v910, %v781
      %v912 = vshrl.u32 %v911, 4
      %v913 = vand.u32 %v911, 15
      %v914 = vsub.s32 0, %v913
      %v915 = vsel %vm909, %v914, %v913
      %vm916 = vcmp.lt.s32.totalorder %v782, 0
      %v917 = vsub.s32 0, %v782
      %v918 = vsel %vm916, %v917, %v782
      %v919 = vshrl.u32 %v918, 4
      %v920 = vand.u32 %v918, 15
      %v921 = vsub.s32 0, %v920
      %v922 = vsel %vm916, %v921, %v920
      %vm923 = vcmp.lt.s32.totalorder %v783, 0
      %v924 = vsub.s32 0, %v783
      %v925 = vsel %vm923, %v924, %v783
      %v926 = vshrl.u32 %v925, 4
      %v927 = vand.u32 %v925, 15
      %v928 = vsub.s32 0, %v927
      %v929 = vsel %vm923, %v928, %v927
      %vm930 = vcmp.lt.s32.totalorder %v784, 0
      %v931 = vsub.s32 0, %v784
      %v932 = vsel %vm930, %v931, %v784
      %v933 = vshrl.u32 %v932, 4
      %v934 = vand.u32 %v932, 15
      %v935 = vsub.s32 0, %v934
      %v936 = vsel %vm930, %v935, %v934
      %vm937 = vcmp.lt.s32.totalorder %v785, 0
      %v938 = vsub.s32 0, %v785
      %v939 = vsel %vm937, %v938, %v785
      %v940 = vshrl.u32 %v939, 4
      %v941 = vand.u32 %v939, 15
      %v942 = vsub.s32 0, %v941
      %v943 = vsel %vm937, %v942, %v941
      %vm944 = vcmp.lt.s32.totalorder %v786, 0
      %v945 = vsub.s32 0, %v786
      %v946 = vsel %vm944, %v945, %v786
      %v947 = vshrl.u32 %v946, 4
      %v948 = vand.u32 %v946, 15
      %v949 = vsub.s32 0, %v948
      %v950 = vsel %vm944, %v949, %v948
      %vm951 = vcmp.lt.s32.totalorder %v787, 0
      %v952 = vsub.s32 0, %v787
      %v953 = vsel %vm951, %v952, %v787
      %v954 = vshrl.u32 %v953, 4
      %v955 = vand.u32 %v953, 15
      %v956 = vsub.s32 0, %v955
      %v957 = vsel %vm951, %v956, %v955
      %vm958 = vcmp.lt.s32.totalorder %v788, 0
      %v959 = vsub.s32 0, %v788
      %v960 = vsel %vm958, %v959, %v788
      %v961 = vshrl.u32 %v960, 4
      %v962 = vand.u32 %v960, 15
      %v963 = vsub.s32 0, %v962
      %v964 = vsel %vm958, %v963, %v962
      %vm965 = vcmp.lt.s32.totalorder %v789, 0
      %v966 = vsub.s32 0, %v789
      %v967 = vsel %vm965, %v966, %v789
      %v968 = vshrl.u32 %v967, 4
      %v969 = vand.u32 %v967, 15
      %v970 = vsub.s32 0, %v969
      %v971 = vsel %vm965, %v970, %v969
      %vm972 = vcmp.lt.s32.totalorder %v790, 0
      %v973 = vsub.s32 0, %v790
      %v974 = vsel %vm972, %v973, %v790
      %v975 = vshrl.u32 %v974, 4
      %v976 = vand.u32 %v974, 15
      %v977 = vsub.s32 0, %v976
      %v978 = vsel %vm972, %v977, %v976
      %vm979 = vcmp.lt.s32.totalorder %v791, 0
      %v980 = vsub.s32 0, %v791
      %v981 = vsel %vm979, %v980, %v791
      %v982 = vshrl.u32 %v981, 4
      %v983 = vand.u32 %v981, 15
      %v984 = vsub.s32 0, %v983
      %v985 = vsel %vm979, %v984, %v983
      %vm986 = vcmp.lt.s32.totalorder %v792, 0
      %v987 = vsub.s32 0, %v792
      %v988 = vsel %vm986, %v987, %v792
      %v989 = vshrl.u32 %v988, 4
      %v990 = vand.u32 %v988, 15
      %v991 = vsub.s32 0, %v990
      %v992 = vsel %vm986, %v991, %v990
      %vm993 = vcmp.lt.s32.totalorder %v793, 0
      %v994 = vsub.s32 0, %v793
      %v995 = vsel %vm993, %v994, %v793
      %v996 = vshrl.u32 %v995, 4
      %v997 = vand.u32 %v995, 15
      %v998 = vsub.s32 0, %v997
      %v999 = vsel %vm993, %v998, %v997
      %vm1000 = vcmp.lt.s32.totalorder %v794, 0
      %v1001 = vsub.s32 0, %v794
      %v1002 = vsel %vm1000, %v1001, %v794
      %v1003 = vshrl.u32 %v1002, 4
      %v1004 = vand.u32 %v1002, 15
      %v1005 = vsub.s32 0, %v1004
      %v1006 = vsel %vm1000, %v1005, %v1004
      %vm1007 = vcmp.lt.s32.totalorder %v795, 0
      %v1008 = vsub.s32 0, %v795
      %v1009 = vsel %vm1007, %v1008, %v795
      %v1010 = vshrl.u32 %v1009, 4
      %v1011 = vand.u32 %v1009, 15
      %v1012 = vsub.s32 0, %v1011
      %v1013 = vsel %vm1007, %v1012, %v1011
      %vm1014 = vcmp.lt.s32.totalorder %v796, 0
      %v1015 = vsub.s32 0, %v796
      %v1016 = vsel %vm1014, %v1015, %v796
      %v1017 = vshrl.u32 %v1016, 4
      %v1018 = vand.u32 %v1016, 15
      %v1019 = vsub.s32 0, %v1018
      %v1020 = vsel %vm1014, %v1019, %v1018
      %vm1021 = vcmp.ne.s32.totalorder %v803, 0
      %vm1022 = vcmp.ne.s32.totalorder %v810, 0
      %vm1023 = vcmp.ne.s32.totalorder %v817, 0
      %vm1024 = vcmp.ne.s32.totalorder %v824, 0
      %vm1025 = vcmp.ne.s32.totalorder %v831, 0
      %vm1026 = vcmp.ne.s32.totalorder %v838, 0
      %vm1027 = vcmp.ne.s32.totalorder %v845, 0
      %vm1028 = vcmp.ne.s32.totalorder %v852, 0
      %vm1029 = vcmp.ne.s32.totalorder %v859, 0
      %vm1030 = vcmp.ne.s32.totalorder %v866, 0
      %vm1031 = vcmp.ne.s32.totalorder %v873, 0
      %vm1032 = vcmp.ne.s32.totalorder %v880, 0
      %vm1033 = vcmp.ne.s32.totalorder %v887, 0
      %vm1034 = vcmp.ne.s32.totalorder %v894, 0
      %vm1035 = vcmp.ne.s32.totalorder %v901, 0
      %vm1036 = vcmp.ne.s32.totalorder %v908, 0
      %vm1037 = vcmp.ne.s32.totalorder %v915, 0
      %vm1038 = vcmp.ne.s32.totalorder %v922, 0
      %vm1039 = vcmp.ne.s32.totalorder %v929, 0
      %vm1040 = vcmp.ne.s32.totalorder %v936, 0
      %vm1041 = vcmp.ne.s32.totalorder %v943, 0
      %vm1042 = vcmp.ne.s32.totalorder %v950, 0
      %vm1043 = vcmp.ne.s32.totalorder %v957, 0
      %vm1044 = vcmp.ne.s32.totalorder %v964, 0
      %vm1045 = vcmp.ne.s32.totalorder %v971, 0
      %vm1046 = vcmp.ne.s32.totalorder %v978, 0
      %vm1047 = vcmp.ne.s32.totalorder %v985, 0
      %vm1048 = vcmp.ne.s32.totalorder %v992, 0
      %vm1049 = vcmp.ne.s32.totalorder %v999, 0
      %vm1050 = vcmp.ne.s32.totalorder %v1006, 0
      %vm1051 = vcmp.ne.s32.totalorder %v1013, 0
      %vm1052 = vcmp.ne.s32.totalorder %v1020, 0
      %vm1053 = vcmp.lt.s32.totalorder %v803, 0
      %vm1054 = vcmp.lt.s32.totalorder %v810, 0
      %vm1055 = vcmp.lt.s32.totalorder %v817, 0
      %vm1056 = vcmp.lt.s32.totalorder %v824, 0
      %vm1057 = vcmp.lt.s32.totalorder %v831, 0
      %vm1058 = vcmp.lt.s32.totalorder %v838, 0
      %vm1059 = vcmp.lt.s32.totalorder %v845, 0
      %vm1060 = vcmp.lt.s32.totalorder %v852, 0
      %vm1061 = vcmp.lt.s32.totalorder %v859, 0
      %vm1062 = vcmp.lt.s32.totalorder %v866, 0
      %vm1063 = vcmp.lt.s32.totalorder %v873, 0
      %vm1064 = vcmp.lt.s32.totalorder %v880, 0
      %vm1065 = vcmp.lt.s32.totalorder %v887, 0
      %vm1066 = vcmp.lt.s32.totalorder %v894, 0
      %vm1067 = vcmp.lt.s32.totalorder %v901, 0
      %vm1068 = vcmp.lt.s32.totalorder %v908, 0
      %vm1069 = vcmp.lt.s32.totalorder %v915, 0
      %vm1070 = vcmp.lt.s32.totalorder %v922, 0
      %vm1071 = vcmp.lt.s32.totalorder %v929, 0
      %vm1072 = vcmp.lt.s32.totalorder %v936, 0
      %vm1073 = vcmp.lt.s32.totalorder %v943, 0
      %vm1074 = vcmp.lt.s32.totalorder %v950, 0
      %vm1075 = vcmp.lt.s32.totalorder %v957, 0
      %vm1076 = vcmp.lt.s32.totalorder %v964, 0
      %vm1077 = vcmp.lt.s32.totalorder %v971, 0
      %vm1078 = vcmp.lt.s32.totalorder %v978, 0
      %vm1079 = vcmp.lt.s32.totalorder %v985, 0
      %vm1080 = vcmp.lt.s32.totalorder %v992, 0
      %vm1081 = vcmp.lt.s32.totalorder %v999, 0
      %vm1082 = vcmp.lt.s32.totalorder %v1006, 0
      %vm1083 = vcmp.lt.s32.totalorder %v1013, 0
      %vm1084 = vcmp.lt.s32.totalorder %v1020, 0
      %vm1085 = vmand %vm1053, %vm1021
      %vm1086 = vmand %vm1054, %vm1022
      %vm1087 = vmand %vm1055, %vm1023
      %vm1088 = vmand %vm1056, %vm1024
      %vm1089 = vmand %vm1057, %vm1025
      %vm1090 = vmand %vm1058, %vm1026
      %vm1091 = vmand %vm1059, %vm1027
      %vm1092 = vmand %vm1060, %vm1028
      %vm1093 = vmand %vm1061, %vm1029
      %vm1094 = vmand %vm1062, %vm1030
      %vm1095 = vmand %vm1063, %vm1031
      %vm1096 = vmand %vm1064, %vm1032
      %vm1097 = vmand %vm1065, %vm1033
      %vm1098 = vmand %vm1066, %vm1034
      %vm1099 = vmand %vm1067, %vm1035
      %vm1100 = vmand %vm1068, %vm1036
      %vm1101 = vmand %vm1069, %vm1037
      %vm1102 = vmand %vm1070, %vm1038
      %vm1103 = vmand %vm1071, %vm1039
      %vm1104 = vmand %vm1072, %vm1040
      %vm1105 = vmand %vm1073, %vm1041
      %vm1106 = vmand %vm1074, %vm1042
      %vm1107 = vmand %vm1075, %vm1043
      %vm1108 = vmand %vm1076, %vm1044
      %vm1109 = vmand %vm1077, %vm1045
      %vm1110 = vmand %vm1078, %vm1046
      %vm1111 = vmand %vm1079, %vm1047
      %vm1112 = vmand %vm1080, %vm1048
      %vm1113 = vmand %vm1081, %vm1049
      %vm1114 = vmand %vm1082, %vm1050
      %vm1115 = vmand %vm1083, %vm1051
      %vm1116 = vmand %vm1084, %vm1052
      %v1117 = vadd.s32 %v803, 16
      %v1118 = vadd.s32 %v810, 16
      %v1119 = vadd.s32 %v817, 16
      %v1120 = vadd.s32 %v824, 16
      %v1121 = vadd.s32 %v831, 16
      %v1122 = vadd.s32 %v838, 16
      %v1123 = vadd.s32 %v845, 16
      %v1124 = vadd.s32 %v852, 16
      %v1125 = vadd.s32 %v859, 16
      %v1126 = vadd.s32 %v866, 16
      %v1127 = vadd.s32 %v873, 16
      %v1128 = vadd.s32 %v880, 16
      %v1129 = vadd.s32 %v887, 16
      %v1130 = vadd.s32 %v894, 16
      %v1131 = vadd.s32 %v901, 16
      %v1132 = vadd.s32 %v908, 16
      %v1133 = vadd.s32 %v915, 16
      %v1134 = vadd.s32 %v922, 16
      %v1135 = vadd.s32 %v929, 16
      %v1136 = vadd.s32 %v936, 16
      %v1137 = vadd.s32 %v943, 16
      %v1138 = vadd.s32 %v950, 16
      %v1139 = vadd.s32 %v957, 16
      %v1140 = vadd.s32 %v964, 16
      %v1141 = vadd.s32 %v971, 16
      %v1142 = vadd.s32 %v978, 16
      %v1143 = vadd.s32 %v985, 16
      %v1144 = vadd.s32 %v992, 16
      %v1145 = vadd.s32 %v999, 16
      %v1146 = vadd.s32 %v1006, 16
      %v1147 = vadd.s32 %v1013, 16
      %v1148 = vadd.s32 %v1020, 16
      %v1149 = vsel %vm1085, %v1117, %v803
      %v1150 = vsel %vm1086, %v1118, %v810
      %v1151 = vsel %vm1087, %v1119, %v817
      %v1152 = vsel %vm1088, %v1120, %v824
      %v1153 = vsel %vm1089, %v1121, %v831
      %v1154 = vsel %vm1090, %v1122, %v838
      %v1155 = vsel %vm1091, %v1123, %v845
      %v1156 = vsel %vm1092, %v1124, %v852
      %v1157 = vsel %vm1093, %v1125, %v859
      %v1158 = vsel %vm1094, %v1126, %v866
      %v1159 = vsel %vm1095, %v1127, %v873
      %v1160 = vsel %vm1096, %v1128, %v880
      %v1161 = vsel %vm1097, %v1129, %v887
      %v1162 = vsel %vm1098, %v1130, %v894
      %v1163 = vsel %vm1099, %v1131, %v901
      %v1164 = vsel %vm1100, %v1132, %v908
      %v1165 = vsel %vm1101, %v1133, %v915
      %v1166 = vsel %vm1102, %v1134, %v922
      %v1167 = vsel %vm1103, %v1135, %v929
      %v1168 = vsel %vm1104, %v1136, %v936
      %v1169 = vsel %vm1105, %v1137, %v943
      %v1170 = vsel %vm1106, %v1138, %v950
      %v1171 = vsel %vm1107, %v1139, %v957
      %v1172 = vsel %vm1108, %v1140, %v964
      %v1173 = vsel %vm1109, %v1141, %v971
      %v1174 = vsel %vm1110, %v1142, %v978
      %v1175 = vsel %vm1111, %v1143, %v985
      %v1176 = vsel %vm1112, %v1144, %v992
      %v1177 = vsel %vm1113, %v1145, %v999
      %v1178 = vsel %vm1114, %v1146, %v1006
      %v1179 = vsel %vm1115, %v1147, %v1013
      %v1180 = vsel %vm1116, %v1148, %v1020
      %vm1181 = vcmp.eq.s32.totalorder %v1149, 0
      %vm1182 = vcmp.eq.s32.totalorder %v1150, 0
      %vm1183 = vcmp.eq.s32.totalorder %v1151, 0
      %vm1184 = vcmp.eq.s32.totalorder %v1152, 0
      %vm1185 = vcmp.eq.s32.totalorder %v1153, 0
      %vm1186 = vcmp.eq.s32.totalorder %v1154, 0
      %vm1187 = vcmp.eq.s32.totalorder %v1155, 0
      %vm1188 = vcmp.eq.s32.totalorder %v1156, 0
      %vm1189 = vcmp.eq.s32.totalorder %v1157, 0
      %vm1190 = vcmp.eq.s32.totalorder %v1158, 0
      %vm1191 = vcmp.eq.s32.totalorder %v1159, 0
      %vm1192 = vcmp.eq.s32.totalorder %v1160, 0
      %vm1193 = vcmp.eq.s32.totalorder %v1161, 0
      %vm1194 = vcmp.eq.s32.totalorder %v1162, 0
      %vm1195 = vcmp.eq.s32.totalorder %v1163, 0
      %vm1196 = vcmp.eq.s32.totalorder %v1164, 0
      %vm1197 = vcmp.eq.s32.totalorder %v1165, 0
      %vm1198 = vcmp.eq.s32.totalorder %v1166, 0
      %vm1199 = vcmp.eq.s32.totalorder %v1167, 0
      %vm1200 = vcmp.eq.s32.totalorder %v1168, 0
      %vm1201 = vcmp.eq.s32.totalorder %v1169, 0
      %vm1202 = vcmp.eq.s32.totalorder %v1170, 0
      %vm1203 = vcmp.eq.s32.totalorder %v1171, 0
      %vm1204 = vcmp.eq.s32.totalorder %v1172, 0
      %vm1205 = vcmp.eq.s32.totalorder %v1173, 0
      %vm1206 = vcmp.eq.s32.totalorder %v1174, 0
      %vm1207 = vcmp.eq.s32.totalorder %v1175, 0
      %vm1208 = vcmp.eq.s32.totalorder %v1176, 0
      %vm1209 = vcmp.eq.s32.totalorder %v1177, 0
      %vm1210 = vcmp.eq.s32.totalorder %v1178, 0
      %vm1211 = vcmp.eq.s32.totalorder %v1179, 0
      %vm1212 = vcmp.eq.s32.totalorder %v1180, 0
      %vm1213 = vcmp.eq.s32.totalorder %v1149, 15
      %vm1214 = vcmp.eq.s32.totalorder %v1150, 15
      %vm1215 = vcmp.eq.s32.totalorder %v1151, 15
      %vm1216 = vcmp.eq.s32.totalorder %v1152, 15
      %vm1217 = vcmp.eq.s32.totalorder %v1153, 15
      %vm1218 = vcmp.eq.s32.totalorder %v1154, 15
      %vm1219 = vcmp.eq.s32.totalorder %v1155, 15
      %vm1220 = vcmp.eq.s32.totalorder %v1156, 15
      %vm1221 = vcmp.eq.s32.totalorder %v1157, 15
      %vm1222 = vcmp.eq.s32.totalorder %v1158, 15
      %vm1223 = vcmp.eq.s32.totalorder %v1159, 15
      %vm1224 = vcmp.eq.s32.totalorder %v1160, 15
      %vm1225 = vcmp.eq.s32.totalorder %v1161, 15
      %vm1226 = vcmp.eq.s32.totalorder %v1162, 15
      %vm1227 = vcmp.eq.s32.totalorder %v1163, 15
      %vm1228 = vcmp.eq.s32.totalorder %v1164, 15
      %vm1229 = vcmp.eq.s32.totalorder %v1165, 15
      %vm1230 = vcmp.eq.s32.totalorder %v1166, 15
      %vm1231 = vcmp.eq.s32.totalorder %v1167, 15
      %vm1232 = vcmp.eq.s32.totalorder %v1168, 15
      %vm1233 = vcmp.eq.s32.totalorder %v1169, 15
      %vm1234 = vcmp.eq.s32.totalorder %v1170, 15
      %vm1235 = vcmp.eq.s32.totalorder %v1171, 15
      %vm1236 = vcmp.eq.s32.totalorder %v1172, 15
      %vm1237 = vcmp.eq.s32.totalorder %v1173, 15
      %vm1238 = vcmp.eq.s32.totalorder %v1174, 15
      %vm1239 = vcmp.eq.s32.totalorder %v1175, 15
      %vm1240 = vcmp.eq.s32.totalorder %v1176, 15
      %vm1241 = vcmp.eq.s32.totalorder %v1177, 15
      %vm1242 = vcmp.eq.s32.totalorder %v1178, 15
      %vm1243 = vcmp.eq.s32.totalorder %v1179, 15
      %vm1244 = vcmp.eq.s32.totalorder %v1180, 15
      %v1245 = vld [vmem:[#allocation2 + $0x7] sm:$0xff]
      %v1246 = vld [vmem:[#allocation2 + $0xf] sm:$0xff]
      %v1247 = vld [vmem:[#allocation2 + $0x17] sm:$0xff]
      %v1248 = vld [vmem:[#allocation2 + $0x1f] sm:$0xff]
      %v1249 = vld [vmem:[#allocation2 + $0x27] sm:$0xff]
      %v1250 = vld [vmem:[#allocation2 + $0x2f] sm:$0xff]
      %v1251 = vld [vmem:[#allocation2 + $0x37] sm:$0xff]
      %v1252 = vld [vmem:[#allocation2 + $0x3f] sm:$0xff]
      %v1253 = vld [vmem:[#allocation2 + $0x47] sm:$0xff]
      %v1254 = vld [vmem:[#allocation2 + $0x4f] sm:$0xff]
      %v1255 = vld [vmem:[#allocation2 + $0x57] sm:$0xff]
      %v1256 = vld [vmem:[#allocation2 + $0x5f] sm:$0xff]
      %v1257 = vld [vmem:[#allocation2 + $0x67] sm:$0xff]
      %v1258 = vld [vmem:[#allocation2 + $0x6f] sm:$0xff]
      %v1259 = vld [vmem:[#allocation2 + $0x77] sm:$0xff]
      %v1260 = vld [vmem:[#allocation2 + $0x7f] sm:$0xff]
      %v1261 = vld [vmem:[#allocation2 + $0x87] sm:$0xff]
      %v1262 = vld [vmem:[#allocation2 + $0x8f] sm:$0xff]
      %v1263 = vld [vmem:[#allocation2 + $0x97] sm:$0xff]
      %v1264 = vld [vmem:[#allocation2 + $0x9f] sm:$0xff]
      %v1265 = vld [vmem:[#allocation2 + $0xa7] sm:$0xff]
      %v1266 = vld [vmem:[#allocation2 + $0xaf] sm:$0xff]
      %v1267 = vld [vmem:[#allocation2 + $0xb7] sm:$0xff]
      %v1268 = vld [vmem:[#allocation2 + $0xbf] sm:$0xff]
      %v1269 = vld [vmem:[#allocation2 + $0xc7] sm:$0xff]
      %v1270 = vld [vmem:[#allocation2 + $0xcf] sm:$0xff]
      %v1271 = vld [vmem:[#allocation2 + $0xd7] sm:$0xff]
      %v1272 = vld [vmem:[#allocation2 + $0xdf] sm:$0xff]
      %v1273 = vld [vmem:[#allocation2 + $0xe7] sm:$0xff]
      %v1274 = vld [vmem:[#allocation2 + $0xef] sm:$0xff]
      %v1275 = vld [vmem:[#allocation2 + $0xf7] sm:$0xff]
      %v1276 = vld [vmem:[#allocation2 + $0xff] sm:$0xff]
      %v1277 = vpack.c.bf16 %v1246, %v1245
      %v1278 = vpack.c.bf16 %v1248, %v1247
      %v1279 = vpack.c.bf16 %v1250, %v1249
      %v1280 = vpack.c.bf16 %v1252, %v1251
      %v1281 = vpack.c.bf16 %v1254, %v1253
      %v1282 = vpack.c.bf16 %v1256, %v1255
      %v1283 = vpack.c.bf16 %v1258, %v1257
      %v1284 = vpack.c.bf16 %v1260, %v1259
      %v1285 = vpack.c.bf16 %v1262, %v1261
      %v1286 = vpack.c.bf16 %v1264, %v1263
      %v1287 = vpack.c.bf16 %v1266, %v1265
      %v1288 = vpack.c.bf16 %v1268, %v1267
      %v1289 = vpack.c.bf16 %v1270, %v1269
      %v1290 = vpack.c.bf16 %v1272, %v1271
      %v1291 = vpack.c.bf16 %v1274, %v1273
      %v1292 = vpack.c.bf16 %v1276, %v1275
      %vm1293 = vmpackc.low %vm1181, %vm1181
      %vm1294 = vmpackc.low %vm1182, %vm1182
      %vm1295 = vmpackc.low %vm1183, %vm1183
      %vm1296 = vmpackc.low %vm1184, %vm1184
      %vm1297 = vmpackc.low %vm1185, %vm1185
      %vm1298 = vmpackc.low %vm1186, %vm1186
      %vm1299 = vmpackc.low %vm1187, %vm1187
      %vm1300 = vmpackc.low %vm1188, %vm1188
      %vm1301 = vmpackc.low %vm1189, %vm1189
      %vm1302 = vmpackc.low %vm1190, %vm1190
      %vm1303 = vmpackc.low %vm1191, %vm1191
      %vm1304 = vmpackc.low %vm1192, %vm1192
      %vm1305 = vmpackc.low %vm1193, %vm1193
      %vm1306 = vmpackc.low %vm1194, %vm1194
      %vm1307 = vmpackc.low %vm1195, %vm1195
      %vm1308 = vmpackc.low %vm1196, %vm1196
      %vm1309 = vmpackc.low %vm1197, %vm1197
      %vm1310 = vmpackc.low %vm1198, %vm1198
      %vm1311 = vmpackc.low %vm1199, %vm1199
      %vm1312 = vmpackc.low %vm1200, %vm1200
      %vm1313 = vmpackc.low %vm1201, %vm1201
      %vm1314 = vmpackc.low %vm1202, %vm1202
      %vm1315 = vmpackc.low %vm1203, %vm1203
      %vm1316 = vmpackc.low %vm1204, %vm1204
      %vm1317 = vmpackc.low %vm1205, %vm1205
      %vm1318 = vmpackc.low %vm1206, %vm1206
      %vm1319 = vmpackc.low %vm1207, %vm1207
      %vm1320 = vmpackc.low %vm1208, %vm1208
      %vm1321 = vmpackc.low %vm1209, %vm1209
      %vm1322 = vmpackc.low %vm1210, %vm1210
      %vm1323 = vmpackc.low %vm1211, %vm1211
      %vm1324 = vmpackc.low %vm1212, %vm1212
      %v1325 = vsel %vm1293, 65537, 0
      %v1326 = vsel %vm1294, 65537, 0
      %v1327 = vsel %vm1295, 65537, 0
      %v1328 = vsel %vm1296, 65537, 0
      %v1329 = vsel %vm1297, 65537, 0
      %v1330 = vsel %vm1298, 65537, 0
      %v1331 = vsel %vm1299, 65537, 0
      %v1332 = vsel %vm1300, 65537, 0
      %v1333 = vsel %vm1301, 65537, 0
      %v1334 = vsel %vm1302, 65537, 0
      %v1335 = vsel %vm1303, 65537, 0
      %v1336 = vsel %vm1304, 65537, 0
      %v1337 = vsel %vm1305, 65537, 0
      %v1338 = vsel %vm1306, 65537, 0
      %v1339 = vsel %vm1307, 65537, 0
      %v1340 = vsel %vm1308, 65537, 0
      %v1341 = vsel %vm1309, 65537, 0
      %v1342 = vsel %vm1310, 65537, 0
      %v1343 = vsel %vm1311, 65537, 0
      %v1344 = vsel %vm1312, 65537, 0
      %v1345 = vsel %vm1313, 65537, 0
      %v1346 = vsel %vm1314, 65537, 0
      %v1347 = vsel %vm1315, 65537, 0
      %v1348 = vsel %vm1316, 65537, 0
      %v1349 = vsel %vm1317, 65537, 0
      %v1350 = vsel %vm1318, 65537, 0
      %v1351 = vsel %vm1319, 65537, 0
      %v1352 = vsel %vm1320, 65537, 0
      %v1353 = vsel %vm1321, 65537, 0
      %v1354 = vsel %vm1322, 65537, 0
      %v1355 = vsel %vm1323, 65537, 0
      %v1356 = vsel %vm1324, 65537, 0
      %v1357 = vunpack.c.l.b16 %v1325
      %v1358 = vunpack.c.l.b16 %v1326
      %v1359 = vunpack.c.l.b16 %v1327
      %v1360 = vunpack.c.l.b16 %v1328
      %v1361 = vunpack.c.l.b16 %v1329
      %v1362 = vunpack.c.l.b16 %v1330
      %v1363 = vunpack.c.l.b16 %v1331
      %v1364 = vunpack.c.l.b16 %v1332
      %v1365 = vunpack.c.l.b16 %v1333
      %v1366 = vunpack.c.l.b16 %v1334
      %v1367 = vunpack.c.l.b16 %v1335
      %v1368 = vunpack.c.l.b16 %v1336
      %v1369 = vunpack.c.l.b16 %v1337
      %v1370 = vunpack.c.l.b16 %v1338
      %v1371 = vunpack.c.l.b16 %v1339
      %v1372 = vunpack.c.l.b16 %v1340
      %v1373 = vunpack.c.l.b16 %v1341
      %v1374 = vunpack.c.l.b16 %v1342
      %v1375 = vunpack.c.l.b16 %v1343
      %v1376 = vunpack.c.l.b16 %v1344
      %v1377 = vunpack.c.l.b16 %v1345
      %v1378 = vunpack.c.l.b16 %v1346
      %v1379 = vunpack.c.l.b16 %v1347
      %v1380 = vunpack.c.l.b16 %v1348
      %v1381 = vunpack.c.l.b16 %v1349
      %v1382 = vunpack.c.l.b16 %v1350
      %v1383 = vunpack.c.l.b16 %v1351
      %v1384 = vunpack.c.l.b16 %v1352
      %v1385 = vunpack.c.l.b16 %v1353
      %v1386 = vunpack.c.l.b16 %v1354
      %v1387 = vunpack.c.l.b16 %v1355
      %v1388 = vunpack.c.l.b16 %v1356
      %v1389 = vpack.c.b16 %v1358, %v1357
      %v1390 = vpack.c.b16 %v1360, %v1359
      %v1391 = vpack.c.b16 %v1362, %v1361
      %v1392 = vpack.c.b16 %v1364, %v1363
      %v1393 = vpack.c.b16 %v1366, %v1365
      %v1394 = vpack.c.b16 %v1368, %v1367
      %v1395 = vpack.c.b16 %v1370, %v1369
      %v1396 = vpack.c.b16 %v1372, %v1371
      %v1397 = vpack.c.b16 %v1374, %v1373
      %v1398 = vpack.c.b16 %v1376, %v1375
      %v1399 = vpack.c.b16 %v1378, %v1377
      %v1400 = vpack.c.b16 %v1380, %v1379
      %v1401 = vpack.c.b16 %v1382, %v1381
      %v1402 = vpack.c.b16 %v1384, %v1383
      %v1403 = vpack.c.b16 %v1386, %v1385
      %v1404 = vpack.c.b16 %v1388, %v1387
      %vm1405 = vcmp.ne.s16.totalorder %v1389, 0
      %vm1406 = vcmp.ne.s16.totalorder %v1390, 0
      %vm1407 = vcmp.ne.s16.totalorder %v1391, 0
      %vm1408 = vcmp.ne.s16.totalorder %v1392, 0
      %vm1409 = vcmp.ne.s16.totalorder %v1393, 0
      %vm1410 = vcmp.ne.s16.totalorder %v1394, 0
      %vm1411 = vcmp.ne.s16.totalorder %v1395, 0
      %vm1412 = vcmp.ne.s16.totalorder %v1396, 0
      %vm1413 = vcmp.ne.s16.totalorder %v1397, 0
      %vm1414 = vcmp.ne.s16.totalorder %v1398, 0
      %vm1415 = vcmp.ne.s16.totalorder %v1399, 0
      %vm1416 = vcmp.ne.s16.totalorder %v1400, 0
      %vm1417 = vcmp.ne.s16.totalorder %v1401, 0
      %vm1418 = vcmp.ne.s16.totalorder %v1402, 0
      %vm1419 = vcmp.ne.s16.totalorder %v1403, 0
      %vm1420 = vcmp.ne.s16.totalorder %v1404, 0
      %v1421 = vsel %vm1405, 0, %v1277
      %v1422 = vsel %vm1406, 0, %v1278
      %v1423 = vsel %vm1407, 0, %v1279
      %v1424 = vsel %vm1408, 0, %v1280
      %v1425 = vsel %vm1409, 0, %v1281
      %v1426 = vsel %vm1410, 0, %v1282
      %v1427 = vsel %vm1411, 0, %v1283
      %v1428 = vsel %vm1412, 0, %v1284
      %v1429 = vsel %vm1413, 0, %v1285
      %v1430 = vsel %vm1414, 0, %v1286
      %v1431 = vsel %vm1415, 0, %v1287
      %v1432 = vsel %vm1416, 0, %v1288
      %v1433 = vsel %vm1417, 0, %v1289
      %v1434 = vsel %vm1418, 0, %v1290
      %v1435 = vsel %vm1419, 0, %v1291
      %v1436 = vsel %vm1420, 0, %v1292
      %v1437 = vld [vmem:[#allocation2 + $0x8] sm:$0xff]
      %v1438 = vld [vmem:[#allocation2 + $0x10] sm:$0xff]
      %v1439 = vld [vmem:[#allocation2 + $0x18] sm:$0xff]
      %v1440 = vld [vmem:[#allocation2 + $0x20] sm:$0xff]
      %v1441 = vld [vmem:[#allocation2 + $0x28] sm:$0xff]
      %v1442 = vld [vmem:[#allocation2 + $0x30] sm:$0xff]
      %v1443 = vld [vmem:[#allocation2 + $0x38] sm:$0xff]
      %v1444 = vld [vmem:[#allocation2 + $0x40] sm:$0xff]
      %v1445 = vld [vmem:[#allocation2 + $0x48] sm:$0xff]
      %v1446 = vld [vmem:[#allocation2 + $0x50] sm:$0xff]
      %v1447 = vld [vmem:[#allocation2 + $0x58] sm:$0xff]
      %v1448 = vld [vmem:[#allocation2 + $0x60] sm:$0xff]
      %v1449 = vld [vmem:[#allocation2 + $0x68] sm:$0xff]
      %v1450 = vld [vmem:[#allocation2 + $0x70] sm:$0xff]
      %v1451 = vld [vmem:[#allocation2 + $0x78] sm:$0xff]
      %v1452 = vld [vmem:[#allocation2 + $0x80] sm:$0xff]
      %v1453 = vld [vmem:[#allocation2 + $0x88] sm:$0xff]
      %v1454 = vld [vmem:[#allocation2 + $0x90] sm:$0xff]
      %v1455 = vld [vmem:[#allocation2 + $0x98] sm:$0xff]
      %v1456 = vld [vmem:[#allocation2 + $0xa0] sm:$0xff]
      %v1457 = vld [vmem:[#allocation2 + $0xa8] sm:$0xff]
      %v1458 = vld [vmem:[#allocation2 + $0xb0] sm:$0xff]
      %v1459 = vld [vmem:[#allocation2 + $0xb8] sm:$0xff]
      %v1460 = vld [vmem:[#allocation2 + $0xc0] sm:$0xff]
      %v1461 = vld [vmem:[#allocation2 + $0xc8] sm:$0xff]
      %v1462 = vld [vmem:[#allocation2 + $0xd0] sm:$0xff]
      %v1463 = vld [vmem:[#allocation2 + $0xd8] sm:$0xff]
      %v1464 = vld [vmem:[#allocation2 + $0xe0] sm:$0xff]
      %v1465 = vld [vmem:[#allocation2 + $0xe8] sm:$0xff]
      %v1466 = vld [vmem:[#allocation2 + $0xf0] sm:$0xff]
      %v1467 = vld [vmem:[#allocation2 + $0xf8] sm:$0xff]
      %v1468 = vld [vmem:[#allocation2 + $0x100] sm:$0xff]
      %v1469 = vpack.c.bf16 %v1438, %v1437
      %v1470 = vpack.c.bf16 %v1440, %v1439
      %v1471 = vpack.c.bf16 %v1442, %v1441
      %v1472 = vpack.c.bf16 %v1444, %v1443
      %v1473 = vpack.c.bf16 %v1446, %v1445
      %v1474 = vpack.c.bf16 %v1448, %v1447
      %v1475 = vpack.c.bf16 %v1450, %v1449
      %v1476 = vpack.c.bf16 %v1452, %v1451
      %v1477 = vpack.c.bf16 %v1454, %v1453
      %v1478 = vpack.c.bf16 %v1456, %v1455
      %v1479 = vpack.c.bf16 %v1458, %v1457
      %v1480 = vpack.c.bf16 %v1460, %v1459
      %v1481 = vpack.c.bf16 %v1462, %v1461
      %v1482 = vpack.c.bf16 %v1464, %v1463
      %v1483 = vpack.c.bf16 %v1466, %v1465
      %v1484 = vpack.c.bf16 %v1468, %v1467
      %v1485 = vld [vmem:[#allocation2 + $0x9] sm:$0xff]
      %v1486 = vld [vmem:[#allocation2 + $0x11] sm:$0xff]
      %v1487 = vld [vmem:[#allocation2 + $0x19] sm:$0xff]
      %v1488 = vld [vmem:[#allocation2 + $0x21] sm:$0xff]
      %v1489 = vld [vmem:[#allocation2 + $0x29] sm:$0xff]
      %v1490 = vld [vmem:[#allocation2 + $0x31] sm:$0xff]
      %v1491 = vld [vmem:[#allocation2 + $0x39] sm:$0xff]
      %v1492 = vld [vmem:[#allocation2 + $0x41] sm:$0xff]
      %v1493 = vld [vmem:[#allocation2 + $0x49] sm:$0xff]
      %v1494 = vld [vmem:[#allocation2 + $0x51] sm:$0xff]
      %v1495 = vld [vmem:[#allocation2 + $0x59] sm:$0xff]
      %v1496 = vld [vmem:[#allocation2 + $0x61] sm:$0xff]
      %v1497 = vld [vmem:[#allocation2 + $0x69] sm:$0xff]
      %v1498 = vld [vmem:[#allocation2 + $0x71] sm:$0xff]
      %v1499 = vld [vmem:[#allocation2 + $0x79] sm:$0xff]
      %v1500 = vld [vmem:[#allocation2 + $0x81] sm:$0xff]
      %v1501 = vld [vmem:[#allocation2 + $0x89] sm:$0xff]
      %v1502 = vld [vmem:[#allocation2 + $0x91] sm:$0xff]
      %v1503 = vld [vmem:[#allocation2 + $0x99] sm:$0xff]
      %v1504 = vld [vmem:[#allocation2 + $0xa1] sm:$0xff]
      %v1505 = vld [vmem:[#allocation2 + $0xa9] sm:$0xff]
      %v1506 = vld [vmem:[#allocation2 + $0xb1] sm:$0xff]
      %v1507 = vld [vmem:[#allocation2 + $0xb9] sm:$0xff]
      %v1508 = vld [vmem:[#allocation2 + $0xc1] sm:$0xff]
      %v1509 = vld [vmem:[#allocation2 + $0xc9] sm:$0xff]
      %v1510 = vld [vmem:[#allocation2 + $0xd1] sm:$0xff]
      %v1511 = vld [vmem:[#allocation2 + $0xd9] sm:$0xff]
      %v1512 = vld [vmem:[#allocation2 + $0xe1] sm:$0xff]
      %v1513 = vld [vmem:[#allocation2 + $0xe9] sm:$0xff]
      %v1514 = vld [vmem:[#allocation2 + $0xf1] sm:$0xff]
      %v1515 = vld [vmem:[#allocation2 + $0xf9] sm:$0xff]
      %v1516 = vld [vmem:[#allocation2 + $0x101] sm:$0xff]
      %v1517 = vpack.c.bf16 %v1486, %v1485
      %v1518 = vpack.c.bf16 %v1488, %v1487
      %v1519 = vpack.c.bf16 %v1490, %v1489
      %v1520 = vpack.c.bf16 %v1492, %v1491
      %v1521 = vpack.c.bf16 %v1494, %v1493
      %v1522 = vpack.c.bf16 %v1496, %v1495
      %v1523 = vpack.c.bf16 %v1498, %v1497
      %v1524 = vpack.c.bf16 %v1500, %v1499
      %v1525 = vpack.c.bf16 %v1502, %v1501
      %v1526 = vpack.c.bf16 %v1504, %v1503
      %v1527 = vpack.c.bf16 %v1506, %v1505
      %v1528 = vpack.c.bf16 %v1508, %v1507
      %v1529 = vpack.c.bf16 %v1510, %v1509
      %v1530 = vpack.c.bf16 %v1512, %v1511
      %v1531 = vpack.c.bf16 %v1514, %v1513
      %v1532 = vpack.c.bf16 %v1516, %v1515
      %vm1533 = vmpackc.low %vm1213, %vm1213
      %vm1534 = vmpackc.low %vm1214, %vm1214
      %vm1535 = vmpackc.low %vm1215, %vm1215
      %vm1536 = vmpackc.low %vm1216, %vm1216
      %vm1537 = vmpackc.low %vm1217, %vm1217
      %vm1538 = vmpackc.low %vm1218, %vm1218
      %vm1539 = vmpackc.low %vm1219, %vm1219
      %vm1540 = vmpackc.low %vm1220, %vm1220
      %vm1541 = vmpackc.low %vm1221, %vm1221
      %vm1542 = vmpackc.low %vm1222, %vm1222
      %vm1543 = vmpackc.low %vm1223, %vm1223
      %vm1544 = vmpackc.low %vm1224, %vm1224
      %vm1545 = vmpackc.low %vm1225, %vm1225
      %vm1546 = vmpackc.low %vm1226, %vm1226
      %vm1547 = vmpackc.low %vm1227, %vm1227
      %vm1548 = vmpackc.low %vm1228, %vm1228
      %vm1549 = vmpackc.low %vm1229, %vm1229
      %vm1550 = vmpackc.low %vm1230, %vm1230
      %vm1551 = vmpackc.low %vm1231, %vm1231
      %vm1552 = vmpackc.low %vm1232, %vm1232
      %vm1553 = vmpackc.low %vm1233, %vm1233
      %vm1554 = vmpackc.low %vm1234, %vm1234
      %vm1555 = vmpackc.low %vm1235, %vm1235
      %vm1556 = vmpackc.low %vm1236, %vm1236
      %vm1557 = vmpackc.low %vm1237, %vm1237
      %vm1558 = vmpackc.low %vm1238, %vm1238
      %vm1559 = vmpackc.low %vm1239, %vm1239
      %vm1560 = vmpackc.low %vm1240, %vm1240
      %vm1561 = vmpackc.low %vm1241, %vm1241
      %vm1562 = vmpackc.low %vm1242, %vm1242
      %vm1563 = vmpackc.low %vm1243, %vm1243
      %vm1564 = vmpackc.low %vm1244, %vm1244
      %v1565 = vsel %vm1533, 65537, 0
      %v1566 = vsel %vm1534, 65537, 0
      %v1567 = vsel %vm1535, 65537, 0
      %v1568 = vsel %vm1536, 65537, 0
      %v1569 = vsel %vm1537, 65537, 0
      %v1570 = vsel %vm1538, 65537, 0
      %v1571 = vsel %vm1539, 65537, 0
      %v1572 = vsel %vm1540, 65537, 0
      %v1573 = vsel %vm1541, 65537, 0
      %v1574 = vsel %vm1542, 65537, 0
      %v1575 = vsel %vm1543, 65537, 0
      %v1576 = vsel %vm1544, 65537, 0
      %v1577 = vsel %vm1545, 65537, 0
      %v1578 = vsel %vm1546, 65537, 0
      %v1579 = vsel %vm1547, 65537, 0
      %v1580 = vsel %vm1548, 65537, 0
      %v1581 = vsel %vm1549, 65537, 0
      %v1582 = vsel %vm1550, 65537, 0
      %v1583 = vsel %vm1551, 65537, 0
      %v1584 = vsel %vm1552, 65537, 0
      %v1585 = vsel %vm1553, 65537, 0
      %v1586 = vsel %vm1554, 65537, 0
      %v1587 = vsel %vm1555, 65537, 0
      %v1588 = vsel %vm1556, 65537, 0
      %v1589 = vsel %vm1557, 65537, 0
      %v1590 = vsel %vm1558, 65537, 0
      %v1591 = vsel %vm1559, 65537, 0
      %v1592 = vsel %vm1560, 65537, 0
      %v1593 = vsel %vm1561, 65537, 0
      %v1594 = vsel %vm1562, 65537, 0
      %v1595 = vsel %vm1563, 65537, 0
      %v1596 = vsel %vm1564, 65537, 0
      %v1597 = vunpack.c.l.b16 %v1565
      %v1598 = vunpack.c.l.b16 %v1566
      %v1599 = vunpack.c.l.b16 %v1567
      %v1600 = vunpack.c.l.b16 %v1568
      %v1601 = vunpack.c.l.b16 %v1569
      %v1602 = vunpack.c.l.b16 %v1570
      %v1603 = vunpack.c.l.b16 %v1571
      %v1604 = vunpack.c.l.b16 %v1572
      %v1605 = vunpack.c.l.b16 %v1573
      %v1606 = vunpack.c.l.b16 %v1574
      %v1607 = vunpack.c.l.b16 %v1575
      %v1608 = vunpack.c.l.b16 %v1576
      %v1609 = vunpack.c.l.b16 %v1577
      %v1610 = vunpack.c.l.b16 %v1578
      %v1611 = vunpack.c.l.b16 %v1579
      %v1612 = vunpack.c.l.b16 %v1580
      %v1613 = vunpack.c.l.b16 %v1581
      %v1614 = vunpack.c.l.b16 %v1582
      %v1615 = vunpack.c.l.b16 %v1583
      %v1616 = vunpack.c.l.b16 %v1584
      %v1617 = vunpack.c.l.b16 %v1585
      %v1618 = vunpack.c.l.b16 %v1586
      %v1619 = vunpack.c.l.b16 %v1587
      %v1620 = vunpack.c.l.b16 %v1588
      %v1621 = vunpack.c.l.b16 %v1589
      %v1622 = vunpack.c.l.b16 %v1590
      %v1623 = vunpack.c.l.b16 %v1591
      %v1624 = vunpack.c.l.b16 %v1592
      %v1625 = vunpack.c.l.b16 %v1593
      %v1626 = vunpack.c.l.b16 %v1594
      %v1627 = vunpack.c.l.b16 %v1595
      %v1628 = vunpack.c.l.b16 %v1596
      %v1629 = vpack.c.b16 %v1598, %v1597
      %v1630 = vpack.c.b16 %v1600, %v1599
      %v1631 = vpack.c.b16 %v1602, %v1601
      %v1632 = vpack.c.b16 %v1604, %v1603
      %v1633 = vpack.c.b16 %v1606, %v1605
      %v1634 = vpack.c.b16 %v1608, %v1607
      %v1635 = vpack.c.b16 %v1610, %v1609
      %v1636 = vpack.c.b16 %v1612, %v1611
      %v1637 = vpack.c.b16 %v1614, %v1613
      %v1638 = vpack.c.b16 %v1616, %v1615
      %v1639 = vpack.c.b16 %v1618, %v1617
      %v1640 = vpack.c.b16 %v1620, %v1619
      %v1641 = vpack.c.b16 %v1622, %v1621
      %v1642 = vpack.c.b16 %v1624, %v1623
      %v1643 = vpack.c.b16 %v1626, %v1625
      %v1644 = vpack.c.b16 %v1628, %v1627
      %vm1645 = vcmp.ne.s16.totalorder %v1629, 0
      %vm1646 = vcmp.ne.s16.totalorder %v1630, 0
      %vm1647 = vcmp.ne.s16.totalorder %v1631, 0
      %vm1648 = vcmp.ne.s16.totalorder %v1632, 0
      %vm1649 = vcmp.ne.s16.totalorder %v1633, 0
      %vm1650 = vcmp.ne.s16.totalorder %v1634, 0
      %vm1651 = vcmp.ne.s16.totalorder %v1635, 0
      %vm1652 = vcmp.ne.s16.totalorder %v1636, 0
      %vm1653 = vcmp.ne.s16.totalorder %v1637, 0
      %vm1654 = vcmp.ne.s16.totalorder %v1638, 0
      %vm1655 = vcmp.ne.s16.totalorder %v1639, 0
      %vm1656 = vcmp.ne.s16.totalorder %v1640, 0
      %vm1657 = vcmp.ne.s16.totalorder %v1641, 0
      %vm1658 = vcmp.ne.s16.totalorder %v1642, 0
      %vm1659 = vcmp.ne.s16.totalorder %v1643, 0
      %vm1660 = vcmp.ne.s16.totalorder %v1644, 0
      %v1661 = vsel %vm1645, 0, %v1517
      %v1662 = vsel %vm1646, 0, %v1518
      %v1663 = vsel %vm1647, 0, %v1519
      %v1664 = vsel %vm1648, 0, %v1520
      %v1665 = vsel %vm1649, 0, %v1521
      %v1666 = vsel %vm1650, 0, %v1522
      %v1667 = vsel %vm1651, 0, %v1523
      %v1668 = vsel %vm1652, 0, %v1524
      %v1669 = vsel %vm1653, 0, %v1525
      %v1670 = vsel %vm1654, 0, %v1526
      %v1671 = vsel %vm1655, 0, %v1527
      %v1672 = vsel %vm1656, 0, %v1528
      %v1673 = vsel %vm1657, 0, %v1529
      %v1674 = vsel %vm1658, 0, %v1530
      %v1675 = vsel %vm1659, 0, %v1531
      %v1676 = vsel %vm1660, 0, %v1532
      %v1677 = vld [vmem:[#allocation2 + $0x107] sm:$0xff]
      %v1678 = vld [vmem:[#allocation2 + $0x10f] sm:$0xff]
      %v1679 = vpack.c.bf16 %v1678, %v1677
      %v1680 = vsel %vm1405, 0, %v1278
      %v1681 = vsel %vm1406, 0, %v1279
      %v1682 = vsel %vm1407, 0, %v1280
      %v1683 = vsel %vm1408, 0, %v1281
      %v1684 = vsel %vm1409, 0, %v1282
      %v1685 = vsel %vm1410, 0, %v1283
      %v1686 = vsel %vm1411, 0, %v1284
      %v1687 = vsel %vm1412, 0, %v1285
      %v1688 = vsel %vm1413, 0, %v1286
      %v1689 = vsel %vm1414, 0, %v1287
      %v1690 = vsel %vm1415, 0, %v1288
      %v1691 = vsel %vm1416, 0, %v1289
      %v1692 = vsel %vm1417, 0, %v1290
      %v1693 = vsel %vm1418, 0, %v1291
      %v1694 = vsel %vm1419, 0, %v1292
      %v1695 = vsel %vm1420, 0, %v1679
      %v1696 = vld [vmem:[#allocation2 + $0x108] sm:$0xff]
      %v1697 = vld [vmem:[#allocation2 + $0x110] sm:$0xff]
      %v1698 = vpack.c.bf16 %v1697, %v1696
      %v1699 = vld [vmem:[#allocation2 + $0x109] sm:$0xff]
      %v1700 = vld [vmem:[#allocation2 + $0x111] sm:$0xff]
      %v1701 = vpack.c.bf16 %v1700, %v1699
      %v1702 = vsel %vm1645, 0, %v1518
      %v1703 = vsel %vm1646, 0, %v1519
      %v1704 = vsel %vm1647, 0, %v1520
      %v1705 = vsel %vm1648, 0, %v1521
      %v1706 = vsel %vm1649, 0, %v1522
      %v1707 = vsel %vm1650, 0, %v1523
      %v1708 = vsel %vm1651, 0, %v1524
      %v1709 = vsel %vm1652, 0, %v1525
      %v1710 = vsel %vm1653, 0, %v1526
      %v1711 = vsel %vm1654, 0, %v1527
      %v1712 = vsel %vm1655, 0, %v1528
      %v1713 = vsel %vm1656, 0, %v1529
      %v1714 = vsel %vm1657, 0, %v1530
      %v1715 = vsel %vm1658, 0, %v1531
      %v1716 = vsel %vm1659, 0, %v1532
      %v1717 = vsel %vm1660, 0, %v1701
      %v1718 = vld [vmem:[#allocation2 + $0x117] sm:$0xff]
      %v1719 = vld [vmem:[#allocation2 + $0x11f] sm:$0xff]
      %v1720 = vpack.c.bf16 %v1719, %v1718
      %v1721 = vsel %vm1405, 0, %v1279
      %v1722 = vsel %vm1406, 0, %v1280
      %v1723 = vsel %vm1407, 0, %v1281
      %v1724 = vsel %vm1408, 0, %v1282
      %v1725 = vsel %vm1409, 0, %v1283
      %v1726 = vsel %vm1410, 0, %v1284
      %v1727 = vsel %vm1411, 0, %v1285
      %v1728 = vsel %vm1412, 0, %v1286
      %v1729 = vsel %vm1413, 0, %v1287
      %v1730 = vsel %vm1414, 0, %v1288
      %v1731 = vsel %vm1415, 0, %v1289
      %v1732 = vsel %vm1416, 0, %v1290
      %v1733 = vsel %vm1417, 0, %v1291
      %v1734 = vsel %vm1418, 0, %v1292
      %v1735 = vsel %vm1419, 0, %v1679
      %v1736 = vsel %vm1420, 0, %v1720
      %v1737 = vld [vmem:[#allocation2 + $0x118] sm:$0xff]
      %v1738 = vld [vmem:[#allocation2 + $0x120] sm:$0xff]
      %v1739 = vpack.c.bf16 %v1738, %v1737
      %v1740 = vld [vmem:[#allocation2 + $0x119] sm:$0xff]
      %v1741 = vld [vmem:[#allocation2 + $0x121] sm:$0xff]
      %v1742 = vpack.c.bf16 %v1741, %v1740
      %v1743 = vsel %vm1645, 0, %v1519
      %v1744 = vsel %vm1646, 0, %v1520
      %v1745 = vsel %vm1647, 0, %v1521
      %v1746 = vsel %vm1648, 0, %v1522
      %v1747 = vsel %vm1649, 0, %v1523
      %v1748 = vsel %vm1650, 0, %v1524
      %v1749 = vsel %vm1651, 0, %v1525
      %v1750 = vsel %vm1652, 0, %v1526
      %v1751 = vsel %vm1653, 0, %v1527
      %v1752 = vsel %vm1654, 0, %v1528
      %v1753 = vsel %vm1655, 0, %v1529
      %v1754 = vsel %vm1656, 0, %v1530
      %v1755 = vsel %vm1657, 0, %v1531
      %v1756 = vsel %vm1658, 0, %v1532
      %v1757 = vsel %vm1659, 0, %v1701
      %v1758 = vsel %vm1660, 0, %v1742
      %1775 = vrot.lane.b32.xlu0 %v1469, 8
      %v1776 = vpop.permute.xlu0 %1775
      %1777 = vrot.lane.b32.xlu0 %v1470, 8
      %v1778 = vpop.permute.xlu0 %1777
      %1779 = vrot.lane.b32.xlu0 %v1471, 8
      %v1780 = vpop.permute.xlu0 %1779
      %1781 = vrot.lane.b32.xlu0 %v1472, 8
      %v1782 = vpop.permute.xlu0 %1781
      %1783 = vrot.lane.b32.xlu0 %v1473, 8
      %v1784 = vpop.permute.xlu0 %1783
      %1785 = vrot.lane.b32.xlu0 %v1474, 8
      %v1786 = vpop.permute.xlu0 %1785
      %1787 = vrot.lane.b32.xlu0 %v1475, 8
      %v1788 = vpop.permute.xlu0 %1787
      %1789 = vrot.lane.b32.xlu0 %v1476, 8
      %v1790 = vpop.permute.xlu0 %1789
      %1791 = vrot.lane.b32.xlu0 %v1477, 8
      %v1792 = vpop.permute.xlu0 %1791
      %1793 = vrot.lane.b32.xlu0 %v1478, 8
      %v1794 = vpop.permute.xlu0 %1793
      %1795 = vrot.lane.b32.xlu0 %v1479, 8
      %v1796 = vpop.permute.xlu0 %1795
      %1797 = vrot.lane.b32.xlu0 %v1480, 8
      %v1798 = vpop.permute.xlu0 %1797
      %1799 = vrot.lane.b32.xlu0 %v1481, 8
      %v1800 = vpop.permute.xlu0 %1799
      %1801 = vrot.lane.b32.xlu0 %v1482, 8
      %v1802 = vpop.permute.xlu0 %1801
      %1803 = vrot.lane.b32.xlu0 %v1483, 8
      %v1804 = vpop.permute.xlu0 %1803
      %1805 = vrot.lane.b32.xlu0 %v1484, 8
      %v1806 = vpop.permute.xlu0 %1805
      %1823 = vrot.lane.b32.xlu0 %v1661, 16
      %v1824 = vpop.permute.xlu0 %1823
      %1825 = vrot.lane.b32.xlu0 %v1662, 16
      %v1826 = vpop.permute.xlu0 %1825
      %1827 = vrot.lane.b32.xlu0 %v1663, 16
      %v1828 = vpop.permute.xlu0 %1827
      %1829 = vrot.lane.b32.xlu0 %v1664, 16
      %v1830 = vpop.permute.xlu0 %1829
      %1831 = vrot.lane.b32.xlu0 %v1665, 16
      %v1832 = vpop.permute.xlu0 %1831
      %1833 = vrot.lane.b32.xlu0 %v1666, 16
      %v1834 = vpop.permute.xlu0 %1833
      %1835 = vrot.lane.b32.xlu0 %v1667, 16
      %v1836 = vpop.permute.xlu0 %1835
      %1837 = vrot.lane.b32.xlu0 %v1668, 16
      %v1838 = vpop.permute.xlu0 %1837
      %1839 = vrot.lane.b32.xlu0 %v1669, 16
      %v1840 = vpop.permute.xlu0 %1839
      %1841 = vrot.lane.b32.xlu0 %v1670, 16
      %v1842 = vpop.permute.xlu0 %1841
      %1843 = vrot.lane.b32.xlu0 %v1671, 16
      %v1844 = vpop.permute.xlu0 %1843
      %1845 = vrot.lane.b32.xlu0 %v1672, 16
      %v1846 = vpop.permute.xlu0 %1845
      %1847 = vrot.lane.b32.xlu0 %v1673, 16
      %v1848 = vpop.permute.xlu0 %1847
      %1849 = vrot.lane.b32.xlu0 %v1674, 16
      %v1850 = vpop.permute.xlu0 %1849
      %1851 = vrot.lane.b32.xlu0 %v1675, 16
      %v1852 = vpop.permute.xlu0 %1851
      %1853 = vrot.lane.b32.xlu0 %v1676, 16
      %v1854 = vpop.permute.xlu0 %1853
      %1871 = vrot.lane.b32.xlu0 %v1680, 24
      %v1872 = vpop.permute.xlu0 %1871
      %1873 = vrot.lane.b32.xlu0 %v1681, 24
      %v1874 = vpop.permute.xlu0 %1873
      %1875 = vrot.lane.b32.xlu0 %v1682, 24
      %v1876 = vpop.permute.xlu0 %1875
      %1877 = vrot.lane.b32.xlu0 %v1683, 24
      %v1878 = vpop.permute.xlu0 %1877
      %1879 = vrot.lane.b32.xlu0 %v1684, 24
      %v1880 = vpop.permute.xlu0 %1879
      %1881 = vrot.lane.b32.xlu0 %v1685, 24
      %v1882 = vpop.permute.xlu0 %1881
      %1883 = vrot.lane.b32.xlu0 %v1686, 24
      %v1884 = vpop.permute.xlu0 %1883
      %1885 = vrot.lane.b32.xlu0 %v1687, 24
      %v1886 = vpop.permute.xlu0 %1885
      %1887 = vrot.lane.b32.xlu0 %v1688, 24
      %v1888 = vpop.permute.xlu0 %1887
      %1889 = vrot.lane.b32.xlu0 %v1689, 24
      %v1890 = vpop.permute.xlu0 %1889
      %1891 = vrot.lane.b32.xlu0 %v1690, 24
      %v1892 = vpop.permute.xlu0 %1891
      %1893 = vrot.lane.b32.xlu0 %v1691, 24
      %v1894 = vpop.permute.xlu0 %1893
      %1895 = vrot.lane.b32.xlu0 %v1692, 24
      %v1896 = vpop.permute.xlu0 %1895
      %1897 = vrot.lane.b32.xlu0 %v1693, 24
      %v1898 = vpop.permute.xlu0 %1897
      %1899 = vrot.lane.b32.xlu0 %v1694, 24
      %v1900 = vpop.permute.xlu0 %1899
      %1901 = vrot.lane.b32.xlu0 %v1695, 24
      %v1902 = vpop.permute.xlu0 %1901
      %1904 = vrot.lane.b32.xlu0 %v1470, 32
      %v1905 = vpop.permute.xlu0 %1904
      %1906 = vrot.lane.b32.xlu0 %v1471, 32
      %v1907 = vpop.permute.xlu0 %1906
      %1908 = vrot.lane.b32.xlu0 %v1472, 32
      %v1909 = vpop.permute.xlu0 %1908
      %1910 = vrot.lane.b32.xlu0 %v1473, 32
      %v1911 = vpop.permute.xlu0 %1910
      %1912 = vrot.lane.b32.xlu0 %v1474, 32
      %v1913 = vpop.permute.xlu0 %1912
      %1914 = vrot.lane.b32.xlu0 %v1475, 32
      %v1915 = vpop.permute.xlu0 %1914
      %1916 = vrot.lane.b32.xlu0 %v1476, 32
      %v1917 = vpop.permute.xlu0 %1916
      %1918 = vrot.lane.b32.xlu0 %v1477, 32
      %v1919 = vpop.permute.xlu0 %1918
      %1920 = vrot.lane.b32.xlu0 %v1478, 32
      %v1921 = vpop.permute.xlu0 %1920
      %1922 = vrot.lane.b32.xlu0 %v1479, 32
      %v1923 = vpop.permute.xlu0 %1922
      %1924 = vrot.lane.b32.xlu0 %v1480, 32
      %v1925 = vpop.permute.xlu0 %1924
      %1926 = vrot.lane.b32.xlu0 %v1481, 32
      %v1927 = vpop.permute.xlu0 %1926
      %1928 = vrot.lane.b32.xlu0 %v1482, 32
      %v1929 = vpop.permute.xlu0 %1928
      %1930 = vrot.lane.b32.xlu0 %v1483, 32
      %v1931 = vpop.permute.xlu0 %1930
      %1932 = vrot.lane.b32.xlu0 %v1484, 32
      %v1933 = vpop.permute.xlu0 %1932
      %1934 = vrot.lane.b32.xlu0 %v1698, 32
      %v1935 = vpop.permute.xlu0 %1934
      %1952 = vrot.lane.b32.xlu0 %v1702, 40
      %v1953 = vpop.permute.xlu0 %1952
      %1954 = vrot.lane.b32.xlu0 %v1703, 40
      %v1955 = vpop.permute.xlu0 %1954
      %1956 = vrot.lane.b32.xlu0 %v1704, 40
      %v1957 = vpop.permute.xlu0 %1956
      %1958 = vrot.lane.b32.xlu0 %v1705, 40
      %v1959 = vpop.permute.xlu0 %1958
      %1960 = vrot.lane.b32.xlu0 %v1706, 40
      %v1961 = vpop.permute.xlu0 %1960
      %1962 = vrot.lane.b32.xlu0 %v1707, 40
      %v1963 = vpop.permute.xlu0 %1962
      %1964 = vrot.lane.b32.xlu0 %v1708, 40
      %v1965 = vpop.permute.xlu0 %1964
      %1966 = vrot.lane.b32.xlu0 %v1709, 40
      %v1967 = vpop.permute.xlu0 %1966
      %1968 = vrot.lane.b32.xlu0 %v1710, 40
      %v1969 = vpop.permute.xlu0 %1968
      %1970 = vrot.lane.b32.xlu0 %v1711, 40
      %v1971 = vpop.permute.xlu0 %1970
      %1972 = vrot.lane.b32.xlu0 %v1712, 40
      %v1973 = vpop.permute.xlu0 %1972
      %1974 = vrot.lane.b32.xlu0 %v1713, 40
      %v1975 = vpop.permute.xlu0 %1974
      %1976 = vrot.lane.b32.xlu0 %v1714, 40
      %v1977 = vpop.permute.xlu0 %1976
      %1978 = vrot.lane.b32.xlu0 %v1715, 40
      %v1979 = vpop.permute.xlu0 %1978
      %1980 = vrot.lane.b32.xlu0 %v1716, 40
      %v1981 = vpop.permute.xlu0 %1980
      %1982 = vrot.lane.b32.xlu0 %v1717, 40
      %v1983 = vpop.permute.xlu0 %1982
      %2000 = vrot.lane.b32.xlu0 %v1721, 48
      %v2001 = vpop.permute.xlu0 %2000
      %2002 = vrot.lane.b32.xlu0 %v1722, 48
      %v2003 = vpop.permute.xlu0 %2002
      %2004 = vrot.lane.b32.xlu0 %v1723, 48
      %v2005 = vpop.permute.xlu0 %2004
      %2006 = vrot.lane.b32.xlu0 %v1724, 48
      %v2007 = vpop.permute.xlu0 %2006
      %2008 = vrot.lane.b32.xlu0 %v1725, 48
      %v2009 = vpop.permute.xlu0 %2008
      %2010 = vrot.lane.b32.xlu0 %v1726, 48
      %v2011 = vpop.permute.xlu0 %2010
      %2012 = vrot.lane.b32.xlu0 %v1727, 48
      %v2013 = vpop.permute.xlu0 %2012
      %2014 = vrot.lane.b32.xlu0 %v1728, 48
      %v2015 = vpop.permute.xlu0 %2014
      %2016 = vrot.lane.b32.xlu0 %v1729, 48
      %v2017 = vpop.permute.xlu0 %2016
      %2018 = vrot.lane.b32.xlu0 %v1730, 48
      %v2019 = vpop.permute.xlu0 %2018
      %2020 = vrot.lane.b32.xlu0 %v1731, 48
      %v2021 = vpop.permute.xlu0 %2020
      %2022 = vrot.lane.b32.xlu0 %v1732, 48
      %v2023 = vpop.permute.xlu0 %2022
      %2024 = vrot.lane.b32.xlu0 %v1733, 48
      %v2025 = vpop.permute.xlu0 %2024
      %2026 = vrot.lane.b32.xlu0 %v1734, 48
      %v2027 = vpop.permute.xlu0 %2026
      %2028 = vrot.lane.b32.xlu0 %v1735, 48
      %v2029 = vpop.permute.xlu0 %2028
      %2030 = vrot.lane.b32.xlu0 %v1736, 48
      %v2031 = vpop.permute.xlu0 %2030
      %2033 = vrot.lane.b32.xlu0 %v1471, 56
      %v2034 = vpop.permute.xlu0 %2033
      %2035 = vrot.lane.b32.xlu0 %v1472, 56
      %v2036 = vpop.permute.xlu0 %2035
      %2037 = vrot.lane.b32.xlu0 %v1473, 56
      %v2038 = vpop.permute.xlu0 %2037
      %2039 = vrot.lane.b32.xlu0 %v1474, 56
      %v2040 = vpop.permute.xlu0 %2039
      %2041 = vrot.lane.b32.xlu0 %v1475, 56
      %v2042 = vpop.permute.xlu0 %2041
      %2043 = vrot.lane.b32.xlu0 %v1476, 56
      %v2044 = vpop.permute.xlu0 %2043
      %2045 = vrot.lane.b32.xlu0 %v1477, 56
      %v2046 = vpop.permute.xlu0 %2045
      %2047 = vrot.lane.b32.xlu0 %v1478, 56
      %v2048 = vpop.permute.xlu0 %2047
      %2049 = vrot.lane.b32.xlu0 %v1479, 56
      %v2050 = vpop.permute.xlu0 %2049
      %2051 = vrot.lane.b32.xlu0 %v1480, 56
      %v2052 = vpop.permute.xlu0 %2051
      %2053 = vrot.lane.b32.xlu0 %v1481, 56
      %v2054 = vpop.permute.xlu0 %2053
      %2055 = vrot.lane.b32.xlu0 %v1482, 56
      %v2056 = vpop.permute.xlu0 %2055
      %2057 = vrot.lane.b32.xlu0 %v1483, 56
      %v2058 = vpop.permute.xlu0 %2057
      %2059 = vrot.lane.b32.xlu0 %v1484, 56
      %v2060 = vpop.permute.xlu0 %2059
      %2061 = vrot.lane.b32.xlu0 %v1698, 56
      %v2062 = vpop.permute.xlu0 %2061
      %2063 = vrot.lane.b32.xlu0 %v1739, 56
      %v2064 = vpop.permute.xlu0 %2063
      %2081 = vrot.lane.b32.xlu0 %v1743, 64
      %v2082 = vpop.permute.xlu0 %2081
      %2083 = vrot.lane.b32.xlu0 %v1744, 64
      %v2084 = vpop.permute.xlu0 %2083
      %2085 = vrot.lane.b32.xlu0 %v1745, 64
      %v2086 = vpop.permute.xlu0 %2085
      %2087 = vrot.lane.b32.xlu0 %v1746, 64
      %v2088 = vpop.permute.xlu0 %2087
      %2089 = vrot.lane.b32.xlu0 %v1747, 64
      %v2090 = vpop.permute.xlu0 %2089
      %2091 = vrot.lane.b32.xlu0 %v1748, 64
      %v2092 = vpop.permute.xlu0 %2091
      %2093 = vrot.lane.b32.xlu0 %v1749, 64
      %v2094 = vpop.permute.xlu0 %2093
      %2095 = vrot.lane.b32.xlu0 %v1750, 64
      %v2096 = vpop.permute.xlu0 %2095
      %2097 = vrot.lane.b32.xlu0 %v1751, 64
      %v2098 = vpop.permute.xlu0 %2097
      %2099 = vrot.lane.b32.xlu0 %v1752, 64
      %v2100 = vpop.permute.xlu0 %2099
      %2101 = vrot.lane.b32.xlu0 %v1753, 64
      %v2102 = vpop.permute.xlu0 %2101
      %2103 = vrot.lane.b32.xlu0 %v1754, 64
      %v2104 = vpop.permute.xlu0 %2103
      %2105 = vrot.lane.b32.xlu0 %v1755, 64
      %v2106 = vpop.permute.xlu0 %2105
      %2107 = vrot.lane.b32.xlu0 %v1756, 64
      %v2108 = vpop.permute.xlu0 %2107
      %2109 = vrot.lane.b32.xlu0 %v1757, 64
      %v2110 = vpop.permute.xlu0 %2109
      %2111 = vrot.lane.b32.xlu0 %v1758, 64
      %v2112 = vpop.permute.xlu0 %2111
      %v2115 = vsel %vm692, %v1421, %v1776
      %v2118 = vsel %vm692, %v1422, %v1778
      %v2121 = vsel %vm692, %v1423, %v1780
      %v2124 = vsel %vm692, %v1424, %v1782
      %v2127 = vsel %vm692, %v1425, %v1784
      %v2130 = vsel %vm692, %v1426, %v1786
      %v2133 = vsel %vm692, %v1427, %v1788
      %v2136 = vsel %vm692, %v1428, %v1790
      %v2139 = vsel %vm692, %v1429, %v1792
      %v2142 = vsel %vm692, %v1430, %v1794
      %v2145 = vsel %vm692, %v1431, %v1796
      %v2148 = vsel %vm692, %v1432, %v1798
      %v2151 = vsel %vm692, %v1433, %v1800
      %v2154 = vsel %vm692, %v1434, %v1802
      %v2157 = vsel %vm692, %v1435, %v1804
      %v2160 = vsel %vm692, %v1436, %v1806
      %vm2161 = vcmask 130048
      %v2163 = vsel %vm2161, %v2115, %v1824
      %v2165 = vsel %vm2161, %v2118, %v1826
      %v2167 = vsel %vm2161, %v2121, %v1828
      %v2169 = vsel %vm2161, %v2124, %v1830
      %v2171 = vsel %vm2161, %v2127, %v1832
      %v2173 = vsel %vm2161, %v2130, %v1834
      %v2175 = vsel %vm2161, %v2133, %v1836
      %v2177 = vsel %vm2161, %v2136, %v1838
      %v2179 = vsel %vm2161, %v2139, %v1840
      %v2181 = vsel %vm2161, %v2142, %v1842
      %v2183 = vsel %vm2161, %v2145, %v1844
      %v2185 = vsel %vm2161, %v2148, %v1846
      %v2187 = vsel %vm2161, %v2151, %v1848
      %v2189 = vsel %vm2161, %v2154, %v1850
      %v2191 = vsel %vm2161, %v2157, %v1852
      %v2193 = vsel %vm2161, %v2160, %v1854
      %vm2194 = vcmask 195584
      %v2196 = vsel %vm2194, %v2163, %v1872
      %v2198 = vsel %vm2194, %v2165, %v1874
      %v2200 = vsel %vm2194, %v2167, %v1876
      %v2202 = vsel %vm2194, %v2169, %v1878
      %v2204 = vsel %vm2194, %v2171, %v1880
      %v2206 = vsel %vm2194, %v2173, %v1882
      %v2208 = vsel %vm2194, %v2175, %v1884
      %v2210 = vsel %vm2194, %v2177, %v1886
      %v2212 = vsel %vm2194, %v2179, %v1888
      %v2214 = vsel %vm2194, %v2181, %v1890
      %v2216 = vsel %vm2194, %v2183, %v1892
      %v2218 = vsel %vm2194, %v2185, %v1894
      %v2220 = vsel %vm2194, %v2187, %v1896
      %v2222 = vsel %vm2194, %v2189, %v1898
      %v2224 = vsel %vm2194, %v2191, %v1900
      %v2226 = vsel %vm2194, %v2193, %v1902
      %vm2227 = vcmask 261120
      %v2229 = vsel %vm2227, %v2196, %v1905
      %v2231 = vsel %vm2227, %v2198, %v1907
      %v2233 = vsel %vm2227, %v2200, %v1909
      %v2235 = vsel %vm2227, %v2202, %v1911
      %v2237 = vsel %vm2227, %v2204, %v1913
      %v2239 = vsel %vm2227, %v2206, %v1915
      %v2241 = vsel %vm2227, %v2208, %v1917
      %v2243 = vsel %vm2227, %v2210, %v1919
      %v2245 = vsel %vm2227, %v2212, %v1921
      %v2247 = vsel %vm2227, %v2214, %v1923
      %v2249 = vsel %vm2227, %v2216, %v1925
      %v2251 = vsel %vm2227, %v2218, %v1927
      %v2253 = vsel %vm2227, %v2220, %v1929
      %v2255 = vsel %vm2227, %v2222, %v1931
      %v2257 = vsel %vm2227, %v2224, %v1933
      %v2259 = vsel %vm2227, %v2226, %v1935
      %vm2260 = vcmask 326656
      %v2262 = vsel %vm2260, %v2229, %v1953
      %v2264 = vsel %vm2260, %v2231, %v1955
      %v2266 = vsel %vm2260, %v2233, %v1957
      %v2268 = vsel %vm2260, %v2235, %v1959
      %v2270 = vsel %vm2260, %v2237, %v1961
      %v2272 = vsel %vm2260, %v2239, %v1963
      %v2274 = vsel %vm2260, %v2241, %v1965
      %v2276 = vsel %vm2260, %v2243, %v1967
      %v2278 = vsel %vm2260, %v2245, %v1969
      %v2280 = vsel %vm2260, %v2247, %v1971
      %v2282 = vsel %vm2260, %v2249, %v1973
      %v2284 = vsel %vm2260, %v2251, %v1975
      %v2286 = vsel %vm2260, %v2253, %v1977
      %v2288 = vsel %vm2260, %v2255, %v1979
      %v2290 = vsel %vm2260, %v2257, %v1981
      %v2292 = vsel %vm2260, %v2259, %v1983
      %vm2293 = vcmask 392192
      %v2295 = vsel %vm2293, %v2262, %v2001
      %v2297 = vsel %vm2293, %v2264, %v2003
      %v2299 = vsel %vm2293, %v2266, %v2005
      %v2301 = vsel %vm2293, %v2268, %v2007
      %v2303 = vsel %vm2293, %v2270, %v2009
      %v2305 = vsel %vm2293, %v2272, %v2011
      %v2307 = vsel %vm2293, %v2274, %v2013
      %v2309 = vsel %vm2293, %v2276, %v2015
      %v2311 = vsel %vm2293, %v2278, %v2017
      %v2313 = vsel %vm2293, %v2280, %v2019
      %v2315 = vsel %vm2293, %v2282, %v2021
      %v2317 = vsel %vm2293, %v2284, %v2023
      %v2319 = vsel %vm2293, %v2286, %v2025
      %v2321 = vsel %vm2293, %v2288, %v2027
      %v2323 = vsel %vm2293, %v2290, %v2029
      %v2325 = vsel %vm2293, %v2292, %v2031
      %vm2326 = vcmask 457728
      %v2328 = vsel %vm2326, %v2295, %v2034
      %v2330 = vsel %vm2326, %v2297, %v2036
      %v2332 = vsel %vm2326, %v2299, %v2038
      %v2334 = vsel %vm2326, %v2301, %v2040
      %v2336 = vsel %vm2326, %v2303, %v2042
      %v2338 = vsel %vm2326, %v2305, %v2044
      %v2340 = vsel %vm2326, %v2307, %v2046
      %v2342 = vsel %vm2326, %v2309, %v2048
      %v2344 = vsel %vm2326, %v2311, %v2050
      %v2346 = vsel %vm2326, %v2313, %v2052
      %v2348 = vsel %vm2326, %v2315, %v2054
      %v2350 = vsel %vm2326, %v2317, %v2056
      %v2352 = vsel %vm2326, %v2319, %v2058
      %v2354 = vsel %vm2326, %v2321, %v2060
      %v2356 = vsel %vm2326, %v2323, %v2062
      %v2358 = vsel %vm2326, %v2325, %v2064
      %vm2359 = vcmask 523264
      %v2361 = vsel %vm2359, %v2328, %v2082
      %v2363 = vsel %vm2359, %v2330, %v2084
      %v2365 = vsel %vm2359, %v2332, %v2086
      %v2367 = vsel %vm2359, %v2334, %v2088
      %v2369 = vsel %vm2359, %v2336, %v2090
      %v2371 = vsel %vm2359, %v2338, %v2092
      %v2373 = vsel %vm2359, %v2340, %v2094
      %v2375 = vsel %vm2359, %v2342, %v2096
      %v2377 = vsel %vm2359, %v2344, %v2098
      %v2379 = vsel %vm2359, %v2346, %v2100
      %v2381 = vsel %vm2359, %v2348, %v2102
      %v2383 = vsel %vm2359, %v2350, %v2104
      %v2385 = vsel %vm2359, %v2352, %v2106
      %v2387 = vsel %vm2359, %v2354, %v2108
      %v2389 = vsel %vm2359, %v2356, %v2110
      %v2391 = vsel %vm2359, %v2358, %v2112
      %v2392 = vld [vmem:[%s1] sm:$0xf]
      %v2393 = vld [vmem:[%s1 + $0x4] sm:$0xf]
      %v2394 = vld [vmem:[%s1 + $0x8] sm:$0xf]
      %v2395 = vld [vmem:[%s1 + $0xc] sm:$0xf]
      %v2396 = vld [vmem:[%s1 + $0x10] sm:$0xf]
      %v2397 = vld [vmem:[%s1 + $0x14] sm:$0xf]
      %v2398 = vld [vmem:[%s1 + $0x18] sm:$0xf]
      %v2399 = vld [vmem:[%s1 + $0x1c] sm:$0xf]
      %v2400 = vld [vmem:[%s1 + $0x20] sm:$0xf]
      %v2401 = vld [vmem:[%s2] sm:$0x1]
      %v2403 = vlaneseq
      %v2404 = vshrl.u32 %v2403, 7
      %v2405 = vsub.s32 0, %v2404
      %v2406 = vrot.slane %v2401, %v2405
      %v2417 = vunpack.c.l.b16 %v2392
      %v2418 = vunpack.c.l.b16 %v2393
      %v2419 = vunpack.c.l.b16 %v2394
      %v2420 = vunpack.c.l.b16 %v2395
      %v2421 = vunpack.c.l.b16 %v2396
      %v2422 = vunpack.c.l.b16 %v2397
      %v2423 = vunpack.c.l.b16 %v2398
      %v2424 = vunpack.c.l.b16 %v2399
      %v2425 = vunpack.c.l.b16 %v2400
      %v2426 = vpack.c.b16 %v2418, %v2417
      %v2427 = vpack.c.b16 %v2420, %v2419
      %v2428 = vpack.c.b16 %v2422, %v2421
      %v2429 = vpack.c.b16 %v2424, %v2423
      %v2430 = vpack.c.b16 %v2425, %v2425
      %vm2435 = vcmask 588800
      %v2436 = vsel %vm2435, %v2361, 0
      %v2438 = vsel %vm2435, %v2363, 0
      %v2440 = vsel %vm2435, %v2365, 0
      %v2442 = vsel %vm2435, %v2367, 0
      %v2444 = vsel %vm2435, %v2369, 0
      %v2446 = vsel %vm2435, %v2371, 0
      %v2448 = vsel %vm2435, %v2373, 0
      %v2450 = vsel %vm2435, %v2375, 0
      %v2452 = vsel %vm2435, %v2377, 0
      %v2454 = vsel %vm2435, %v2379, 0
      %v2456 = vsel %vm2435, %v2381, 0
      %v2458 = vsel %vm2435, %v2383, 0
      %v2460 = vsel %vm2435, %v2385, 0
      %v2462 = vsel %vm2435, %v2387, 0
      %v2464 = vsel %vm2435, %v2389, 0
      %v2466 = vsel %vm2435, %v2391, 0
      %vm2468 = vcmask 1043456
      %v2470 = vsel %vm2468, %v2430, 0
      %2472 = vmatprep.subr.bf16.mxu0 0
      %2473 = vmatpush1.bf16.msra.mxu0 0
      %2474 = vmatprep.subr.bf16.mxu0 0
      %2475 = vmatpush1.bf16.msra.mxu0 0
      %2476 = vmatprep.subr.bf16.mxu0 0
      %2477 = vmatpush1.bf16.msra.mxu0 0
      %2478 = vmatprep.subr.bf16.mxu0 0
      %2479 = vmatpush1.bf16.msra.mxu0 %v2470
      %2480 = vmatprep.subr.bf16.mxu0 0
      %2481 = vmatpush1.bf16.msra.mxu0 %v2429
      %2482 = vmatprep.subr.bf16.mxu0 0
      %2483 = vmatpush1.bf16.msra.mxu0 %v2428
      %2484 = vmatprep.subr.bf16.mxu0 0
      %2485 = vmatpush1.bf16.msra.mxu0 %v2427
      %2486 = vmatprep.subr.bf16.mxu0 0
      %2487 = vmatpush1.bf16.msra.mxu0 %v2426
      %2488 = vmatprep.subr.bf16.mxu0 0
      %2489 = vmatpush2.bf16.msra.mxu0 0
      %2490 = vmatprep.subr.bf16.mxu0 0
      %2491 = vmatpush2.bf16.msra.mxu0 0
      %2492 = vmatprep.subr.bf16.mxu0 0
      %2493 = vmatpush2.bf16.msra.mxu0 0
      %2494 = vmatprep.subr.bf16.mxu0 0
      %2495 = vmatpush2.bf16.msra.mxu0 0
      %2496 = vmatprep.subr.bf16.mxu0 0
      %2497 = vmatpush2.bf16.msra.mxu0 0
      %2498 = vmatprep.subr.bf16.mxu0 0
      %2499 = vmatpush2.bf16.msra.mxu0 0
      %2500 = vmatprep.subr.bf16.mxu0 0
      %2501 = vmatpush2.bf16.msra.mxu0 0
      %2502 = vmatprep.subr.bf16.mxu0 0
      %2503 = vmatpush2.bf16.msra.mxu0 0
      %2504 = vmatprep.mubr.bf16.mxu0 0
      %2505 = vmatmul.mubr.bf16.gmra.mxu0 %v2436
      %v2506 = vpop.f32.mrf.mxu0
      %v2507 = vadd.f32 %v2406, %v2506
      %v2508 = vpop.f32.mrf.mxu0
      %v2509 = vpop.f32.mrf.mxu0
      %v2510 = vadd.f32 %v2406, %v2509
      %v2511 = vpop.f32.mrf.mxu0
      %2512 = vmatprep.mubr.bf16.mxu0 0
      %2513 = vmatmul.mubr.bf16.gmra.mxu0 %v2438
      %v2514 = vpop.f32.mrf.mxu0
      %v2515 = vadd.f32 %v2406, %v2514
      %v2516 = vpop.f32.mrf.mxu0
      %v2517 = vpop.f32.mrf.mxu0
      %v2518 = vadd.f32 %v2406, %v2517
      %v2519 = vpop.f32.mrf.mxu0
      %2520 = vmatprep.mubr.bf16.mxu0 0
      %2521 = vmatmul.mubr.bf16.gmra.mxu0 %v2440
      %v2522 = vpop.f32.mrf.mxu0
      %v2523 = vadd.f32 %v2406, %v2522
      %v2524 = vpop.f32.mrf.mxu0
      %v2525 = vpop.f32.mrf.mxu0
      %v2526 = vadd.f32 %v2406, %v2525
      %v2527 = vpop.f32.mrf.mxu0
      %2528 = vmatprep.mubr.bf16.mxu0 0
      %2529 = vmatmul.mubr.bf16.gmra.mxu0 %v2442
      %v2530 = vpop.f32.mrf.mxu0
      %v2531 = vadd.f32 %v2406, %v2530
      %v2532 = vpop.f32.mrf.mxu0
      %v2533 = vpop.f32.mrf.mxu0
      %v2534 = vadd.f32 %v2406, %v2533
      %v2535 = vpop.f32.mrf.mxu0
      %2536 = vmatprep.mubr.bf16.mxu0 0
      %2537 = vmatmul.mubr.bf16.gmra.mxu0 %v2444
      %v2538 = vpop.f32.mrf.mxu0
      %v2539 = vadd.f32 %v2406, %v2538
      %v2540 = vpop.f32.mrf.mxu0
      %v2541 = vpop.f32.mrf.mxu0
      %v2542 = vadd.f32 %v2406, %v2541
      %v2543 = vpop.f32.mrf.mxu0
      %2544 = vmatprep.mubr.bf16.mxu0 0
      %2545 = vmatmul.mubr.bf16.gmra.mxu0 %v2446
      %v2546 = vpop.f32.mrf.mxu0
      %v2547 = vadd.f32 %v2406, %v2546
      %v2548 = vpop.f32.mrf.mxu0
      %v2549 = vpop.f32.mrf.mxu0
      %v2550 = vadd.f32 %v2406, %v2549
      %v2551 = vpop.f32.mrf.mxu0
      %2552 = vmatprep.mubr.bf16.mxu0 0
      %2553 = vmatmul.mubr.bf16.gmra.mxu0 %v2448
      %v2554 = vpop.f32.mrf.mxu0
      %v2555 = vadd.f32 %v2406, %v2554
      %v2556 = vpop.f32.mrf.mxu0
      %v2557 = vpop.f32.mrf.mxu0
      %v2558 = vadd.f32 %v2406, %v2557
      %v2559 = vpop.f32.mrf.mxu0
      %2560 = vmatprep.mubr.bf16.mxu0 0
      %2561 = vmatmul.mubr.bf16.gmra.mxu0 %v2450
      %v2562 = vpop.f32.mrf.mxu0
      %v2563 = vadd.f32 %v2406, %v2562
      %v2564 = vpop.f32.mrf.mxu0
      %v2565 = vpop.f32.mrf.mxu0
      %v2566 = vadd.f32 %v2406, %v2565
      %v2567 = vpop.f32.mrf.mxu0
      %2568 = vmatprep.mubr.bf16.mxu0 0
      %2569 = vmatmul.mubr.bf16.gmra.mxu0 %v2452
      %v2570 = vpop.f32.mrf.mxu0
      %v2571 = vadd.f32 %v2406, %v2570
      %v2572 = vpop.f32.mrf.mxu0
      %v2573 = vpop.f32.mrf.mxu0
      %v2574 = vadd.f32 %v2406, %v2573
      %v2575 = vpop.f32.mrf.mxu0
      %2576 = vmatprep.mubr.bf16.mxu0 0
      %2577 = vmatmul.mubr.bf16.gmra.mxu0 %v2454
      %v2578 = vpop.f32.mrf.mxu0
      %v2579 = vadd.f32 %v2406, %v2578
      %v2580 = vpop.f32.mrf.mxu0
      %v2581 = vpop.f32.mrf.mxu0
      %v2582 = vadd.f32 %v2406, %v2581
      %v2583 = vpop.f32.mrf.mxu0
      %2584 = vmatprep.mubr.bf16.mxu0 0
      %2585 = vmatmul.mubr.bf16.gmra.mxu0 %v2456
      %v2586 = vpop.f32.mrf.mxu0
      %v2587 = vadd.f32 %v2406, %v2586
      %v2588 = vpop.f32.mrf.mxu0
      %v2589 = vpop.f32.mrf.mxu0
      %v2590 = vadd.f32 %v2406, %v2589
      %v2591 = vpop.f32.mrf.mxu0
      %2592 = vmatprep.mubr.bf16.mxu0 0
      %2593 = vmatmul.mubr.bf16.gmra.mxu0 %v2458
      %v2594 = vpop.f32.mrf.mxu0
      %v2595 = vadd.f32 %v2406, %v2594
      %v2596 = vpop.f32.mrf.mxu0
      %v2597 = vpop.f32.mrf.mxu0
      %v2598 = vadd.f32 %v2406, %v2597
      %v2599 = vpop.f32.mrf.mxu0
      %2600 = vmatprep.mubr.bf16.mxu0 0
      %2601 = vmatmul.mubr.bf16.gmra.mxu0 %v2460
      %v2602 = vpop.f32.mrf.mxu0
      %v2603 = vadd.f32 %v2406, %v2602
      %v2604 = vpop.f32.mrf.mxu0
      %v2605 = vpop.f32.mrf.mxu0
      %v2606 = vadd.f32 %v2406, %v2605
      %v2607 = vpop.f32.mrf.mxu0
      %2608 = vmatprep.mubr.bf16.mxu0 0
      %2609 = vmatmul.mubr.bf16.gmra.mxu0 %v2462
      %v2610 = vpop.f32.mrf.mxu0
      %v2611 = vadd.f32 %v2406, %v2610
      %v2612 = vpop.f32.mrf.mxu0
      %v2613 = vpop.f32.mrf.mxu0
      %v2614 = vadd.f32 %v2406, %v2613
      %v2615 = vpop.f32.mrf.mxu0
      %2616 = vmatprep.mubr.bf16.mxu0 0
      %2617 = vmatmul.mubr.bf16.gmra.mxu0 %v2464
      %v2618 = vpop.f32.mrf.mxu0
      %v2619 = vadd.f32 %v2406, %v2618
      %v2620 = vpop.f32.mrf.mxu0
      %v2621 = vpop.f32.mrf.mxu0
      %v2622 = vadd.f32 %v2406, %v2621
      %v2623 = vpop.f32.mrf.mxu0
      %2624 = vmatprep.mubr.bf16.mxu0 0
      %2625 = vmatmul.mubr.bf16.gmra.mxu0 %v2466
      %v2626 = vpop.f32.mrf.mxu0
      %v2627 = vadd.f32 %v2406, %v2626
      %v2628 = vpop.f32.mrf.mxu0
      %v2629 = vpop.f32.mrf.mxu0
      %v2630 = vadd.f32 %v2406, %v2629
      %v2631 = vpop.f32.mrf.mxu0
      %2632 = vdwg.mxu0
      %v2633 = vmax.f32 %v2507, 0.0
      %v2634 = vmax.f32 %v2510, 0.0
      %v2635 = vmax.f32 %v2515, 0.0
      %v2636 = vmax.f32 %v2518, 0.0
      %v2637 = vmax.f32 %v2523, 0.0
      %v2638 = vmax.f32 %v2526, 0.0
      %v2639 = vmax.f32 %v2531, 0.0
      %v2640 = vmax.f32 %v2534, 0.0
      %v2641 = vmax.f32 %v2539, 0.0
      %v2642 = vmax.f32 %v2542, 0.0
      %v2643 = vmax.f32 %v2547, 0.0
      %v2644 = vmax.f32 %v2550, 0.0
      %v2645 = vmax.f32 %v2555, 0.0
      %v2646 = vmax.f32 %v2558, 0.0
      %v2647 = vmax.f32 %v2563, 0.0
      %v2648 = vmax.f32 %v2566, 0.0
      %v2649 = vmax.f32 %v2571, 0.0
      %v2650 = vmax.f32 %v2574, 0.0
      %v2651 = vmax.f32 %v2579, 0.0
      %v2652 = vmax.f32 %v2582, 0.0
      %v2653 = vmax.f32 %v2587, 0.0
      %v2654 = vmax.f32 %v2590, 0.0
      %v2655 = vmax.f32 %v2595, 0.0
      %v2656 = vmax.f32 %v2598, 0.0
      %v2657 = vmax.f32 %v2603, 0.0
      %v2658 = vmax.f32 %v2606, 0.0
      %v2659 = vmax.f32 %v2611, 0.0
      %v2660 = vmax.f32 %v2614, 0.0
      %v2661 = vmax.f32 %v2619, 0.0
      %v2662 = vmax.f32 %v2622, 0.0
      %v2663 = vmax.f32 %v2627, 0.0
      %v2664 = vmax.f32 %v2630, 0.0
      %2665 = vst.msk [vmem:[#allocation9] sm:$0xff] %vm2359, %v2633
      %2666 = vst.msk [vmem:[#allocation9 + $0x8] sm:$0xff] %vm2359, %v2634
      %2667 = vst.msk [vmem:[#allocation9 + $0x10] sm:$0xff] %vm2359, %v2635
      %2668 = vst.msk [vmem:[#allocation9 + $0x18] sm:$0xff] %vm2359, %v2636
      %2669 = vst.msk [vmem:[#allocation9 + $0x20] sm:$0xff] %vm2359, %v2637
      %2670 = vst.msk [vmem:[#allocation9 + $0x28] sm:$0xff] %vm2359, %v2638
      %2671 = vst.msk [vmem:[#allocation9 + $0x30] sm:$0xff] %vm2359, %v2639
      %2672 = vst.msk [vmem:[#allocation9 + $0x38] sm:$0xff] %vm2359, %v2640
      %2673 = vst.msk [vmem:[#allocation9 + $0x40] sm:$0xff] %vm2359, %v2641
      %2674 = vst.msk [vmem:[#allocation9 + $0x48] sm:$0xff] %vm2359, %v2642
      %2675 = vst.msk [vmem:[#allocation9 + $0x50] sm:$0xff] %vm2359, %v2643
      %2676 = vst.msk [vmem:[#allocation9 + $0x58] sm:$0xff] %vm2359, %v2644
      %2677 = vst.msk [vmem:[#allocation9 + $0x60] sm:$0xff] %vm2359, %v2645
      %2678 = vst.msk [vmem:[#allocation9 + $0x68] sm:$0xff] %vm2359, %v2646
      %2679 = vst.msk [vmem:[#allocation9 + $0x70] sm:$0xff] %vm2359, %v2647
      %2680 = vst.msk [vmem:[#allocation9 + $0x78] sm:$0xff] %vm2359, %v2648
      %2681 = vst.msk [vmem:[#allocation9 + $0x80] sm:$0xff] %vm2359, %v2649
      %2682 = vst.msk [vmem:[#allocation9 + $0x88] sm:$0xff] %vm2359, %v2650
      %2683 = vst.msk [vmem:[#allocation9 + $0x90] sm:$0xff] %vm2359, %v2651
      %2684 = vst.msk [vmem:[#allocation9 + $0x98] sm:$0xff] %vm2359, %v2652
      %2685 = vst.msk [vmem:[#allocation9 + $0xa0] sm:$0xff] %vm2359, %v2653
      %2686 = vst.msk [vmem:[#allocation9 + $0xa8] sm:$0xff] %vm2359, %v2654
      %2687 = vst.msk [vmem:[#allocation9 + $0xb0] sm:$0xff] %vm2359, %v2655
      %2688 = vst.msk [vmem:[#allocation9 + $0xb8] sm:$0xff] %vm2359, %v2656
      %2689 = vst.msk [vmem:[#allocation9 + $0xc0] sm:$0xff] %vm2359, %v2657
      %2690 = vst.msk [vmem:[#allocation9 + $0xc8] sm:$0xff] %vm2359, %v2658
      %2691 = vst.msk [vmem:[#allocation9 + $0xd0] sm:$0xff] %vm2359, %v2659
      %2692 = vst.msk [vmem:[#allocation9 + $0xd8] sm:$0xff] %vm2359, %v2660
      %2693 = vst.msk [vmem:[#allocation9 + $0xe0] sm:$0xff] %vm2359, %v2661
      %2694 = vst.msk [vmem:[#allocation9 + $0xe8] sm:$0xff] %vm2359, %v2662
      %2695 = vst.msk [vmem:[#allocation9 + $0xf0] sm:$0xff] %vm2359, %v2663
      %2696 = vst.msk [vmem:[#allocation9 + $0xf8] sm:$0xff] %vm2359, %v2664
      %2697 = vst.msk [vmem:[#allocation9 + $0x100] sm:$0xff] %vm2359, 0.0
      %2698 = vst.msk [vmem:[#allocation9 + $0x108] sm:$0xff] %vm2359, 0.0
      %vm2699 = vcmask 516096
      %2700 = vst.msk [vmem:[#allocation9 + $0x110] sm:$0x1] %vm2699, 0.0
      %v2701 = vld [vmem:[#allocation9 + $0x1] sm:$0xff]
      %v2702 = vld [vmem:[#allocation9 + $0x9] sm:$0xff]
      %v2703 = vld [vmem:[#allocation9 + $0x11] sm:$0xff]
      %v2704 = vld [vmem:[#allocation9 + $0x19] sm:$0xff]
      %v2705 = vld [vmem:[#allocation9 + $0x21] sm:$0xff]
      %v2706 = vld [vmem:[#allocation9 + $0x29] sm:$0xff]
      %v2707 = vld [vmem:[#allocation9 + $0x31] sm:$0xff]
      %v2708 = vld [vmem:[#allocation9 + $0x39] sm:$0xff]
      %v2709 = vld [vmem:[#allocation9 + $0x41] sm:$0xff]
      %v2710 = vld [vmem:[#allocation9 + $0x49] sm:$0xff]
      %v2711 = vld [vmem:[#allocation9 + $0x51] sm:$0xff]
      %v2712 = vld [vmem:[#allocation9 + $0x59] sm:$0xff]
      %v2713 = vld [vmem:[#allocation9 + $0x61] sm:$0xff]
      %v2714 = vld [vmem:[#allocation9 + $0x69] sm:$0xff]
      %v2715 = vld [vmem:[#allocation9 + $0x71] sm:$0xff]
      %v2716 = vld [vmem:[#allocation9 + $0x79] sm:$0xff]
      %v2717 = vld [vmem:[#allocation9 + $0x81] sm:$0xff]
      %v2718 = vld [vmem:[#allocation9 + $0x89] sm:$0xff]
      %v2719 = vld [vmem:[#allocation9 + $0x91] sm:$0xff]
      %v2720 = vld [vmem:[#allocation9 + $0x99] sm:$0xff]
      %v2721 = vld [vmem:[#allocation9 + $0xa1] sm:$0xff]
      %v2722 = vld [vmem:[#allocation9 + $0xa9] sm:$0xff]
      %v2723 = vld [vmem:[#allocation9 + $0xb1] sm:$0xff]
      %v2724 = vld [vmem:[#allocation9 + $0xb9] sm:$0xff]
      %v2725 = vld [vmem:[#allocation9 + $0xc1] sm:$0xff]
      %v2726 = vld [vmem:[#allocation9 + $0xc9] sm:$0xff]
      %v2727 = vld [vmem:[#allocation9 + $0xd1] sm:$0xff]
      %v2728 = vld [vmem:[#allocation9 + $0xd9] sm:$0xff]
      %v2729 = vld [vmem:[#allocation9 + $0xe1] sm:$0xff]
      %v2730 = vld [vmem:[#allocation9 + $0xe9] sm:$0xff]
      %v2731 = vld [vmem:[#allocation9 + $0xf1] sm:$0xff]
      %v2732 = vld [vmem:[#allocation9 + $0xf9] sm:$0xff]
      %v2733 = vmax.f32 %v2633, %v2701
      %v2734 = vmax.f32 %v2634, %v2702
      %v2735 = vmax.f32 %v2635, %v2703
      %v2736 = vmax.f32 %v2636, %v2704
      %v2737 = vmax.f32 %v2637, %v2705
      %v2738 = vmax.f32 %v2638, %v2706
      %v2739 = vmax.f32 %v2639, %v2707
      %v2740 = vmax.f32 %v2640, %v2708
      %v2741 = vmax.f32 %v2641, %v2709
      %v2742 = vmax.f32 %v2642, %v2710
      %v2743 = vmax.f32 %v2643, %v2711
      %v2744 = vmax.f32 %v2644, %v2712
      %v2745 = vmax.f32 %v2645, %v2713
      %v2746 = vmax.f32 %v2646, %v2714
      %v2747 = vmax.f32 %v2647, %v2715
      %v2748 = vmax.f32 %v2648, %v2716
      %v2749 = vmax.f32 %v2649, %v2717
      %v2750 = vmax.f32 %v2650, %v2718
      %v2751 = vmax.f32 %v2651, %v2719
      %v2752 = vmax.f32 %v2652, %v2720
      %v2753 = vmax.f32 %v2653, %v2721
      %v2754 = vmax.f32 %v2654, %v2722
      %v2755 = vmax.f32 %v2655, %v2723
      %v2756 = vmax.f32 %v2656, %v2724
      %v2757 = vmax.f32 %v2657, %v2725
      %v2758 = vmax.f32 %v2658, %v2726
      %v2759 = vmax.f32 %v2659, %v2727
      %v2760 = vmax.f32 %v2660, %v2728
      %v2761 = vmax.f32 %v2661, %v2729
      %v2762 = vmax.f32 %v2662, %v2730
      %v2763 = vmax.f32 %v2663, %v2731
      %v2764 = vmax.f32 %v2664, %v2732
      %v2765 = vld [vmem:[#allocation9 + $0x10] sm:$0xff]
      %v2766 = vld [vmem:[#allocation9 + $0x18] sm:$0xff]
      %v2767 = vld [vmem:[#allocation9 + $0x20] sm:$0xff]
      %v2768 = vld [vmem:[#allocation9 + $0x28] sm:$0xff]
      %v2769 = vld [vmem:[#allocation9 + $0x30] sm:$0xff]
      %v2770 = vld [vmem:[#allocation9 + $0x38] sm:$0xff]
      %v2771 = vld [vmem:[#allocation9 + $0x40] sm:$0xff]
      %v2772 = vld [vmem:[#allocation9 + $0x48] sm:$0xff]
      %v2773 = vld [vmem:[#allocation9 + $0x50] sm:$0xff]
      %v2774 = vld [vmem:[#allocation9 + $0x58] sm:$0xff]
      %v2775 = vld [vmem:[#allocation9 + $0x60] sm:$0xff]
      %v2776 = vld [vmem:[#allocation9 + $0x68] sm:$0xff]
      %v2777 = vld [vmem:[#allocation9 + $0x70] sm:$0xff]
      %v2778 = vld [vmem:[#allocation9 + $0x78] sm:$0xff]
      %v2779 = vld [vmem:[#allocation9 + $0x80] sm:$0xff]
      %v2780 = vld [vmem:[#allocation9 + $0x88] sm:$0xff]
      %v2781 = vld [vmem:[#allocation9 + $0x90] sm:$0xff]
      %v2782 = vld [vmem:[#allocation9 + $0x98] sm:$0xff]
      %v2783 = vld [vmem:[#allocation9 + $0xa0] sm:$0xff]
      %v2784 = vld [vmem:[#allocation9 + $0xa8] sm:$0xff]
      %v2785 = vld [vmem:[#allocation9 + $0xb0] sm:$0xff]
      %v2786 = vld [vmem:[#allocation9 + $0xb8] sm:$0xff]
      %v2787 = vld [vmem:[#allocation9 + $0xc0] sm:$0xff]
      %v2788 = vld [vmem:[#allocation9 + $0xc8] sm:$0xff]
      %v2789 = vld [vmem:[#allocation9 + $0xd0] sm:$0xff]
      %v2790 = vld [vmem:[#allocation9 + $0xd8] sm:$0xff]
      %v2791 = vld [vmem:[#allocation9 + $0xe0] sm:$0xff]
      %v2792 = vld [vmem:[#allocation9 + $0xe8] sm:$0xff]
      %v2793 = vld [vmem:[#allocation9 + $0xf0] sm:$0xff]
      %v2794 = vld [vmem:[#allocation9 + $0xf8] sm:$0xff]
      %v2795 = vld [vmem:[#allocation9 + $0x100] sm:$0xff]
      %v2796 = vld [vmem:[#allocation9 + $0x108] sm:$0xff]
      %v2797 = vld [vmem:[#allocation9 + $0x101] sm:$0xff]
      %v2798 = vld [vmem:[#allocation9 + $0x109] sm:$0xff]
      %v2799 = vmax.f32 %v2765, %v2703
      %v2800 = vmax.f32 %v2766, %v2704
      %v2801 = vmax.f32 %v2767, %v2705
      %v2802 = vmax.f32 %v2768, %v2706
      %v2803 = vmax.f32 %v2769, %v2707
      %v2804 = vmax.f32 %v2770, %v2708
      %v2805 = vmax.f32 %v2771, %v2709
      %v2806 = vmax.f32 %v2772, %v2710
      %v2807 = vmax.f32 %v2773, %v2711
      %v2808 = vmax.f32 %v2774, %v2712
      %v2809 = vmax.f32 %v2775, %v2713
      %v2810 = vmax.f32 %v2776, %v2714
      %v2811 = vmax.f32 %v2777, %v2715
      %v2812 = vmax.f32 %v2778, %v2716
      %v2813 = vmax.f32 %v2779, %v2717
      %v2814 = vmax.f32 %v2780, %v2718
      %v2815 = vmax.f32 %v2781, %v2719
      %v2816 = vmax.f32 %v2782, %v2720
      %v2817 = vmax.f32 %v2783, %v2721
      %v2818 = vmax.f32 %v2784, %v2722
      %v2819 = vmax.f32 %v2785, %v2723
      %v2820 = vmax.f32 %v2786, %v2724
      %v2821 = vmax.f32 %v2787, %v2725
      %v2822 = vmax.f32 %v2788, %v2726
      %v2823 = vmax.f32 %v2789, %v2727
      %v2824 = vmax.f32 %v2790, %v2728
      %v2825 = vmax.f32 %v2791, %v2729
      %v2826 = vmax.f32 %v2792, %v2730
      %v2827 = vmax.f32 %v2793, %v2731
      %v2828 = vmax.f32 %v2794, %v2732
      %v2829 = vmax.f32 %v2795, %v2797
      %v2830 = vmax.f32 %v2796, %v2798
      %v2831 = vmax.f32 %v2733, %v2799
      %v2832 = vmax.f32 %v2734, %v2800
      %v2833 = vmax.f32 %v2735, %v2801
      %v2834 = vmax.f32 %v2736, %v2802
      %v2835 = vmax.f32 %v2737, %v2803
      %v2836 = vmax.f32 %v2738, %v2804
      %v2837 = vmax.f32 %v2739, %v2805
      %v2838 = vmax.f32 %v2740, %v2806
      %v2839 = vmax.f32 %v2741, %v2807
      %v2840 = vmax.f32 %v2742, %v2808
      %v2841 = vmax.f32 %v2743, %v2809
      %v2842 = vmax.f32 %v2744, %v2810
      %v2843 = vmax.f32 %v2745, %v2811
      %v2844 = vmax.f32 %v2746, %v2812
      %v2845 = vmax.f32 %v2747, %v2813
      %v2846 = vmax.f32 %v2748, %v2814
      %v2847 = vmax.f32 %v2749, %v2815
      %v2848 = vmax.f32 %v2750, %v2816
      %v2849 = vmax.f32 %v2751, %v2817
      %v2850 = vmax.f32 %v2752, %v2818
      %v2851 = vmax.f32 %v2753, %v2819
      %v2852 = vmax.f32 %v2754, %v2820
      %v2853 = vmax.f32 %v2755, %v2821
      %v2854 = vmax.f32 %v2756, %v2822
      %v2855 = vmax.f32 %v2757, %v2823
      %v2856 = vmax.f32 %v2758, %v2824
      %v2857 = vmax.f32 %v2759, %v2825
      %v2858 = vmax.f32 %v2760, %v2826
      %v2859 = vmax.f32 %v2761, %v2827
      %v2860 = vmax.f32 %v2762, %v2828
      %v2861 = vmax.f32 %v2763, %v2829
      %v2862 = vmax.f32 %v2764, %v2830
      %v2863 = vld [vmem:[%s15] sm:$0xff]
      %v2864 = vld [vmem:[%s15 + $0x8] sm:$0xff]
      %v2865 = vld [vmem:[%s15 + $0x10] sm:$0xff]
      %v2866 = vld [vmem:[%s15 + $0x18] sm:$0xff]
      %v2867 = vld [vmem:[%s15 + $0x20] sm:$0xff]
      %v2868 = vld [vmem:[%s15 + $0x28] sm:$0xff]
      %v2869 = vld [vmem:[%s15 + $0x30] sm:$0xff]
      %v2870 = vld [vmem:[%s15 + $0x38] sm:$0xff]
      %v2871 = vpack.c.bf16 %v2832, %v2831
      %v2872 = vpack.c.bf16 %v2834, %v2833
      %v2873 = vpack.c.bf16 %v2836, %v2835
      %v2874 = vpack.c.bf16 %v2838, %v2837
      %v2875 = vpack.c.bf16 %v2840, %v2839
      %v2876 = vpack.c.bf16 %v2842, %v2841
      %v2877 = vpack.c.bf16 %v2844, %v2843
      %v2878 = vpack.c.bf16 %v2846, %v2845
      %v2879 = vpack.c.bf16 %v2848, %v2847
      %v2880 = vpack.c.bf16 %v2850, %v2849
      %v2881 = vpack.c.bf16 %v2852, %v2851
      %v2882 = vpack.c.bf16 %v2854, %v2853
      %v2883 = vpack.c.bf16 %v2856, %v2855
      %v2884 = vpack.c.bf16 %v2858, %v2857
      %v2885 = vpack.c.bf16 %v2860, %v2859
      %v2886 = vpack.c.bf16 %v2862, %v2861
      %v2895 = vunpack.c.l.b16 %v2863
      %v2896 = vunpack.c.h.b16 %v2863
      %v2897 = vunpack.c.l.b16 %v2864
      %v2898 = vunpack.c.h.b16 %v2864
      %v2899 = vunpack.c.l.b16 %v2865
      %v2900 = vunpack.c.h.b16 %v2865
      %v2901 = vunpack.c.l.b16 %v2866
      %v2902 = vunpack.c.h.b16 %v2866
      %v2903 = vunpack.c.l.b16 %v2867
      %v2904 = vunpack.c.h.b16 %v2867
      %v2905 = vunpack.c.l.b16 %v2868
      %v2906 = vunpack.c.h.b16 %v2868
      %v2907 = vunpack.c.l.b16 %v2869
      %v2908 = vunpack.c.h.b16 %v2869
      %v2909 = vunpack.c.l.b16 %v2870
      %v2910 = vunpack.c.h.b16 %v2870
      %v2911 = vpack.c.b16 %v2897, %v2895
      %v2912 = vpack.c.b16 %v2898, %v2896
      %v2913 = vpack.c.b16 %v2901, %v2899
      %v2914 = vpack.c.b16 %v2902, %v2900
      %v2915 = vpack.c.b16 %v2905, %v2903
      %v2916 = vpack.c.b16 %v2906, %v2904
      %v2917 = vpack.c.b16 %v2909, %v2907
      %v2918 = vpack.c.b16 %v2910, %v2908
      %2927 = vmatprep.subr.bf16.mxu0 0
      %2928 = vmatpush1.bf16.msra.mxu0 %v2878
      %2929 = vmatprep.subr.bf16.mxu0 0
      %2930 = vmatpush1.bf16.msra.mxu0 %v2877
      %2931 = vmatprep.subr.bf16.mxu0 0
      %2932 = vmatpush1.bf16.msra.mxu0 %v2876
      %2933 = vmatprep.subr.bf16.mxu0 0
      %2934 = vmatpush1.bf16.msra.mxu0 %v2875
      %2935 = vmatprep.subr.bf16.mxu0 0
      %2936 = vmatpush1.bf16.msra.mxu0 %v2874
      %2937 = vmatprep.subr.bf16.mxu0 0
      %2938 = vmatpush1.bf16.msra.mxu0 %v2873
      %2939 = vmatprep.subr.bf16.mxu0 0
      %2940 = vmatpush1.bf16.msra.mxu0 %v2872
      %2941 = vmatprep.subr.bf16.mxu0 0
      %2942 = vmatpush1.bf16.msra.mxu0 %v2871
      %2943 = vmatprep.subr.bf16.mxu0 0
      %2944 = vmatpush2.bf16.msra.mxu0 %v2886
      %2945 = vmatprep.subr.bf16.mxu0 0
      %2946 = vmatpush2.bf16.msra.mxu0 %v2885
      %2947 = vmatprep.subr.bf16.mxu0 0
      %2948 = vmatpush2.bf16.msra.mxu0 %v2884
      %2949 = vmatprep.subr.bf16.mxu0 0
      %2950 = vmatpush2.bf16.msra.mxu0 %v2883
      %2951 = vmatprep.subr.bf16.mxu0 0
      %2952 = vmatpush2.bf16.msra.mxu0 %v2882
      %2953 = vmatprep.subr.bf16.mxu0 0
      %2954 = vmatpush2.bf16.msra.mxu0 %v2881
      %2955 = vmatprep.subr.bf16.mxu0 0
      %2956 = vmatpush2.bf16.msra.mxu0 %v2880
      %2957 = vmatprep.subr.bf16.mxu0 0
      %2958 = vmatpush2.bf16.msra.mxu0 %v2879
      %2959 = vmatprep.mubr.bf16.mxu0 %v2912
      %2960 = vmatmul.mubr.bf16.gmra.mxu0 %v2911
      %v2961 = vpop.f32.mrf.mxu0
      %v2962 = vadd.f32 0.0, %v2961
      %v2963 = vpop.f32.mrf.mxu0
      %v2964 = vpop.f32.mrf.mxu0
      %v2965 = vadd.f32 0.0, %v2964
      %v2966 = vpop.f32.mrf.mxu0
      %2967 = vmatprep.mubr.bf16.mxu0 %v2914
      %2968 = vmatmul.mubr.bf16.gmra.mxu0 %v2913
      %v2969 = vpop.f32.mrf.mxu0
      %v2970 = vadd.f32 0.0, %v2969
      %v2971 = vpop.f32.mrf.mxu0
      %v2972 = vpop.f32.mrf.mxu0
      %v2973 = vadd.f32 0.0, %v2972
      %v2974 = vpop.f32.mrf.mxu0
      %2975 = vmatprep.mubr.bf16.mxu0 %v2916
      %2976 = vmatmul.mubr.bf16.gmra.mxu0 %v2915
      %v2977 = vpop.f32.mrf.mxu0
      %v2978 = vadd.f32 0.0, %v2977
      %v2979 = vpop.f32.mrf.mxu0
      %v2980 = vpop.f32.mrf.mxu0
      %v2981 = vadd.f32 0.0, %v2980
      %v2982 = vpop.f32.mrf.mxu0
      %2983 = vmatprep.mubr.bf16.mxu0 %v2918
      %2984 = vmatmul.mubr.bf16.gmra.mxu0 %v2917
      %v2985 = vpop.f32.mrf.mxu0
      %v2986 = vadd.f32 0.0, %v2985
      %v2987 = vpop.f32.mrf.mxu0
      %v2988 = vpop.f32.mrf.mxu0
      %v2989 = vadd.f32 0.0, %v2988
      %v2990 = vpop.f32.mrf.mxu0
      %2991 = vdwg.mxu0
      %v2992 = vpack.c.bf16 %v2965, %v2962
      %v2993 = vpack.c.bf16 %v2973, %v2970
      %v2994 = vpack.c.bf16 %v2981, %v2978
      %v2995 = vpack.c.bf16 %v2989, %v2986
      %2996 = vst.msk [vmem:[#allocation3] sm:$0xff] %vm2359, 0.0
      %2997 = vst.msk [vmem:[#allocation3 + $0x8] sm:$0xff] %vm2359, 0.0
      %2998 = vst.msk [vmem:[#allocation3 + $0x50] sm:$0xff] %vm2359, 0.0
      %2999 = vst.msk [vmem:[#allocation3 + $0x58] sm:$0x1] %vm2699, 0.0
      %v3000 = vunpack.c.l.bf16 %v2992
      %v3001 = vunpack.c.h.bf16 %v2992
      %v3002 = vunpack.c.l.bf16 %v2993
      %v3003 = vunpack.c.h.bf16 %v2993
      %v3004 = vunpack.c.l.bf16 %v2994
      %v3005 = vunpack.c.h.bf16 %v2994
      %v3006 = vunpack.c.l.bf16 %v2995
      %v3007 = vunpack.c.h.bf16 %v2995
      %3008 = vst.msk [vmem:[#allocation3 + $0x10] sm:$0xff] %vm2359, %v3000
      %3009 = vst.msk [vmem:[#allocation3 + $0x18] sm:$0xff] %vm2359, %v3001
      %3010 = vst.msk [vmem:[#allocation3 + $0x20] sm:$0xff] %vm2359, %v3002
      %3011 = vst.msk [vmem:[#allocation3 + $0x28] sm:$0xff] %vm2359, %v3003
      %3012 = vst.msk [vmem:[#allocation3 + $0x30] sm:$0xff] %vm2359, %v3004
      %3013 = vst.msk [vmem:[#allocation3 + $0x38] sm:$0xff] %vm2359, %v3005
      %3014 = vst.msk [vmem:[#allocation3 + $0x40] sm:$0xff] %vm2359, %v3006
      %3015 = vst.msk [vmem:[#allocation3 + $0x48] sm:$0xff] %vm2359, %v3007
      %vm3016 = vcmp.lt.s32.totalorder %v765, 0
      %v3017 = vsub.s32 0, %v765
      %v3018 = vsel %vm3016, %v3017, %v765
      %v3019 = vshrl.u32 %v3018, 3
      %v3020 = vand.u32 %v3018, 7
      %v3021 = vsub.s32 0, %v3020
      %v3022 = vsel %vm3016, %v3021, %v3020
      %vm3023 = vcmp.lt.s32.totalorder %v766, 0
      %v3024 = vsub.s32 0, %v766
      %v3025 = vsel %vm3023, %v3024, %v766
      %v3026 = vshrl.u32 %v3025, 3
      %v3027 = vand.u32 %v3025, 7
      %v3028 = vsub.s32 0, %v3027
      %v3029 = vsel %vm3023, %v3028, %v3027
      %vm3030 = vcmp.lt.s32.totalorder %v767, 0
      %v3031 = vsub.s32 0, %v767
      %v3032 = vsel %vm3030, %v3031, %v767
      %v3033 = vshrl.u32 %v3032, 3
      %v3034 = vand.u32 %v3032, 7
      %v3035 = vsub.s32 0, %v3034
      %v3036 = vsel %vm3030, %v3035, %v3034
      %vm3037 = vcmp.lt.s32.totalorder %v768, 0
      %v3038 = vsub.s32 0, %v768
      %v3039 = vsel %vm3037, %v3038, %v768
      %v3040 = vshrl.u32 %v3039, 3
      %v3041 = vand.u32 %v3039, 7
      %v3042 = vsub.s32 0, %v3041
      %v3043 = vsel %vm3037, %v3042, %v3041
      %vm3044 = vcmp.lt.s32.totalorder %v769, 0
      %v3045 = vsub.s32 0, %v769
      %v3046 = vsel %vm3044, %v3045, %v769
      %v3047 = vshrl.u32 %v3046, 3
      %v3048 = vand.u32 %v3046, 7
      %v3049 = vsub.s32 0, %v3048
      %v3050 = vsel %vm3044, %v3049, %v3048
      %vm3051 = vcmp.lt.s32.totalorder %v770, 0
      %v3052 = vsub.s32 0, %v770
      %v3053 = vsel %vm3051, %v3052, %v770
      %v3054 = vshrl.u32 %v3053, 3
      %v3055 = vand.u32 %v3053, 7
      %v3056 = vsub.s32 0, %v3055
      %v3057 = vsel %vm3051, %v3056, %v3055
      %vm3058 = vcmp.lt.s32.totalorder %v771, 0
      %v3059 = vsub.s32 0, %v771
      %v3060 = vsel %vm3058, %v3059, %v771
      %v3061 = vshrl.u32 %v3060, 3
      %v3062 = vand.u32 %v3060, 7
      %v3063 = vsub.s32 0, %v3062
      %v3064 = vsel %vm3058, %v3063, %v3062
      %vm3065 = vcmp.lt.s32.totalorder %v772, 0
      %v3066 = vsub.s32 0, %v772
      %v3067 = vsel %vm3065, %v3066, %v772
      %v3068 = vshrl.u32 %v3067, 3
      %v3069 = vand.u32 %v3067, 7
      %v3070 = vsub.s32 0, %v3069
      %v3071 = vsel %vm3065, %v3070, %v3069
      %vm3072 = vcmp.ne.s32.totalorder %v3022, 0
      %vm3073 = vcmp.ne.s32.totalorder %v3029, 0
      %vm3074 = vcmp.ne.s32.totalorder %v3036, 0
      %vm3075 = vcmp.ne.s32.totalorder %v3043, 0
      %vm3076 = vcmp.ne.s32.totalorder %v3050, 0
      %vm3077 = vcmp.ne.s32.totalorder %v3057, 0
      %vm3078 = vcmp.ne.s32.totalorder %v3064, 0
      %vm3079 = vcmp.ne.s32.totalorder %v3071, 0
      %vm3080 = vcmp.lt.s32.totalorder %v3022, 0
      %vm3081 = vcmp.lt.s32.totalorder %v3029, 0
      %vm3082 = vcmp.lt.s32.totalorder %v3036, 0
      %vm3083 = vcmp.lt.s32.totalorder %v3043, 0
      %vm3084 = vcmp.lt.s32.totalorder %v3050, 0
      %vm3085 = vcmp.lt.s32.totalorder %v3057, 0
      %vm3086 = vcmp.lt.s32.totalorder %v3064, 0
      %vm3087 = vcmp.lt.s32.totalorder %v3071, 0
      %vm3088 = vmand %vm3080, %vm3072
      %vm3089 = vmand %vm3081, %vm3073
      %vm3090 = vmand %vm3082, %vm3074
      %vm3091 = vmand %vm3083, %vm3075
      %vm3092 = vmand %vm3084, %vm3076
      %vm3093 = vmand %vm3085, %vm3077
      %vm3094 = vmand %vm3086, %vm3078
      %vm3095 = vmand %vm3087, %vm3079
      %v3096 = vadd.s32 %v3022, 8
      %v3097 = vadd.s32 %v3029, 8
      %v3098 = vadd.s32 %v3036, 8
      %v3099 = vadd.s32 %v3043, 8
      %v3100 = vadd.s32 %v3050, 8
      %v3101 = vadd.s32 %v3057, 8
      %v3102 = vadd.s32 %v3064, 8
      %v3103 = vadd.s32 %v3071, 8
      %v3104 = vsel %vm3088, %v3096, %v3022
      %v3105 = vsel %vm3089, %v3097, %v3029
      %v3106 = vsel %vm3090, %v3098, %v3036
      %v3107 = vsel %vm3091, %v3099, %v3043
      %v3108 = vsel %vm3092, %v3100, %v3050
      %v3109 = vsel %vm3093, %v3101, %v3057
      %v3110 = vsel %vm3094, %v3102, %v3064
      %v3111 = vsel %vm3095, %v3103, %v3071
      %vm3112 = vcmp.eq.s32.totalorder %v3104, 0
      %vm3113 = vcmp.eq.s32.totalorder %v3105, 0
      %vm3114 = vcmp.eq.s32.totalorder %v3106, 0
      %vm3115 = vcmp.eq.s32.totalorder %v3107, 0
      %vm3116 = vcmp.eq.s32.totalorder %v3108, 0
      %vm3117 = vcmp.eq.s32.totalorder %v3109, 0
      %vm3118 = vcmp.eq.s32.totalorder %v3110, 0
      %vm3119 = vcmp.eq.s32.totalorder %v3111, 0
      %vm3120 = vcmp.eq.s32.totalorder %v3104, 7
      %vm3121 = vcmp.eq.s32.totalorder %v3105, 7
      %vm3122 = vcmp.eq.s32.totalorder %v3106, 7
      %vm3123 = vcmp.eq.s32.totalorder %v3107, 7
      %vm3124 = vcmp.eq.s32.totalorder %v3108, 7
      %vm3125 = vcmp.eq.s32.totalorder %v3109, 7
      %vm3126 = vcmp.eq.s32.totalorder %v3110, 7
      %vm3127 = vcmp.eq.s32.totalorder %v3111, 7
      %v3128 = vld [vmem:[#allocation3 + $0x7] sm:$0xff]
      %v3129 = vld [vmem:[#allocation3 + $0xf] sm:$0xff]
      %v3130 = vld [vmem:[#allocation3 + $0x17] sm:$0xff]
      %v3131 = vld [vmem:[#allocation3 + $0x1f] sm:$0xff]
      %v3132 = vld [vmem:[#allocation3 + $0x27] sm:$0xff]
      %v3133 = vld [vmem:[#allocation3 + $0x2f] sm:$0xff]
      %v3134 = vld [vmem:[#allocation3 + $0x37] sm:$0xff]
      %v3135 = vld [vmem:[#allocation3 + $0x3f] sm:$0xff]
      %v3136 = vpack.c.bf16 %v3129, %v3128
      %v3137 = vpack.c.bf16 %v3131, %v3130
      %v3138 = vpack.c.bf16 %v3133, %v3132
      %v3139 = vpack.c.bf16 %v3135, %v3134
      %vm3140 = vmpackc.low %vm3112, %vm3112
      %vm3141 = vmpackc.low %vm3113, %vm3113
      %vm3142 = vmpackc.low %vm3114, %vm3114
      %vm3143 = vmpackc.low %vm3115, %vm3115
      %vm3144 = vmpackc.low %vm3116, %vm3116
      %vm3145 = vmpackc.low %vm3117, %vm3117
      %vm3146 = vmpackc.low %vm3118, %vm3118
      %vm3147 = vmpackc.low %vm3119, %vm3119
      %v3148 = vsel %vm3140, 65537, 0
      %v3149 = vsel %vm3141, 65537, 0
      %v3150 = vsel %vm3142, 65537, 0
      %v3151 = vsel %vm3143, 65537, 0
      %v3152 = vsel %vm3144, 65537, 0
      %v3153 = vsel %vm3145, 65537, 0
      %v3154 = vsel %vm3146, 65537, 0
      %v3155 = vsel %vm3147, 65537, 0
      %v3156 = vunpack.c.l.b16 %v3148
      %v3157 = vunpack.c.l.b16 %v3149
      %v3158 = vunpack.c.l.b16 %v3150
      %v3159 = vunpack.c.l.b16 %v3151
      %v3160 = vunpack.c.l.b16 %v3152
      %v3161 = vunpack.c.l.b16 %v3153
      %v3162 = vunpack.c.l.b16 %v3154
      %v3163 = vunpack.c.l.b16 %v3155
      %v3164 = vpack.c.b16 %v3157, %v3156
      %v3165 = vpack.c.b16 %v3159, %v3158
      %v3166 = vpack.c.b16 %v3161, %v3160
      %v3167 = vpack.c.b16 %v3163, %v3162
      %vm3168 = vcmp.ne.s16.totalorder %v3164, 0
      %vm3169 = vcmp.ne.s16.totalorder %v3165, 0
      %vm3170 = vcmp.ne.s16.totalorder %v3166, 0
      %vm3171 = vcmp.ne.s16.totalorder %v3167, 0
      %v3172 = vsel %vm3168, 0, %v3136
      %v3173 = vsel %vm3169, 0, %v3137
      %v3174 = vsel %vm3170, 0, %v3138
      %v3175 = vsel %vm3171, 0, %v3139
      %v3176 = vld [vmem:[#allocation3 + $0x8] sm:$0xff]
      %v3177 = vld [vmem:[#allocation3 + $0x10] sm:$0xff]
      %v3178 = vld [vmem:[#allocation3 + $0x18] sm:$0xff]
      %v3179 = vld [vmem:[#allocation3 + $0x20] sm:$0xff]
      %v3180 = vld [vmem:[#allocation3 + $0x28] sm:$0xff]
      %v3181 = vld [vmem:[#allocation3 + $0x30] sm:$0xff]
      %v3182 = vld [vmem:[#allocation3 + $0x38] sm:$0xff]
      %v3183 = vld [vmem:[#allocation3 + $0x40] sm:$0xff]
      %v3184 = vpack.c.bf16 %v3177, %v3176
      %v3185 = vpack.c.bf16 %v3179, %v3178
      %v3186 = vpack.c.bf16 %v3181, %v3180
      %v3187 = vpack.c.bf16 %v3183, %v3182
      %v3188 = vld [vmem:[#allocation3 + $0x9] sm:$0xff]
      %v3189 = vld [vmem:[#allocation3 + $0x11] sm:$0xff]
      %v3190 = vld [vmem:[#allocation3 + $0x19] sm:$0xff]
      %v3191 = vld [vmem:[#allocation3 + $0x21] sm:$0xff]
      %v3192 = vld [vmem:[#allocation3 + $0x29] sm:$0xff]
      %v3193 = vld [vmem:[#allocation3 + $0x31] sm:$0xff]
      %v3194 = vld [vmem:[#allocation3 + $0x39] sm:$0xff]
      %v3195 = vld [vmem:[#allocation3 + $0x41] sm:$0xff]
      %v3196 = vpack.c.bf16 %v3189, %v3188
      %v3197 = vpack.c.bf16 %v3191, %v3190
      %v3198 = vpack.c.bf16 %v3193, %v3192
      %v3199 = vpack.c.bf16 %v3195, %v3194
      %vm3200 = vmpackc.low %vm3120, %vm3120
      %vm3201 = vmpackc.low %vm3121, %vm3121
      %vm3202 = vmpackc.low %vm3122, %vm3122
      %vm3203 = vmpackc.low %vm3123, %vm3123
      %vm3204 = vmpackc.low %vm3124, %vm3124
      %vm3205 = vmpackc.low %vm3125, %vm3125
      %vm3206 = vmpackc.low %vm3126, %vm3126
      %vm3207 = vmpackc.low %vm3127, %vm3127
      %v3208 = vsel %vm3200, 65537, 0
      %v3209 = vsel %vm3201, 65537, 0
      %v3210 = vsel %vm3202, 65537, 0
      %v3211 = vsel %vm3203, 65537, 0
      %v3212 = vsel %vm3204, 65537, 0
      %v3213 = vsel %vm3205, 65537, 0
      %v3214 = vsel %vm3206, 65537, 0
      %v3215 = vsel %vm3207, 65537, 0
      %v3216 = vunpack.c.l.b16 %v3208
      %v3217 = vunpack.c.l.b16 %v3209
      %v3218 = vunpack.c.l.b16 %v3210
      %v3219 = vunpack.c.l.b16 %v3211
      %v3220 = vunpack.c.l.b16 %v3212
      %v3221 = vunpack.c.l.b16 %v3213
      %v3222 = vunpack.c.l.b16 %v3214
      %v3223 = vunpack.c.l.b16 %v3215
      %v3224 = vpack.c.b16 %v3217, %v3216
      %v3225 = vpack.c.b16 %v3219, %v3218
      %v3226 = vpack.c.b16 %v3221, %v3220
      %v3227 = vpack.c.b16 %v3223, %v3222
      %vm3228 = vcmp.ne.s16.totalorder %v3224, 0
      %vm3229 = vcmp.ne.s16.totalorder %v3225, 0
      %vm3230 = vcmp.ne.s16.totalorder %v3226, 0
      %vm3231 = vcmp.ne.s16.totalorder %v3227, 0
      %v3232 = vsel %vm3228, 0, %v3196
      %v3233 = vsel %vm3229, 0, %v3197
      %v3234 = vsel %vm3230, 0, %v3198
      %v3235 = vsel %vm3231, 0, %v3199
      %v3236 = vld [vmem:[#allocation3 + $0x47] sm:$0xff]
      %v3237 = vpack.c.bf16 %v3130, %v3129
      %v3238 = vpack.c.bf16 %v3132, %v3131
      %v3239 = vpack.c.bf16 %v3134, %v3133
      %v3240 = vpack.c.bf16 %v3236, %v3135
      %v3241 = vsel %vm3168, 0, %v3237
      %v3242 = vsel %vm3169, 0, %v3238
      %v3243 = vsel %vm3170, 0, %v3239
      %v3244 = vsel %vm3171, 0, %v3240
      %v3245 = vld [vmem:[#allocation3 + $0x48] sm:$0xff]
      %v3246 = vpack.c.bf16 %v3178, %v3177
      %v3247 = vpack.c.bf16 %v3180, %v3179
      %v3248 = vpack.c.bf16 %v3182, %v3181
      %v3249 = vpack.c.bf16 %v3245, %v3183
      %v3250 = vld [vmem:[#allocation3 + $0x49] sm:$0xff]
      %v3251 = vpack.c.bf16 %v3190, %v3189
      %v3252 = vpack.c.bf16 %v3192, %v3191
      %v3253 = vpack.c.bf16 %v3194, %v3193
      %v3254 = vpack.c.bf16 %v3250, %v3195
      %v3255 = vsel %vm3228, 0, %v3251
      %v3256 = vsel %vm3229, 0, %v3252
      %v3257 = vsel %vm3230, 0, %v3253
      %v3258 = vsel %vm3231, 0, %v3254
      %v3259 = vld [vmem:[#allocation3 + $0x4f] sm:$0xff]
      %v3260 = vpack.c.bf16 %v3259, %v3236
      %v3261 = vsel %vm3168, 0, %v3137
      %v3262 = vsel %vm3169, 0, %v3138
      %v3263 = vsel %vm3170, 0, %v3139
      %v3264 = vsel %vm3171, 0, %v3260
      %v3265 = vld [vmem:[#allocation3 + $0x50] sm:$0xff]
      %v3266 = vpack.c.bf16 %v3265, %v3245
      %v3267 = vld [vmem:[#allocation3 + $0x51] sm:$0xff]
      %v3268 = vpack.c.bf16 %v3267, %v3250
      %v3269 = vsel %vm3228, 0, %v3197
      %v3270 = vsel %vm3229, 0, %v3198
      %v3271 = vsel %vm3230, 0, %v3199
      %v3272 = vsel %vm3231, 0, %v3268
      %3277 = vrot.lane.b32.xlu0 %v3184, 64
      %v3278 = vpop.permute.xlu0 %3277
      %3279 = vrot.lane.b32.xlu0 %v3185, 64
      %v3280 = vpop.permute.xlu0 %3279
      %3281 = vrot.lane.b32.xlu0 %v3186, 64
      %v3282 = vpop.permute.xlu0 %3281
      %3283 = vrot.lane.b32.xlu0 %v3187, 64
      %v3284 = vpop.permute.xlu0 %3283
      %3289 = vrot.lane.b32.xlu0 %v3241, 64
      %v3290 = vpop.permute.xlu0 %3289
      %3291 = vrot.lane.b32.xlu0 %v3242, 64
      %v3292 = vpop.permute.xlu0 %3291
      %3293 = vrot.lane.b32.xlu0 %v3243, 64
      %v3294 = vpop.permute.xlu0 %3293
      %3295 = vrot.lane.b32.xlu0 %v3244, 64
      %v3296 = vpop.permute.xlu0 %3295
      %3301 = vrot.lane.b32.xlu0 %v3255, 64
      %v3302 = vpop.permute.xlu0 %3301
      %3303 = vrot.lane.b32.xlu0 %v3256, 64
      %v3304 = vpop.permute.xlu0 %3303
      %3305 = vrot.lane.b32.xlu0 %v3257, 64
      %v3306 = vpop.permute.xlu0 %3305
      %3307 = vrot.lane.b32.xlu0 %v3258, 64
      %v3308 = vpop.permute.xlu0 %3307
      %3310 = vrot.lane.b32.xlu0 %v3266, 64
      %v3311 = vpop.permute.xlu0 %3310
      %v3314 = vsel %vm2359, %v3172, %v3278
      %v3318 = vsel %vm2359, %v3173, %v3280
      %v3322 = vsel %vm2359, %v3174, %v3282
      %v3326 = vsel %vm2359, %v3175, %v3284
      %v3330 = vsel %vm2359, %v3232, %v3290
      %v3334 = vsel %vm2359, %v3233, %v3292
      %v3338 = vsel %vm2359, %v3234, %v3294
      %v3342 = vsel %vm2359, %v3235, %v3296
      %v3346 = vsel %vm2359, %v3246, %v3302
      %v3350 = vsel %vm2359, %v3247, %v3304
      %v3354 = vsel %vm2359, %v3248, %v3306
      %v3358 = vsel %vm2359, %v3249, %v3308
      %v3361 = vsel %vm2359, %v3261, %v3280
      %v3364 = vsel %vm2359, %v3262, %v3282
      %v3367 = vsel %vm2359, %v3263, %v3284
      %v3371 = vsel %vm2359, %v3264, %v3311
      %v3373 = vld [vmem:[%s3] sm:$0xf]
      %v3374 = vld [vmem:[%s3 + $0x4] sm:$0xf]
      %v3375 = vld [vmem:[%s3 + $0x8] sm:$0xf]
      %v3376 = vld [vmem:[%s3 + $0xc] sm:$0xf]
      %v3377 = vld [vmem:[%s3 + $0x10] sm:$0xf]
      %v3378 = vld [vmem:[%s3 + $0x14] sm:$0xf]
      %v3379 = vld [vmem:[%s3 + $0x18] sm:$0xf]
      %v3380 = vld [vmem:[%s3 + $0x1c] sm:$0xf]
      %v3381 = vld [vmem:[%s3 + $0x20] sm:$0xf]
      %v3382 = vld [vmem:[%s3 + $0x24] sm:$0xf]
      %v3383 = vld [vmem:[%s3 + $0x28] sm:$0xf]
      %v3384 = vld [vmem:[%s3 + $0x2c] sm:$0xf]
      %v3385 = vld [vmem:[%s3 + $0x30] sm:$0xf]
      %v3386 = vld [vmem:[%s3 + $0x34] sm:$0xf]
      %v3387 = vld [vmem:[%s3 + $0x38] sm:$0xf]
      %v3388 = vld [vmem:[%s3 + $0x3c] sm:$0xf]
      %v3389 = vld [vmem:[%s3 + $0x40] sm:$0xf]
      %v3390 = vld [vmem:[%s3 + $0x44] sm:$0xf]
      %v3391 = vld [vmem:[%s3 + $0x48] sm:$0xf]
      %v3392 = vld [vmem:[%s3 + $0x4c] sm:$0xf]
      %v3393 = vld [vmem:[%s3 + $0x50] sm:$0xf]
      %v3394 = vld [vmem:[%s3 + $0x54] sm:$0xf]
      %v3395 = vld [vmem:[%s3 + $0x58] sm:$0xf]
      %v3396 = vld [vmem:[%s3 + $0x5c] sm:$0xf]
      %v3397 = vld [vmem:[%s3 + $0x60] sm:$0xf]
      %v3398 = vld [vmem:[%s3 + $0x64] sm:$0xf]
      %v3399 = vld [vmem:[%s3 + $0x68] sm:$0xf]
      %v3400 = vld [vmem:[%s3 + $0x6c] sm:$0xf]
      %v3401 = vld [vmem:[%s3 + $0x70] sm:$0xf]
      %v3402 = vld [vmem:[%s3 + $0x74] sm:$0xf]
      %v3403 = vld [vmem:[%s3 + $0x78] sm:$0xf]
      %v3404 = vld [vmem:[%s3 + $0x7c] sm:$0xf]
      %v3405 = vld [vmem:[%s3 + $0x80] sm:$0xf]
      %v3406 = vld [vmem:[%s3 + $0x84] sm:$0xf]
      %v3407 = vld [vmem:[%s3 + $0x88] sm:$0xf]
      %v3408 = vld [vmem:[%s3 + $0x8c] sm:$0xf]
      %v3409 = vld [vmem:[%s3 + $0x90] sm:$0xf]
      %v3410 = vld [vmem:[%s3 + $0x94] sm:$0xf]
      %v3411 = vld [vmem:[%s3 + $0x98] sm:$0xf]
      %v3412 = vld [vmem:[%s3 + $0x9c] sm:$0xf]
      %v3413 = vld [vmem:[%s3 + $0xa0] sm:$0xf]
      %v3414 = vld [vmem:[%s3 + $0xa4] sm:$0xf]
      %v3415 = vld [vmem:[%s3 + $0xa8] sm:$0xf]
      %v3416 = vld [vmem:[%s3 + $0xac] sm:$0xf]
      %v3417 = vld [vmem:[%s3 + $0xb0] sm:$0xf]
      %v3418 = vld [vmem:[%s3 + $0xb4] sm:$0xf]
      %v3419 = vld [vmem:[%s3 + $0xb8] sm:$0xf]
      %v3420 = vld [vmem:[%s3 + $0xbc] sm:$0xf]
      %v3421 = vld [vmem:[%s3 + $0xc0] sm:$0xf]
      %v3422 = vld [vmem:[%s3 + $0xc4] sm:$0xf]
      %v3423 = vld [vmem:[%s3 + $0xc8] sm:$0xf]
      %v3424 = vld [vmem:[%s3 + $0xcc] sm:$0xf]
      %v3425 = vld [vmem:[%s3 + $0xd0] sm:$0xf]
      %v3426 = vld [vmem:[%s3 + $0xd4] sm:$0xf]
      %v3427 = vld [vmem:[%s3 + $0xd8] sm:$0xf]
      %v3428 = vld [vmem:[%s3 + $0xdc] sm:$0xf]
      %v3429 = vld [vmem:[%s3 + $0xe0] sm:$0xf]
      %v3430 = vld [vmem:[%s3 + $0xe4] sm:$0xf]
      %v3431 = vld [vmem:[%s3 + $0xe8] sm:$0xf]
      %v3432 = vld [vmem:[%s3 + $0xec] sm:$0xf]
      %v3433 = vld [vmem:[%s3 + $0xf0] sm:$0xf]
      %v3434 = vld [vmem:[%s3 + $0xf4] sm:$0xf]
      %v3435 = vld [vmem:[%s3 + $0xf8] sm:$0xf]
      %v3436 = vld [vmem:[%s3 + $0xfc] sm:$0xf]
      %v3437 = vld [vmem:[%s3 + $0x100] sm:$0xf]
      %v3438 = vld [vmem:[%s3 + $0x104] sm:$0xf]
      %v3439 = vld [vmem:[%s3 + $0x108] sm:$0xf]
      %v3440 = vld [vmem:[%s3 + $0x10c] sm:$0xf]
      %v3441 = vld [vmem:[%s3 + $0x110] sm:$0xf]
      %v3442 = vld [vmem:[%s3 + $0x114] sm:$0xf]
      %v3443 = vld [vmem:[%s3 + $0x118] sm:$0xf]
      %v3444 = vld [vmem:[%s3 + $0x11c] sm:$0xf]
      %v3445 = vld [vmem:[%s4] sm:$0x1]
      %v3447 = vlaneseq
      %v3448 = vshrl.u32 %v3447, 7
      %v3449 = vsub.s32 0, %v3448
      %v3450 = vrot.slane %v3445, %v3449
      %v3524 = vunpack.c.l.b16 %v3373
      %v3525 = vunpack.c.l.b16 %v3374
      %v3526 = vunpack.c.l.b16 %v3375
      %v3527 = vunpack.c.l.b16 %v3376
      %v3528 = vunpack.c.l.b16 %v3377
      %v3529 = vunpack.c.l.b16 %v3378
      %v3530 = vunpack.c.l.b16 %v3379
      %v3531 = vunpack.c.l.b16 %v3380
      %v3532 = vunpack.c.l.b16 %v3381
      %v3533 = vunpack.c.l.b16 %v3382
      %v3534 = vunpack.c.l.b16 %v3383
      %v3535 = vunpack.c.l.b16 %v3384
      %v3536 = vunpack.c.l.b16 %v3385
      %v3537 = vunpack.c.l.b16 %v3386
      %v3538 = vunpack.c.l.b16 %v3387
      %v3539 = vunpack.c.l.b16 %v3388
      %v3540 = vunpack.c.l.b16 %v3389
      %v3541 = vunpack.c.l.b16 %v3390
      %v3542 = vunpack.c.l.b16 %v3391
      %v3543 = vunpack.c.l.b16 %v3392
      %v3544 = vunpack.c.l.b16 %v3393
      %v3545 = vunpack.c.l.b16 %v3394
      %v3546 = vunpack.c.l.b16 %v3395
      %v3547 = vunpack.c.l.b16 %v3396
      %v3548 = vunpack.c.l.b16 %v3397
      %v3549 = vunpack.c.l.b16 %v3398
      %v3550 = vunpack.c.l.b16 %v3399
      %v3551 = vunpack.c.l.b16 %v3400
      %v3552 = vunpack.c.l.b16 %v3401
      %v3553 = vunpack.c.l.b16 %v3402
      %v3554 = vunpack.c.l.b16 %v3403
      %v3555 = vunpack.c.l.b16 %v3404
      %v3556 = vunpack.c.l.b16 %v3405
      %v3557 = vunpack.c.l.b16 %v3406
      %v3558 = vunpack.c.l.b16 %v3407
      %v3559 = vunpack.c.l.b16 %v3408
      %v3560 = vunpack.c.l.b16 %v3409
      %v3561 = vunpack.c.l.b16 %v3410
      %v3562 = vunpack.c.l.b16 %v3411
      %v3563 = vunpack.c.l.b16 %v3412
      %v3564 = vunpack.c.l.b16 %v3413
      %v3565 = vunpack.c.l.b16 %v3414
      %v3566 = vunpack.c.l.b16 %v3415
      %v3567 = vunpack.c.l.b16 %v3416
      %v3568 = vunpack.c.l.b16 %v3417
      %v3569 = vunpack.c.l.b16 %v3418
      %v3570 = vunpack.c.l.b16 %v3419
      %v3571 = vunpack.c.l.b16 %v3420
      %v3572 = vunpack.c.l.b16 %v3421
      %v3573 = vunpack.c.l.b16 %v3422
      %v3574 = vunpack.c.l.b16 %v3423
      %v3575 = vunpack.c.l.b16 %v3424
      %v3576 = vunpack.c.l.b16 %v3425
      %v3577 = vunpack.c.l.b16 %v3426
      %v3578 = vunpack.c.l.b16 %v3427
      %v3579 = vunpack.c.l.b16 %v3428
      %v3580 = vunpack.c.l.b16 %v3429
      %v3581 = vunpack.c.l.b16 %v3430
      %v3582 = vunpack.c.l.b16 %v3431
      %v3583 = vunpack.c.l.b16 %v3432
      %v3584 = vunpack.c.l.b16 %v3433
      %v3585 = vunpack.c.l.b16 %v3434
      %v3586 = vunpack.c.l.b16 %v3435
      %v3587 = vunpack.c.l.b16 %v3436
      %v3588 = vunpack.c.l.b16 %v3437
      %v3589 = vunpack.c.l.b16 %v3438
      %v3590 = vunpack.c.l.b16 %v3439
      %v3591 = vunpack.c.l.b16 %v3440
      %v3592 = vunpack.c.l.b16 %v3441
      %v3593 = vunpack.c.l.b16 %v3442
      %v3594 = vunpack.c.l.b16 %v3443
      %v3595 = vunpack.c.l.b16 %v3444
      %v3596 = vpack.c.b16 %v3525, %v3524
      %v3597 = vpack.c.b16 %v3527, %v3526
      %v3598 = vpack.c.b16 %v3529, %v3528
      %v3599 = vpack.c.b16 %v3531, %v3530
      %v3600 = vpack.c.b16 %v3533, %v3532
      %v3601 = vpack.c.b16 %v3535, %v3534
      %v3602 = vpack.c.b16 %v3537, %v3536
      %v3603 = vpack.c.b16 %v3539, %v3538
      %v3604 = vpack.c.b16 %v3541, %v3540
      %v3605 = vpack.c.b16 %v3543, %v3542
      %v3606 = vpack.c.b16 %v3545, %v3544
      %v3607 = vpack.c.b16 %v3547, %v3546
      %v3608 = vpack.c.b16 %v3549, %v3548
      %v3609 = vpack.c.b16 %v3551, %v3550
      %v3610 = vpack.c.b16 %v3553, %v3552
      %v3611 = vpack.c.b16 %v3555, %v3554
      %v3612 = vpack.c.b16 %v3557, %v3556
      %v3613 = vpack.c.b16 %v3559, %v3558
      %v3614 = vpack.c.b16 %v3561, %v3560
      %v3615 = vpack.c.b16 %v3563, %v3562
      %v3616 = vpack.c.b16 %v3565, %v3564
      %v3617 = vpack.c.b16 %v3567, %v3566
      %v3618 = vpack.c.b16 %v3569, %v3568
      %v3619 = vpack.c.b16 %v3571, %v3570
      %v3620 = vpack.c.b16 %v3573, %v3572
      %v3621 = vpack.c.b16 %v3575, %v3574
      %v3622 = vpack.c.b16 %v3577, %v3576
      %v3623 = vpack.c.b16 %v3579, %v3578
      %v3624 = vpack.c.b16 %v3581, %v3580
      %v3625 = vpack.c.b16 %v3583, %v3582
      %v3626 = vpack.c.b16 %v3585, %v3584
      %v3627 = vpack.c.b16 %v3587, %v3586
      %v3628 = vpack.c.b16 %v3589, %v3588
      %v3629 = vpack.c.b16 %v3591, %v3590
      %v3630 = vpack.c.b16 %v3593, %v3592
      %v3631 = vpack.c.b16 %v3595, %v3594
      %v3669 = vsel %vm2359, %v3269, 0
      %v3672 = vsel %vm2359, %v3270, 0
      %v3675 = vsel %vm2359, %v3271, 0
      %v3678 = vsel %vm2359, %v3272, 0
      %3680 = vmatprep.subr.bf16.mxu0 0
      %3681 = vmatpush1.bf16.msra.mxu0 %v3603
      %3682 = vmatprep.subr.bf16.mxu0 0
      %3683 = vmatpush1.bf16.msra.mxu0 %v3602
      %3684 = vmatprep.subr.bf16.mxu0 0
      %3685 = vmatpush1.bf16.msra.mxu0 %v3601
      %3686 = vmatprep.subr.bf16.mxu0 0
      %3687 = vmatpush1.bf16.msra.mxu0 %v3600
      %3688 = vmatprep.subr.bf16.mxu0 0
      %3689 = vmatpush1.bf16.msra.mxu0 %v3599
      %3690 = vmatprep.subr.bf16.mxu0 0
      %3691 = vmatpush1.bf16.msra.mxu0 %v3598
      %3692 = vmatprep.subr.bf16.mxu0 0
      %3693 = vmatpush1.bf16.msra.mxu0 %v3597
      %3694 = vmatprep.subr.bf16.mxu0 0
      %3695 = vmatpush1.bf16.msra.mxu0 %v3596
      %3696 = vmatprep.subr.bf16.mxu0 0
      %3697 = vmatpush2.bf16.msra.mxu0 %v3611
      %3698 = vmatprep.subr.bf16.mxu0 0
      %3699 = vmatpush2.bf16.msra.mxu0 %v3610
      %3700 = vmatprep.subr.bf16.mxu0 0
      %3701 = vmatpush2.bf16.msra.mxu0 %v3609
      %3702 = vmatprep.subr.bf16.mxu0 0
      %3703 = vmatpush2.bf16.msra.mxu0 %v3608
      %3704 = vmatprep.subr.bf16.mxu0 0
      %3705 = vmatpush2.bf16.msra.mxu0 %v3607
      %3706 = vmatprep.subr.bf16.mxu0 0
      %3707 = vmatpush2.bf16.msra.mxu0 %v3606
      %3708 = vmatprep.subr.bf16.mxu0 0
      %3709 = vmatpush2.bf16.msra.mxu0 %v3605
      %3710 = vmatprep.subr.bf16.mxu0 0
      %3711 = vmatpush2.bf16.msra.mxu0 %v3604
      %3712 = vmatprep.mubr.bf16.mxu0 %v3330
      %3713 = vmatmul.mubr.bf16.gmra.mxu0 %v3314
      %v3714 = vpop.f32.mrf.mxu0
      %v3715 = vadd.f32 %v3450, %v3714
      %v3716 = vpop.f32.mrf.mxu0
      %v3717 = vpop.f32.mrf.mxu0
      %v3718 = vadd.f32 %v3450, %v3717
      %v3719 = vpop.f32.mrf.mxu0
      %3720 = vmatprep.mubr.bf16.mxu0 %v3334
      %3721 = vmatmul.mubr.bf16.gmra.mxu0 %v3318
      %v3722 = vpop.f32.mrf.mxu0
      %v3723 = vadd.f32 %v3450, %v3722
      %v3724 = vpop.f32.mrf.mxu0
      %v3725 = vpop.f32.mrf.mxu0
      %v3726 = vadd.f32 %v3450, %v3725
      %v3727 = vpop.f32.mrf.mxu0
      %3728 = vmatprep.mubr.bf16.mxu0 %v3338
      %3729 = vmatmul.mubr.bf16.gmra.mxu0 %v3322
      %v3730 = vpop.f32.mrf.mxu0
      %v3731 = vadd.f32 %v3450, %v3730
      %v3732 = vpop.f32.mrf.mxu0
      %v3733 = vpop.f32.mrf.mxu0
      %v3734 = vadd.f32 %v3450, %v3733
      %v3735 = vpop.f32.mrf.mxu0
      %3736 = vmatprep.mubr.bf16.mxu0 %v3342
      %3737 = vmatmul.mubr.bf16.gmra.mxu0 %v3326
      %v3738 = vpop.f32.mrf.mxu0
      %v3739 = vadd.f32 %v3450, %v3738
      %v3740 = vpop.f32.mrf.mxu0
      %v3741 = vpop.f32.mrf.mxu0
      %v3742 = vadd.f32 %v3450, %v3741
      %v3743 = vpop.f32.mrf.mxu0
      %3744 = vdwg.mxu0
      %3745 = vmatprep.subr.bf16.mxu0 0
      %3746 = vmatpush1.bf16.msra.mxu0 %v3619
      %3747 = vmatprep.subr.bf16.mxu0 0
      %3748 = vmatpush1.bf16.msra.mxu0 %v3618
      %3749 = vmatprep.subr.bf16.mxu0 0
      %3750 = vmatpush1.bf16.msra.mxu0 %v3617
      %3751 = vmatprep.subr.bf16.mxu0 0
      %3752 = vmatpush1.bf16.msra.mxu0 %v3616
      %3753 = vmatprep.subr.bf16.mxu0 0
      %3754 = vmatpush1.bf16.msra.mxu0 %v3615
      %3755 = vmatprep.subr.bf16.mxu0 0
      %3756 = vmatpush1.bf16.msra.mxu0 %v3614
      %3757 = vmatprep.subr.bf16.mxu0 0
      %3758 = vmatpush1.bf16.msra.mxu0 %v3613
      %3759 = vmatprep.subr.bf16.mxu0 0
      %3760 = vmatpush1.bf16.msra.mxu0 %v3612
      %3761 = vmatprep.subr.bf16.mxu0 0
      %3762 = vmatpush2.bf16.msra.mxu0 %v3627
      %3763 = vmatprep.subr.bf16.mxu0 0
      %3764 = vmatpush2.bf16.msra.mxu0 %v3626
      %3765 = vmatprep.subr.bf16.mxu0 0
      %3766 = vmatpush2.bf16.msra.mxu0 %v3625
      %3767 = vmatprep.subr.bf16.mxu0 0
      %3768 = vmatpush2.bf16.msra.mxu0 %v3624
      %3769 = vmatprep.subr.bf16.mxu0 0
      %3770 = vmatpush2.bf16.msra.mxu0 %v3623
      %3771 = vmatprep.subr.bf16.mxu0 0
      %3772 = vmatpush2.bf16.msra.mxu0 %v3622
      %3773 = vmatprep.subr.bf16.mxu0 0
      %3774 = vmatpush2.bf16.msra.mxu0 %v3621
      %3775 = vmatprep.subr.bf16.mxu0 0
      %3776 = vmatpush2.bf16.msra.mxu0 %v3620
      %3777 = vmatprep.mubr.bf16.mxu0 %v3361
      %3778 = vmatmul.mubr.bf16.gmra.mxu0 %v3346
      %v3779 = vpop.f32.mrf.mxu0
      %v3780 = vadd.f32 %v3715, %v3779
      %v3781 = vpop.f32.mrf.mxu0
      %v3782 = vpop.f32.mrf.mxu0
      %v3783 = vadd.f32 %v3718, %v3782
      %v3784 = vpop.f32.mrf.mxu0
      %3785 = vmatprep.mubr.bf16.mxu0 %v3364
      %3786 = vmatmul.mubr.bf16.gmra.mxu0 %v3350
      %v3787 = vpop.f32.mrf.mxu0
      %v3788 = vadd.f32 %v3723, %v3787
      %v3789 = vpop.f32.mrf.mxu0
      %v3790 = vpop.f32.mrf.mxu0
      %v3791 = vadd.f32 %v3726, %v3790
      %v3792 = vpop.f32.mrf.mxu0
      %3793 = vmatprep.mubr.bf16.mxu0 %v3367
      %3794 = vmatmul.mubr.bf16.gmra.mxu0 %v3354
      %v3795 = vpop.f32.mrf.mxu0
      %v3796 = vadd.f32 %v3731, %v3795
      %v3797 = vpop.f32.mrf.mxu0
      %v3798 = vpop.f32.mrf.mxu0
      %v3799 = vadd.f32 %v3734, %v3798
      %v3800 = vpop.f32.mrf.mxu0
      %3801 = vmatprep.mubr.bf16.mxu0 %v3371
      %3802 = vmatmul.mubr.bf16.gmra.mxu0 %v3358
      %v3803 = vpop.f32.mrf.mxu0
      %v3804 = vadd.f32 %v3739, %v3803
      %v3805 = vpop.f32.mrf.mxu0
      %v3806 = vpop.f32.mrf.mxu0
      %v3807 = vadd.f32 %v3742, %v3806
      %v3808 = vpop.f32.mrf.mxu0
      %3809 = vdwg.mxu0
      %3810 = vmatprep.subr.bf16.mxu0 0
      %3811 = vmatpush1.bf16.msra.mxu0 0
      %3812 = vmatprep.subr.bf16.mxu0 0
      %3813 = vmatpush1.bf16.msra.mxu0 0
      %3814 = vmatprep.subr.bf16.mxu0 0
      %3815 = vmatpush1.bf16.msra.mxu0 0
      %3816 = vmatprep.subr.bf16.mxu0 0
      %3817 = vmatpush1.bf16.msra.mxu0 0
      %3818 = vmatprep.subr.bf16.mxu0 0
      %3819 = vmatpush1.bf16.msra.mxu0 %v3631
      %3820 = vmatprep.subr.bf16.mxu0 0
      %3821 = vmatpush1.bf16.msra.mxu0 %v3630
      %3822 = vmatprep.subr.bf16.mxu0 0
      %3823 = vmatpush1.bf16.msra.mxu0 %v3629
      %3824 = vmatprep.subr.bf16.mxu0 0
      %3825 = vmatpush1.bf16.msra.mxu0 %v3628
      %3826 = vmatprep.subr.bf16.mxu0 0
      %3827 = vmatpush2.bf16.msra.mxu0 0
      %3828 = vmatprep.subr.bf16.mxu0 0
      %3829 = vmatpush2.bf16.msra.mxu0 0
      %3830 = vmatprep.subr.bf16.mxu0 0
      %3831 = vmatpush2.bf16.msra.mxu0 0
      %3832 = vmatprep.subr.bf16.mxu0 0
      %3833 = vmatpush2.bf16.msra.mxu0 0
      %3834 = vmatprep.subr.bf16.mxu0 0
      %3835 = vmatpush2.bf16.msra.mxu0 0
      %3836 = vmatprep.subr.bf16.mxu0 0
      %3837 = vmatpush2.bf16.msra.mxu0 0
      %3838 = vmatprep.subr.bf16.mxu0 0
      %3839 = vmatpush2.bf16.msra.mxu0 0
      %3840 = vmatprep.subr.bf16.mxu0 0
      %3841 = vmatpush2.bf16.msra.mxu0 0
      %3842 = vmatprep.mubr.bf16.mxu0 0
      %3843 = vmatmul.mubr.bf16.gmra.mxu0 %v3669
      %v3844 = vpop.f32.mrf.mxu0
      %v3845 = vadd.f32 %v3780, %v3844
      %v3846 = vpop.f32.mrf.mxu0
      %v3847 = vpop.f32.mrf.mxu0
      %v3848 = vadd.f32 %v3783, %v3847
      %v3849 = vpop.f32.mrf.mxu0
      %3850 = vmatprep.mubr.bf16.mxu0 0
      %3851 = vmatmul.mubr.bf16.gmra.mxu0 %v3672
      %v3852 = vpop.f32.mrf.mxu0
      %v3853 = vadd.f32 %v3788, %v3852
      %v3854 = vpop.f32.mrf.mxu0
      %v3855 = vpop.f32.mrf.mxu0
      %v3856 = vadd.f32 %v3791, %v3855
      %v3857 = vpop.f32.mrf.mxu0
      %3858 = vmatprep.mubr.bf16.mxu0 0
      %3859 = vmatmul.mubr.bf16.gmra.mxu0 %v3675
      %v3860 = vpop.f32.mrf.mxu0
      %v3861 = vadd.f32 %v3796, %v3860
      %v3862 = vpop.f32.mrf.mxu0
      %v3863 = vpop.f32.mrf.mxu0
      %v3864 = vadd.f32 %v3799, %v3863
      %v3865 = vpop.f32.mrf.mxu0
      %3866 = vmatprep.mubr.bf16.mxu0 0
      %3867 = vmatmul.mubr.bf16.gmra.mxu0 %v3678
      %v3868 = vpop.f32.mrf.mxu0
      %v3869 = vadd.f32 %v3804, %v3868
      %v3870 = vpop.f32.mrf.mxu0
      %v3871 = vpop.f32.mrf.mxu0
      %v3872 = vadd.f32 %v3807, %v3871
      %v3873 = vpop.f32.mrf.mxu0
      %3874 = vdwg.mxu0
      %v3875 = vmax.f32 %v3845, 0.0
      %v3876 = vmax.f32 %v3848, 0.0
      %v3877 = vmax.f32 %v3853, 0.0
      %v3878 = vmax.f32 %v3856, 0.0
      %v3879 = vmax.f32 %v3861, 0.0
      %v3880 = vmax.f32 %v3864, 0.0
      %v3881 = vmax.f32 %v3869, 0.0
      %v3882 = vmax.f32 %v3872, 0.0
      %3883 = vst.msk [vmem:[#allocation10] sm:$0xff] %vm2227, %v3875
      %3884 = vst.msk [vmem:[#allocation10 + $0x8] sm:$0xff] %vm2227, %v3876
      %3885 = vst.msk [vmem:[#allocation10 + $0x10] sm:$0xff] %vm2227, %v3877
      %3886 = vst.msk [vmem:[#allocation10 + $0x18] sm:$0xff] %vm2227, %v3878
      %3887 = vst.msk [vmem:[#allocation10 + $0x20] sm:$0xff] %vm2227, %v3879
      %3888 = vst.msk [vmem:[#allocation10 + $0x28] sm:$0xff] %vm2227, %v3880
      %3889 = vst.msk [vmem:[#allocation10 + $0x30] sm:$0xff] %vm2227, %v3881
      %3890 = vst.msk [vmem:[#allocation10 + $0x38] sm:$0xff] %vm2227, %v3882
      %3891 = vst.msk [vmem:[#allocation10 + $0x40] sm:$0xff] %vm2227, 0.0
      %vm3892 = vcmask 253952
      %3893 = vst.msk [vmem:[#allocation10 + $0x48] sm:$0x1] %vm3892, 0.0
      %v3894 = vld [vmem:[#allocation10 + $0x1] sm:$0xff]
      %v3895 = vld [vmem:[#allocation10 + $0x9] sm:$0xff]
      %v3896 = vld [vmem:[#allocation10 + $0x11] sm:$0xff]
      %v3897 = vld [vmem:[#allocation10 + $0x19] sm:$0xff]
      %v3898 = vld [vmem:[#allocation10 + $0x21] sm:$0xff]
      %v3899 = vld [vmem:[#allocation10 + $0x29] sm:$0xff]
      %v3900 = vld [vmem:[#allocation10 + $0x31] sm:$0xff]
      %v3901 = vld [vmem:[#allocation10 + $0x39] sm:$0xff]
      %v3902 = vmax.f32 %v3875, %v3894
      %v3903 = vmax.f32 %v3876, %v3895
      %v3904 = vmax.f32 %v3877, %v3896
      %v3905 = vmax.f32 %v3878, %v3897
      %v3906 = vmax.f32 %v3879, %v3898
      %v3907 = vmax.f32 %v3880, %v3899
      %v3908 = vmax.f32 %v3881, %v3900
      %v3909 = vmax.f32 %v3882, %v3901
      %v3910 = vld [vmem:[#allocation10 + $0x8] sm:$0xff]
      %v3911 = vld [vmem:[#allocation10 + $0x10] sm:$0xff]
      %v3912 = vld [vmem:[#allocation10 + $0x18] sm:$0xff]
      %v3913 = vld [vmem:[#allocation10 + $0x20] sm:$0xff]
      %v3914 = vld [vmem:[#allocation10 + $0x28] sm:$0xff]
      %v3915 = vld [vmem:[#allocation10 + $0x30] sm:$0xff]
      %v3916 = vld [vmem:[#allocation10 + $0x38] sm:$0xff]
      %v3917 = vld [vmem:[#allocation10 + $0x40] sm:$0xff]
      %v3918 = vld [vmem:[#allocation10 + $0x41] sm:$0xff]
      %v3919 = vmax.f32 %v3910, %v3895
      %v3920 = vmax.f32 %v3911, %v3896
      %v3921 = vmax.f32 %v3912, %v3897
      %v3922 = vmax.f32 %v3913, %v3898
      %v3923 = vmax.f32 %v3914, %v3899
      %v3924 = vmax.f32 %v3915, %v3900
      %v3925 = vmax.f32 %v3916, %v3901
      %v3926 = vmax.f32 %v3917, %v3918
      %v3927 = vmax.f32 %v3902, %v3919
      %v3928 = vmax.f32 %v3903, %v3920
      %v3929 = vmax.f32 %v3904, %v3921
      %v3930 = vmax.f32 %v3905, %v3922
      %v3931 = vmax.f32 %v3906, %v3923
      %v3932 = vmax.f32 %v3907, %v3924
      %v3933 = vmax.f32 %v3908, %v3925
      %v3934 = vmax.f32 %v3909, %v3926
      %v3935 = vld [vmem:[%s16] sm:$0xf]
      %v3936 = vld [vmem:[%s16 + $0x4] sm:$0xf]
      %v3937 = vpack.c.bf16 %v3928, %v3927
      %v3938 = vpack.c.bf16 %v3930, %v3929
      %v3939 = vpack.c.bf16 %v3932, %v3931
      %v3940 = vpack.c.bf16 %v3934, %v3933
      %v3943 = vunpack.c.l.b16 %v3935
      %v3944 = vunpack.c.l.b16 %v3936
      %v3945 = vpack.c.b16 %v3944, %v3943
      %v3947 = vsel %vm2359, %v3945, 0
      %3949 = vmatprep.subr.bf16.mxu0 0
      %3950 = vmatpush1.bf16.msra.mxu0 0
      %3951 = vmatprep.subr.bf16.mxu0 0
      %3952 = vmatpush1.bf16.msra.mxu0 0
      %3953 = vmatprep.subr.bf16.mxu0 0
      %3954 = vmatpush1.bf16.msra.mxu0 0
      %3955 = vmatprep.subr.bf16.mxu0 0
      %3956 = vmatpush1.bf16.msra.mxu0 0
      %3957 = vmatprep.subr.bf16.mxu0 0
      %3958 = vmatpush1.bf16.msra.mxu0 %v3940
      %3959 = vmatprep.subr.bf16.mxu0 0
      %3960 = vmatpush1.bf16.msra.mxu0 %v3939
      %3961 = vmatprep.subr.bf16.mxu0 0
      %3962 = vmatpush1.bf16.msra.mxu0 %v3938
      %3963 = vmatprep.subr.bf16.mxu0 0
      %3964 = vmatpush1.bf16.msra.mxu0 %v3937
      %3965 = vmatprep.subr.bf16.mxu0 0
      %3966 = vmatpush2.bf16.msra.mxu0 0
      %3967 = vmatprep.subr.bf16.mxu0 0
      %3968 = vmatpush2.bf16.msra.mxu0 0
      %3969 = vmatprep.subr.bf16.mxu0 0
      %3970 = vmatpush2.bf16.msra.mxu0 0
      %3971 = vmatprep.subr.bf16.mxu0 0
      %3972 = vmatpush2.bf16.msra.mxu0 0
      %3973 = vmatprep.subr.bf16.mxu0 0
      %3974 = vmatpush2.bf16.msra.mxu0 0
      %3975 = vmatprep.subr.bf16.mxu0 0
      %3976 = vmatpush2.bf16.msra.mxu0 0
      %3977 = vmatprep.subr.bf16.mxu0 0
      %3978 = vmatpush2.bf16.msra.mxu0 0
      %3979 = vmatprep.subr.bf16.mxu0 0
      %3980 = vmatpush2.bf16.msra.mxu0 0
      %3981 = vmatprep.mubr.bf16.mxu0 0
      %3982 = vmatmul.mubr.bf16.gmra.mxu0 %v3947
      %v3983 = vpop.f32.mrf.mxu0
      %v3984 = vadd.f32 0.0, %v3983
      %v3985 = vpop.f32.mrf.mxu0
      %v3986 = vpop.f32.mrf.mxu0
      %v3987 = vadd.f32 0.0, %v3986
      %v3988 = vpop.f32.mrf.mxu0
      %3989 = vdwg.mxu0
      %v3990 = vpack.c.bf16 %v3987, %v3984
      %3991 = vst.msk [vmem:[#allocation4] sm:$0xff] %vm2227, 0.0
      %vm3992 = vcmask 258048
      %3993 = vst.msk [vmem:[#allocation4 + $0x18] sm:$0x1f] %vm3992, 0.0
      %v3994 = vunpack.c.l.bf16 %v3990
      %v3995 = vunpack.c.h.bf16 %v3990
      %3996 = vst.msk [vmem:[#allocation4 + $0x8] sm:$0xff] %vm2227, %v3994
      %3997 = vst.msk [vmem:[#allocation4 + $0x10] sm:$0xff] %vm2227, %v3995
      %vm3998 = vcmp.lt.s32.totalorder %v765, 0
      %v3999 = vsub.s32 0, %v765
      %v4000 = vsel %vm3998, %v3999, %v765
      %v4001 = vshrl.u32 %v4000, 2
      %v4002 = vand.u32 %v4000, 3
      %v4003 = vsub.s32 0, %v4002
      %v4004 = vsel %vm3998, %v4003, %v4002
      %vm4005 = vcmp.lt.s32.totalorder %v766, 0
      %v4006 = vsub.s32 0, %v766
      %v4007 = vsel %vm4005, %v4006, %v766
      %v4008 = vshrl.u32 %v4007, 2
      %v4009 = vand.u32 %v4007, 3
      %v4010 = vsub.s32 0, %v4009
      %v4011 = vsel %vm4005, %v4010, %v4009
      %vm4012 = vcmp.ne.s32.totalorder %v4004, 0
      %vm4013 = vcmp.ne.s32.totalorder %v4011, 0
      %vm4014 = vcmp.lt.s32.totalorder %v4004, 0
      %vm4015 = vcmp.lt.s32.totalorder %v4011, 0
      %vm4016 = vmand %vm4014, %vm4012
      %vm4017 = vmand %vm4015, %vm4013
      %v4018 = vadd.s32 %v4004, 4
      %v4019 = vadd.s32 %v4011, 4
      %v4020 = vsel %vm4016, %v4018, %v4004
      %v4021 = vsel %vm4017, %v4019, %v4011
      %vm4022 = vcmp.eq.s32.totalorder %v4020, 0
      %vm4023 = vcmp.eq.s32.totalorder %v4021, 0
      %vm4024 = vcmp.eq.s32.totalorder %v4020, 3
      %vm4025 = vcmp.eq.s32.totalorder %v4021, 3
      %v4026 = vld [vmem:[#allocation4 + $0x3] sm:$0xff]
      %v4027 = vld [vmem:[#allocation4 + $0xb] sm:$0xff]
      %v4028 = vpack.c.bf16 %v4027, %v4026
      %vm4029 = vmpackc.low %vm4022, %vm4022
      %vm4030 = vmpackc.low %vm4023, %vm4023
      %v4031 = vsel %vm4029, 65537, 0
      %v4032 = vsel %vm4030, 65537, 0
      %v4033 = vunpack.c.l.b16 %v4031
      %v4034 = vunpack.c.l.b16 %v4032
      %v4035 = vpack.c.b16 %v4034, %v4033
      %vm4036 = vcmp.ne.s16.totalorder %v4035, 0
      %v4037 = vsel %vm4036, 0, %v4028
      %v4038 = vld [vmem:[#allocation4 + $0x4] sm:$0xff]
      %v4039 = vld [vmem:[#allocation4 + $0xc] sm:$0xff]
      %v4040 = vpack.c.bf16 %v4039, %v4038
      %v4041 = vld [vmem:[#allocation4 + $0x5] sm:$0xff]
      %v4042 = vld [vmem:[#allocation4 + $0xd] sm:$0xff]
      %v4043 = vpack.c.bf16 %v4042, %v4041
      %vm4044 = vmpackc.low %vm4024, %vm4024
      %vm4045 = vmpackc.low %vm4025, %vm4025
      %v4046 = vsel %vm4044, 65537, 0
      %v4047 = vsel %vm4045, 65537, 0
      %v4048 = vunpack.c.l.b16 %v4046
      %v4049 = vunpack.c.l.b16 %v4047
      %v4050 = vpack.c.b16 %v4049, %v4048
      %vm4051 = vcmp.ne.s16.totalorder %v4050, 0
      %v4052 = vsel %vm4051, 0, %v4043
      %v4053 = vld [vmem:[#allocation4 + $0x7] sm:$0xff]
      %v4054 = vld [vmem:[#allocation4 + $0xf] sm:$0xff]
      %v4055 = vpack.c.bf16 %v4054, %v4053
      %v4056 = vsel %vm4036, 0, %v4055
      %v4057 = vld [vmem:[#allocation4 + $0x8] sm:$0xff]
      %v4058 = vld [vmem:[#allocation4 + $0x10] sm:$0xff]
      %v4059 = vpack.c.bf16 %v4058, %v4057
      %v4060 = vld [vmem:[#allocation4 + $0x9] sm:$0xff]
      %v4061 = vld [vmem:[#allocation4 + $0x11] sm:$0xff]
      %v4062 = vpack.c.bf16 %v4061, %v4060
      %v4063 = vsel %vm4051, 0, %v4062
      %v4064 = vld [vmem:[#allocation4 + $0x13] sm:$0xff]
      %v4065 = vpack.c.bf16 %v4064, %v4027
      %v4066 = vsel %vm4036, 0, %v4065
      %v4067 = vld [vmem:[#allocation4 + $0x14] sm:$0xff]
      %v4068 = vpack.c.bf16 %v4067, %v4039
      %v4069 = vld [vmem:[#allocation4 + $0x15] sm:$0xff]
      %v4070 = vpack.c.bf16 %v4069, %v4042
      %v4071 = vsel %vm4051, 0, %v4070
      %4073 = vrot.lane.b32.xlu0 %v4040, 32
      %v4074 = vpop.permute.xlu0 %4073
      %4076 = vrot.lane.b32.xlu0 %v4052, 64
      %v4077 = vpop.permute.xlu0 %4076
      %4079 = vrot.lane.b32.xlu0 %v4056, 96
      %v4080 = vpop.permute.xlu0 %4079
      %4082 = vrot.lane.b32.xlu0 %v4063, 32
      %v4083 = vpop.permute.xlu0 %4082
      %4085 = vrot.lane.b32.xlu0 %v4066, 64
      %v4086 = vpop.permute.xlu0 %4085
      %4088 = vrot.lane.b32.xlu0 %v4068, 96
      %v4089 = vpop.permute.xlu0 %4088
      %v4092 = vsel %vm2227, %v4037, %v4074
      %v4094 = vsel %vm2359, %v4092, %v4077
      %vm4095 = vcmask 785408
      %v4097 = vsel %vm4095, %v4094, %v4080
      %v4101 = vsel %vm2227, %v4059, %v4083
      %v4103 = vsel %vm2359, %v4101, %v4086
      %v4105 = vsel %vm4095, %v4103, %v4089
      %v4107 = vld [vmem:[%s5] sm:$0xf]
      %v4108 = vld [vmem:[%s5 + $0x4] sm:$0xf]
      %v4109 = vld [vmem:[%s5 + $0x8] sm:$0xf]
      %v4110 = vld [vmem:[%s5 + $0xc] sm:$0xf]
      %v4111 = vld [vmem:[%s5 + $0x10] sm:$0xf]
      %v4112 = vld [vmem:[%s5 + $0x14] sm:$0xf]
      %v4113 = vld [vmem:[%s5 + $0x18] sm:$0xf]
      %v4114 = vld [vmem:[%s5 + $0x1c] sm:$0xf]
      %v4115 = vld [vmem:[%s5 + $0x20] sm:$0xf]
      %v4116 = vld [vmem:[%s5 + $0x24] sm:$0xf]
      %v4117 = vld [vmem:[%s5 + $0x28] sm:$0xf]
      %v4118 = vld [vmem:[%s5 + $0x2c] sm:$0xf]
      %v4119 = vld [vmem:[%s5 + $0x30] sm:$0xf]
      %v4120 = vld [vmem:[%s5 + $0x34] sm:$0xf]
      %v4121 = vld [vmem:[%s5 + $0x38] sm:$0xf]
      %v4122 = vld [vmem:[%s5 + $0x3c] sm:$0xf]
      %v4123 = vld [vmem:[%s5 + $0x40] sm:$0xf]
      %v4124 = vld [vmem:[%s5 + $0x44] sm:$0xf]
      %v4125 = vld [vmem:[%s5 + $0x48] sm:$0xf]
      %v4126 = vld [vmem:[%s5 + $0x4c] sm:$0xf]
      %v4127 = vld [vmem:[%s5 + $0x50] sm:$0xf]
      %v4128 = vld [vmem:[%s5 + $0x54] sm:$0xf]
      %v4129 = vld [vmem:[%s5 + $0x58] sm:$0xf]
      %v4130 = vld [vmem:[%s5 + $0x5c] sm:$0xf]
      %v4131 = vld [vmem:[%s5 + $0x60] sm:$0xf]
      %v4132 = vld [vmem:[%s5 + $0x64] sm:$0xf]
      %v4133 = vld [vmem:[%s5 + $0x68] sm:$0xf]
      %v4134 = vld [vmem:[%s5 + $0x6c] sm:$0xf]
      %v4135 = vld [vmem:[%s5 + $0x70] sm:$0xf]
      %v4136 = vld [vmem:[%s5 + $0x74] sm:$0xf]
      %v4137 = vld [vmem:[%s5 + $0x78] sm:$0xf]
      %v4138 = vld [vmem:[%s5 + $0x7c] sm:$0xf]
      %v4139 = vld [vmem:[%s5 + $0x80] sm:$0xf]
      %v4140 = vld [vmem:[%s5 + $0x84] sm:$0xf]
      %v4141 = vld [vmem:[%s5 + $0x88] sm:$0xf]
      %v4142 = vld [vmem:[%s5 + $0x8c] sm:$0xf]
      %v4143 = vld [vmem:[%s6] sm:$0x1]
      %v4145 = vlaneseq
      %v4146 = vshrl.u32 %v4145, 7
      %v4147 = vsub.s32 0, %v4146
      %v4148 = vrot.slane %v4143, %v4147
      %v4186 = vunpack.c.l.b16 %v4107
      %v4187 = vunpack.c.l.b16 %v4108
      %v4188 = vunpack.c.l.b16 %v4109
      %v4189 = vunpack.c.l.b16 %v4110
      %v4190 = vunpack.c.l.b16 %v4111
      %v4191 = vunpack.c.l.b16 %v4112
      %v4192 = vunpack.c.l.b16 %v4113
      %v4193 = vunpack.c.l.b16 %v4114
      %v4194 = vunpack.c.l.b16 %v4115
      %v4195 = vunpack.c.l.b16 %v4116
      %v4196 = vunpack.c.l.b16 %v4117
      %v4197 = vunpack.c.l.b16 %v4118
      %v4198 = vunpack.c.l.b16 %v4119
      %v4199 = vunpack.c.l.b16 %v4120
      %v4200 = vunpack.c.l.b16 %v4121
      %v4201 = vunpack.c.l.b16 %v4122
      %v4202 = vunpack.c.l.b16 %v4123
      %v4203 = vunpack.c.l.b16 %v4124
      %v4204 = vunpack.c.l.b16 %v4125
      %v4205 = vunpack.c.l.b16 %v4126
      %v4206 = vunpack.c.l.b16 %v4127
      %v4207 = vunpack.c.l.b16 %v4128
      %v4208 = vunpack.c.l.b16 %v4129
      %v4209 = vunpack.c.l.b16 %v4130
      %v4210 = vunpack.c.l.b16 %v4131
      %v4211 = vunpack.c.l.b16 %v4132
      %v4212 = vunpack.c.l.b16 %v4133
      %v4213 = vunpack.c.l.b16 %v4134
      %v4214 = vunpack.c.l.b16 %v4135
      %v4215 = vunpack.c.l.b16 %v4136
      %v4216 = vunpack.c.l.b16 %v4137
      %v4217 = vunpack.c.l.b16 %v4138
      %v4218 = vunpack.c.l.b16 %v4139
      %v4219 = vunpack.c.l.b16 %v4140
      %v4220 = vunpack.c.l.b16 %v4141
      %v4221 = vunpack.c.l.b16 %v4142
      %v4222 = vpack.c.b16 %v4187, %v4186
      %v4223 = vpack.c.b16 %v4189, %v4188
      %v4224 = vpack.c.b16 %v4191, %v4190
      %v4225 = vpack.c.b16 %v4193, %v4192
      %v4226 = vpack.c.b16 %v4195, %v4194
      %v4227 = vpack.c.b16 %v4197, %v4196
      %v4228 = vpack.c.b16 %v4199, %v4198
      %v4229 = vpack.c.b16 %v4201, %v4200
      %v4230 = vpack.c.b16 %v4203, %v4202
      %v4231 = vpack.c.b16 %v4205, %v4204
      %v4232 = vpack.c.b16 %v4207, %v4206
      %v4233 = vpack.c.b16 %v4209, %v4208
      %v4234 = vpack.c.b16 %v4211, %v4210
      %v4235 = vpack.c.b16 %v4213, %v4212
      %v4236 = vpack.c.b16 %v4215, %v4214
      %v4237 = vpack.c.b16 %v4217, %v4216
      %v4238 = vpack.c.b16 %v4219, %v4218
      %v4239 = vpack.c.b16 %v4221, %v4220
      %v4259 = vsel %vm2227, %v4071, 0
      %4261 = vmatprep.subr.bf16.mxu0 0
      %4262 = vmatpush1.bf16.msra.mxu0 %v4229
      %4263 = vmatprep.subr.bf16.mxu0 0
      %4264 = vmatpush1.bf16.msra.mxu0 %v4228
      %4265 = vmatprep.subr.bf16.mxu0 0
      %4266 = vmatpush1.bf16.msra.mxu0 %v4227
      %4267 = vmatprep.subr.bf16.mxu0 0
      %4268 = vmatpush1.bf16.msra.mxu0 %v4226
      %4269 = vmatprep.subr.bf16.mxu0 0
      %4270 = vmatpush1.bf16.msra.mxu0 %v4225
      %4271 = vmatprep.subr.bf16.mxu0 0
      %4272 = vmatpush1.bf16.msra.mxu0 %v4224
      %4273 = vmatprep.subr.bf16.mxu0 0
      %4274 = vmatpush1.bf16.msra.mxu0 %v4223
      %4275 = vmatprep.subr.bf16.mxu0 0
      %4276 = vmatpush1.bf16.msra.mxu0 %v4222
      %4277 = vmatprep.subr.bf16.mxu0 0
      %4278 = vmatpush2.bf16.msra.mxu0 %v4237
      %4279 = vmatprep.subr.bf16.mxu0 0
      %4280 = vmatpush2.bf16.msra.mxu0 %v4236
      %4281 = vmatprep.subr.bf16.mxu0 0
      %4282 = vmatpush2.bf16.msra.mxu0 %v4235
      %4283 = vmatprep.subr.bf16.mxu0 0
      %4284 = vmatpush2.bf16.msra.mxu0 %v4234
      %4285 = vmatprep.subr.bf16.mxu0 0
      %4286 = vmatpush2.bf16.msra.mxu0 %v4233
      %4287 = vmatprep.subr.bf16.mxu0 0
      %4288 = vmatpush2.bf16.msra.mxu0 %v4232
      %4289 = vmatprep.subr.bf16.mxu0 0
      %4290 = vmatpush2.bf16.msra.mxu0 %v4231
      %4291 = vmatprep.subr.bf16.mxu0 0
      %4292 = vmatpush2.bf16.msra.mxu0 %v4230
      %4293 = vmatprep.mubr.bf16.mxu0 %v4105
      %4294 = vmatmul.mubr.bf16.gmra.mxu0 %v4097
      %v4295 = vpop.f32.mrf.mxu0
      %v4296 = vadd.f32 %v4148, %v4295
      %v4297 = vpop.f32.mrf.mxu0
      %v4298 = vpop.f32.mrf.mxu0
      %v4299 = vadd.f32 %v4148, %v4298
      %v4300 = vpop.f32.mrf.mxu0
      %4301 = vdwg.mxu0
      %4302 = vmatprep.subr.bf16.mxu0 0
      %4303 = vmatpush1.bf16.msra.mxu0 0
      %4304 = vmatprep.subr.bf16.mxu0 0
      %4305 = vmatpush1.bf16.msra.mxu0 0
      %4306 = vmatprep.subr.bf16.mxu0 0
      %4307 = vmatpush1.bf16.msra.mxu0 0
      %4308 = vmatprep.subr.bf16.mxu0 0
      %4309 = vmatpush1.bf16.msra.mxu0 0
      %4310 = vmatprep.subr.bf16.mxu0 0
      %4311 = vmatpush1.bf16.msra.mxu0 0
      %4312 = vmatprep.subr.bf16.mxu0 0
      %4313 = vmatpush1.bf16.msra.mxu0 0
      %4314 = vmatprep.subr.bf16.mxu0 0
      %4315 = vmatpush1.bf16.msra.mxu0 %v4239
      %4316 = vmatprep.subr.bf16.mxu0 0
      %4317 = vmatpush1.bf16.msra.mxu0 %v4238
      %4318 = vmatprep.subr.bf16.mxu0 0
      %4319 = vmatpush2.bf16.msra.mxu0 0
      %4320 = vmatprep.subr.bf16.mxu0 0
      %4321 = vmatpush2.bf16.msra.mxu0 0
      %4322 = vmatprep.subr.bf16.mxu0 0
      %4323 = vmatpush2.bf16.msra.mxu0 0
      %4324 = vmatprep.subr.bf16.mxu0 0
      %4325 = vmatpush2.bf16.msra.mxu0 0
      %4326 = vmatprep.subr.bf16.mxu0 0
      %4327 = vmatpush2.bf16.msra.mxu0 0
      %4328 = vmatprep.subr.bf16.mxu0 0
      %4329 = vmatpush2.bf16.msra.mxu0 0
      %4330 = vmatprep.subr.bf16.mxu0 0
      %4331 = vmatpush2.bf16.msra.mxu0 0
      %4332 = vmatprep.subr.bf16.mxu0 0
      %4333 = vmatpush2.bf16.msra.mxu0 0
      %4334 = vmatprep.mubr.bf16.mxu0 0
      %4335 = vmatmul.mubr.bf16.gmra.mxu0 %v4259
      %v4336 = vpop.f32.mrf.mxu0
      %v4337 = vadd.f32 %v4296, %v4336
      %v4338 = vpop.f32.mrf.mxu0
      %v4339 = vpop.f32.mrf.mxu0
      %v4340 = vadd.f32 %v4299, %v4339
      %v4341 = vpop.f32.mrf.mxu0
      %4342 = vdwg.mxu0
      %v4343 = vmax.f32 %v4337, 0.0
      %v4344 = vmax.f32 %v4340, 0.0
      %4345 = vst.msk [vmem:[#allocation11] sm:$0xff] %vm2161, %v4343
      %4346 = vst.msk [vmem:[#allocation11 + $0x8] sm:$0xff] %vm2161, %v4344
      %vm4347 = vcmask 126976
      %4348 = vst.msk [vmem:[#allocation11 + $0x10] sm:$0x1f] %vm4347, 0.0
      %v4349 = vld [vmem:[#allocation11 + $0x1] sm:$0xff]
      %v4350 = vld [vmem:[#allocation11 + $0x9] sm:$0xff]
      %v4351 = vmax.f32 %v4343, %v4349
      %v4352 = vmax.f32 %v4344, %v4350
      %v4353 = vld [vmem:[#allocation11 + $0x4] sm:$0xff]
      %v4354 = vld [vmem:[#allocation11 + $0xc] sm:$0xff]
      %v4355 = vld [vmem:[#allocation11 + $0x5] sm:$0xff]
      %v4356 = vld [vmem:[#allocation11 + $0xd] sm:$0xff]
      %v4357 = vmax.f32 %v4353, %v4355
      %v4358 = vmax.f32 %v4354, %v4356
      %v4359 = vmax.f32 %v4351, %v4357
      %v4360 = vmax.f32 %v4352, %v4358
      %v4361 = vld [vmem:[%s17] sm:$0x3]
      %v4362 = vpack.c.bf16 %v4360, %v4359
      %v4364 = vsel %vm2161, %v4361, 0
      %4366 = vmatprep.subr.bf16.mxu0 0
      %4367 = vmatpush1.bf16.msra.mxu0 0
      %4368 = vmatprep.subr.bf16.mxu0 0
      %4369 = vmatpush1.bf16.msra.mxu0 0
      %4370 = vmatprep.subr.bf16.mxu0 0
      %4371 = vmatpush1.bf16.msra.mxu0 0
      %4372 = vmatprep.subr.bf16.mxu0 0
      %4373 = vmatpush1.bf16.msra.mxu0 0
      %4374 = vmatprep.subr.bf16.mxu0 0
      %4375 = vmatpush1.bf16.msra.mxu0 0
      %4376 = vmatprep.subr.bf16.mxu0 0
      %4377 = vmatpush1.bf16.msra.mxu0 0
      %4378 = vmatprep.subr.bf16.mxu0 0
      %4379 = vmatpush1.bf16.msra.mxu0 0
      %4380 = vmatprep.subr.bf16.mxu0 0
      %4381 = vmatpush1.bf16.msra.mxu0 %v4362
      %4382 = vmatprep.subr.bf16.mxu0 0
      %4383 = vmatpush2.bf16.msra.mxu0 0
      %4384 = vmatprep.subr.bf16.mxu0 0
      %4385 = vmatpush2.bf16.msra.mxu0 0
      %4386 = vmatprep.subr.bf16.mxu0 0
      %4387 = vmatpush2.bf16.msra.mxu0 0
      %4388 = vmatprep.subr.bf16.mxu0 0
      %4389 = vmatpush2.bf16.msra.mxu0 0
      %4390 = vmatprep.subr.bf16.mxu0 0
      %4391 = vmatpush2.bf16.msra.mxu0 0
      %4392 = vmatprep.subr.bf16.mxu0 0
      %4393 = vmatpush2.bf16.msra.mxu0 0
      %4394 = vmatprep.subr.bf16.mxu0 0
      %4395 = vmatpush2.bf16.msra.mxu0 0
      %4396 = vmatprep.subr.bf16.mxu0 0
      %4397 = vmatpush2.bf16.msra.mxu0 0
      %4398 = vmatprep.mubr.bf16.mxu0 0
      %4399 = vmatmul.mubr.bf16.gmra.mxu0 %v4364
      %v4400 = vpop.f32.mrf.mxu0
      %v4401 = vadd.f32 0.0, %v4400
      %v4402 = vpop.f32.mrf.mxu0
      %v4403 = vpop.f32.mrf.mxu0
      %v4404 = vpop.f32.mrf.mxu0
      %4405 = vdwg.mxu0
      %v4406 = vpack.c.bf16 %v4401, %v4401
      %4407 = vst.msk [vmem:[#allocation5] sm:$0xff] %vm2161, 0.0
      %vm4408 = vcmask 124928
      %4409 = vst.msk [vmem:[#allocation5 + $0xc] sm:$0x7] %vm4408, 0.0
      %v4410 = vunpack.c.l.bf16 %v4406
      %vm4411 = vcmask 125952
      %4412 = vst.msk [vmem:[#allocation5 + $0x8] sm:$0xf] %vm4411, %v4410
      %vm4413 = vcmp.lt.s32.totalorder %v765, 0
      %v4414 = vsub.s32 0, %v765
      %v4415 = vsel %vm4413, %v4414, %v765
      %v4416 = vshrl.u32 %v4415, 1
      %v4417 = vand.u32 %v4415, 1
      %v4418 = vsub.s32 0, %v4417
      %v4419 = vsel %vm4413, %v4418, %v4417
      %vm4420 = vcmp.ne.s32.totalorder %v4419, 0
      %vm4421 = vcmp.lt.s32.totalorder %v4419, 0
      %vm4422 = vmand %vm4421, %vm4420
      %v4423 = vadd.s32 %v4419, 2
      %v4424 = vsel %vm4422, %v4423, %v4419
      %vm4425 = vcmp.eq.s32.totalorder %v4424, 0
      %vm4426 = vcmp.eq.s32.totalorder %v4424, 1
      %v4427 = vld [vmem:[#allocation5 + $0x5] sm:$0xf]
      %v4428 = vpack.c.bf16 %v4427, %v4427
      %vm4429 = vmpackc.low %vm4425, %vm4425
      %v4430 = vsel %vm4429, 0, %v4428
      %v4431 = vld [vmem:[#allocation5 + $0x6] sm:$0xf]
      %v4432 = vpack.c.bf16 %v4431, %v4431
      %v4433 = vld [vmem:[#allocation5 + $0x7] sm:$0xf]
      %v4434 = vpack.c.bf16 %v4433, %v4433
      %vm4435 = vmpackc.low %vm4426, %vm4426
      %v4436 = vsel %vm4435, 0, %v4434
      %v4437 = vsel %vm4429, 0, %v4434
      %v4438 = vld [vmem:[#allocation5 + $0x8] sm:$0xf]
      %v4439 = vpack.c.bf16 %v4438, %v4438
      %v4440 = vld [vmem:[#allocation5 + $0x9] sm:$0xf]
      %v4441 = vpack.c.bf16 %v4440, %v4440
      %v4442 = vsel %vm4435, 0, %v4441
      %v4443 = vsel %vm4429, 0, %v4441
      %v4444 = vld [vmem:[#allocation5 + $0xa] sm:$0xf]
      %v4445 = vpack.c.bf16 %v4444, %v4444
      %v4446 = vld [vmem:[#allocation5 + $0xb] sm:$0xf]
      %v4447 = vpack.c.bf16 %v4446, %v4446
      %v4448 = vsel %vm4435, 0, %v4447
      %4450 = vrot.lane.b32.xlu0 %v4432, 16
      %v4451 = vpop.permute.xlu0 %4450
      %4453 = vrot.lane.b32.xlu0 %v4436, 32
      %v4454 = vpop.permute.xlu0 %4453
      %4456 = vrot.lane.b32.xlu0 %v4437, 48
      %v4457 = vpop.permute.xlu0 %4456
      %4459 = vrot.lane.b32.xlu0 %v4439, 64
      %v4460 = vpop.permute.xlu0 %4459
      %4462 = vrot.lane.b32.xlu0 %v4442, 80
      %v4463 = vpop.permute.xlu0 %4462
      %4465 = vrot.lane.b32.xlu0 %v4443, 96
      %v4466 = vpop.permute.xlu0 %4465
      %4468 = vrot.lane.b32.xlu0 %v4445, 112
      %v4469 = vpop.permute.xlu0 %4468
      %v4472 = vsel %vm2161, %v4430, %v4451
      %v4474 = vsel %vm2227, %v4472, %v4454
      %v4476 = vsel %vm2293, %v4474, %v4457
      %v4478 = vsel %vm2359, %v4476, %v4460
      %vm4479 = vcmask 654336
      %v4481 = vsel %vm4479, %v4478, %v4463
      %v4483 = vsel %vm4095, %v4481, %v4466
      %vm4484 = vcmask 916480
      %v4486 = vsel %vm4484, %v4483, %v4469
      %v4488 = vld [vmem:[%s7] sm:$0xf]
      %v4489 = vld [vmem:[%s7 + $0x4] sm:$0xf]
      %v4490 = vld [vmem:[%s7 + $0x8] sm:$0xf]
      %v4491 = vld [vmem:[%s7 + $0xc] sm:$0xf]
      %v4492 = vld [vmem:[%s7 + $0x10] sm:$0xf]
      %v4493 = vld [vmem:[%s7 + $0x14] sm:$0xf]
      %v4494 = vld [vmem:[%s7 + $0x18] sm:$0xf]
      %v4495 = vld [vmem:[%s7 + $0x1c] sm:$0xf]
      %v4496 = vld [vmem:[%s7 + $0x20] sm:$0xf]
      %v4497 = vld [vmem:[%s7 + $0x24] sm:$0xf]
      %v4498 = vld [vmem:[%s7 + $0x28] sm:$0xf]
      %v4499 = vld [vmem:[%s7 + $0x2c] sm:$0xf]
      %v4500 = vld [vmem:[%s7 + $0x30] sm:$0xf]
      %v4501 = vld [vmem:[%s7 + $0x34] sm:$0xf]
      %v4502 = vld [vmem:[%s7 + $0x38] sm:$0xf]
      %v4503 = vld [vmem:[%s7 + $0x3c] sm:$0xf]
      %v4504 = vld [vmem:[%s7 + $0x40] sm:$0xf]
      %v4505 = vld [vmem:[%s7 + $0x44] sm:$0xf]
      %v4506 = vld [vmem:[%s8] sm:$0x1]
      %v4508 = vlaneseq
      %v4509 = vshrl.u32 %v4508, 7
      %v4510 = vsub.s32 0, %v4509
      %v4511 = vrot.slane %v4506, %v4510
      %v4531 = vunpack.c.l.b16 %v4488
      %v4532 = vunpack.c.l.b16 %v4489
      %v4533 = vunpack.c.l.b16 %v4490
      %v4534 = vunpack.c.l.b16 %v4491
      %v4535 = vunpack.c.l.b16 %v4492
      %v4536 = vunpack.c.l.b16 %v4493
      %v4537 = vunpack.c.l.b16 %v4494
      %v4538 = vunpack.c.l.b16 %v4495
      %v4539 = vunpack.c.l.b16 %v4496
      %v4540 = vunpack.c.l.b16 %v4497
      %v4541 = vunpack.c.l.b16 %v4498
      %v4542 = vunpack.c.l.b16 %v4499
      %v4543 = vunpack.c.l.b16 %v4500
      %v4544 = vunpack.c.l.b16 %v4501
      %v4545 = vunpack.c.l.b16 %v4502
      %v4546 = vunpack.c.l.b16 %v4503
      %v4547 = vunpack.c.l.b16 %v4504
      %v4548 = vunpack.c.l.b16 %v4505
      %v4549 = vpack.c.b16 %v4532, %v4531
      %v4550 = vpack.c.b16 %v4534, %v4533
      %v4551 = vpack.c.b16 %v4536, %v4535
      %v4552 = vpack.c.b16 %v4538, %v4537
      %v4553 = vpack.c.b16 %v4540, %v4539
      %v4554 = vpack.c.b16 %v4542, %v4541
      %v4555 = vpack.c.b16 %v4544, %v4543
      %v4556 = vpack.c.b16 %v4546, %v4545
      %v4557 = vpack.c.b16 %v4548, %v4547
      %v4568 = vsel %vm2161, %v4448, 0
      %4570 = vmatprep.subr.bf16.mxu0 0
      %4571 = vmatpush1.bf16.msra.mxu0 %v4556
      %4572 = vmatprep.subr.bf16.mxu0 0
      %4573 = vmatpush1.bf16.msra.mxu0 %v4555
      %4574 = vmatprep.subr.bf16.mxu0 0
      %4575 = vmatpush1.bf16.msra.mxu0 %v4554
      %4576 = vmatprep.subr.bf16.mxu0 0
      %4577 = vmatpush1.bf16.msra.mxu0 %v4553
      %4578 = vmatprep.subr.bf16.mxu0 0
      %4579 = vmatpush1.bf16.msra.mxu0 %v4552
      %4580 = vmatprep.subr.bf16.mxu0 0
      %4581 = vmatpush1.bf16.msra.mxu0 %v4551
      %4582 = vmatprep.subr.bf16.mxu0 0
      %4583 = vmatpush1.bf16.msra.mxu0 %v4550
      %4584 = vmatprep.subr.bf16.mxu0 0
      %4585 = vmatpush1.bf16.msra.mxu0 %v4549
      %4586 = vmatprep.subr.bf16.mxu0 0
      %4587 = vmatpush2.bf16.msra.mxu0 0
      %4588 = vmatprep.subr.bf16.mxu0 0
      %4589 = vmatpush2.bf16.msra.mxu0 0
      %4590 = vmatprep.subr.bf16.mxu0 0
      %4591 = vmatpush2.bf16.msra.mxu0 0
      %4592 = vmatprep.subr.bf16.mxu0 0
      %4593 = vmatpush2.bf16.msra.mxu0 0
      %4594 = vmatprep.subr.bf16.mxu0 0
      %4595 = vmatpush2.bf16.msra.mxu0 0
      %4596 = vmatprep.subr.bf16.mxu0 0
      %4597 = vmatpush2.bf16.msra.mxu0 0
      %4598 = vmatprep.subr.bf16.mxu0 0
      %4599 = vmatpush2.bf16.msra.mxu0 0
      %4600 = vmatprep.subr.bf16.mxu0 0
      %4601 = vmatpush2.bf16.msra.mxu0 %v4557
      %4602 = vmatprep.mubr.bf16.mxu0 %v4568
      %4603 = vmatmul.mubr.bf16.gmra.mxu0 %v4486
      %v4604 = vpop.f32.mrf.mxu0
      %v4605 = vadd.f32 %v4511, %v4604
      %v4606 = vpop.f32.mrf.mxu0
      %v4607 = vpop.f32.mrf.mxu0
      %v4608 = vpop.f32.mrf.mxu0
      %4609 = vdwg.mxu0
      %v4610 = vmax.f32 %v4605, 0.0
      %v4611 = vpack.c.bf16 %v4610, %v4610
      %v4612 = vld [vmem:[%s18] sm:$0xf]
      %v4613 = vld [vmem:[%s18 + $0x4] sm:$0xf]
      %v4616 = vunpack.c.l.b16 %v4612
      %v4617 = vunpack.c.l.b16 %v4613
      %v4618 = vpack.c.b16 %v4617, %v4616
      %vm4619 = vcmask 31744
      %v4621 = vsel %vm4619, %v4618, 0
      %vm4623 = vcmask 1041408
      %v4625 = vsel %vm4623, %v4611, 0
      %4627 = vmatprep.subr.bf16.mxu0 0
      %4628 = vmatpush1.bf16.msra.mxu0 0
      %4629 = vmatprep.subr.bf16.mxu0 0
      %4630 = vmatpush1.bf16.msra.mxu0 0
      %4631 = vmatprep.subr.bf16.mxu0 0
      %4632 = vmatpush1.bf16.msra.mxu0 0
      %4633 = vmatprep.subr.bf16.mxu0 0
      %4634 = vmatpush1.bf16.msra.mxu0 0
      %4635 = vmatprep.subr.bf16.mxu0 0
      %4636 = vmatpush1.bf16.msra.mxu0 0
      %4637 = vmatprep.subr.bf16.mxu0 0
      %4638 = vmatpush1.bf16.msra.mxu0 0
      %4639 = vmatprep.subr.bf16.mxu0 0
      %4640 = vmatpush1.bf16.msra.mxu0 0
      %4641 = vmatprep.subr.bf16.mxu0 0
      %4642 = vmatpush1.bf16.msra.mxu0 %v4625
      %4643 = vmatprep.subr.bf16.mxu0 0
      %4644 = vmatpush2.bf16.msra.mxu0 0
      %4645 = vmatprep.subr.bf16.mxu0 0
      %4646 = vmatpush2.bf16.msra.mxu0 0
      %4647 = vmatprep.subr.bf16.mxu0 0
      %4648 = vmatpush2.bf16.msra.mxu0 0
      %4649 = vmatprep.subr.bf16.mxu0 0
      %4650 = vmatpush2.bf16.msra.mxu0 0
      %4651 = vmatprep.subr.bf16.mxu0 0
      %4652 = vmatpush2.bf16.msra.mxu0 0
      %4653 = vmatprep.subr.bf16.mxu0 0
      %4654 = vmatpush2.bf16.msra.mxu0 0
      %4655 = vmatprep.subr.bf16.mxu0 0
      %4656 = vmatpush2.bf16.msra.mxu0 0
      %4657 = vmatprep.subr.bf16.mxu0 0
      %4658 = vmatpush2.bf16.msra.mxu0 0
      %4659 = vmatprep.mubr.bf16.mxu0 0
      %4660 = vmatmul.mubr.bf16.gmra.mxu0 %v4621
      %v4661 = vpop.f32.mrf.mxu0
      %v4662 = vadd.f32 0.0, %v4661
      %v4663 = vpop.f32.mrf.mxu0
      %v4664 = vpop.f32.mrf.mxu0
      %v4665 = vadd.f32 0.0, %v4664
      %v4666 = vpop.f32.mrf.mxu0
      %4667 = vdwg.mxu0
      %v4668 = vpack.c.bf16 %v4665, %v4662
      %4669 = vst.msk [vmem:[#allocation6] sm:$0xff] %vm2227, 0.0
      %4670 = vst.msk [vmem:[#allocation6 + $0x18] sm:$0x1f] %vm3992, 0.0
      %v4671 = vunpack.c.l.bf16 %v4668
      %v4672 = vunpack.c.h.bf16 %v4668
      %4673 = vst.msk [vmem:[#allocation6 + $0x8] sm:$0xff] %vm2227, %v4671
      %4674 = vst.msk [vmem:[#allocation6 + $0x10] sm:$0xff] %vm2227, %v4672
      %v4675 = vld [vmem:[#allocation6 + $0x3] sm:$0xff]
      %v4676 = vld [vmem:[#allocation6 + $0xb] sm:$0xff]
      %v4677 = vpack.c.bf16 %v4676, %v4675
      %v4678 = vsel %vm4036, 0, %v4677
      %v4679 = vld [vmem:[#allocation6 + $0x4] sm:$0xff]
      %v4680 = vld [vmem:[#allocation6 + $0xc] sm:$0xff]
      %v4681 = vpack.c.bf16 %v4680, %v4679
      %v4682 = vld [vmem:[#allocation6 + $0x5] sm:$0xff]
      %v4683 = vld [vmem:[#allocation6 + $0xd] sm:$0xff]
      %v4684 = vpack.c.bf16 %v4683, %v4682
      %v4685 = vsel %vm4051, 0, %v4684
      %v4686 = vld [vmem:[#allocation6 + $0x7] sm:$0xff]
      %v4687 = vld [vmem:[#allocation6 + $0xf] sm:$0xff]
      %v4688 = vpack.c.bf16 %v4687, %v4686
      %v4689 = vsel %vm4036, 0, %v4688
      %v4690 = vld [vmem:[#allocation6 + $0x8] sm:$0xff]
      %v4691 = vld [vmem:[#allocation6 + $0x10] sm:$0xff]
      %v4692 = vpack.c.bf16 %v4691, %v4690
      %v4693 = vld [vmem:[#allocation6 + $0x9] sm:$0xff]
      %v4694 = vld [vmem:[#allocation6 + $0x11] sm:$0xff]
      %v4695 = vpack.c.bf16 %v4694, %v4693
      %v4696 = vsel %vm4051, 0, %v4695
      %v4697 = vld [vmem:[#allocation6 + $0x13] sm:$0xff]
      %v4698 = vpack.c.bf16 %v4697, %v4676
      %v4699 = vsel %vm4036, 0, %v4698
      %v4700 = vld [vmem:[#allocation6 + $0x14] sm:$0xff]
      %v4701 = vpack.c.bf16 %v4700, %v4680
      %v4702 = vld [vmem:[#allocation6 + $0x15] sm:$0xff]
      %v4703 = vpack.c.bf16 %v4702, %v4683
      %v4704 = vsel %vm4051, 0, %v4703
      %4706 = vrot.lane.b32.xlu0 %v4681, 32
      %v4707 = vpop.permute.xlu0 %4706
      %4709 = vrot.lane.b32.xlu0 %v4685, 64
      %v4710 = vpop.permute.xlu0 %4709
      %4712 = vrot.lane.b32.xlu0 %v4689, 96
      %v4713 = vpop.permute.xlu0 %4712
      %4715 = vrot.lane.b32.xlu0 %v4696, 32
      %v4716 = vpop.permute.xlu0 %4715
      %4718 = vrot.lane.b32.xlu0 %v4699, 64
      %v4719 = vpop.permute.xlu0 %4718
      %4721 = vrot.lane.b32.xlu0 %v4701, 96
      %v4722 = vpop.permute.xlu0 %4721
      %v4725 = vsel %vm2227, %v4678, %v4707
      %v4727 = vsel %vm2359, %v4725, %v4710
      %v4729 = vsel %vm4095, %v4727, %v4713
      %v4733 = vsel %vm2227, %v4692, %v4716
      %v4735 = vsel %vm2359, %v4733, %v4719
      %v4737 = vsel %vm4095, %v4735, %v4722
      %v4739 = vld [vmem:[%s9] sm:$0xf]
      %v4740 = vld [vmem:[%s9 + $0x4] sm:$0xf]
      %v4741 = vld [vmem:[%s9 + $0x8] sm:$0xf]
      %v4742 = vld [vmem:[%s9 + $0xc] sm:$0xf]
      %v4743 = vld [vmem:[%s9 + $0x10] sm:$0xf]
      %v4744 = vld [vmem:[%s9 + $0x14] sm:$0xf]
      %v4745 = vld [vmem:[%s9 + $0x18] sm:$0xf]
      %v4746 = vld [vmem:[%s9 + $0x1c] sm:$0xf]
      %v4747 = vld [vmem:[%s9 + $0x20] sm:$0xf]
      %v4748 = vld [vmem:[%s9 + $0x24] sm:$0xf]
      %v4749 = vld [vmem:[%s9 + $0x28] sm:$0xf]
      %v4750 = vld [vmem:[%s9 + $0x2c] sm:$0xf]
      %v4751 = vld [vmem:[%s9 + $0x30] sm:$0xf]
      %v4752 = vld [vmem:[%s9 + $0x34] sm:$0xf]
      %v4753 = vld [vmem:[%s9 + $0x38] sm:$0xf]
      %v4754 = vld [vmem:[%s9 + $0x3c] sm:$0xf]
      %v4755 = vld [vmem:[%s9 + $0x40] sm:$0xf]
      %v4756 = vld [vmem:[%s9 + $0x44] sm:$0xf]
      %v4757 = vld [vmem:[%s9 + $0x48] sm:$0xf]
      %v4758 = vld [vmem:[%s9 + $0x4c] sm:$0xf]
      %v4759 = vld [vmem:[%s9 + $0x50] sm:$0xf]
      %v4760 = vld [vmem:[%s9 + $0x54] sm:$0xf]
      %v4761 = vld [vmem:[%s9 + $0x58] sm:$0xf]
      %v4762 = vld [vmem:[%s9 + $0x5c] sm:$0xf]
      %v4763 = vld [vmem:[%s9 + $0x60] sm:$0xf]
      %v4764 = vld [vmem:[%s9 + $0x64] sm:$0xf]
      %v4765 = vld [vmem:[%s9 + $0x68] sm:$0xf]
      %v4766 = vld [vmem:[%s9 + $0x6c] sm:$0xf]
      %v4767 = vld [vmem:[%s9 + $0x70] sm:$0xf]
      %v4768 = vld [vmem:[%s9 + $0x74] sm:$0xf]
      %v4769 = vld [vmem:[%s9 + $0x78] sm:$0xf]
      %v4770 = vld [vmem:[%s9 + $0x7c] sm:$0xf]
      %v4771 = vld [vmem:[%s9 + $0x80] sm:$0xf]
      %v4772 = vld [vmem:[%s9 + $0x84] sm:$0xf]
      %v4773 = vld [vmem:[%s9 + $0x88] sm:$0xf]
      %v4774 = vld [vmem:[%s9 + $0x8c] sm:$0xf]
      %v4775 = vld [vmem:[%s10] sm:$0x1]
      %v4777 = vlaneseq
      %v4778 = vshrl.u32 %v4777, 7
      %v4779 = vsub.s32 0, %v4778
      %v4780 = vrot.slane %v4775, %v4779
      %v4818 = vunpack.c.l.b16 %v4739
      %v4819 = vunpack.c.l.b16 %v4740
      %v4820 = vunpack.c.l.b16 %v4741
      %v4821 = vunpack.c.l.b16 %v4742
      %v4822 = vunpack.c.l.b16 %v4743
      %v4823 = vunpack.c.l.b16 %v4744
      %v4824 = vunpack.c.l.b16 %v4745
      %v4825 = vunpack.c.l.b16 %v4746
      %v4826 = vunpack.c.l.b16 %v4747
      %v4827 = vunpack.c.l.b16 %v4748
      %v4828 = vunpack.c.l.b16 %v4749
      %v4829 = vunpack.c.l.b16 %v4750
      %v4830 = vunpack.c.l.b16 %v4751
      %v4831 = vunpack.c.l.b16 %v4752
      %v4832 = vunpack.c.l.b16 %v4753
      %v4833 = vunpack.c.l.b16 %v4754
      %v4834 = vunpack.c.l.b16 %v4755
      %v4835 = vunpack.c.l.b16 %v4756
      %v4836 = vunpack.c.l.b16 %v4757
      %v4837 = vunpack.c.l.b16 %v4758
      %v4838 = vunpack.c.l.b16 %v4759
      %v4839 = vunpack.c.l.b16 %v4760
      %v4840 = vunpack.c.l.b16 %v4761
      %v4841 = vunpack.c.l.b16 %v4762
      %v4842 = vunpack.c.l.b16 %v4763
      %v4843 = vunpack.c.l.b16 %v4764
      %v4844 = vunpack.c.l.b16 %v4765
      %v4845 = vunpack.c.l.b16 %v4766
      %v4846 = vunpack.c.l.b16 %v4767
      %v4847 = vunpack.c.l.b16 %v4768
      %v4848 = vunpack.c.l.b16 %v4769
      %v4849 = vunpack.c.l.b16 %v4770
      %v4850 = vunpack.c.l.b16 %v4771
      %v4851 = vunpack.c.l.b16 %v4772
      %v4852 = vunpack.c.l.b16 %v4773
      %v4853 = vunpack.c.l.b16 %v4774
      %v4854 = vpack.c.b16 %v4819, %v4818
      %v4855 = vpack.c.b16 %v4821, %v4820
      %v4856 = vpack.c.b16 %v4823, %v4822
      %v4857 = vpack.c.b16 %v4825, %v4824
      %v4858 = vpack.c.b16 %v4827, %v4826
      %v4859 = vpack.c.b16 %v4829, %v4828
      %v4860 = vpack.c.b16 %v4831, %v4830
      %v4861 = vpack.c.b16 %v4833, %v4832
      %v4862 = vpack.c.b16 %v4835, %v4834
      %v4863 = vpack.c.b16 %v4837, %v4836
      %v4864 = vpack.c.b16 %v4839, %v4838
      %v4865 = vpack.c.b16 %v4841, %v4840
      %v4866 = vpack.c.b16 %v4843, %v4842
      %v4867 = vpack.c.b16 %v4845, %v4844
      %v4868 = vpack.c.b16 %v4847, %v4846
      %v4869 = vpack.c.b16 %v4849, %v4848
      %v4870 = vpack.c.b16 %v4851, %v4850
      %v4871 = vpack.c.b16 %v4853, %v4852
      %v4891 = vsel %vm2227, %v4704, 0
      %4893 = vmatprep.subr.bf16.mxu0 0
      %4894 = vmatpush1.bf16.msra.mxu0 %v4861
      %4895 = vmatprep.subr.bf16.mxu0 0
      %4896 = vmatpush1.bf16.msra.mxu0 %v4860
      %4897 = vmatprep.subr.bf16.mxu0 0
      %4898 = vmatpush1.bf16.msra.mxu0 %v4859
      %4899 = vmatprep.subr.bf16.mxu0 0
      %4900 = vmatpush1.bf16.msra.mxu0 %v4858
      %4901 = vmatprep.subr.bf16.mxu0 0
      %4902 = vmatpush1.bf16.msra.mxu0 %v4857
      %4903 = vmatprep.subr.bf16.mxu0 0
      %4904 = vmatpush1.bf16.msra.mxu0 %v4856
      %4905 = vmatprep.subr.bf16.mxu0 0
      %4906 = vmatpush1.bf16.msra.mxu0 %v4855
      %4907 = vmatprep.subr.bf16.mxu0 0
      %4908 = vmatpush1.bf16.msra.mxu0 %v4854
      %4909 = vmatprep.subr.bf16.mxu0 0
      %4910 = vmatpush2.bf16.msra.mxu0 %v4869
      %4911 = vmatprep.subr.bf16.mxu0 0
      %4912 = vmatpush2.bf16.msra.mxu0 %v4868
      %4913 = vmatprep.subr.bf16.mxu0 0
      %4914 = vmatpush2.bf16.msra.mxu0 %v4867
      %4915 = vmatprep.subr.bf16.mxu0 0
      %4916 = vmatpush2.bf16.msra.mxu0 %v4866
      %4917 = vmatprep.subr.bf16.mxu0 0
      %4918 = vmatpush2.bf16.msra.mxu0 %v4865
      %4919 = vmatprep.subr.bf16.mxu0 0
      %4920 = vmatpush2.bf16.msra.mxu0 %v4864
      %4921 = vmatprep.subr.bf16.mxu0 0
      %4922 = vmatpush2.bf16.msra.mxu0 %v4863
      %4923 = vmatprep.subr.bf16.mxu0 0
      %4924 = vmatpush2.bf16.msra.mxu0 %v4862
      %4925 = vmatprep.mubr.bf16.mxu0 %v4737
      %4926 = vmatmul.mubr.bf16.gmra.mxu0 %v4729
      %v4927 = vpop.f32.mrf.mxu0
      %v4928 = vadd.f32 %v4780, %v4927
      %v4929 = vpop.f32.mrf.mxu0
      %v4930 = vpop.f32.mrf.mxu0
      %v4931 = vadd.f32 %v4780, %v4930
      %v4932 = vpop.f32.mrf.mxu0
      %4933 = vdwg.mxu0
      %4934 = vmatprep.subr.bf16.mxu0 0
      %4935 = vmatpush1.bf16.msra.mxu0 0
      %4936 = vmatprep.subr.bf16.mxu0 0
      %4937 = vmatpush1.bf16.msra.mxu0 0
      %4938 = vmatprep.subr.bf16.mxu0 0
      %4939 = vmatpush1.bf16.msra.mxu0 0
      %4940 = vmatprep.subr.bf16.mxu0 0
      %4941 = vmatpush1.bf16.msra.mxu0 0
      %4942 = vmatprep.subr.bf16.mxu0 0
      %4943 = vmatpush1.bf16.msra.mxu0 0
      %4944 = vmatprep.subr.bf16.mxu0 0
      %4945 = vmatpush1.bf16.msra.mxu0 0
      %4946 = vmatprep.subr.bf16.mxu0 0
      %4947 = vmatpush1.bf16.msra.mxu0 %v4871
      %4948 = vmatprep.subr.bf16.mxu0 0
      %4949 = vmatpush1.bf16.msra.mxu0 %v4870
      %4950 = vmatprep.subr.bf16.mxu0 0
      %4951 = vmatpush2.bf16.msra.mxu0 0
      %4952 = vmatprep.subr.bf16.mxu0 0
      %4953 = vmatpush2.bf16.msra.mxu0 0
      %4954 = vmatprep.subr.bf16.mxu0 0
      %4955 = vmatpush2.bf16.msra.mxu0 0
      %4956 = vmatprep.subr.bf16.mxu0 0
      %4957 = vmatpush2.bf16.msra.mxu0 0
      %4958 = vmatprep.subr.bf16.mxu0 0
      %4959 = vmatpush2.bf16.msra.mxu0 0
      %4960 = vmatprep.subr.bf16.mxu0 0
      %4961 = vmatpush2.bf16.msra.mxu0 0
      %4962 = vmatprep.subr.bf16.mxu0 0
      %4963 = vmatpush2.bf16.msra.mxu0 0
      %4964 = vmatprep.subr.bf16.mxu0 0
      %4965 = vmatpush2.bf16.msra.mxu0 0
      %4966 = vmatprep.mubr.bf16.mxu0 0
      %4967 = vmatmul.mubr.bf16.gmra.mxu0 %v4891
      %v4968 = vpop.f32.mrf.mxu0
      %v4969 = vadd.f32 %v4928, %v4968
      %v4970 = vpop.f32.mrf.mxu0
      %v4971 = vpop.f32.mrf.mxu0
      %v4972 = vadd.f32 %v4931, %v4971
      %v4973 = vpop.f32.mrf.mxu0
      %4974 = vdwg.mxu0
      %v4975 = vmax.f32 %v4969, 0.0
      %v4976 = vmax.f32 %v4972, 0.0
      %v4977 = vpack.c.bf16 %v4976, %v4975
      %v4978 = vld [vmem:[%s19] sm:$0xf]
      %v4979 = vld [vmem:[%s19 + $0x4] sm:$0xf]
      %v4980 = vld [vmem:[%s19 + $0x8] sm:$0xf]
      %v4981 = vld [vmem:[%s19 + $0xc] sm:$0xf]
      %v4982 = vld [vmem:[%s19 + $0x10] sm:$0xf]
      %v4983 = vld [vmem:[%s19 + $0x14] sm:$0xf]
      %v4984 = vld [vmem:[%s19 + $0x18] sm:$0xf]
      %v4985 = vld [vmem:[%s19 + $0x1c] sm:$0xf]
      %v4994 = vunpack.c.l.b16 %v4978
      %v4995 = vunpack.c.l.b16 %v4979
      %v4996 = vunpack.c.l.b16 %v4980
      %v4997 = vunpack.c.l.b16 %v4981
      %v4998 = vunpack.c.l.b16 %v4982
      %v4999 = vunpack.c.l.b16 %v4983
      %v5000 = vunpack.c.l.b16 %v4984
      %v5001 = vunpack.c.l.b16 %v4985
      %v5002 = vpack.c.b16 %v4995, %v4994
      %v5003 = vpack.c.b16 %v4997, %v4996
      %v5004 = vpack.c.b16 %v4999, %v4998
      %v5005 = vpack.c.b16 %v5001, %v5000
      %v5007 = vsel %vm2161, %v5002, 0
      %v5010 = vsel %vm2161, %v5003, 0
      %v5013 = vsel %vm2161, %v5004, 0
      %v5016 = vsel %vm2161, %v5005, 0
      %5018 = vmatprep.subr.bf16.mxu0 0
      %5019 = vmatpush1.bf16.msra.mxu0 0
      %5020 = vmatprep.subr.bf16.mxu0 0
      %5021 = vmatpush1.bf16.msra.mxu0 0
      %5022 = vmatprep.subr.bf16.mxu0 0
      %5023 = vmatpush1.bf16.msra.mxu0 0
      %5024 = vmatprep.subr.bf16.mxu0 0
      %5025 = vmatpush1.bf16.msra.mxu0 0
      %5026 = vmatprep.subr.bf16.mxu0 0
      %5027 = vmatpush1.bf16.msra.mxu0 0
      %5028 = vmatprep.subr.bf16.mxu0 0
      %5029 = vmatpush1.bf16.msra.mxu0 0
      %5030 = vmatprep.subr.bf16.mxu0 0
      %5031 = vmatpush1.bf16.msra.mxu0 0
      %5032 = vmatprep.subr.bf16.mxu0 0
      %5033 = vmatpush1.bf16.msra.mxu0 %v4977
      %5034 = vmatprep.subr.bf16.mxu0 0
      %5035 = vmatpush2.bf16.msra.mxu0 0
      %5036 = vmatprep.subr.bf16.mxu0 0
      %5037 = vmatpush2.bf16.msra.mxu0 0
      %5038 = vmatprep.subr.bf16.mxu0 0
      %5039 = vmatpush2.bf16.msra.mxu0 0
      %5040 = vmatprep.subr.bf16.mxu0 0
      %5041 = vmatpush2.bf16.msra.mxu0 0
      %5042 = vmatprep.subr.bf16.mxu0 0
      %5043 = vmatpush2.bf16.msra.mxu0 0
      %5044 = vmatprep.subr.bf16.mxu0 0
      %5045 = vmatpush2.bf16.msra.mxu0 0
      %5046 = vmatprep.subr.bf16.mxu0 0
      %5047 = vmatpush2.bf16.msra.mxu0 0
      %5048 = vmatprep.subr.bf16.mxu0 0
      %5049 = vmatpush2.bf16.msra.mxu0 0
      %5050 = vmatprep.mubr.bf16.mxu0 0
      %5051 = vmatmul.mubr.bf16.gmra.mxu0 %v5007
      %v5052 = vpop.f32.mrf.mxu0
      %v5053 = vadd.f32 0.0, %v5052
      %v5054 = vpop.f32.mrf.mxu0
      %v5055 = vpop.f32.mrf.mxu0
      %v5056 = vadd.f32 0.0, %v5055
      %v5057 = vpop.f32.mrf.mxu0
      %5058 = vmatprep.mubr.bf16.mxu0 0
      %5059 = vmatmul.mubr.bf16.gmra.mxu0 %v5010
      %v5060 = vpop.f32.mrf.mxu0
      %v5061 = vadd.f32 0.0, %v5060
      %v5062 = vpop.f32.mrf.mxu0
      %v5063 = vpop.f32.mrf.mxu0
      %v5064 = vadd.f32 0.0, %v5063
      %v5065 = vpop.f32.mrf.mxu0
      %5066 = vmatprep.mubr.bf16.mxu0 0
      %5067 = vmatmul.mubr.bf16.gmra.mxu0 %v5013
      %v5068 = vpop.f32.mrf.mxu0
      %v5069 = vadd.f32 0.0, %v5068
      %v5070 = vpop.f32.mrf.mxu0
      %v5071 = vpop.f32.mrf.mxu0
      %v5072 = vadd.f32 0.0, %v5071
      %v5073 = vpop.f32.mrf.mxu0
      %5074 = vmatprep.mubr.bf16.mxu0 0
      %5075 = vmatmul.mubr.bf16.gmra.mxu0 %v5016
      %v5076 = vpop.f32.mrf.mxu0
      %v5077 = vadd.f32 0.0, %v5076
      %v5078 = vpop.f32.mrf.mxu0
      %v5079 = vpop.f32.mrf.mxu0
      %v5080 = vadd.f32 0.0, %v5079
      %v5081 = vpop.f32.mrf.mxu0
      %5082 = vdwg.mxu0
      %v5083 = vpack.c.bf16 %v5056, %v5053
      %v5084 = vpack.c.bf16 %v5064, %v5061
      %v5085 = vpack.c.bf16 %v5072, %v5069
      %v5086 = vpack.c.bf16 %v5080, %v5077
      %5087 = vst.msk [vmem:[#allocation7] sm:$0xff] %vm2359, 0.0
      %5088 = vst.msk [vmem:[#allocation7 + $0x8] sm:$0xff] %vm2359, 0.0
      %5089 = vst.msk [vmem:[#allocation7 + $0x50] sm:$0xff] %vm2359, 0.0
      %5090 = vst.msk [vmem:[#allocation7 + $0x58] sm:$0x1] %vm2699, 0.0
      %v5091 = vunpack.c.l.bf16 %v5083
      %v5092 = vunpack.c.h.bf16 %v5083
      %v5093 = vunpack.c.l.bf16 %v5084
      %v5094 = vunpack.c.h.bf16 %v5084
      %v5095 = vunpack.c.l.bf16 %v5085
      %v5096 = vunpack.c.h.bf16 %v5085
      %v5097 = vunpack.c.l.bf16 %v5086
      %v5098 = vunpack.c.h.bf16 %v5086
      %5099 = vst.msk [vmem:[#allocation7 + $0x10] sm:$0xff] %vm2359, %v5091
      %5100 = vst.msk [vmem:[#allocation7 + $0x18] sm:$0xff] %vm2359, %v5092
      %5101 = vst.msk [vmem:[#allocation7 + $0x20] sm:$0xff] %vm2359, %v5093
      %5102 = vst.msk [vmem:[#allocation7 + $0x28] sm:$0xff] %vm2359, %v5094
      %5103 = vst.msk [vmem:[#allocation7 + $0x30] sm:$0xff] %vm2359, %v5095
      %5104 = vst.msk [vmem:[#allocation7 + $0x38] sm:$0xff] %vm2359, %v5096
      %5105 = vst.msk [vmem:[#allocation7 + $0x40] sm:$0xff] %vm2359, %v5097
      %5106 = vst.msk [vmem:[#allocation7 + $0x48] sm:$0xff] %vm2359, %v5098
      %v5107 = vld [vmem:[#allocation7 + $0x7] sm:$0xff]
      %v5108 = vld [vmem:[#allocation7 + $0xf] sm:$0xff]
      %v5109 = vld [vmem:[#allocation7 + $0x17] sm:$0xff]
      %v5110 = vld [vmem:[#allocation7 + $0x1f] sm:$0xff]
      %v5111 = vld [vmem:[#allocation7 + $0x27] sm:$0xff]
      %v5112 = vld [vmem:[#allocation7 + $0x2f] sm:$0xff]
      %v5113 = vld [vmem:[#allocation7 + $0x37] sm:$0xff]
      %v5114 = vld [vmem:[#allocation7 + $0x3f] sm:$0xff]
      %v5115 = vpack.c.bf16 %v5108, %v5107
      %v5116 = vpack.c.bf16 %v5110, %v5109
      %v5117 = vpack.c.bf16 %v5112, %v5111
      %v5118 = vpack.c.bf16 %v5114, %v5113
      %v5119 = vsel %vm3168, 0, %v5115
      %v5120 = vsel %vm3169, 0, %v5116
      %v5121 = vsel %vm3170, 0, %v5117
      %v5122 = vsel %vm3171, 0, %v5118
      %v5123 = vld [vmem:[#allocation7 + $0x8] sm:$0xff]
      %v5124 = vld [vmem:[#allocation7 + $0x10] sm:$0xff]
      %v5125 = vld [vmem:[#allocation7 + $0x18] sm:$0xff]
      %v5126 = vld [vmem:[#allocation7 + $0x20] sm:$0xff]
      %v5127 = vld [vmem:[#allocation7 + $0x28] sm:$0xff]
      %v5128 = vld [vmem:[#allocation7 + $0x30] sm:$0xff]
      %v5129 = vld [vmem:[#allocation7 + $0x38] sm:$0xff]
      %v5130 = vld [vmem:[#allocation7 + $0x40] sm:$0xff]
      %v5131 = vpack.c.bf16 %v5124, %v5123
      %v5132 = vpack.c.bf16 %v5126, %v5125
      %v5133 = vpack.c.bf16 %v5128, %v5127
      %v5134 = vpack.c.bf16 %v5130, %v5129
      %v5135 = vld [vmem:[#allocation7 + $0x9] sm:$0xff]
      %v5136 = vld [vmem:[#allocation7 + $0x11] sm:$0xff]
      %v5137 = vld [vmem:[#allocation7 + $0x19] sm:$0xff]
      %v5138 = vld [vmem:[#allocation7 + $0x21] sm:$0xff]
      %v5139 = vld [vmem:[#allocation7 + $0x29] sm:$0xff]
      %v5140 = vld [vmem:[#allocation7 + $0x31] sm:$0xff]
      %v5141 = vld [vmem:[#allocation7 + $0x39] sm:$0xff]
      %v5142 = vld [vmem:[#allocation7 + $0x41] sm:$0xff]
      %v5143 = vpack.c.bf16 %v5136, %v5135
      %v5144 = vpack.c.bf16 %v5138, %v5137
      %v5145 = vpack.c.bf16 %v5140, %v5139
      %v5146 = vpack.c.bf16 %v5142, %v5141
      %v5147 = vsel %vm3228, 0, %v5143
      %v5148 = vsel %vm3229, 0, %v5144
      %v5149 = vsel %vm3230, 0, %v5145
      %v5150 = vsel %vm3231, 0, %v5146
      %v5151 = vld [vmem:[#allocation7 + $0x47] sm:$0xff]
      %v5152 = vpack.c.bf16 %v5109, %v5108
      %v5153 = vpack.c.bf16 %v5111, %v5110
      %v5154 = vpack.c.bf16 %v5113, %v5112
      %v5155 = vpack.c.bf16 %v5151, %v5114
      %v5156 = vsel %vm3168, 0, %v5152
      %v5157 = vsel %vm3169, 0, %v5153
      %v5158 = vsel %vm3170, 0, %v5154
      %v5159 = vsel %vm3171, 0, %v5155
      %v5160 = vld [vmem:[#allocation7 + $0x48] sm:$0xff]
      %v5161 = vpack.c.bf16 %v5125, %v5124
      %v5162 = vpack.c.bf16 %v5127, %v5126
      %v5163 = vpack.c.bf16 %v5129, %v5128
      %v5164 = vpack.c.bf16 %v5160, %v5130
      %v5165 = vld [vmem:[#allocation7 + $0x49] sm:$0xff]
      %v5166 = vpack.c.bf16 %v5137, %v5136
      %v5167 = vpack.c.bf16 %v5139, %v5138
      %v5168 = vpack.c.bf16 %v5141, %v5140
      %v5169 = vpack.c.bf16 %v5165, %v5142
      %v5170 = vsel %vm3228, 0, %v5166
      %v5171 = vsel %vm3229, 0, %v5167
      %v5172 = vsel %vm3230, 0, %v5168
      %v5173 = vsel %vm3231, 0, %v5169
      %v5174 = vld [vmem:[#allocation7 + $0x4f] sm:$0xff]
      %v5175 = vpack.c.bf16 %v5174, %v5151
      %v5176 = vsel %vm3168, 0, %v5116
      %v5177 = vsel %vm3169, 0, %v5117
      %v5178 = vsel %vm3170, 0, %v5118
      %v5179 = vsel %vm3171, 0, %v5175
      %v5180 = vld [vmem:[#allocation7 + $0x50] sm:$0xff]
      %v5181 = vpack.c.bf16 %v5180, %v5160
      %v5182 = vld [vmem:[#allocation7 + $0x51] sm:$0xff]
      %v5183 = vpack.c.bf16 %v5182, %v5165
      %v5184 = vsel %vm3228, 0, %v5144
      %v5185 = vsel %vm3229, 0, %v5145
      %v5186 = vsel %vm3230, 0, %v5146
      %v5187 = vsel %vm3231, 0, %v5183
      %5192 = vrot.lane.b32.xlu0 %v5131, 64
      %v5193 = vpop.permute.xlu0 %5192
      %5194 = vrot.lane.b32.xlu0 %v5132, 64
      %v5195 = vpop.permute.xlu0 %5194
      %5196 = vrot.lane.b32.xlu0 %v5133, 64
      %v5197 = vpop.permute.xlu0 %5196
      %5198 = vrot.lane.b32.xlu0 %v5134, 64
      %v5199 = vpop.permute.xlu0 %5198
      %5204 = vrot.lane.b32.xlu0 %v5156, 64
      %v5205 = vpop.permute.xlu0 %5204
      %5206 = vrot.lane.b32.xlu0 %v5157, 64
      %v5207 = vpop.permute.xlu0 %5206
      %5208 = vrot.lane.b32.xlu0 %v5158, 64
      %v5209 = vpop.permute.xlu0 %5208
      %5210 = vrot.lane.b32.xlu0 %v5159, 64
      %v5211 = vpop.permute.xlu0 %5210
      %5216 = vrot.lane.b32.xlu0 %v5170, 64
      %v5217 = vpop.permute.xlu0 %5216
      %5218 = vrot.lane.b32.xlu0 %v5171, 64
      %v5219 = vpop.permute.xlu0 %5218
      %5220 = vrot.lane.b32.xlu0 %v5172, 64
      %v5221 = vpop.permute.xlu0 %5220
      %5222 = vrot.lane.b32.xlu0 %v5173, 64
      %v5223 = vpop.permute.xlu0 %5222
      %5225 = vrot.lane.b32.xlu0 %v5181, 64
      %v5226 = vpop.permute.xlu0 %5225
      %v5229 = vsel %vm2359, %v5119, %v5193
      %v5233 = vsel %vm2359, %v5120, %v5195
      %v5237 = vsel %vm2359, %v5121, %v5197
      %v5241 = vsel %vm2359, %v5122, %v5199
      %v5245 = vsel %vm2359, %v5147, %v5205
      %v5249 = vsel %vm2359, %v5148, %v5207
      %v5253 = vsel %vm2359, %v5149, %v5209
      %v5257 = vsel %vm2359, %v5150, %v5211
      %v5261 = vsel %vm2359, %v5161, %v5217
      %v5265 = vsel %vm2359, %v5162, %v5219
      %v5269 = vsel %vm2359, %v5163, %v5221
      %v5273 = vsel %vm2359, %v5164, %v5223
      %v5276 = vsel %vm2359, %v5176, %v5195
      %v5279 = vsel %vm2359, %v5177, %v5197
      %v5282 = vsel %vm2359, %v5178, %v5199
      %v5286 = vsel %vm2359, %v5179, %v5226
      %v5288 = vld [vmem:[%s11] sm:$0xf]
      %v5289 = vld [vmem:[%s11 + $0x4] sm:$0xf]
      %v5290 = vld [vmem:[%s11 + $0x8] sm:$0xf]
      %v5291 = vld [vmem:[%s11 + $0xc] sm:$0xf]
      %v5292 = vld [vmem:[%s11 + $0x10] sm:$0xf]
      %v5293 = vld [vmem:[%s11 + $0x14] sm:$0xf]
      %v5294 = vld [vmem:[%s11 + $0x18] sm:$0xf]
      %v5295 = vld [vmem:[%s11 + $0x1c] sm:$0xf]
      %v5296 = vld [vmem:[%s11 + $0x20] sm:$0xf]
      %v5297 = vld [vmem:[%s11 + $0x24] sm:$0xf]
      %v5298 = vld [vmem:[%s11 + $0x28] sm:$0xf]
      %v5299 = vld [vmem:[%s11 + $0x2c] sm:$0xf]
      %v5300 = vld [vmem:[%s11 + $0x30] sm:$0xf]
      %v5301 = vld [vmem:[%s11 + $0x34] sm:$0xf]
      %v5302 = vld [vmem:[%s11 + $0x38] sm:$0xf]
      %v5303 = vld [vmem:[%s11 + $0x3c] sm:$0xf]
      %v5304 = vld [vmem:[%s11 + $0x40] sm:$0xf]
      %v5305 = vld [vmem:[%s11 + $0x44] sm:$0xf]
      %v5306 = vld [vmem:[%s11 + $0x48] sm:$0xf]
      %v5307 = vld [vmem:[%s11 + $0x4c] sm:$0xf]
      %v5308 = vld [vmem:[%s11 + $0x50] sm:$0xf]
      %v5309 = vld [vmem:[%s11 + $0x54] sm:$0xf]
      %v5310 = vld [vmem:[%s11 + $0x58] sm:$0xf]
      %v5311 = vld [vmem:[%s11 + $0x5c] sm:$0xf]
      %v5312 = vld [vmem:[%s11 + $0x60] sm:$0xf]
      %v5313 = vld [vmem:[%s11 + $0x64] sm:$0xf]
      %v5314 = vld [vmem:[%s11 + $0x68] sm:$0xf]
      %v5315 = vld [vmem:[%s11 + $0x6c] sm:$0xf]
      %v5316 = vld [vmem:[%s11 + $0x70] sm:$0xf]
      %v5317 = vld [vmem:[%s11 + $0x74] sm:$0xf]
      %v5318 = vld [vmem:[%s11 + $0x78] sm:$0xf]
      %v5319 = vld [vmem:[%s11 + $0x7c] sm:$0xf]
      %v5320 = vld [vmem:[%s11 + $0x80] sm:$0xf]
      %v5321 = vld [vmem:[%s11 + $0x84] sm:$0xf]
      %v5322 = vld [vmem:[%s11 + $0x88] sm:$0xf]
      %v5323 = vld [vmem:[%s11 + $0x8c] sm:$0xf]
      %v5324 = vld [vmem:[%s11 + $0x90] sm:$0xf]
      %v5325 = vld [vmem:[%s11 + $0x94] sm:$0xf]
      %v5326 = vld [vmem:[%s11 + $0x98] sm:$0xf]
      %v5327 = vld [vmem:[%s11 + $0x9c] sm:$0xf]
      %v5328 = vld [vmem:[%s11 + $0xa0] sm:$0xf]
      %v5329 = vld [vmem:[%s11 + $0xa4] sm:$0xf]
      %v5330 = vld [vmem:[%s11 + $0xa8] sm:$0xf]
      %v5331 = vld [vmem:[%s11 + $0xac] sm:$0xf]
      %v5332 = vld [vmem:[%s11 + $0xb0] sm:$0xf]
      %v5333 = vld [vmem:[%s11 + $0xb4] sm:$0xf]
      %v5334 = vld [vmem:[%s11 + $0xb8] sm:$0xf]
      %v5335 = vld [vmem:[%s11 + $0xbc] sm:$0xf]
      %v5336 = vld [vmem:[%s11 + $0xc0] sm:$0xf]
      %v5337 = vld [vmem:[%s11 + $0xc4] sm:$0xf]
      %v5338 = vld [vmem:[%s11 + $0xc8] sm:$0xf]
      %v5339 = vld [vmem:[%s11 + $0xcc] sm:$0xf]
      %v5340 = vld [vmem:[%s11 + $0xd0] sm:$0xf]
      %v5341 = vld [vmem:[%s11 + $0xd4] sm:$0xf]
      %v5342 = vld [vmem:[%s11 + $0xd8] sm:$0xf]
      %v5343 = vld [vmem:[%s11 + $0xdc] sm:$0xf]
      %v5344 = vld [vmem:[%s11 + $0xe0] sm:$0xf]
      %v5345 = vld [vmem:[%s11 + $0xe4] sm:$0xf]
      %v5346 = vld [vmem:[%s11 + $0xe8] sm:$0xf]
      %v5347 = vld [vmem:[%s11 + $0xec] sm:$0xf]
      %v5348 = vld [vmem:[%s11 + $0xf0] sm:$0xf]
      %v5349 = vld [vmem:[%s11 + $0xf4] sm:$0xf]
      %v5350 = vld [vmem:[%s11 + $0xf8] sm:$0xf]
      %v5351 = vld [vmem:[%s11 + $0xfc] sm:$0xf]
      %v5352 = vld [vmem:[%s11 + $0x100] sm:$0xf]
      %v5353 = vld [vmem:[%s11 + $0x104] sm:$0xf]
      %v5354 = vld [vmem:[%s11 + $0x108] sm:$0xf]
      %v5355 = vld [vmem:[%s11 + $0x10c] sm:$0xf]
      %v5356 = vld [vmem:[%s11 + $0x110] sm:$0xf]
      %v5357 = vld [vmem:[%s11 + $0x114] sm:$0xf]
      %v5358 = vld [vmem:[%s11 + $0x118] sm:$0xf]
      %v5359 = vld [vmem:[%s11 + $0x11c] sm:$0xf]
      %v5360 = vld [vmem:[%s12] sm:$0x1]
      %v5362 = vlaneseq
      %v5363 = vshrl.u32 %v5362, 7
      %v5364 = vsub.s32 0, %v5363
      %v5365 = vrot.slane %v5360, %v5364
      %v5439 = vunpack.c.l.b16 %v5288
      %v5440 = vunpack.c.l.b16 %v5289
      %v5441 = vunpack.c.l.b16 %v5290
      %v5442 = vunpack.c.l.b16 %v5291
      %v5443 = vunpack.c.l.b16 %v5292
      %v5444 = vunpack.c.l.b16 %v5293
      %v5445 = vunpack.c.l.b16 %v5294
      %v5446 = vunpack.c.l.b16 %v5295
      %v5447 = vunpack.c.l.b16 %v5296
      %v5448 = vunpack.c.l.b16 %v5297
      %v5449 = vunpack.c.l.b16 %v5298
      %v5450 = vunpack.c.l.b16 %v5299
      %v5451 = vunpack.c.l.b16 %v5300
      %v5452 = vunpack.c.l.b16 %v5301
      %v5453 = vunpack.c.l.b16 %v5302
      %v5454 = vunpack.c.l.b16 %v5303
      %v5455 = vunpack.c.l.b16 %v5304
      %v5456 = vunpack.c.l.b16 %v5305
      %v5457 = vunpack.c.l.b16 %v5306
      %v5458 = vunpack.c.l.b16 %v5307
      %v5459 = vunpack.c.l.b16 %v5308
      %v5460 = vunpack.c.l.b16 %v5309
      %v5461 = vunpack.c.l.b16 %v5310
      %v5462 = vunpack.c.l.b16 %v5311
      %v5463 = vunpack.c.l.b16 %v5312
      %v5464 = vunpack.c.l.b16 %v5313
      %v5465 = vunpack.c.l.b16 %v5314
      %v5466 = vunpack.c.l.b16 %v5315
      %v5467 = vunpack.c.l.b16 %v5316
      %v5468 = vunpack.c.l.b16 %v5317
      %v5469 = vunpack.c.l.b16 %v5318
      %v5470 = vunpack.c.l.b16 %v5319
      %v5471 = vunpack.c.l.b16 %v5320
      %v5472 = vunpack.c.l.b16 %v5321
      %v5473 = vunpack.c.l.b16 %v5322
      %v5474 = vunpack.c.l.b16 %v5323
      %v5475 = vunpack.c.l.b16 %v5324
      %v5476 = vunpack.c.l.b16 %v5325
      %v5477 = vunpack.c.l.b16 %v5326
      %v5478 = vunpack.c.l.b16 %v5327
      %v5479 = vunpack.c.l.b16 %v5328
      %v5480 = vunpack.c.l.b16 %v5329
      %v5481 = vunpack.c.l.b16 %v5330
      %v5482 = vunpack.c.l.b16 %v5331
      %v5483 = vunpack.c.l.b16 %v5332
      %v5484 = vunpack.c.l.b16 %v5333
      %v5485 = vunpack.c.l.b16 %v5334
      %v5486 = vunpack.c.l.b16 %v5335
      %v5487 = vunpack.c.l.b16 %v5336
      %v5488 = vunpack.c.l.b16 %v5337
      %v5489 = vunpack.c.l.b16 %v5338
      %v5490 = vunpack.c.l.b16 %v5339
      %v5491 = vunpack.c.l.b16 %v5340
      %v5492 = vunpack.c.l.b16 %v5341
      %v5493 = vunpack.c.l.b16 %v5342
      %v5494 = vunpack.c.l.b16 %v5343
      %v5495 = vunpack.c.l.b16 %v5344
      %v5496 = vunpack.c.l.b16 %v5345
      %v5497 = vunpack.c.l.b16 %v5346
      %v5498 = vunpack.c.l.b16 %v5347
      %v5499 = vunpack.c.l.b16 %v5348
      %v5500 = vunpack.c.l.b16 %v5349
      %v5501 = vunpack.c.l.b16 %v5350
      %v5502 = vunpack.c.l.b16 %v5351
      %v5503 = vunpack.c.l.b16 %v5352
      %v5504 = vunpack.c.l.b16 %v5353
      %v5505 = vunpack.c.l.b16 %v5354
      %v5506 = vunpack.c.l.b16 %v5355
      %v5507 = vunpack.c.l.b16 %v5356
      %v5508 = vunpack.c.l.b16 %v5357
      %v5509 = vunpack.c.l.b16 %v5358
      %v5510 = vunpack.c.l.b16 %v5359
      %v5511 = vpack.c.b16 %v5440, %v5439
      %v5512 = vpack.c.b16 %v5442, %v5441
      %v5513 = vpack.c.b16 %v5444, %v5443
      %v5514 = vpack.c.b16 %v5446, %v5445
      %v5515 = vpack.c.b16 %v5448, %v5447
      %v5516 = vpack.c.b16 %v5450, %v5449
      %v5517 = vpack.c.b16 %v5452, %v5451
      %v5518 = vpack.c.b16 %v5454, %v5453
      %v5519 = vpack.c.b16 %v5456, %v5455
      %v5520 = vpack.c.b16 %v5458, %v5457
      %v5521 = vpack.c.b16 %v5460, %v5459
      %v5522 = vpack.c.b16 %v5462, %v5461
      %v5523 = vpack.c.b16 %v5464, %v5463
      %v5524 = vpack.c.b16 %v5466, %v5465
      %v5525 = vpack.c.b16 %v5468, %v5467
      %v5526 = vpack.c.b16 %v5470, %v5469
      %v5527 = vpack.c.b16 %v5472, %v5471
      %v5528 = vpack.c.b16 %v5474, %v5473
      %v5529 = vpack.c.b16 %v5476, %v5475
      %v5530 = vpack.c.b16 %v5478, %v5477
      %v5531 = vpack.c.b16 %v5480, %v5479
      %v5532 = vpack.c.b16 %v5482, %v5481
      %v5533 = vpack.c.b16 %v5484, %v5483
      %v5534 = vpack.c.b16 %v5486, %v5485
      %v5535 = vpack.c.b16 %v5488, %v5487
      %v5536 = vpack.c.b16 %v5490, %v5489
      %v5537 = vpack.c.b16 %v5492, %v5491
      %v5538 = vpack.c.b16 %v5494, %v5493
      %v5539 = vpack.c.b16 %v5496, %v5495
      %v5540 = vpack.c.b16 %v5498, %v5497
      %v5541 = vpack.c.b16 %v5500, %v5499
      %v5542 = vpack.c.b16 %v5502, %v5501
      %v5543 = vpack.c.b16 %v5504, %v5503
      %v5544 = vpack.c.b16 %v5506, %v5505
      %v5545 = vpack.c.b16 %v5508, %v5507
      %v5546 = vpack.c.b16 %v5510, %v5509
      %v5584 = vsel %vm2359, %v5184, 0
      %v5587 = vsel %vm2359, %v5185, 0
      %v5590 = vsel %vm2359, %v5186, 0
      %v5593 = vsel %vm2359, %v5187, 0
      %5595 = vmatprep.subr.bf16.mxu0 0
      %5596 = vmatpush1.bf16.msra.mxu0 %v5518
      %5597 = vmatprep.subr.bf16.mxu0 0
      %5598 = vmatpush1.bf16.msra.mxu0 %v5517
      %5599 = vmatprep.subr.bf16.mxu0 0
      %5600 = vmatpush1.bf16.msra.mxu0 %v5516
      %5601 = vmatprep.subr.bf16.mxu0 0
      %5602 = vmatpush1.bf16.msra.mxu0 %v5515
      %5603 = vmatprep.subr.bf16.mxu0 0
      %5604 = vmatpush1.bf16.msra.mxu0 %v5514
      %5605 = vmatprep.subr.bf16.mxu0 0
      %5606 = vmatpush1.bf16.msra.mxu0 %v5513
      %5607 = vmatprep.subr.bf16.mxu0 0
      %5608 = vmatpush1.bf16.msra.mxu0 %v5512
      %5609 = vmatprep.subr.bf16.mxu0 0
      %5610 = vmatpush1.bf16.msra.mxu0 %v5511
      %5611 = vmatprep.subr.bf16.mxu0 0
      %5612 = vmatpush2.bf16.msra.mxu0 %v5526
      %5613 = vmatprep.subr.bf16.mxu0 0
      %5614 = vmatpush2.bf16.msra.mxu0 %v5525
      %5615 = vmatprep.subr.bf16.mxu0 0
      %5616 = vmatpush2.bf16.msra.mxu0 %v5524
      %5617 = vmatprep.subr.bf16.mxu0 0
      %5618 = vmatpush2.bf16.msra.mxu0 %v5523
      %5619 = vmatprep.subr.bf16.mxu0 0
      %5620 = vmatpush2.bf16.msra.mxu0 %v5522
      %5621 = vmatprep.subr.bf16.mxu0 0
      %5622 = vmatpush2.bf16.msra.mxu0 %v5521
      %5623 = vmatprep.subr.bf16.mxu0 0
      %5624 = vmatpush2.bf16.msra.mxu0 %v5520
      %5625 = vmatprep.subr.bf16.mxu0 0
      %5626 = vmatpush2.bf16.msra.mxu0 %v5519
      %5627 = vmatprep.mubr.bf16.mxu0 %v5245
      %5628 = vmatmul.mubr.bf16.gmra.mxu0 %v5229
      %v5629 = vpop.f32.mrf.mxu0
      %v5630 = vadd.f32 %v5365, %v5629
      %v5631 = vpop.f32.mrf.mxu0
      %v5632 = vpop.f32.mrf.mxu0
      %v5633 = vadd.f32 %v5365, %v5632
      %v5634 = vpop.f32.mrf.mxu0
      %5635 = vmatprep.mubr.bf16.mxu0 %v5249
      %5636 = vmatmul.mubr.bf16.gmra.mxu0 %v5233
      %v5637 = vpop.f32.mrf.mxu0
      %v5638 = vadd.f32 %v5365, %v5637
      %v5639 = vpop.f32.mrf.mxu0
      %v5640 = vpop.f32.mrf.mxu0
      %v5641 = vadd.f32 %v5365, %v5640
      %v5642 = vpop.f32.mrf.mxu0
      %5643 = vmatprep.mubr.bf16.mxu0 %v5253
      %5644 = vmatmul.mubr.bf16.gmra.mxu0 %v5237
      %v5645 = vpop.f32.mrf.mxu0
      %v5646 = vadd.f32 %v5365, %v5645
      %v5647 = vpop.f32.mrf.mxu0
      %v5648 = vpop.f32.mrf.mxu0
      %v5649 = vadd.f32 %v5365, %v5648
      %v5650 = vpop.f32.mrf.mxu0
      %5651 = vmatprep.mubr.bf16.mxu0 %v5257
      %5652 = vmatmul.mubr.bf16.gmra.mxu0 %v5241
      %v5653 = vpop.f32.mrf.mxu0
      %v5654 = vadd.f32 %v5365, %v5653
      %v5655 = vpop.f32.mrf.mxu0
      %v5656 = vpop.f32.mrf.mxu0
      %v5657 = vadd.f32 %v5365, %v5656
      %v5658 = vpop.f32.mrf.mxu0
      %5659 = vdwg.mxu0
      %5660 = vmatprep.subr.bf16.mxu0 0
      %5661 = vmatpush1.bf16.msra.mxu0 %v5534
      %5662 = vmatprep.subr.bf16.mxu0 0
      %5663 = vmatpush1.bf16.msra.mxu0 %v5533
      %5664 = vmatprep.subr.bf16.mxu0 0
      %5665 = vmatpush1.bf16.msra.mxu0 %v5532
      %5666 = vmatprep.subr.bf16.mxu0 0
      %5667 = vmatpush1.bf16.msra.mxu0 %v5531
      %5668 = vmatprep.subr.bf16.mxu0 0
      %5669 = vmatpush1.bf16.msra.mxu0 %v5530
      %5670 = vmatprep.subr.bf16.mxu0 0
      %5671 = vmatpush1.bf16.msra.mxu0 %v5529
      %5672 = vmatprep.subr.bf16.mxu0 0
      %5673 = vmatpush1.bf16.msra.mxu0 %v5528
      %5674 = vmatprep.subr.bf16.mxu0 0
      %5675 = vmatpush1.bf16.msra.mxu0 %v5527
      %5676 = vmatprep.subr.bf16.mxu0 0
      %5677 = vmatpush2.bf16.msra.mxu0 %v5542
      %5678 = vmatprep.subr.bf16.mxu0 0
      %5679 = vmatpush2.bf16.msra.mxu0 %v5541
      %5680 = vmatprep.subr.bf16.mxu0 0
      %5681 = vmatpush2.bf16.msra.mxu0 %v5540
      %5682 = vmatprep.subr.bf16.mxu0 0
      %5683 = vmatpush2.bf16.msra.mxu0 %v5539
      %5684 = vmatprep.subr.bf16.mxu0 0
      %5685 = vmatpush2.bf16.msra.mxu0 %v5538
      %5686 = vmatprep.subr.bf16.mxu0 0
      %5687 = vmatpush2.bf16.msra.mxu0 %v5537
      %5688 = vmatprep.subr.bf16.mxu0 0
      %5689 = vmatpush2.bf16.msra.mxu0 %v5536
      %5690 = vmatprep.subr.bf16.mxu0 0
      %5691 = vmatpush2.bf16.msra.mxu0 %v5535
      %5692 = vmatprep.mubr.bf16.mxu0 %v5276
      %5693 = vmatmul.mubr.bf16.gmra.mxu0 %v5261
      %v5694 = vpop.f32.mrf.mxu0
      %v5695 = vadd.f32 %v5630, %v5694
      %v5696 = vpop.f32.mrf.mxu0
      %v5697 = vpop.f32.mrf.mxu0
      %v5698 = vadd.f32 %v5633, %v5697
      %v5699 = vpop.f32.mrf.mxu0
      %5700 = vmatprep.mubr.bf16.mxu0 %v5279
      %5701 = vmatmul.mubr.bf16.gmra.mxu0 %v5265
      %v5702 = vpop.f32.mrf.mxu0
      %v5703 = vadd.f32 %v5638, %v5702
      %v5704 = vpop.f32.mrf.mxu0
      %v5705 = vpop.f32.mrf.mxu0
      %v5706 = vadd.f32 %v5641, %v5705
      %v5707 = vpop.f32.mrf.mxu0
      %5708 = vmatprep.mubr.bf16.mxu0 %v5282
      %5709 = vmatmul.mubr.bf16.gmra.mxu0 %v5269
      %v5710 = vpop.f32.mrf.mxu0
      %v5711 = vadd.f32 %v5646, %v5710
      %v5712 = vpop.f32.mrf.mxu0
      %v5713 = vpop.f32.mrf.mxu0
      %v5714 = vadd.f32 %v5649, %v5713
      %v5715 = vpop.f32.mrf.mxu0
      %5716 = vmatprep.mubr.bf16.mxu0 %v5286
      %5717 = vmatmul.mubr.bf16.gmra.mxu0 %v5273
      %v5718 = vpop.f32.mrf.mxu0
      %v5719 = vadd.f32 %v5654, %v5718
      %v5720 = vpop.f32.mrf.mxu0
      %v5721 = vpop.f32.mrf.mxu0
      %v5722 = vadd.f32 %v5657, %v5721
      %v5723 = vpop.f32.mrf.mxu0
      %5724 = vdwg.mxu0
      %5725 = vmatprep.subr.bf16.mxu0 0
      %5726 = vmatpush1.bf16.msra.mxu0 0
      %5727 = vmatprep.subr.bf16.mxu0 0
      %5728 = vmatpush1.bf16.msra.mxu0 0
      %5729 = vmatprep.subr.bf16.mxu0 0
      %5730 = vmatpush1.bf16.msra.mxu0 0
      %5731 = vmatprep.subr.bf16.mxu0 0
      %5732 = vmatpush1.bf16.msra.mxu0 0
      %5733 = vmatprep.subr.bf16.mxu0 0
      %5734 = vmatpush1.bf16.msra.mxu0 %v5546
      %5735 = vmatprep.subr.bf16.mxu0 0
      %5736 = vmatpush1.bf16.msra.mxu0 %v5545
      %5737 = vmatprep.subr.bf16.mxu0 0
      %5738 = vmatpush1.bf16.msra.mxu0 %v5544
      %5739 = vmatprep.subr.bf16.mxu0 0
      %5740 = vmatpush1.bf16.msra.mxu0 %v5543
      %5741 = vmatprep.subr.bf16.mxu0 0
      %5742 = vmatpush2.bf16.msra.mxu0 0
      %5743 = vmatprep.subr.bf16.mxu0 0
      %5744 = vmatpush2.bf16.msra.mxu0 0
      %5745 = vmatprep.subr.bf16.mxu0 0
      %5746 = vmatpush2.bf16.msra.mxu0 0
      %5747 = vmatprep.subr.bf16.mxu0 0
      %5748 = vmatpush2.bf16.msra.mxu0 0
      %5749 = vmatprep.subr.bf16.mxu0 0
      %5750 = vmatpush2.bf16.msra.mxu0 0
      %5751 = vmatprep.subr.bf16.mxu0 0
      %5752 = vmatpush2.bf16.msra.mxu0 0
      %5753 = vmatprep.subr.bf16.mxu0 0
      %5754 = vmatpush2.bf16.msra.mxu0 0
      %5755 = vmatprep.subr.bf16.mxu0 0
      %5756 = vmatpush2.bf16.msra.mxu0 0
      %5757 = vmatprep.mubr.bf16.mxu0 0
      %5758 = vmatmul.mubr.bf16.gmra.mxu0 %v5584
      %v5759 = vpop.f32.mrf.mxu0
      %v5760 = vadd.f32 %v5695, %v5759
      %v5761 = vpop.f32.mrf.mxu0
      %v5762 = vpop.f32.mrf.mxu0
      %v5763 = vadd.f32 %v5698, %v5762
      %v5764 = vpop.f32.mrf.mxu0
      %5765 = vmatprep.mubr.bf16.mxu0 0
      %5766 = vmatmul.mubr.bf16.gmra.mxu0 %v5587
      %v5767 = vpop.f32.mrf.mxu0
      %v5768 = vadd.f32 %v5703, %v5767
      %v5769 = vpop.f32.mrf.mxu0
      %v5770 = vpop.f32.mrf.mxu0
      %v5771 = vadd.f32 %v5706, %v5770
      %v5772 = vpop.f32.mrf.mxu0
      %5773 = vmatprep.mubr.bf16.mxu0 0
      %5774 = vmatmul.mubr.bf16.gmra.mxu0 %v5590
      %v5775 = vpop.f32.mrf.mxu0
      %v5776 = vadd.f32 %v5711, %v5775
      %v5777 = vpop.f32.mrf.mxu0
      %v5778 = vpop.f32.mrf.mxu0
      %v5779 = vadd.f32 %v5714, %v5778
      %v5780 = vpop.f32.mrf.mxu0
      %5781 = vmatprep.mubr.bf16.mxu0 0
      %5782 = vmatmul.mubr.bf16.gmra.mxu0 %v5593
      %v5783 = vpop.f32.mrf.mxu0
      %v5784 = vadd.f32 %v5719, %v5783
      %v5785 = vpop.f32.mrf.mxu0
      %v5786 = vpop.f32.mrf.mxu0
      %v5787 = vadd.f32 %v5722, %v5786
      %v5788 = vpop.f32.mrf.mxu0
      %5789 = vdwg.mxu0
      %v5790 = vmax.f32 %v5760, 0.0
      %v5791 = vmax.f32 %v5763, 0.0
      %v5792 = vmax.f32 %v5768, 0.0
      %v5793 = vmax.f32 %v5771, 0.0
      %v5794 = vmax.f32 %v5776, 0.0
      %v5795 = vmax.f32 %v5779, 0.0
      %v5796 = vmax.f32 %v5784, 0.0
      %v5797 = vmax.f32 %v5787, 0.0
      %v5798 = vpack.c.bf16 %v5791, %v5790
      %v5799 = vpack.c.bf16 %v5793, %v5792
      %v5800 = vpack.c.bf16 %v5795, %v5794
      %v5801 = vpack.c.bf16 %v5797, %v5796
      %v5802 = vld [vmem:[%s20] sm:$0xf]
      %v5803 = vld [vmem:[%s20 + $0x4] sm:$0xf]
      %v5804 = vld [vmem:[%s20 + $0x8] sm:$0xf]
      %v5805 = vld [vmem:[%s20 + $0xc] sm:$0xf]
      %v5806 = vld [vmem:[%s20 + $0x10] sm:$0xf]
      %v5807 = vld [vmem:[%s20 + $0x14] sm:$0xf]
      %v5808 = vld [vmem:[%s20 + $0x18] sm:$0xf]
      %v5809 = vld [vmem:[%s20 + $0x1c] sm:$0xf]
      %v5810 = vld [vmem:[%s20 + $0x20] sm:$0xf]
      %v5811 = vld [vmem:[%s20 + $0x24] sm:$0xf]
      %v5812 = vld [vmem:[%s20 + $0x28] sm:$0xf]
      %v5813 = vld [vmem:[%s20 + $0x2c] sm:$0xf]
      %v5814 = vld [vmem:[%s20 + $0x30] sm:$0xf]
      %v5815 = vld [vmem:[%s20 + $0x34] sm:$0xf]
      %v5816 = vld [vmem:[%s20 + $0x38] sm:$0xf]
      %v5817 = vld [vmem:[%s20 + $0x3c] sm:$0xf]
      %v5818 = vld [vmem:[%s20 + $0x40] sm:$0xf]
      %v5819 = vld [vmem:[%s20 + $0x44] sm:$0xf]
      %v5820 = vld [vmem:[%s20 + $0x48] sm:$0xf]
      %v5821 = vld [vmem:[%s20 + $0x4c] sm:$0xf]
      %v5822 = vld [vmem:[%s20 + $0x50] sm:$0xf]
      %v5823 = vld [vmem:[%s20 + $0x54] sm:$0xf]
      %v5824 = vld [vmem:[%s20 + $0x58] sm:$0xf]
      %v5825 = vld [vmem:[%s20 + $0x5c] sm:$0xf]
      %v5826 = vld [vmem:[%s20 + $0x60] sm:$0xf]
      %v5827 = vld [vmem:[%s20 + $0x64] sm:$0xf]
      %v5828 = vld [vmem:[%s20 + $0x68] sm:$0xf]
      %v5829 = vld [vmem:[%s20 + $0x6c] sm:$0xf]
      %v5830 = vld [vmem:[%s20 + $0x70] sm:$0xf]
      %v5831 = vld [vmem:[%s20 + $0x74] sm:$0xf]
      %v5832 = vld [vmem:[%s20 + $0x78] sm:$0xf]
      %v5833 = vld [vmem:[%s20 + $0x7c] sm:$0xf]
      %v5866 = vunpack.c.l.b16 %v5802
      %v5867 = vunpack.c.l.b16 %v5803
      %v5868 = vunpack.c.l.b16 %v5804
      %v5869 = vunpack.c.l.b16 %v5805
      %v5870 = vunpack.c.l.b16 %v5806
      %v5871 = vunpack.c.l.b16 %v5807
      %v5872 = vunpack.c.l.b16 %v5808
      %v5873 = vunpack.c.l.b16 %v5809
      %v5874 = vunpack.c.l.b16 %v5810
      %v5875 = vunpack.c.l.b16 %v5811
      %v5876 = vunpack.c.l.b16 %v5812
      %v5877 = vunpack.c.l.b16 %v5813
      %v5878 = vunpack.c.l.b16 %v5814
      %v5879 = vunpack.c.l.b16 %v5815
      %v5880 = vunpack.c.l.b16 %v5816
      %v5881 = vunpack.c.l.b16 %v5817
      %v5882 = vunpack.c.l.b16 %v5818
      %v5883 = vunpack.c.l.b16 %v5819
      %v5884 = vunpack.c.l.b16 %v5820
      %v5885 = vunpack.c.l.b16 %v5821
      %v5886 = vunpack.c.l.b16 %v5822
      %v5887 = vunpack.c.l.b16 %v5823
      %v5888 = vunpack.c.l.b16 %v5824
      %v5889 = vunpack.c.l.b16 %v5825
      %v5890 = vunpack.c.l.b16 %v5826
      %v5891 = vunpack.c.l.b16 %v5827
      %v5892 = vunpack.c.l.b16 %v5828
      %v5893 = vunpack.c.l.b16 %v5829
      %v5894 = vunpack.c.l.b16 %v5830
      %v5895 = vunpack.c.l.b16 %v5831
      %v5896 = vunpack.c.l.b16 %v5832
      %v5897 = vunpack.c.l.b16 %v5833
      %v5898 = vpack.c.b16 %v5867, %v5866
      %v5899 = vpack.c.b16 %v5869, %v5868
      %v5900 = vpack.c.b16 %v5871, %v5870
      %v5901 = vpack.c.b16 %v5873, %v5872
      %v5902 = vpack.c.b16 %v5875, %v5874
      %v5903 = vpack.c.b16 %v5877, %v5876
      %v5904 = vpack.c.b16 %v5879, %v5878
      %v5905 = vpack.c.b16 %v5881, %v5880
      %v5906 = vpack.c.b16 %v5883, %v5882
      %v5907 = vpack.c.b16 %v5885, %v5884
      %v5908 = vpack.c.b16 %v5887, %v5886
      %v5909 = vpack.c.b16 %v5889, %v5888
      %v5910 = vpack.c.b16 %v5891, %v5890
      %v5911 = vpack.c.b16 %v5893, %v5892
      %v5912 = vpack.c.b16 %v5895, %v5894
      %v5913 = vpack.c.b16 %v5897, %v5896
      %v5915 = vsel %vm2359, %v5898, 0
      %v5918 = vsel %vm2359, %v5899, 0
      %v5921 = vsel %vm2359, %v5900, 0
      %v5924 = vsel %vm2359, %v5901, 0
      %v5927 = vsel %vm2359, %v5902, 0
      %v5930 = vsel %vm2359, %v5903, 0
      %v5933 = vsel %vm2359, %v5904, 0
      %v5936 = vsel %vm2359, %v5905, 0
      %v5939 = vsel %vm2359, %v5906, 0
      %v5942 = vsel %vm2359, %v5907, 0
      %v5945 = vsel %vm2359, %v5908, 0
      %v5948 = vsel %vm2359, %v5909, 0
      %v5951 = vsel %vm2359, %v5910, 0
      %v5954 = vsel %vm2359, %v5911, 0
      %v5957 = vsel %vm2359, %v5912, 0
      %v5960 = vsel %vm2359, %v5913, 0
      %5962 = vmatprep.subr.bf16.mxu0 0
      %5963 = vmatpush1.bf16.msra.mxu0 0
      %5964 = vmatprep.subr.bf16.mxu0 0
      %5965 = vmatpush1.bf16.msra.mxu0 0
      %5966 = vmatprep.subr.bf16.mxu0 0
      %5967 = vmatpush1.bf16.msra.mxu0 0
      %5968 = vmatprep.subr.bf16.mxu0 0
      %5969 = vmatpush1.bf16.msra.mxu0 0
      %5970 = vmatprep.subr.bf16.mxu0 0
      %5971 = vmatpush1.bf16.msra.mxu0 %v5801
      %5972 = vmatprep.subr.bf16.mxu0 0
      %5973 = vmatpush1.bf16.msra.mxu0 %v5800
      %5974 = vmatprep.subr.bf16.mxu0 0
      %5975 = vmatpush1.bf16.msra.mxu0 %v5799
      %5976 = vmatprep.subr.bf16.mxu0 0
      %5977 = vmatpush1.bf16.msra.mxu0 %v5798
      %5978 = vmatprep.subr.bf16.mxu0 0
      %5979 = vmatpush2.bf16.msra.mxu0 0
      %5980 = vmatprep.subr.bf16.mxu0 0
      %5981 = vmatpush2.bf16.msra.mxu0 0
      %5982 = vmatprep.subr.bf16.mxu0 0
      %5983 = vmatpush2.bf16.msra.mxu0 0
      %5984 = vmatprep.subr.bf16.mxu0 0
      %5985 = vmatpush2.bf16.msra.mxu0 0
      %5986 = vmatprep.subr.bf16.mxu0 0
      %5987 = vmatpush2.bf16.msra.mxu0 0
      %5988 = vmatprep.subr.bf16.mxu0 0
      %5989 = vmatpush2.bf16.msra.mxu0 0
      %5990 = vmatprep.subr.bf16.mxu0 0
      %5991 = vmatpush2.bf16.msra.mxu0 0
      %5992 = vmatprep.subr.bf16.mxu0 0
      %5993 = vmatpush2.bf16.msra.mxu0 0
      %5994 = vmatprep.mubr.bf16.mxu0 0
      %5995 = vmatmul.mubr.bf16.gmra.mxu0 %v5915
      %v5996 = vpop.f32.mrf.mxu0
      %v5997 = vadd.f32 0.0, %v5996
      %v5998 = vpop.f32.mrf.mxu0
      %v5999 = vpop.f32.mrf.mxu0
      %v6000 = vadd.f32 0.0, %v5999
      %v6001 = vpop.f32.mrf.mxu0
      %6002 = vmatprep.mubr.bf16.mxu0 0
      %6003 = vmatmul.mubr.bf16.gmra.mxu0 %v5918
      %v6004 = vpop.f32.mrf.mxu0
      %v6005 = vadd.f32 0.0, %v6004
      %v6006 = vpop.f32.mrf.mxu0
      %v6007 = vpop.f32.mrf.mxu0
      %v6008 = vadd.f32 0.0, %v6007
      %v6009 = vpop.f32.mrf.mxu0
      %6010 = vmatprep.mubr.bf16.mxu0 0
      %6011 = vmatmul.mubr.bf16.gmra.mxu0 %v5921
      %v6012 = vpop.f32.mrf.mxu0
      %v6013 = vadd.f32 0.0, %v6012
      %v6014 = vpop.f32.mrf.mxu0
      %v6015 = vpop.f32.mrf.mxu0
      %v6016 = vadd.f32 0.0, %v6015
      %v6017 = vpop.f32.mrf.mxu0
      %6018 = vmatprep.mubr.bf16.mxu0 0
      %6019 = vmatmul.mubr.bf16.gmra.mxu0 %v5924
      %v6020 = vpop.f32.mrf.mxu0
      %v6021 = vadd.f32 0.0, %v6020
      %v6022 = vpop.f32.mrf.mxu0
      %v6023 = vpop.f32.mrf.mxu0
      %v6024 = vadd.f32 0.0, %v6023
      %v6025 = vpop.f32.mrf.mxu0
      %6026 = vmatprep.mubr.bf16.mxu0 0
      %6027 = vmatmul.mubr.bf16.gmra.mxu0 %v5927
      %v6028 = vpop.f32.mrf.mxu0
      %v6029 = vadd.f32 0.0, %v6028
      %v6030 = vpop.f32.mrf.mxu0
      %v6031 = vpop.f32.mrf.mxu0
      %v6032 = vadd.f32 0.0, %v6031
      %v6033 = vpop.f32.mrf.mxu0
      %6034 = vmatprep.mubr.bf16.mxu0 0
      %6035 = vmatmul.mubr.bf16.gmra.mxu0 %v5930
      %v6036 = vpop.f32.mrf.mxu0
      %v6037 = vadd.f32 0.0, %v6036
      %v6038 = vpop.f32.mrf.mxu0
      %v6039 = vpop.f32.mrf.mxu0
      %v6040 = vadd.f32 0.0, %v6039
      %v6041 = vpop.f32.mrf.mxu0
      %6042 = vmatprep.mubr.bf16.mxu0 0
      %6043 = vmatmul.mubr.bf16.gmra.mxu0 %v5933
      %v6044 = vpop.f32.mrf.mxu0
      %v6045 = vadd.f32 0.0, %v6044
      %v6046 = vpop.f32.mrf.mxu0
      %v6047 = vpop.f32.mrf.mxu0
      %v6048 = vadd.f32 0.0, %v6047
      %v6049 = vpop.f32.mrf.mxu0
      %6050 = vmatprep.mubr.bf16.mxu0 0
      %6051 = vmatmul.mubr.bf16.gmra.mxu0 %v5936
      %v6052 = vpop.f32.mrf.mxu0
      %v6053 = vadd.f32 0.0, %v6052
      %v6054 = vpop.f32.mrf.mxu0
      %v6055 = vpop.f32.mrf.mxu0
      %v6056 = vadd.f32 0.0, %v6055
      %v6057 = vpop.f32.mrf.mxu0
      %6058 = vmatprep.mubr.bf16.mxu0 0
      %6059 = vmatmul.mubr.bf16.gmra.mxu0 %v5939
      %v6060 = vpop.f32.mrf.mxu0
      %v6061 = vadd.f32 0.0, %v6060
      %v6062 = vpop.f32.mrf.mxu0
      %v6063 = vpop.f32.mrf.mxu0
      %v6064 = vadd.f32 0.0, %v6063
      %v6065 = vpop.f32.mrf.mxu0
      %6066 = vmatprep.mubr.bf16.mxu0 0
      %6067 = vmatmul.mubr.bf16.gmra.mxu0 %v5942
      %v6068 = vpop.f32.mrf.mxu0
      %v6069 = vadd.f32 0.0, %v6068
      %v6070 = vpop.f32.mrf.mxu0
      %v6071 = vpop.f32.mrf.mxu0
      %v6072 = vadd.f32 0.0, %v6071
      %v6073 = vpop.f32.mrf.mxu0
      %6074 = vmatprep.mubr.bf16.mxu0 0
      %6075 = vmatmul.mubr.bf16.gmra.mxu0 %v5945
      %v6076 = vpop.f32.mrf.mxu0
      %v6077 = vadd.f32 0.0, %v6076
      %v6078 = vpop.f32.mrf.mxu0
      %v6079 = vpop.f32.mrf.mxu0
      %v6080 = vadd.f32 0.0, %v6079
      %v6081 = vpop.f32.mrf.mxu0
      %6082 = vmatprep.mubr.bf16.mxu0 0
      %6083 = vmatmul.mubr.bf16.gmra.mxu0 %v5948
      %v6084 = vpop.f32.mrf.mxu0
      %v6085 = vadd.f32 0.0, %v6084
      %v6086 = vpop.f32.mrf.mxu0
      %v6087 = vpop.f32.mrf.mxu0
      %v6088 = vadd.f32 0.0, %v6087
      %v6089 = vpop.f32.mrf.mxu0
      %6090 = vmatprep.mubr.bf16.mxu0 0
      %6091 = vmatmul.mubr.bf16.gmra.mxu0 %v5951
      %v6092 = vpop.f32.mrf.mxu0
      %v6093 = vadd.f32 0.0, %v6092
      %v6094 = vpop.f32.mrf.mxu0
      %v6095 = vpop.f32.mrf.mxu0
      %v6096 = vadd.f32 0.0, %v6095
      %v6097 = vpop.f32.mrf.mxu0
      %6098 = vmatprep.mubr.bf16.mxu0 0
      %6099 = vmatmul.mubr.bf16.gmra.mxu0 %v5954
      %v6100 = vpop.f32.mrf.mxu0
      %v6101 = vadd.f32 0.0, %v6100
      %v6102 = vpop.f32.mrf.mxu0
      %v6103 = vpop.f32.mrf.mxu0
      %v6104 = vadd.f32 0.0, %v6103
      %v6105 = vpop.f32.mrf.mxu0
      %6106 = vmatprep.mubr.bf16.mxu0 0
      %6107 = vmatmul.mubr.bf16.gmra.mxu0 %v5957
      %v6108 = vpop.f32.mrf.mxu0
      %v6109 = vadd.f32 0.0, %v6108
      %v6110 = vpop.f32.mrf.mxu0
      %v6111 = vpop.f32.mrf.mxu0
      %v6112 = vadd.f32 0.0, %v6111
      %v6113 = vpop.f32.mrf.mxu0
      %6114 = vmatprep.mubr.bf16.mxu0 0
      %6115 = vmatmul.mubr.bf16.gmra.mxu0 %v5960
      %v6116 = vpop.f32.mrf.mxu0
      %v6117 = vadd.f32 0.0, %v6116
      %v6118 = vpop.f32.mrf.mxu0
      %v6119 = vpop.f32.mrf.mxu0
      %v6120 = vadd.f32 0.0, %v6119
      %v6121 = vpop.f32.mrf.mxu0
      %6122 = vdwg.mxu0
      %v6123 = vpack.c.bf16 %v6000, %v5997
      %v6124 = vpack.c.bf16 %v6008, %v6005
      %v6125 = vpack.c.bf16 %v6016, %v6013
      %v6126 = vpack.c.bf16 %v6024, %v6021
      %v6127 = vpack.c.bf16 %v6032, %v6029
      %v6128 = vpack.c.bf16 %v6040, %v6037
      %v6129 = vpack.c.bf16 %v6048, %v6045
      %v6130 = vpack.c.bf16 %v6056, %v6053
      %v6131 = vpack.c.bf16 %v6064, %v6061
      %v6132 = vpack.c.bf16 %v6072, %v6069
      %v6133 = vpack.c.bf16 %v6080, %v6077
      %v6134 = vpack.c.bf16 %v6088, %v6085
      %v6135 = vpack.c.bf16 %v6096, %v6093
      %v6136 = vpack.c.bf16 %v6104, %v6101
      %v6137 = vpack.c.bf16 %v6112, %v6109
      %v6138 = vpack.c.bf16 %v6120, %v6117
      %6139 = vst [vmem:[#allocation8] sm:$0xff] 0.0
      %6140 = vst [vmem:[#allocation8 + $0x8] sm:$0xff] 0.0
      %6141 = vst [vmem:[#allocation8 + $0x10] sm:$0xff] 0.0
      %6142 = vst [vmem:[#allocation8 + $0x118] sm:$0xff] 0.0
      %6143 = vst [vmem:[#allocation8 + $0x120] sm:$0xff] 0.0
      %6144 = vst [vmem:[#allocation8 + $0x128] sm:$0x1] 0.0
      %v6145 = vunpack.c.l.bf16 %v6123
      %v6146 = vunpack.c.h.bf16 %v6123
      %v6147 = vunpack.c.l.bf16 %v6124
      %v6148 = vunpack.c.h.bf16 %v6124
      %v6149 = vunpack.c.l.bf16 %v6125
      %v6150 = vunpack.c.h.bf16 %v6125
      %v6151 = vunpack.c.l.bf16 %v6126
      %v6152 = vunpack.c.h.bf16 %v6126
      %v6153 = vunpack.c.l.bf16 %v6127
      %v6154 = vunpack.c.h.bf16 %v6127
      %v6155 = vunpack.c.l.bf16 %v6128
      %v6156 = vunpack.c.h.bf16 %v6128
      %v6157 = vunpack.c.l.bf16 %v6129
      %v6158 = vunpack.c.h.bf16 %v6129
      %v6159 = vunpack.c.l.bf16 %v6130
      %v6160 = vunpack.c.h.bf16 %v6130
      %v6161 = vunpack.c.l.bf16 %v6131
      %v6162 = vunpack.c.h.bf16 %v6131
      %v6163 = vunpack.c.l.bf16 %v6132
      %v6164 = vunpack.c.h.bf16 %v6132
      %v6165 = vunpack.c.l.bf16 %v6133
      %v6166 = vunpack.c.h.bf16 %v6133
      %v6167 = vunpack.c.l.bf16 %v6134
      %v6168 = vunpack.c.h.bf16 %v6134
      %v6169 = vunpack.c.l.bf16 %v6135
      %v6170 = vunpack.c.h.bf16 %v6135
      %v6171 = vunpack.c.l.bf16 %v6136
      %v6172 = vunpack.c.h.bf16 %v6136
      %v6173 = vunpack.c.l.bf16 %v6137
      %v6174 = vunpack.c.h.bf16 %v6137
      %v6175 = vunpack.c.l.bf16 %v6138
      %v6176 = vunpack.c.h.bf16 %v6138
      %6177 = vst [vmem:[#allocation8 + $0x18] sm:$0xff] %v6145
      %6178 = vst [vmem:[#allocation8 + $0x20] sm:$0xff] %v6146
      %6179 = vst [vmem:[#allocation8 + $0x28] sm:$0xff] %v6147
      %6180 = vst [vmem:[#allocation8 + $0x30] sm:$0xff] %v6148
      %6181 = vst [vmem:[#allocation8 + $0x38] sm:$0xff] %v6149
      %6182 = vst [vmem:[#allocation8 + $0x40] sm:$0xff] %v6150
      %6183 = vst [vmem:[#allocation8 + $0x48] sm:$0xff] %v6151
      %6184 = vst [vmem:[#allocation8 + $0x50] sm:$0xff] %v6152
      %6185 = vst [vmem:[#allocation8 + $0x58] sm:$0xff] %v6153
      %6186 = vst [vmem:[#allocation8 + $0x60] sm:$0xff] %v6154
      %6187 = vst [vmem:[#allocation8 + $0x68] sm:$0xff] %v6155
      %6188 = vst [vmem:[#allocation8 + $0x70] sm:$0xff] %v6156
      %6189 = vst [vmem:[#allocation8 + $0x78] sm:$0xff] %v6157
      %6190 = vst [vmem:[#allocation8 + $0x80] sm:$0xff] %v6158
      %6191 = vst [vmem:[#allocation8 + $0x88] sm:$0xff] %v6159
      %6192 = vst [vmem:[#allocation8 + $0x90] sm:$0xff] %v6160
      %6193 = vst [vmem:[#allocation8 + $0x98] sm:$0xff] %v6161
      %6194 = vst [vmem:[#allocation8 + $0xa0] sm:$0xff] %v6162
      %6195 = vst [vmem:[#allocation8 + $0xa8] sm:$0xff] %v6163
      %6196 = vst [vmem:[#allocation8 + $0xb0] sm:$0xff] %v6164
      %6197 = vst [vmem:[#allocation8 + $0xb8] sm:$0xff] %v6165
      %6198 = vst [vmem:[#allocation8 + $0xc0] sm:$0xff] %v6166
      %6199 = vst [vmem:[#allocation8 + $0xc8] sm:$0xff] %v6167
      %6200 = vst [vmem:[#allocation8 + $0xd0] sm:$0xff] %v6168
      %6201 = vst [vmem:[#allocation8 + $0xd8] sm:$0xff] %v6169
      %6202 = vst [vmem:[#allocation8 + $0xe0] sm:$0xff] %v6170
      %6203 = vst [vmem:[#allocation8 + $0xe8] sm:$0xff] %v6171
      %6204 = vst [vmem:[#allocation8 + $0xf0] sm:$0xff] %v6172
      %6205 = vst [vmem:[#allocation8 + $0xf8] sm:$0xff] %v6173
      %6206 = vst [vmem:[#allocation8 + $0x100] sm:$0xff] %v6174
      %6207 = vst [vmem:[#allocation8 + $0x108] sm:$0xff] %v6175
      %6208 = vst [vmem:[#allocation8 + $0x110] sm:$0xff] %v6176
      %v6209 = vld [vmem:[#allocation8 + $0x7] sm:$0xff]
      %v6210 = vld [vmem:[#allocation8 + $0xf] sm:$0xff]
      %v6211 = vld [vmem:[#allocation8 + $0x17] sm:$0xff]
      %v6212 = vld [vmem:[#allocation8 + $0x1f] sm:$0xff]
      %v6213 = vld [vmem:[#allocation8 + $0x27] sm:$0xff]
      %v6214 = vld [vmem:[#allocation8 + $0x2f] sm:$0xff]
      %v6215 = vld [vmem:[#allocation8 + $0x37] sm:$0xff]
      %v6216 = vld [vmem:[#allocation8 + $0x3f] sm:$0xff]
      %v6217 = vld [vmem:[#allocation8 + $0x47] sm:$0xff]
      %v6218 = vld [vmem:[#allocation8 + $0x4f] sm:$0xff]
      %v6219 = vld [vmem:[#allocation8 + $0x57] sm:$0xff]
      %v6220 = vld [vmem:[#allocation8 + $0x5f] sm:$0xff]
      %v6221 = vld [vmem:[#allocation8 + $0x67] sm:$0xff]
      %v6222 = vld [vmem:[#allocation8 + $0x6f] sm:$0xff]
      %v6223 = vld [vmem:[#allocation8 + $0x77] sm:$0xff]
      %v6224 = vld [vmem:[#allocation8 + $0x7f] sm:$0xff]
      %v6225 = vld [vmem:[#allocation8 + $0x87] sm:$0xff]
      %v6226 = vld [vmem:[#allocation8 + $0x8f] sm:$0xff]
      %v6227 = vld [vmem:[#allocation8 + $0x97] sm:$0xff]
      %v6228 = vld [vmem:[#allocation8 + $0x9f] sm:$0xff]
      %v6229 = vld [vmem:[#allocation8 + $0xa7] sm:$0xff]
      %v6230 = vld [vmem:[#allocation8 + $0xaf] sm:$0xff]
      %v6231 = vld [vmem:[#allocation8 + $0xb7] sm:$0xff]
      %v6232 = vld [vmem:[#allocation8 + $0xbf] sm:$0xff]
      %v6233 = vld [vmem:[#allocation8 + $0xc7] sm:$0xff]
      %v6234 = vld [vmem:[#allocation8 + $0xcf] sm:$0xff]
      %v6235 = vld [vmem:[#allocation8 + $0xd7] sm:$0xff]
      %v6236 = vld [vmem:[#allocation8 + $0xdf] sm:$0xff]
      %v6237 = vld [vmem:[#allocation8 + $0xe7] sm:$0xff]
      %v6238 = vld [vmem:[#allocation8 + $0xef] sm:$0xff]
      %v6239 = vld [vmem:[#allocation8 + $0xf7] sm:$0xff]
      %v6240 = vld [vmem:[#allocation8 + $0xff] sm:$0xff]
      %v6241 = vpack.c.bf16 %v6210, %v6209
      %v6242 = vpack.c.bf16 %v6212, %v6211
      %v6243 = vpack.c.bf16 %v6214, %v6213
      %v6244 = vpack.c.bf16 %v6216, %v6215
      %v6245 = vpack.c.bf16 %v6218, %v6217
      %v6246 = vpack.c.bf16 %v6220, %v6219
      %v6247 = vpack.c.bf16 %v6222, %v6221
      %v6248 = vpack.c.bf16 %v6224, %v6223
      %v6249 = vpack.c.bf16 %v6226, %v6225
      %v6250 = vpack.c.bf16 %v6228, %v6227
      %v6251 = vpack.c.bf16 %v6230, %v6229
      %v6252 = vpack.c.bf16 %v6232, %v6231
      %v6253 = vpack.c.bf16 %v6234, %v6233
      %v6254 = vpack.c.bf16 %v6236, %v6235
      %v6255 = vpack.c.bf16 %v6238, %v6237
      %v6256 = vpack.c.bf16 %v6240, %v6239
      %v6257 = vsel %vm1405, 0, %v6241
      %v6258 = vsel %vm1406, 0, %v6242
      %v6259 = vsel %vm1407, 0, %v6243
      %v6260 = vsel %vm1408, 0, %v6244
      %v6261 = vsel %vm1409, 0, %v6245
      %v6262 = vsel %vm1410, 0, %v6246
      %v6263 = vsel %vm1411, 0, %v6247
      %v6264 = vsel %vm1412, 0, %v6248
      %v6265 = vsel %vm1413, 0, %v6249
      %v6266 = vsel %vm1414, 0, %v6250
      %v6267 = vsel %vm1415, 0, %v6251
      %v6268 = vsel %vm1416, 0, %v6252
      %v6269 = vsel %vm1417, 0, %v6253
      %v6270 = vsel %vm1418, 0, %v6254
      %v6271 = vsel %vm1419, 0, %v6255
      %v6272 = vsel %vm1420, 0, %v6256
      %v6273 = vld [vmem:[#allocation8 + $0x8] sm:$0xff]
      %v6274 = vld [vmem:[#allocation8 + $0x10] sm:$0xff]
      %v6275 = vld [vmem:[#allocation8 + $0x18] sm:$0xff]
      %v6276 = vld [vmem:[#allocation8 + $0x20] sm:$0xff]
      %v6277 = vld [vmem:[#allocation8 + $0x28] sm:$0xff]
      %v6278 = vld [vmem:[#allocation8 + $0x30] sm:$0xff]
      %v6279 = vld [vmem:[#allocation8 + $0x38] sm:$0xff]
      %v6280 = vld [vmem:[#allocation8 + $0x40] sm:$0xff]
      %v6281 = vld [vmem:[#allocation8 + $0x48] sm:$0xff]
      %v6282 = vld [vmem:[#allocation8 + $0x50] sm:$0xff]
      %v6283 = vld [vmem:[#allocation8 + $0x58] sm:$0xff]
      %v6284 = vld [vmem:[#allocation8 + $0x60] sm:$0xff]
      %v6285 = vld [vmem:[#allocation8 + $0x68] sm:$0xff]
      %v6286 = vld [vmem:[#allocation8 + $0x70] sm:$0xff]
      %v6287 = vld [vmem:[#allocation8 + $0x78] sm:$0xff]
      %v6288 = vld [vmem:[#allocation8 + $0x80] sm:$0xff]
      %v6289 = vld [vmem:[#allocation8 + $0x88] sm:$0xff]
      %v6290 = vld [vmem:[#allocation8 + $0x90] sm:$0xff]
      %v6291 = vld [vmem:[#allocation8 + $0x98] sm:$0xff]
      %v6292 = vld [vmem:[#allocation8 + $0xa0] sm:$0xff]
      %v6293 = vld [vmem:[#allocation8 + $0xa8] sm:$0xff]
      %v6294 = vld [vmem:[#allocation8 + $0xb0] sm:$0xff]
      %v6295 = vld [vmem:[#allocation8 + $0xb8] sm:$0xff]
      %v6296 = vld [vmem:[#allocation8 + $0xc0] sm:$0xff]
      %v6297 = vld [vmem:[#allocation8 + $0xc8] sm:$0xff]
      %v6298 = vld [vmem:[#allocation8 + $0xd0] sm:$0xff]
      %v6299 = vld [vmem:[#allocation8 + $0xd8] sm:$0xff]
      %v6300 = vld [vmem:[#allocation8 + $0xe0] sm:$0xff]
      %v6301 = vld [vmem:[#allocation8 + $0xe8] sm:$0xff]
      %v6302 = vld [vmem:[#allocation8 + $0xf0] sm:$0xff]
      %v6303 = vld [vmem:[#allocation8 + $0xf8] sm:$0xff]
      %v6304 = vld [vmem:[#allocation8 + $0x100] sm:$0xff]
      %v6305 = vpack.c.bf16 %v6274, %v6273
      %v6306 = vpack.c.bf16 %v6276, %v6275
      %v6307 = vpack.c.bf16 %v6278, %v6277
      %v6308 = vpack.c.bf16 %v6280, %v6279
      %v6309 = vpack.c.bf16 %v6282, %v6281
      %v6310 = vpack.c.bf16 %v6284, %v6283
      %v6311 = vpack.c.bf16 %v6286, %v6285
      %v6312 = vpack.c.bf16 %v6288, %v6287
      %v6313 = vpack.c.bf16 %v6290, %v6289
      %v6314 = vpack.c.bf16 %v6292, %v6291
      %v6315 = vpack.c.bf16 %v6294, %v6293
      %v6316 = vpack.c.bf16 %v6296, %v6295
      %v6317 = vpack.c.bf16 %v6298, %v6297
      %v6318 = vpack.c.bf16 %v6300, %v6299
      %v6319 = vpack.c.bf16 %v6302, %v6301
      %v6320 = vpack.c.bf16 %v6304, %v6303
      %v6321 = vld [vmem:[#allocation8 + $0x9] sm:$0xff]
      %v6322 = vld [vmem:[#allocation8 + $0x11] sm:$0xff]
      %v6323 = vld [vmem:[#allocation8 + $0x19] sm:$0xff]
      %v6324 = vld [vmem:[#allocation8 + $0x21] sm:$0xff]
      %v6325 = vld [vmem:[#allocation8 + $0x29] sm:$0xff]
      %v6326 = vld [vmem:[#allocation8 + $0x31] sm:$0xff]
      %v6327 = vld [vmem:[#allocation8 + $0x39] sm:$0xff]
      %v6328 = vld [vmem:[#allocation8 + $0x41] sm:$0xff]
      %v6329 = vld [vmem:[#allocation8 + $0x49] sm:$0xff]
      %v6330 = vld [vmem:[#allocation8 + $0x51] sm:$0xff]
      %v6331 = vld [vmem:[#allocation8 + $0x59] sm:$0xff]
      %v6332 = vld [vmem:[#allocation8 + $0x61] sm:$0xff]
      %v6333 = vld [vmem:[#allocation8 + $0x69] sm:$0xff]
      %v6334 = vld [vmem:[#allocation8 + $0x71] sm:$0xff]
      %v6335 = vld [vmem:[#allocation8 + $0x79] sm:$0xff]
      %v6336 = vld [vmem:[#allocation8 + $0x81] sm:$0xff]
      %v6337 = vld [vmem:[#allocation8 + $0x89] sm:$0xff]
      %v6338 = vld [vmem:[#allocation8 + $0x91] sm:$0xff]
      %v6339 = vld [vmem:[#allocation8 + $0x99] sm:$0xff]
      %v6340 = vld [vmem:[#allocation8 + $0xa1] sm:$0xff]
      %v6341 = vld [vmem:[#allocation8 + $0xa9] sm:$0xff]
      %v6342 = vld [vmem:[#allocation8 + $0xb1] sm:$0xff]
      %v6343 = vld [vmem:[#allocation8 + $0xb9] sm:$0xff]
      %v6344 = vld [vmem:[#allocation8 + $0xc1] sm:$0xff]
      %v6345 = vld [vmem:[#allocation8 + $0xc9] sm:$0xff]
      %v6346 = vld [vmem:[#allocation8 + $0xd1] sm:$0xff]
      %v6347 = vld [vmem:[#allocation8 + $0xd9] sm:$0xff]
      %v6348 = vld [vmem:[#allocation8 + $0xe1] sm:$0xff]
      %v6349 = vld [vmem:[#allocation8 + $0xe9] sm:$0xff]
      %v6350 = vld [vmem:[#allocation8 + $0xf1] sm:$0xff]
      %v6351 = vld [vmem:[#allocation8 + $0xf9] sm:$0xff]
      %v6352 = vld [vmem:[#allocation8 + $0x101] sm:$0xff]
      %v6353 = vpack.c.bf16 %v6322, %v6321
      %v6354 = vpack.c.bf16 %v6324, %v6323
      %v6355 = vpack.c.bf16 %v6326, %v6325
      %v6356 = vpack.c.bf16 %v6328, %v6327
      %v6357 = vpack.c.bf16 %v6330, %v6329
      %v6358 = vpack.c.bf16 %v6332, %v6331
      %v6359 = vpack.c.bf16 %v6334, %v6333
      %v6360 = vpack.c.bf16 %v6336, %v6335
      %v6361 = vpack.c.bf16 %v6338, %v6337
      %v6362 = vpack.c.bf16 %v6340, %v6339
      %v6363 = vpack.c.bf16 %v6342, %v6341
      %v6364 = vpack.c.bf16 %v6344, %v6343
      %v6365 = vpack.c.bf16 %v6346, %v6345
      %v6366 = vpack.c.bf16 %v6348, %v6347
      %v6367 = vpack.c.bf16 %v6350, %v6349
      %v6368 = vpack.c.bf16 %v6352, %v6351
      %v6369 = vsel %vm1645, 0, %v6353
      %v6370 = vsel %vm1646, 0, %v6354
      %v6371 = vsel %vm1647, 0, %v6355
      %v6372 = vsel %vm1648, 0, %v6356
      %v6373 = vsel %vm1649, 0, %v6357
      %v6374 = vsel %vm1650, 0, %v6358
      %v6375 = vsel %vm1651, 0, %v6359
      %v6376 = vsel %vm1652, 0, %v6360
      %v6377 = vsel %vm1653, 0, %v6361
      %v6378 = vsel %vm1654, 0, %v6362
      %v6379 = vsel %vm1655, 0, %v6363
      %v6380 = vsel %vm1656, 0, %v6364
      %v6381 = vsel %vm1657, 0, %v6365
      %v6382 = vsel %vm1658, 0, %v6366
      %v6383 = vsel %vm1659, 0, %v6367
      %v6384 = vsel %vm1660, 0, %v6368
      %v6385 = vld [vmem:[#allocation8 + $0x107] sm:$0xff]
      %v6386 = vld [vmem:[#allocation8 + $0x10f] sm:$0xff]
      %v6387 = vpack.c.bf16 %v6386, %v6385
      %v6388 = vsel %vm1405, 0, %v6242
      %v6389 = vsel %vm1406, 0, %v6243
      %v6390 = vsel %vm1407, 0, %v6244
      %v6391 = vsel %vm1408, 0, %v6245
      %v6392 = vsel %vm1409, 0, %v6246
      %v6393 = vsel %vm1410, 0, %v6247
      %v6394 = vsel %vm1411, 0, %v6248
      %v6395 = vsel %vm1412, 0, %v6249
      %v6396 = vsel %vm1413, 0, %v6250
      %v6397 = vsel %vm1414, 0, %v6251
      %v6398 = vsel %vm1415, 0, %v6252
      %v6399 = vsel %vm1416, 0, %v6253
      %v6400 = vsel %vm1417, 0, %v6254
      %v6401 = vsel %vm1418, 0, %v6255
      %v6402 = vsel %vm1419, 0, %v6256
      %v6403 = vsel %vm1420, 0, %v6387
      %v6404 = vld [vmem:[#allocation8 + $0x108] sm:$0xff]
      %v6405 = vld [vmem:[#allocation8 + $0x110] sm:$0xff]
      %v6406 = vpack.c.bf16 %v6405, %v6404
      %v6407 = vld [vmem:[#allocation8 + $0x109] sm:$0xff]
      %v6408 = vld [vmem:[#allocation8 + $0x111] sm:$0xff]
      %v6409 = vpack.c.bf16 %v6408, %v6407
      %v6410 = vsel %vm1645, 0, %v6354
      %v6411 = vsel %vm1646, 0, %v6355
      %v6412 = vsel %vm1647, 0, %v6356
      %v6413 = vsel %vm1648, 0, %v6357
      %v6414 = vsel %vm1649, 0, %v6358
      %v6415 = vsel %vm1650, 0, %v6359
      %v6416 = vsel %vm1651, 0, %v6360
      %v6417 = vsel %vm1652, 0, %v6361
      %v6418 = vsel %vm1653, 0, %v6362
      %v6419 = vsel %vm1654, 0, %v6363
      %v6420 = vsel %vm1655, 0, %v6364
      %v6421 = vsel %vm1656, 0, %v6365
      %v6422 = vsel %vm1657, 0, %v6366
      %v6423 = vsel %vm1658, 0, %v6367
      %v6424 = vsel %vm1659, 0, %v6368
      %v6425 = vsel %vm1660, 0, %v6409
      %v6426 = vld [vmem:[#allocation8 + $0x117] sm:$0xff]
      %v6427 = vld [vmem:[#allocation8 + $0x11f] sm:$0xff]
      %v6428 = vpack.c.bf16 %v6427, %v6426
      %v6429 = vsel %vm1405, 0, %v6243
      %v6430 = vsel %vm1406, 0, %v6244
      %v6431 = vsel %vm1407, 0, %v6245
      %v6432 = vsel %vm1408, 0, %v6246
      %v6433 = vsel %vm1409, 0, %v6247
      %v6434 = vsel %vm1410, 0, %v6248
      %v6435 = vsel %vm1411, 0, %v6249
      %v6436 = vsel %vm1412, 0, %v6250
      %v6437 = vsel %vm1413, 0, %v6251
      %v6438 = vsel %vm1414, 0, %v6252
      %v6439 = vsel %vm1415, 0, %v6253
      %v6440 = vsel %vm1416, 0, %v6254
      %v6441 = vsel %vm1417, 0, %v6255
      %v6442 = vsel %vm1418, 0, %v6256
      %v6443 = vsel %vm1419, 0, %v6387
      %v6444 = vsel %vm1420, 0, %v6428
      %v6445 = vld [vmem:[#allocation8 + $0x118] sm:$0xff]
      %v6446 = vld [vmem:[#allocation8 + $0x120] sm:$0xff]
      %v6447 = vpack.c.bf16 %v6446, %v6445
      %v6448 = vld [vmem:[#allocation8 + $0x29] sm:$0xff]
      %v6449 = vld [vmem:[#allocation8 + $0x31] sm:$0xff]
      %v6450 = vld [vmem:[#allocation8 + $0x39] sm:$0xff]
      %v6451 = vld [vmem:[#allocation8 + $0x41] sm:$0xff]
      %v6452 = vld [vmem:[#allocation8 + $0x49] sm:$0xff]
      %v6453 = vld [vmem:[#allocation8 + $0x51] sm:$0xff]
      %v6454 = vld [vmem:[#allocation8 + $0x59] sm:$0xff]
      %v6455 = vld [vmem:[#allocation8 + $0x61] sm:$0xff]
      %v6456 = vld [vmem:[#allocation8 + $0x69] sm:$0xff]
      %v6457 = vld [vmem:[#allocation8 + $0x71] sm:$0xff]
      %v6458 = vld [vmem:[#allocation8 + $0x79] sm:$0xff]
      %v6459 = vld [vmem:[#allocation8 + $0x81] sm:$0xff]
      %v6460 = vld [vmem:[#allocation8 + $0x89] sm:$0xff]
      %v6461 = vld [vmem:[#allocation8 + $0x91] sm:$0xff]
      %v6462 = vld [vmem:[#allocation8 + $0x99] sm:$0xff]
      %v6463 = vld [vmem:[#allocation8 + $0xa1] sm:$0xff]
      %v6464 = vld [vmem:[#allocation8 + $0xa9] sm:$0xff]
      %v6465 = vld [vmem:[#allocation8 + $0xb1] sm:$0xff]
      %v6466 = vld [vmem:[#allocation8 + $0xb9] sm:$0xff]
      %v6467 = vld [vmem:[#allocation8 + $0xc1] sm:$0xff]
      %v6468 = vld [vmem:[#allocation8 + $0xc9] sm:$0xff]
      %v6469 = vld [vmem:[#allocation8 + $0xd1] sm:$0xff]
      %v6470 = vld [vmem:[#allocation8 + $0xd9] sm:$0xff]
      %v6471 = vld [vmem:[#allocation8 + $0xe1] sm:$0xff]
      %v6472 = vld [vmem:[#allocation8 + $0xe9] sm:$0xff]
      %v6473 = vld [vmem:[#allocation8 + $0xf1] sm:$0xff]
      %v6474 = vld [vmem:[#allocation8 + $0xf9] sm:$0xff]
      %v6475 = vld [vmem:[#allocation8 + $0x101] sm:$0xff]
      %v6476 = vld [vmem:[#allocation8 + $0x109] sm:$0xff]
      %v6477 = vld [vmem:[#allocation8 + $0x111] sm:$0xff]
      %v6478 = vld [vmem:[#allocation8 + $0x119] sm:$0xff]
      %v6479 = vld [vmem:[#allocation8 + $0x121] sm:$0xff]
      %v6480 = vpack.c.bf16 %v6449, %v6448
      %v6481 = vpack.c.bf16 %v6451, %v6450
      %v6482 = vpack.c.bf16 %v6453, %v6452
      %v6483 = vpack.c.bf16 %v6455, %v6454
      %v6484 = vpack.c.bf16 %v6457, %v6456
      %v6485 = vpack.c.bf16 %v6459, %v6458
      %v6486 = vpack.c.bf16 %v6461, %v6460
      %v6487 = vpack.c.bf16 %v6463, %v6462
      %v6488 = vpack.c.bf16 %v6465, %v6464
      %v6489 = vpack.c.bf16 %v6467, %v6466
      %v6490 = vpack.c.bf16 %v6469, %v6468
      %v6491 = vpack.c.bf16 %v6471, %v6470
      %v6492 = vpack.c.bf16 %v6473, %v6472
      %v6493 = vpack.c.bf16 %v6475, %v6474
      %v6494 = vpack.c.bf16 %v6477, %v6476
      %v6495 = vpack.c.bf16 %v6479, %v6478
      %v6496 = vsel %vm1645, 0, %v6480
      %v6497 = vsel %vm1646, 0, %v6481
      %v6498 = vsel %vm1647, 0, %v6482
      %v6499 = vsel %vm1648, 0, %v6483
      %v6500 = vsel %vm1649, 0, %v6484
      %v6501 = vsel %vm1650, 0, %v6485
      %v6502 = vsel %vm1651, 0, %v6486
      %v6503 = vsel %vm1652, 0, %v6487
      %v6504 = vsel %vm1653, 0, %v6488
      %v6505 = vsel %vm1654, 0, %v6489
      %v6506 = vsel %vm1655, 0, %v6490
      %v6507 = vsel %vm1656, 0, %v6491
      %v6508 = vsel %vm1657, 0, %v6492
      %v6509 = vsel %vm1658, 0, %v6493
      %v6510 = vsel %vm1659, 0, %v6494
      %v6511 = vsel %vm1660, 0, %v6495
      %v6512 = vld [vmem:[%s13] sm:$0xf]
      %v6513 = vld [vmem:[%s13 + $0x4] sm:$0xf]
      %v6514 = vld [vmem:[%s13 + $0x8] sm:$0xf]
      %v6515 = vld [vmem:[%s13 + $0xc] sm:$0xf]
      %v6516 = vld [vmem:[%s13 + $0x10] sm:$0xf]
      %v6517 = vld [vmem:[%s13 + $0x14] sm:$0xf]
      %v6518 = vld [vmem:[%s13 + $0x18] sm:$0xf]
      %v6519 = vld [vmem:[%s13 + $0x1c] sm:$0xf]
      %v6520 = vld [vmem:[%s13 + $0x20] sm:$0xf]
      %v6521 = vld [vmem:[%s13 + $0x24] sm:$0xf]
      %v6522 = vld [vmem:[%s13 + $0x28] sm:$0xf]
      %v6523 = vld [vmem:[%s13 + $0x2c] sm:$0xf]
      %v6524 = vld [vmem:[%s13 + $0x30] sm:$0xf]
      %v6525 = vld [vmem:[%s13 + $0x34] sm:$0xf]
      %v6526 = vld [vmem:[%s13 + $0x38] sm:$0xf]
      %v6527 = vld [vmem:[%s13 + $0x3c] sm:$0xf]
      %v6528 = vld [vmem:[%s13 + $0x40] sm:$0xf]
      %v6529 = vld [vmem:[%s13 + $0x44] sm:$0xf]
      %v6530 = vld [vmem:[%s13 + $0x48] sm:$0xf]
      %v6531 = vld [vmem:[%s13 + $0x4c] sm:$0xf]
      %v6532 = vld [vmem:[%s13 + $0x50] sm:$0xf]
      %v6533 = vld [vmem:[%s13 + $0x54] sm:$0xf]
      %v6534 = vld [vmem:[%s13 + $0x58] sm:$0xf]
      %v6535 = vld [vmem:[%s13 + $0x5c] sm:$0xf]
      %v6536 = vld [vmem:[%s13 + $0x60] sm:$0xf]
      %v6537 = vld [vmem:[%s13 + $0x64] sm:$0xf]
      %v6538 = vld [vmem:[%s13 + $0x68] sm:$0xf]
      %v6539 = vld [vmem:[%s13 + $0x6c] sm:$0xf]
      %v6540 = vld [vmem:[%s13 + $0x70] sm:$0xf]
      %v6541 = vld [vmem:[%s13 + $0x74] sm:$0xf]
      %v6542 = vld [vmem:[%s13 + $0x78] sm:$0xf]
      %v6543 = vld [vmem:[%s13 + $0x7c] sm:$0xf]
      %v6544 = vld [vmem:[%s13 + $0x80] sm:$0xf]
      %v6545 = vld [vmem:[%s13 + $0x84] sm:$0xf]
      %v6546 = vld [vmem:[%s13 + $0x88] sm:$0xf]
      %v6547 = vld [vmem:[%s13 + $0x8c] sm:$0xf]
      %v6548 = vld [vmem:[%s13 + $0x90] sm:$0xf]
      %v6549 = vld [vmem:[%s13 + $0x94] sm:$0xf]
      %v6550 = vld [vmem:[%s13 + $0x98] sm:$0xf]
      %v6551 = vld [vmem:[%s13 + $0x9c] sm:$0xf]
      %v6552 = vld [vmem:[%s13 + $0xa0] sm:$0xf]
      %v6553 = vld [vmem:[%s13 + $0xa4] sm:$0xf]
      %v6554 = vld [vmem:[%s13 + $0xa8] sm:$0xf]
      %v6555 = vld [vmem:[%s13 + $0xac] sm:$0xf]
      %v6556 = vld [vmem:[%s13 + $0xb0] sm:$0xf]
      %v6557 = vld [vmem:[%s13 + $0xb4] sm:$0xf]
      %v6558 = vld [vmem:[%s13 + $0xb8] sm:$0xf]
      %v6559 = vld [vmem:[%s13 + $0xbc] sm:$0xf]
      %v6560 = vld [vmem:[%s13 + $0xc0] sm:$0xf]
      %v6561 = vld [vmem:[%s13 + $0xc4] sm:$0xf]
      %v6562 = vld [vmem:[%s13 + $0xc8] sm:$0xf]
      %v6563 = vld [vmem:[%s13 + $0xcc] sm:$0xf]
      %v6564 = vld [vmem:[%s13 + $0xd0] sm:$0xf]
      %v6565 = vld [vmem:[%s13 + $0xd4] sm:$0xf]
      %v6566 = vld [vmem:[%s13 + $0xd8] sm:$0xf]
      %v6567 = vld [vmem:[%s13 + $0xdc] sm:$0xf]
      %v6568 = vld [vmem:[%s13 + $0xe0] sm:$0xf]
      %v6569 = vld [vmem:[%s13 + $0xe4] sm:$0xf]
      %v6570 = vld [vmem:[%s13 + $0xe8] sm:$0xf]
      %v6571 = vld [vmem:[%s13 + $0xec] sm:$0xf]
      %v6572 = vld [vmem:[%s13 + $0xf0] sm:$0xf]
      %v6573 = vld [vmem:[%s13 + $0xf4] sm:$0xf]
      %v6574 = vld [vmem:[%s13 + $0xf8] sm:$0xf]
      %v6575 = vld [vmem:[%s13 + $0xfc] sm:$0xf]
      %v6576 = vld [vmem:[%s13 + $0x100] sm:$0xf]
      %v6577 = vld [vmem:[%s13 + $0x104] sm:$0xf]
      %v6578 = vld [vmem:[%s13 + $0x108] sm:$0xf]
      %v6579 = vld [vmem:[%s13 + $0x10c] sm:$0xf]
      %v6580 = vld [vmem:[%s13 + $0x110] sm:$0xf]
      %v6581 = vld [vmem:[%s13 + $0x114] sm:$0xf]
      %v6582 = vld [vmem:[%s13 + $0x118] sm:$0xf]
      %v6583 = vld [vmem:[%s13 + $0x11c] sm:$0xf]
      %v6584 = vld [vmem:[%s13 + $0x120] sm:$0xf]
      %v6585 = vld [vmem:[%s13 + $0x124] sm:$0xf]
      %v6586 = vld [vmem:[%s13 + $0x128] sm:$0xf]
      %v6587 = vld [vmem:[%s13 + $0x12c] sm:$0xf]
      %v6588 = vld [vmem:[%s13 + $0x130] sm:$0xf]
      %v6589 = vld [vmem:[%s13 + $0x134] sm:$0xf]
      %v6590 = vld [vmem:[%s13 + $0x138] sm:$0xf]
      %v6591 = vld [vmem:[%s13 + $0x13c] sm:$0xf]
      %v6592 = vld [vmem:[%s13 + $0x140] sm:$0xf]
      %v6593 = vld [vmem:[%s13 + $0x144] sm:$0xf]
      %v6594 = vld [vmem:[%s13 + $0x148] sm:$0xf]
      %v6595 = vld [vmem:[%s13 + $0x14c] sm:$0xf]
      %v6596 = vld [vmem:[%s13 + $0x150] sm:$0xf]
      %v6597 = vld [vmem:[%s13 + $0x154] sm:$0xf]
      %v6598 = vld [vmem:[%s13 + $0x158] sm:$0xf]
      %v6599 = vld [vmem:[%s13 + $0x15c] sm:$0xf]
      %v6600 = vld [vmem:[%s13 + $0x160] sm:$0xf]
      %v6601 = vld [vmem:[%s13 + $0x164] sm:$0xf]
      %v6602 = vld [vmem:[%s13 + $0x168] sm:$0xf]
      %v6603 = vld [vmem:[%s13 + $0x16c] sm:$0xf]
      %v6604 = vld [vmem:[%s13 + $0x170] sm:$0xf]
      %v6605 = vld [vmem:[%s13 + $0x174] sm:$0xf]
      %v6606 = vld [vmem:[%s13 + $0x178] sm:$0xf]
      %v6607 = vld [vmem:[%s13 + $0x17c] sm:$0xf]
      %v6608 = vld [vmem:[%s13 + $0x180] sm:$0xf]
      %v6609 = vld [vmem:[%s13 + $0x184] sm:$0xf]
      %v6610 = vld [vmem:[%s13 + $0x188] sm:$0xf]
      %v6611 = vld [vmem:[%s13 + $0x18c] sm:$0xf]
      %v6612 = vld [vmem:[%s13 + $0x190] sm:$0xf]
      %v6613 = vld [vmem:[%s13 + $0x194] sm:$0xf]
      %v6614 = vld [vmem:[%s13 + $0x198] sm:$0xf]
      %v6615 = vld [vmem:[%s13 + $0x19c] sm:$0xf]
      %v6616 = vld [vmem:[%s13 + $0x1a0] sm:$0xf]
      %v6617 = vld [vmem:[%s13 + $0x1a4] sm:$0xf]
      %v6618 = vld [vmem:[%s13 + $0x1a8] sm:$0xf]
      %v6619 = vld [vmem:[%s13 + $0x1ac] sm:$0xf]
      %v6620 = vld [vmem:[%s13 + $0x1b0] sm:$0xf]
      %v6621 = vld [vmem:[%s13 + $0x1b4] sm:$0xf]
      %v6622 = vld [vmem:[%s13 + $0x1b8] sm:$0xf]
      %v6623 = vld [vmem:[%s13 + $0x1bc] sm:$0xf]
      %v6624 = vld [vmem:[%s13 + $0x1c0] sm:$0xf]
      %v6625 = vld [vmem:[%s13 + $0x1c4] sm:$0xf]
      %v6626 = vld [vmem:[%s13 + $0x1c8] sm:$0xf]
      %v6627 = vld [vmem:[%s13 + $0x1cc] sm:$0xf]
      %v6628 = vld [vmem:[%s13 + $0x1d0] sm:$0xf]
      %v6629 = vld [vmem:[%s13 + $0x1d4] sm:$0xf]
      %v6630 = vld [vmem:[%s13 + $0x1d8] sm:$0xf]
      %v6631 = vld [vmem:[%s13 + $0x1dc] sm:$0xf]
      %v6632 = vld [vmem:[%s13 + $0x1e0] sm:$0xf]
      %v6633 = vld [vmem:[%s13 + $0x1e4] sm:$0xf]
      %v6634 = vld [vmem:[%s13 + $0x1e8] sm:$0xf]
      %v6635 = vld [vmem:[%s13 + $0x1ec] sm:$0xf]
      %v6636 = vld [vmem:[%s13 + $0x1f0] sm:$0xf]
      %v6637 = vld [vmem:[%s13 + $0x1f4] sm:$0xf]
      %v6638 = vld [vmem:[%s13 + $0x1f8] sm:$0xf]
      %v6639 = vld [vmem:[%s13 + $0x1fc] sm:$0xf]
      %v6640 = vld [vmem:[%s13 + $0x200] sm:$0xf]
      %v6641 = vld [vmem:[%s13 + $0x204] sm:$0xf]
      %v6642 = vld [vmem:[%s13 + $0x208] sm:$0xf]
      %v6643 = vld [vmem:[%s13 + $0x20c] sm:$0xf]
      %v6644 = vld [vmem:[%s13 + $0x210] sm:$0xf]
      %v6645 = vld [vmem:[%s13 + $0x214] sm:$0xf]
      %v6646 = vld [vmem:[%s13 + $0x218] sm:$0xf]
      %v6647 = vld [vmem:[%s13 + $0x21c] sm:$0xf]
      %v6648 = vld [vmem:[%s13 + $0x220] sm:$0xf]
      %v6649 = vld [vmem:[%s13 + $0x224] sm:$0xf]
      %v6650 = vld [vmem:[%s13 + $0x228] sm:$0xf]
      %v6651 = vld [vmem:[%s13 + $0x22c] sm:$0xf]
      %v6652 = vld [vmem:[%s13 + $0x230] sm:$0xf]
      %v6653 = vld [vmem:[%s13 + $0x234] sm:$0xf]
      %v6654 = vld [vmem:[%s13 + $0x238] sm:$0xf]
      %v6655 = vld [vmem:[%s13 + $0x23c] sm:$0xf]
      %v6656 = vld [vmem:[%s14] sm:$0x1]
      %v6658 = vlaneseq
      %v6659 = vshrl.u32 %v6658, 7
      %v6660 = vsub.s32 0, %v6659
      %v6661 = vrot.slane %v6656, %v6660
      %v6807 = vunpack.c.l.b16 %v6512
      %v6808 = vunpack.c.l.b16 %v6513
      %v6809 = vunpack.c.l.b16 %v6514
      %v6810 = vunpack.c.l.b16 %v6515
      %v6811 = vunpack.c.l.b16 %v6516
      %v6812 = vunpack.c.l.b16 %v6517
      %v6813 = vunpack.c.l.b16 %v6518
      %v6814 = vunpack.c.l.b16 %v6519
      %v6815 = vunpack.c.l.b16 %v6520
      %v6816 = vunpack.c.l.b16 %v6521
      %v6817 = vunpack.c.l.b16 %v6522
      %v6818 = vunpack.c.l.b16 %v6523
      %v6819 = vunpack.c.l.b16 %v6524
      %v6820 = vunpack.c.l.b16 %v6525
      %v6821 = vunpack.c.l.b16 %v6526
      %v6822 = vunpack.c.l.b16 %v6527
      %v6823 = vunpack.c.l.b16 %v6528
      %v6824 = vunpack.c.l.b16 %v6529
      %v6825 = vunpack.c.l.b16 %v6530
      %v6826 = vunpack.c.l.b16 %v6531
      %v6827 = vunpack.c.l.b16 %v6532
      %v6828 = vunpack.c.l.b16 %v6533
      %v6829 = vunpack.c.l.b16 %v6534
      %v6830 = vunpack.c.l.b16 %v6535
      %v6831 = vunpack.c.l.b16 %v6536
      %v6832 = vunpack.c.l.b16 %v6537
      %v6833 = vunpack.c.l.b16 %v6538
      %v6834 = vunpack.c.l.b16 %v6539
      %v6835 = vunpack.c.l.b16 %v6540
      %v6836 = vunpack.c.l.b16 %v6541
      %v6837 = vunpack.c.l.b16 %v6542
      %v6838 = vunpack.c.l.b16 %v6543
      %v6839 = vunpack.c.l.b16 %v6544
      %v6840 = vunpack.c.l.b16 %v6545
      %v6841 = vunpack.c.l.b16 %v6546
      %v6842 = vunpack.c.l.b16 %v6547
      %v6843 = vunpack.c.l.b16 %v6548
      %v6844 = vunpack.c.l.b16 %v6549
      %v6845 = vunpack.c.l.b16 %v6550
      %v6846 = vunpack.c.l.b16 %v6551
      %v6847 = vunpack.c.l.b16 %v6552
      %v6848 = vunpack.c.l.b16 %v6553
      %v6849 = vunpack.c.l.b16 %v6554
      %v6850 = vunpack.c.l.b16 %v6555
      %v6851 = vunpack.c.l.b16 %v6556
      %v6852 = vunpack.c.l.b16 %v6557
      %v6853 = vunpack.c.l.b16 %v6558
      %v6854 = vunpack.c.l.b16 %v6559
      %v6855 = vunpack.c.l.b16 %v6560
      %v6856 = vunpack.c.l.b16 %v6561
      %v6857 = vunpack.c.l.b16 %v6562
      %v6858 = vunpack.c.l.b16 %v6563
      %v6859 = vunpack.c.l.b16 %v6564
      %v6860 = vunpack.c.l.b16 %v6565
      %v6861 = vunpack.c.l.b16 %v6566
      %v6862 = vunpack.c.l.b16 %v6567
      %v6863 = vunpack.c.l.b16 %v6568
      %v6864 = vunpack.c.l.b16 %v6569
      %v6865 = vunpack.c.l.b16 %v6570
      %v6866 = vunpack.c.l.b16 %v6571
      %v6867 = vunpack.c.l.b16 %v6572
      %v6868 = vunpack.c.l.b16 %v6573
      %v6869 = vunpack.c.l.b16 %v6574
      %v6870 = vunpack.c.l.b16 %v6575
      %v6871 = vunpack.c.l.b16 %v6576
      %v6872 = vunpack.c.l.b16 %v6577
      %v6873 = vunpack.c.l.b16 %v6578
      %v6874 = vunpack.c.l.b16 %v6579
      %v6875 = vunpack.c.l.b16 %v6580
      %v6876 = vunpack.c.l.b16 %v6581
      %v6877 = vunpack.c.l.b16 %v6582
      %v6878 = vunpack.c.l.b16 %v6583
      %v6879 = vunpack.c.l.b16 %v6584
      %v6880 = vunpack.c.l.b16 %v6585
      %v6881 = vunpack.c.l.b16 %v6586
      %v6882 = vunpack.c.l.b16 %v6587
      %v6883 = vunpack.c.l.b16 %v6588
      %v6884 = vunpack.c.l.b16 %v6589
      %v6885 = vunpack.c.l.b16 %v6590
      %v6886 = vunpack.c.l.b16 %v6591
      %v6887 = vunpack.c.l.b16 %v6592
      %v6888 = vunpack.c.l.b16 %v6593
      %v6889 = vunpack.c.l.b16 %v6594
      %v6890 = vunpack.c.l.b16 %v6595
      %v6891 = vunpack.c.l.b16 %v6596
      %v6892 = vunpack.c.l.b16 %v6597
      %v6893 = vunpack.c.l.b16 %v6598
      %v6894 = vunpack.c.l.b16 %v6599
      %v6895 = vunpack.c.l.b16 %v6600
      %v6896 = vunpack.c.l.b16 %v6601
      %v6897 = vunpack.c.l.b16 %v6602
      %v6898 = vunpack.c.l.b16 %v6603
      %v6899 = vunpack.c.l.b16 %v6604
      %v6900 = vunpack.c.l.b16 %v6605
      %v6901 = vunpack.c.l.b16 %v6606
      %v6902 = vunpack.c.l.b16 %v6607
      %v6903 = vunpack.c.l.b16 %v6608
      %v6904 = vunpack.c.l.b16 %v6609
      %v6905 = vunpack.c.l.b16 %v6610
      %v6906 = vunpack.c.l.b16 %v6611
      %v6907 = vunpack.c.l.b16 %v6612
      %v6908 = vunpack.c.l.b16 %v6613
      %v6909 = vunpack.c.l.b16 %v6614
      %v6910 = vunpack.c.l.b16 %v6615
      %v6911 = vunpack.c.l.b16 %v6616
      %v6912 = vunpack.c.l.b16 %v6617
      %v6913 = vunpack.c.l.b16 %v6618
      %v6914 = vunpack.c.l.b16 %v6619
      %v6915 = vunpack.c.l.b16 %v6620
      %v6916 = vunpack.c.l.b16 %v6621
      %v6917 = vunpack.c.l.b16 %v6622
      %v6918 = vunpack.c.l.b16 %v6623
      %v6919 = vunpack.c.l.b16 %v6624
      %v6920 = vunpack.c.l.b16 %v6625
      %v6921 = vunpack.c.l.b16 %v6626
      %v6922 = vunpack.c.l.b16 %v6627
      %v6923 = vunpack.c.l.b16 %v6628
      %v6924 = vunpack.c.l.b16 %v6629
      %v6925 = vunpack.c.l.b16 %v6630
      %v6926 = vunpack.c.l.b16 %v6631
      %v6927 = vunpack.c.l.b16 %v6632
      %v6928 = vunpack.c.l.b16 %v6633
      %v6929 = vunpack.c.l.b16 %v6634
      %v6930 = vunpack.c.l.b16 %v6635
      %v6931 = vunpack.c.l.b16 %v6636
      %v6932 = vunpack.c.l.b16 %v6637
      %v6933 = vunpack.c.l.b16 %v6638
      %v6934 = vunpack.c.l.b16 %v6639
      %v6935 = vunpack.c.l.b16 %v6640
      %v6936 = vunpack.c.l.b16 %v6641
      %v6937 = vunpack.c.l.b16 %v6642
      %v6938 = vunpack.c.l.b16 %v6643
      %v6939 = vunpack.c.l.b16 %v6644
      %v6940 = vunpack.c.l.b16 %v6645
      %v6941 = vunpack.c.l.b16 %v6646
      %v6942 = vunpack.c.l.b16 %v6647
      %v6943 = vunpack.c.l.b16 %v6648
      %v6944 = vunpack.c.l.b16 %v6649
      %v6945 = vunpack.c.l.b16 %v6650
      %v6946 = vunpack.c.l.b16 %v6651
      %v6947 = vunpack.c.l.b16 %v6652
      %v6948 = vunpack.c.l.b16 %v6653
      %v6949 = vunpack.c.l.b16 %v6654
      %v6950 = vunpack.c.l.b16 %v6655
      %v6951 = vpack.c.b16 %v6808, %v6807
      %v6952 = vpack.c.b16 %v6810, %v6809
      %v6953 = vpack.c.b16 %v6812, %v6811
      %v6954 = vpack.c.b16 %v6814, %v6813
      %v6955 = vpack.c.b16 %v6816, %v6815
      %v6956 = vpack.c.b16 %v6818, %v6817
      %v6957 = vpack.c.b16 %v6820, %v6819
      %v6958 = vpack.c.b16 %v6822, %v6821
      %v6959 = vpack.c.b16 %v6824, %v6823
      %v6960 = vpack.c.b16 %v6826, %v6825
      %v6961 = vpack.c.b16 %v6828, %v6827
      %v6962 = vpack.c.b16 %v6830, %v6829
      %v6963 = vpack.c.b16 %v6832, %v6831
      %v6964 = vpack.c.b16 %v6834, %v6833
      %v6965 = vpack.c.b16 %v6836, %v6835
      %v6966 = vpack.c.b16 %v6838, %v6837
      %v6967 = vpack.c.b16 %v6840, %v6839
      %v6968 = vpack.c.b16 %v6842, %v6841
      %v6969 = vpack.c.b16 %v6844, %v6843
      %v6970 = vpack.c.b16 %v6846, %v6845
      %v6971 = vpack.c.b16 %v6848, %v6847
      %v6972 = vpack.c.b16 %v6850, %v6849
      %v6973 = vpack.c.b16 %v6852, %v6851
      %v6974 = vpack.c.b16 %v6854, %v6853
      %v6975 = vpack.c.b16 %v6856, %v6855
      %v6976 = vpack.c.b16 %v6858, %v6857
      %v6977 = vpack.c.b16 %v6860, %v6859
      %v6978 = vpack.c.b16 %v6862, %v6861
      %v6979 = vpack.c.b16 %v6864, %v6863
      %v6980 = vpack.c.b16 %v6866, %v6865
      %v6981 = vpack.c.b16 %v6868, %v6867
      %v6982 = vpack.c.b16 %v6870, %v6869
      %v6983 = vpack.c.b16 %v6872, %v6871
      %v6984 = vpack.c.b16 %v6874, %v6873
      %v6985 = vpack.c.b16 %v6876, %v6875
      %v6986 = vpack.c.b16 %v6878, %v6877
      %v6987 = vpack.c.b16 %v6880, %v6879
      %v6988 = vpack.c.b16 %v6882, %v6881
      %v6989 = vpack.c.b16 %v6884, %v6883
      %v6990 = vpack.c.b16 %v6886, %v6885
      %v6991 = vpack.c.b16 %v6888, %v6887
      %v6992 = vpack.c.b16 %v6890, %v6889
      %v6993 = vpack.c.b16 %v6892, %v6891
      %v6994 = vpack.c.b16 %v6894, %v6893
      %v6995 = vpack.c.b16 %v6896, %v6895
      %v6996 = vpack.c.b16 %v6898, %v6897
      %v6997 = vpack.c.b16 %v6900, %v6899
      %v6998 = vpack.c.b16 %v6902, %v6901
      %v6999 = vpack.c.b16 %v6904, %v6903
      %v7000 = vpack.c.b16 %v6906, %v6905
      %v7001 = vpack.c.b16 %v6908, %v6907
      %v7002 = vpack.c.b16 %v6910, %v6909
      %v7003 = vpack.c.b16 %v6912, %v6911
      %v7004 = vpack.c.b16 %v6914, %v6913
      %v7005 = vpack.c.b16 %v6916, %v6915
      %v7006 = vpack.c.b16 %v6918, %v6917
      %v7007 = vpack.c.b16 %v6920, %v6919
      %v7008 = vpack.c.b16 %v6922, %v6921
      %v7009 = vpack.c.b16 %v6924, %v6923
      %v7010 = vpack.c.b16 %v6926, %v6925
      %v7011 = vpack.c.b16 %v6928, %v6927
      %v7012 = vpack.c.b16 %v6930, %v6929
      %v7013 = vpack.c.b16 %v6932, %v6931
      %v7014 = vpack.c.b16 %v6934, %v6933
      %v7015 = vpack.c.b16 %v6936, %v6935
      %v7016 = vpack.c.b16 %v6938, %v6937
      %v7017 = vpack.c.b16 %v6940, %v6939
      %v7018 = vpack.c.b16 %v6942, %v6941
      %v7019 = vpack.c.b16 %v6944, %v6943
      %v7020 = vpack.c.b16 %v6946, %v6945
      %v7021 = vpack.c.b16 %v6948, %v6947
      %v7022 = vpack.c.b16 %v6950, %v6949
      %7095 = vmatprep.subr.bf16.mxu0 0
      %7096 = vmatpush1.bf16.msra.mxu0 %v6958
      %7097 = vmatprep.subr.bf16.mxu0 0
      %7098 = vmatpush1.bf16.msra.mxu0 %v6957
      %7099 = vmatprep.subr.bf16.mxu0 0
      %7100 = vmatpush1.bf16.msra.mxu0 %v6956
      %7101 = vmatprep.subr.bf16.mxu0 0
      %7102 = vmatpush1.bf16.msra.mxu0 %v6955
      %7103 = vmatprep.subr.bf16.mxu0 0
      %7104 = vmatpush1.bf16.msra.mxu0 %v6954
      %7105 = vmatprep.subr.bf16.mxu0 0
      %7106 = vmatpush1.bf16.msra.mxu0 %v6953
      %7107 = vmatprep.subr.bf16.mxu0 0
      %7108 = vmatpush1.bf16.msra.mxu0 %v6952
      %7109 = vmatprep.subr.bf16.mxu0 0
      %7110 = vmatpush1.bf16.msra.mxu0 %v6951
      %7111 = vmatprep.subr.bf16.mxu0 0
      %7112 = vmatpush2.bf16.msra.mxu0 %v6966
      %7113 = vmatprep.subr.bf16.mxu0 0
      %7114 = vmatpush2.bf16.msra.mxu0 %v6965
      %7115 = vmatprep.subr.bf16.mxu0 0
      %7116 = vmatpush2.bf16.msra.mxu0 %v6964
      %7117 = vmatprep.subr.bf16.mxu0 0
      %7118 = vmatpush2.bf16.msra.mxu0 %v6963
      %7119 = vmatprep.subr.bf16.mxu0 0
      %7120 = vmatpush2.bf16.msra.mxu0 %v6962
      %7121 = vmatprep.subr.bf16.mxu0 0
      %7122 = vmatpush2.bf16.msra.mxu0 %v6961
      %7123 = vmatprep.subr.bf16.mxu0 0
      %7124 = vmatpush2.bf16.msra.mxu0 %v6960
      %7125 = vmatprep.subr.bf16.mxu0 0
      %7126 = vmatpush2.bf16.msra.mxu0 %v6959
      %7127 = vmatprep.mubr.bf16.mxu0 %v6305
      %7128 = vmatmul.mubr.bf16.gmra.mxu0 %v6257
      %v7129 = vpop.f32.mrf.mxu0
      %v7130 = vadd.f32 %v6661, %v7129
      %v7131 = vpop.f32.mrf.mxu0
      %v7132 = vpop.f32.mrf.mxu0
      %v7133 = vadd.f32 %v6661, %v7132
      %v7134 = vpop.f32.mrf.mxu0
      %7135 = vmatprep.mubr.bf16.mxu0 %v6306
      %7136 = vmatmul.mubr.bf16.gmra.mxu0 %v6258
      %v7137 = vpop.f32.mrf.mxu0
      %v7138 = vadd.f32 %v6661, %v7137
      %v7139 = vpop.f32.mrf.mxu0
      %v7140 = vpop.f32.mrf.mxu0
      %v7141 = vadd.f32 %v6661, %v7140
      %v7142 = vpop.f32.mrf.mxu0
      %7143 = vmatprep.mubr.bf16.mxu0 %v6307
      %7144 = vmatmul.mubr.bf16.gmra.mxu0 %v6259
      %v7145 = vpop.f32.mrf.mxu0
      %v7146 = vadd.f32 %v6661, %v7145
      %v7147 = vpop.f32.mrf.mxu0
      %v7148 = vpop.f32.mrf.mxu0
      %v7149 = vadd.f32 %v6661, %v7148
      %v7150 = vpop.f32.mrf.mxu0
      %7151 = vmatprep.mubr.bf16.mxu0 %v6308
      %7152 = vmatmul.mubr.bf16.gmra.mxu0 %v6260
      %v7153 = vpop.f32.mrf.mxu0
      %v7154 = vadd.f32 %v6661, %v7153
      %v7155 = vpop.f32.mrf.mxu0
      %v7156 = vpop.f32.mrf.mxu0
      %v7157 = vadd.f32 %v6661, %v7156
      %v7158 = vpop.f32.mrf.mxu0
      %7159 = vmatprep.mubr.bf16.mxu0 %v6309
      %7160 = vmatmul.mubr.bf16.gmra.mxu0 %v6261
      %v7161 = vpop.f32.mrf.mxu0
      %v7162 = vadd.f32 %v6661, %v7161
      %v7163 = vpop.f32.mrf.mxu0
      %v7164 = vpop.f32.mrf.mxu0
      %v7165 = vadd.f32 %v6661, %v7164
      %v7166 = vpop.f32.mrf.mxu0
      %7167 = vmatprep.mubr.bf16.mxu0 %v6310
      %7168 = vmatmul.mubr.bf16.gmra.mxu0 %v6262
      %v7169 = vpop.f32.mrf.mxu0
      %v7170 = vadd.f32 %v6661, %v7169
      %v7171 = vpop.f32.mrf.mxu0
      %v7172 = vpop.f32.mrf.mxu0
      %v7173 = vadd.f32 %v6661, %v7172
      %v7174 = vpop.f32.mrf.mxu0
      %7175 = vmatprep.mubr.bf16.mxu0 %v6311
      %7176 = vmatmul.mubr.bf16.gmra.mxu0 %v6263
      %v7177 = vpop.f32.mrf.mxu0
      %v7178 = vadd.f32 %v6661, %v7177
      %v7179 = vpop.f32.mrf.mxu0
      %v7180 = vpop.f32.mrf.mxu0
      %v7181 = vadd.f32 %v6661, %v7180
      %v7182 = vpop.f32.mrf.mxu0
      %7183 = vmatprep.mubr.bf16.mxu0 %v6312
      %7184 = vmatmul.mubr.bf16.gmra.mxu0 %v6264
      %v7185 = vpop.f32.mrf.mxu0
      %v7186 = vadd.f32 %v6661, %v7185
      %v7187 = vpop.f32.mrf.mxu0
      %v7188 = vpop.f32.mrf.mxu0
      %v7189 = vadd.f32 %v6661, %v7188
      %v7190 = vpop.f32.mrf.mxu0
      %7191 = vmatprep.mubr.bf16.mxu0 %v6313
      %7192 = vmatmul.mubr.bf16.gmra.mxu0 %v6265
      %v7193 = vpop.f32.mrf.mxu0
      %v7194 = vadd.f32 %v6661, %v7193
      %v7195 = vpop.f32.mrf.mxu0
      %v7196 = vpop.f32.mrf.mxu0
      %v7197 = vadd.f32 %v6661, %v7196
      %v7198 = vpop.f32.mrf.mxu0
      %7199 = vmatprep.mubr.bf16.mxu0 %v6314
      %7200 = vmatmul.mubr.bf16.gmra.mxu0 %v6266
      %v7201 = vpop.f32.mrf.mxu0
      %v7202 = vadd.f32 %v6661, %v7201
      %v7203 = vpop.f32.mrf.mxu0
      %v7204 = vpop.f32.mrf.mxu0
      %v7205 = vadd.f32 %v6661, %v7204
      %v7206 = vpop.f32.mrf.mxu0
      %7207 = vmatprep.mubr.bf16.mxu0 %v6315
      %7208 = vmatmul.mubr.bf16.gmra.mxu0 %v6267
      %v7209 = vpop.f32.mrf.mxu0
      %v7210 = vadd.f32 %v6661, %v7209
      %v7211 = vpop.f32.mrf.mxu0
      %v7212 = vpop.f32.mrf.mxu0
      %v7213 = vadd.f32 %v6661, %v7212
      %v7214 = vpop.f32.mrf.mxu0
      %7215 = vmatprep.mubr.bf16.mxu0 %v6316
      %7216 = vmatmul.mubr.bf16.gmra.mxu0 %v6268
      %v7217 = vpop.f32.mrf.mxu0
      %v7218 = vadd.f32 %v6661, %v7217
      %v7219 = vpop.f32.mrf.mxu0
      %v7220 = vpop.f32.mrf.mxu0
      %v7221 = vadd.f32 %v6661, %v7220
      %v7222 = vpop.f32.mrf.mxu0
      %7223 = vmatprep.mubr.bf16.mxu0 %v6317
      %7224 = vmatmul.mubr.bf16.gmra.mxu0 %v6269
      %v7225 = vpop.f32.mrf.mxu0
      %v7226 = vadd.f32 %v6661, %v7225
      %v7227 = vpop.f32.mrf.mxu0
      %v7228 = vpop.f32.mrf.mxu0
      %v7229 = vadd.f32 %v6661, %v7228
      %v7230 = vpop.f32.mrf.mxu0
      %7231 = vmatprep.mubr.bf16.mxu0 %v6318
      %7232 = vmatmul.mubr.bf16.gmra.mxu0 %v6270
      %v7233 = vpop.f32.mrf.mxu0
      %v7234 = vadd.f32 %v6661, %v7233
      %v7235 = vpop.f32.mrf.mxu0
      %v7236 = vpop.f32.mrf.mxu0
      %v7237 = vadd.f32 %v6661, %v7236
      %v7238 = vpop.f32.mrf.mxu0
      %7239 = vmatprep.mubr.bf16.mxu0 %v6319
      %7240 = vmatmul.mubr.bf16.gmra.mxu0 %v6271
      %v7241 = vpop.f32.mrf.mxu0
      %v7242 = vadd.f32 %v6661, %v7241
      %v7243 = vpop.f32.mrf.mxu0
      %v7244 = vpop.f32.mrf.mxu0
      %v7245 = vadd.f32 %v6661, %v7244
      %v7246 = vpop.f32.mrf.mxu0
      %7247 = vmatprep.mubr.bf16.mxu0 %v6320
      %7248 = vmatmul.mubr.bf16.gmra.mxu0 %v6272
      %v7249 = vpop.f32.mrf.mxu0
      %v7250 = vadd.f32 %v6661, %v7249
      %v7251 = vpop.f32.mrf.mxu0
      %v7252 = vpop.f32.mrf.mxu0
      %v7253 = vadd.f32 %v6661, %v7252
      %v7254 = vpop.f32.mrf.mxu0
      %7255 = vdwg.mxu0
      %7256 = vmatprep.subr.bf16.mxu0 0
      %7257 = vmatpush1.bf16.msra.mxu0 %v6974
      %7258 = vmatprep.subr.bf16.mxu0 0
      %7259 = vmatpush1.bf16.msra.mxu0 %v6973
      %7260 = vmatprep.subr.bf16.mxu0 0
      %7261 = vmatpush1.bf16.msra.mxu0 %v6972
      %7262 = vmatprep.subr.bf16.mxu0 0
      %7263 = vmatpush1.bf16.msra.mxu0 %v6971
      %7264 = vmatprep.subr.bf16.mxu0 0
      %7265 = vmatpush1.bf16.msra.mxu0 %v6970
      %7266 = vmatprep.subr.bf16.mxu0 0
      %7267 = vmatpush1.bf16.msra.mxu0 %v6969
      %7268 = vmatprep.subr.bf16.mxu0 0
      %7269 = vmatpush1.bf16.msra.mxu0 %v6968
      %7270 = vmatprep.subr.bf16.mxu0 0
      %7271 = vmatpush1.bf16.msra.mxu0 %v6967
      %7272 = vmatprep.subr.bf16.mxu0 0
      %7273 = vmatpush2.bf16.msra.mxu0 %v6982
      %7274 = vmatprep.subr.bf16.mxu0 0
      %7275 = vmatpush2.bf16.msra.mxu0 %v6981
      %7276 = vmatprep.subr.bf16.mxu0 0
      %7277 = vmatpush2.bf16.msra.mxu0 %v6980
      %7278 = vmatprep.subr.bf16.mxu0 0
      %7279 = vmatpush2.bf16.msra.mxu0 %v6979
      %7280 = vmatprep.subr.bf16.mxu0 0
      %7281 = vmatpush2.bf16.msra.mxu0 %v6978
      %7282 = vmatprep.subr.bf16.mxu0 0
      %7283 = vmatpush2.bf16.msra.mxu0 %v6977
      %7284 = vmatprep.subr.bf16.mxu0 0
      %7285 = vmatpush2.bf16.msra.mxu0 %v6976
      %7286 = vmatprep.subr.bf16.mxu0 0
      %7287 = vmatpush2.bf16.msra.mxu0 %v6975
      %7288 = vmatprep.mubr.bf16.mxu0 %v6388
      %7289 = vmatmul.mubr.bf16.gmra.mxu0 %v6369
      %v7290 = vpop.f32.mrf.mxu0
      %v7291 = vadd.f32 %v7130, %v7290
      %v7292 = vpop.f32.mrf.mxu0
      %v7293 = vpop.f32.mrf.mxu0
      %v7294 = vadd.f32 %v7133, %v7293
      %v7295 = vpop.f32.mrf.mxu0
      %7296 = vmatprep.mubr.bf16.mxu0 %v6389
      %7297 = vmatmul.mubr.bf16.gmra.mxu0 %v6370
      %v7298 = vpop.f32.mrf.mxu0
      %v7299 = vadd.f32 %v7138, %v7298
      %v7300 = vpop.f32.mrf.mxu0
      %v7301 = vpop.f32.mrf.mxu0
      %v7302 = vadd.f32 %v7141, %v7301
      %v7303 = vpop.f32.mrf.mxu0
      %7304 = vmatprep.mubr.bf16.mxu0 %v6390
      %7305 = vmatmul.mubr.bf16.gmra.mxu0 %v6371
      %v7306 = vpop.f32.mrf.mxu0
      %v7307 = vadd.f32 %v7146, %v7306
      %v7308 = vpop.f32.mrf.mxu0
      %v7309 = vpop.f32.mrf.mxu0
      %v7310 = vadd.f32 %v7149, %v7309
      %v7311 = vpop.f32.mrf.mxu0
      %7312 = vmatprep.mubr.bf16.mxu0 %v6391
      %7313 = vmatmul.mubr.bf16.gmra.mxu0 %v6372
      %v7314 = vpop.f32.mrf.mxu0
      %v7315 = vadd.f32 %v7154, %v7314
      %v7316 = vpop.f32.mrf.mxu0
      %v7317 = vpop.f32.mrf.mxu0
      %v7318 = vadd.f32 %v7157, %v7317
      %v7319 = vpop.f32.mrf.mxu0
      %7320 = vmatprep.mubr.bf16.mxu0 %v6392
      %7321 = vmatmul.mubr.bf16.gmra.mxu0 %v6373
      %v7322 = vpop.f32.mrf.mxu0
      %v7323 = vadd.f32 %v7162, %v7322
      %v7324 = vpop.f32.mrf.mxu0
      %v7325 = vpop.f32.mrf.mxu0
      %v7326 = vadd.f32 %v7165, %v7325
      %v7327 = vpop.f32.mrf.mxu0
      %7328 = vmatprep.mubr.bf16.mxu0 %v6393
      %7329 = vmatmul.mubr.bf16.gmra.mxu0 %v6374
      %v7330 = vpop.f32.mrf.mxu0
      %v7331 = vadd.f32 %v7170, %v7330
      %v7332 = vpop.f32.mrf.mxu0
      %v7333 = vpop.f32.mrf.mxu0
      %v7334 = vadd.f32 %v7173, %v7333
      %v7335 = vpop.f32.mrf.mxu0
      %7336 = vmatprep.mubr.bf16.mxu0 %v6394
      %7337 = vmatmul.mubr.bf16.gmra.mxu0 %v6375
      %v7338 = vpop.f32.mrf.mxu0
      %v7339 = vadd.f32 %v7178, %v7338
      %v7340 = vpop.f32.mrf.mxu0
      %v7341 = vpop.f32.mrf.mxu0
      %v7342 = vadd.f32 %v7181, %v7341
      %v7343 = vpop.f32.mrf.mxu0
      %7344 = vmatprep.mubr.bf16.mxu0 %v6395
      %7345 = vmatmul.mubr.bf16.gmra.mxu0 %v6376
      %v7346 = vpop.f32.mrf.mxu0
      %v7347 = vadd.f32 %v7186, %v7346
      %v7348 = vpop.f32.mrf.mxu0
      %v7349 = vpop.f32.mrf.mxu0
      %v7350 = vadd.f32 %v7189, %v7349
      %v7351 = vpop.f32.mrf.mxu0
      %7352 = vmatprep.mubr.bf16.mxu0 %v6396
      %7353 = vmatmul.mubr.bf16.gmra.mxu0 %v6377
      %v7354 = vpop.f32.mrf.mxu0
      %v7355 = vadd.f32 %v7194, %v7354
      %v7356 = vpop.f32.mrf.mxu0
      %v7357 = vpop.f32.mrf.mxu0
      %v7358 = vadd.f32 %v7197, %v7357
      %v7359 = vpop.f32.mrf.mxu0
      %7360 = vmatprep.mubr.bf16.mxu0 %v6397
      %7361 = vmatmul.mubr.bf16.gmra.mxu0 %v6378
      %v7362 = vpop.f32.mrf.mxu0
      %v7363 = vadd.f32 %v7202, %v7362
      %v7364 = vpop.f32.mrf.mxu0
      %v7365 = vpop.f32.mrf.mxu0
      %v7366 = vadd.f32 %v7205, %v7365
      %v7367 = vpop.f32.mrf.mxu0
      %7368 = vmatprep.mubr.bf16.mxu0 %v6398
      %7369 = vmatmul.mubr.bf16.gmra.mxu0 %v6379
      %v7370 = vpop.f32.mrf.mxu0
      %v7371 = vadd.f32 %v7210, %v7370
      %v7372 = vpop.f32.mrf.mxu0
      %v7373 = vpop.f32.mrf.mxu0
      %v7374 = vadd.f32 %v7213, %v7373
      %v7375 = vpop.f32.mrf.mxu0
      %7376 = vmatprep.mubr.bf16.mxu0 %v6399
      %7377 = vmatmul.mubr.bf16.gmra.mxu0 %v6380
      %v7378 = vpop.f32.mrf.mxu0
      %v7379 = vadd.f32 %v7218, %v7378
      %v7380 = vpop.f32.mrf.mxu0
      %v7381 = vpop.f32.mrf.mxu0
      %v7382 = vadd.f32 %v7221, %v7381
      %v7383 = vpop.f32.mrf.mxu0
      %7384 = vmatprep.mubr.bf16.mxu0 %v6400
      %7385 = vmatmul.mubr.bf16.gmra.mxu0 %v6381
      %v7386 = vpop.f32.mrf.mxu0
      %v7387 = vadd.f32 %v7226, %v7386
      %v7388 = vpop.f32.mrf.mxu0
      %v7389 = vpop.f32.mrf.mxu0
      %v7390 = vadd.f32 %v7229, %v7389
      %v7391 = vpop.f32.mrf.mxu0
      %7392 = vmatprep.mubr.bf16.mxu0 %v6401
      %7393 = vmatmul.mubr.bf16.gmra.mxu0 %v6382
      %v7394 = vpop.f32.mrf.mxu0
      %v7395 = vadd.f32 %v7234, %v7394
      %v7396 = vpop.f32.mrf.mxu0
      %v7397 = vpop.f32.mrf.mxu0
      %v7398 = vadd.f32 %v7237, %v7397
      %v7399 = vpop.f32.mrf.mxu0
      %7400 = vmatprep.mubr.bf16.mxu0 %v6402
      %7401 = vmatmul.mubr.bf16.gmra.mxu0 %v6383
      %v7402 = vpop.f32.mrf.mxu0
      %v7403 = vadd.f32 %v7242, %v7402
      %v7404 = vpop.f32.mrf.mxu0
      %v7405 = vpop.f32.mrf.mxu0
      %v7406 = vadd.f32 %v7245, %v7405
      %v7407 = vpop.f32.mrf.mxu0
      %7408 = vmatprep.mubr.bf16.mxu0 %v6403
      %7409 = vmatmul.mubr.bf16.gmra.mxu0 %v6384
      %v7410 = vpop.f32.mrf.mxu0
      %v7411 = vadd.f32 %v7250, %v7410
      %v7412 = vpop.f32.mrf.mxu0
      %v7413 = vpop.f32.mrf.mxu0
      %v7414 = vadd.f32 %v7253, %v7413
      %v7415 = vpop.f32.mrf.mxu0
      %7416 = vdwg.mxu0
      %7417 = vmatprep.subr.bf16.mxu0 0
      %7418 = vmatpush1.bf16.msra.mxu0 %v6990
      %7419 = vmatprep.subr.bf16.mxu0 0
      %7420 = vmatpush1.bf16.msra.mxu0 %v6989
      %7421 = vmatprep.subr.bf16.mxu0 0
      %7422 = vmatpush1.bf16.msra.mxu0 %v6988
      %7423 = vmatprep.subr.bf16.mxu0 0
      %7424 = vmatpush1.bf16.msra.mxu0 %v6987
      %7425 = vmatprep.subr.bf16.mxu0 0
      %7426 = vmatpush1.bf16.msra.mxu0 %v6986
      %7427 = vmatprep.subr.bf16.mxu0 0
      %7428 = vmatpush1.bf16.msra.mxu0 %v6985
      %7429 = vmatprep.subr.bf16.mxu0 0
      %7430 = vmatpush1.bf16.msra.mxu0 %v6984
      %7431 = vmatprep.subr.bf16.mxu0 0
      %7432 = vmatpush1.bf16.msra.mxu0 %v6983
      %7433 = vmatprep.subr.bf16.mxu0 0
      %7434 = vmatpush2.bf16.msra.mxu0 %v6998
      %7435 = vmatprep.subr.bf16.mxu0 0
      %7436 = vmatpush2.bf16.msra.mxu0 %v6997
      %7437 = vmatprep.subr.bf16.mxu0 0
      %7438 = vmatpush2.bf16.msra.mxu0 %v6996
      %7439 = vmatprep.subr.bf16.mxu0 0
      %7440 = vmatpush2.bf16.msra.mxu0 %v6995
      %7441 = vmatprep.subr.bf16.mxu0 0
      %7442 = vmatpush2.bf16.msra.mxu0 %v6994
      %7443 = vmatprep.subr.bf16.mxu0 0
      %7444 = vmatpush2.bf16.msra.mxu0 %v6993
      %7445 = vmatprep.subr.bf16.mxu0 0
      %7446 = vmatpush2.bf16.msra.mxu0 %v6992
      %7447 = vmatprep.subr.bf16.mxu0 0
      %7448 = vmatpush2.bf16.msra.mxu0 %v6991
      %7449 = vmatprep.mubr.bf16.mxu0 %v6410
      %7450 = vmatmul.mubr.bf16.gmra.mxu0 %v6306
      %v7451 = vpop.f32.mrf.mxu0
      %v7452 = vadd.f32 %v7291, %v7451
      %v7453 = vpop.f32.mrf.mxu0
      %v7454 = vpop.f32.mrf.mxu0
      %v7455 = vadd.f32 %v7294, %v7454
      %v7456 = vpop.f32.mrf.mxu0
      %7457 = vmatprep.mubr.bf16.mxu0 %v6411
      %7458 = vmatmul.mubr.bf16.gmra.mxu0 %v6307
      %v7459 = vpop.f32.mrf.mxu0
      %v7460 = vadd.f32 %v7299, %v7459
      %v7461 = vpop.f32.mrf.mxu0
      %v7462 = vpop.f32.mrf.mxu0
      %v7463 = vadd.f32 %v7302, %v7462
      %v7464 = vpop.f32.mrf.mxu0
      %7465 = vmatprep.mubr.bf16.mxu0 %v6412
      %7466 = vmatmul.mubr.bf16.gmra.mxu0 %v6308
      %v7467 = vpop.f32.mrf.mxu0
      %v7468 = vadd.f32 %v7307, %v7467
      %v7469 = vpop.f32.mrf.mxu0
      %v7470 = vpop.f32.mrf.mxu0
      %v7471 = vadd.f32 %v7310, %v7470
      %v7472 = vpop.f32.mrf.mxu0
      %7473 = vmatprep.mubr.bf16.mxu0 %v6413
      %7474 = vmatmul.mubr.bf16.gmra.mxu0 %v6309
      %v7475 = vpop.f32.mrf.mxu0
      %v7476 = vadd.f32 %v7315, %v7475
      %v7477 = vpop.f32.mrf.mxu0
      %v7478 = vpop.f32.mrf.mxu0
      %v7479 = vadd.f32 %v7318, %v7478
      %v7480 = vpop.f32.mrf.mxu0
      %7481 = vmatprep.mubr.bf16.mxu0 %v6414
      %7482 = vmatmul.mubr.bf16.gmra.mxu0 %v6310
      %v7483 = vpop.f32.mrf.mxu0
      %v7484 = vadd.f32 %v7323, %v7483
      %v7485 = vpop.f32.mrf.mxu0
      %v7486 = vpop.f32.mrf.mxu0
      %v7487 = vadd.f32 %v7326, %v7486
      %v7488 = vpop.f32.mrf.mxu0
      %7489 = vmatprep.mubr.bf16.mxu0 %v6415
      %7490 = vmatmul.mubr.bf16.gmra.mxu0 %v6311
      %v7491 = vpop.f32.mrf.mxu0
      %v7492 = vadd.f32 %v7331, %v7491
      %v7493 = vpop.f32.mrf.mxu0
      %v7494 = vpop.f32.mrf.mxu0
      %v7495 = vadd.f32 %v7334, %v7494
      %v7496 = vpop.f32.mrf.mxu0
      %7497 = vmatprep.mubr.bf16.mxu0 %v6416
      %7498 = vmatmul.mubr.bf16.gmra.mxu0 %v6312
      %v7499 = vpop.f32.mrf.mxu0
      %v7500 = vadd.f32 %v7339, %v7499
      %v7501 = vpop.f32.mrf.mxu0
      %v7502 = vpop.f32.mrf.mxu0
      %v7503 = vadd.f32 %v7342, %v7502
      %v7504 = vpop.f32.mrf.mxu0
      %7505 = vmatprep.mubr.bf16.mxu0 %v6417
      %7506 = vmatmul.mubr.bf16.gmra.mxu0 %v6313
      %v7507 = vpop.f32.mrf.mxu0
      %v7508 = vadd.f32 %v7347, %v7507
      %v7509 = vpop.f32.mrf.mxu0
      %v7510 = vpop.f32.mrf.mxu0
      %v7511 = vadd.f32 %v7350, %v7510
      %v7512 = vpop.f32.mrf.mxu0
      %7513 = vmatprep.mubr.bf16.mxu0 %v6418
      %7514 = vmatmul.mubr.bf16.gmra.mxu0 %v6314
      %v7515 = vpop.f32.mrf.mxu0
      %v7516 = vadd.f32 %v7355, %v7515
      %v7517 = vpop.f32.mrf.mxu0
      %v7518 = vpop.f32.mrf.mxu0
      %v7519 = vadd.f32 %v7358, %v7518
      %v7520 = vpop.f32.mrf.mxu0
      %7521 = vmatprep.mubr.bf16.mxu0 %v6419
      %7522 = vmatmul.mubr.bf16.gmra.mxu0 %v6315
      %v7523 = vpop.f32.mrf.mxu0
      %v7524 = vadd.f32 %v7363, %v7523
      %v7525 = vpop.f32.mrf.mxu0
      %v7526 = vpop.f32.mrf.mxu0
      %v7527 = vadd.f32 %v7366, %v7526
      %v7528 = vpop.f32.mrf.mxu0
      %7529 = vmatprep.mubr.bf16.mxu0 %v6420
      %7530 = vmatmul.mubr.bf16.gmra.mxu0 %v6316
      %v7531 = vpop.f32.mrf.mxu0
      %v7532 = vadd.f32 %v7371, %v7531
      %v7533 = vpop.f32.mrf.mxu0
      %v7534 = vpop.f32.mrf.mxu0
      %v7535 = vadd.f32 %v7374, %v7534
      %v7536 = vpop.f32.mrf.mxu0
      %7537 = vmatprep.mubr.bf16.mxu0 %v6421
      %7538 = vmatmul.mubr.bf16.gmra.mxu0 %v6317
      %v7539 = vpop.f32.mrf.mxu0
      %v7540 = vadd.f32 %v7379, %v7539
      %v7541 = vpop.f32.mrf.mxu0
      %v7542 = vpop.f32.mrf.mxu0
      %v7543 = vadd.f32 %v7382, %v7542
      %v7544 = vpop.f32.mrf.mxu0
      %7545 = vmatprep.mubr.bf16.mxu0 %v6422
      %7546 = vmatmul.mubr.bf16.gmra.mxu0 %v6318
      %v7547 = vpop.f32.mrf.mxu0
      %v7548 = vadd.f32 %v7387, %v7547
      %v7549 = vpop.f32.mrf.mxu0
      %v7550 = vpop.f32.mrf.mxu0
      %v7551 = vadd.f32 %v7390, %v7550
      %v7552 = vpop.f32.mrf.mxu0
      %7553 = vmatprep.mubr.bf16.mxu0 %v6423
      %7554 = vmatmul.mubr.bf16.gmra.mxu0 %v6319
      %v7555 = vpop.f32.mrf.mxu0
      %v7556 = vadd.f32 %v7395, %v7555
      %v7557 = vpop.f32.mrf.mxu0
      %v7558 = vpop.f32.mrf.mxu0
      %v7559 = vadd.f32 %v7398, %v7558
      %v7560 = vpop.f32.mrf.mxu0
      %7561 = vmatprep.mubr.bf16.mxu0 %v6424
      %7562 = vmatmul.mubr.bf16.gmra.mxu0 %v6320
      %v7563 = vpop.f32.mrf.mxu0
      %v7564 = vadd.f32 %v7403, %v7563
      %v7565 = vpop.f32.mrf.mxu0
      %v7566 = vpop.f32.mrf.mxu0
      %v7567 = vadd.f32 %v7406, %v7566
      %v7568 = vpop.f32.mrf.mxu0
      %7569 = vmatprep.mubr.bf16.mxu0 %v6425
      %7570 = vmatmul.mubr.bf16.gmra.mxu0 %v6406
      %v7571 = vpop.f32.mrf.mxu0
      %v7572 = vadd.f32 %v7411, %v7571
      %v7573 = vpop.f32.mrf.mxu0
      %v7574 = vpop.f32.mrf.mxu0
      %v7575 = vadd.f32 %v7414, %v7574
      %v7576 = vpop.f32.mrf.mxu0
      %7577 = vdwg.mxu0
      %7578 = vmatprep.subr.bf16.mxu0 0
      %7579 = vmatpush1.bf16.msra.mxu0 %v7006
      %7580 = vmatprep.subr.bf16.mxu0 0
      %7581 = vmatpush1.bf16.msra.mxu0 %v7005
      %7582 = vmatprep.subr.bf16.mxu0 0
      %7583 = vmatpush1.bf16.msra.mxu0 %v7004
      %7584 = vmatprep.subr.bf16.mxu0 0
      %7585 = vmatpush1.bf16.msra.mxu0 %v7003
      %7586 = vmatprep.subr.bf16.mxu0 0
      %7587 = vmatpush1.bf16.msra.mxu0 %v7002
      %7588 = vmatprep.subr.bf16.mxu0 0
      %7589 = vmatpush1.bf16.msra.mxu0 %v7001
      %7590 = vmatprep.subr.bf16.mxu0 0
      %7591 = vmatpush1.bf16.msra.mxu0 %v7000
      %7592 = vmatprep.subr.bf16.mxu0 0
      %7593 = vmatpush1.bf16.msra.mxu0 %v6999
      %7594 = vmatprep.subr.bf16.mxu0 0
      %7595 = vmatpush2.bf16.msra.mxu0 %v7014
      %7596 = vmatprep.subr.bf16.mxu0 0
      %7597 = vmatpush2.bf16.msra.mxu0 %v7013
      %7598 = vmatprep.subr.bf16.mxu0 0
      %7599 = vmatpush2.bf16.msra.mxu0 %v7012
      %7600 = vmatprep.subr.bf16.mxu0 0
      %7601 = vmatpush2.bf16.msra.mxu0 %v7011
      %7602 = vmatprep.subr.bf16.mxu0 0
      %7603 = vmatpush2.bf16.msra.mxu0 %v7010
      %7604 = vmatprep.subr.bf16.mxu0 0
      %7605 = vmatpush2.bf16.msra.mxu0 %v7009
      %7606 = vmatprep.subr.bf16.mxu0 0
      %7607 = vmatpush2.bf16.msra.mxu0 %v7008
      %7608 = vmatprep.subr.bf16.mxu0 0
      %7609 = vmatpush2.bf16.msra.mxu0 %v7007
      %7610 = vmatprep.mubr.bf16.mxu0 %v6307
      %7611 = vmatmul.mubr.bf16.gmra.mxu0 %v6429
      %v7612 = vpop.f32.mrf.mxu0
      %v7613 = vadd.f32 %v7452, %v7612
      %v7614 = vpop.f32.mrf.mxu0
      %v7615 = vpop.f32.mrf.mxu0
      %v7616 = vadd.f32 %v7455, %v7615
      %v7617 = vpop.f32.mrf.mxu0
      %7618 = vmatprep.mubr.bf16.mxu0 %v6308
      %7619 = vmatmul.mubr.bf16.gmra.mxu0 %v6430
      %v7620 = vpop.f32.mrf.mxu0
      %v7621 = vadd.f32 %v7460, %v7620
      %v7622 = vpop.f32.mrf.mxu0
      %v7623 = vpop.f32.mrf.mxu0
      %v7624 = vadd.f32 %v7463, %v7623
      %v7625 = vpop.f32.mrf.mxu0
      %7626 = vmatprep.mubr.bf16.mxu0 %v6309
      %7627 = vmatmul.mubr.bf16.gmra.mxu0 %v6431
      %v7628 = vpop.f32.mrf.mxu0
      %v7629 = vadd.f32 %v7468, %v7628
      %v7630 = vpop.f32.mrf.mxu0
      %v7631 = vpop.f32.mrf.mxu0
      %v7632 = vadd.f32 %v7471, %v7631
      %v7633 = vpop.f32.mrf.mxu0
      %7634 = vmatprep.mubr.bf16.mxu0 %v6310
      %7635 = vmatmul.mubr.bf16.gmra.mxu0 %v6432
      %v7636 = vpop.f32.mrf.mxu0
      %v7637 = vadd.f32 %v7476, %v7636
      %v7638 = vpop.f32.mrf.mxu0
      %v7639 = vpop.f32.mrf.mxu0
      %v7640 = vadd.f32 %v7479, %v7639
      %v7641 = vpop.f32.mrf.mxu0
      %7642 = vmatprep.mubr.bf16.mxu0 %v6311
      %7643 = vmatmul.mubr.bf16.gmra.mxu0 %v6433
      %v7644 = vpop.f32.mrf.mxu0
      %v7645 = vadd.f32 %v7484, %v7644
      %v7646 = vpop.f32.mrf.mxu0
      %v7647 = vpop.f32.mrf.mxu0
      %v7648 = vadd.f32 %v7487, %v7647
      %v7649 = vpop.f32.mrf.mxu0
      %7650 = vmatprep.mubr.bf16.mxu0 %v6312
      %7651 = vmatmul.mubr.bf16.gmra.mxu0 %v6434
      %v7652 = vpop.f32.mrf.mxu0
      %v7653 = vadd.f32 %v7492, %v7652
      %v7654 = vpop.f32.mrf.mxu0
      %v7655 = vpop.f32.mrf.mxu0
      %v7656 = vadd.f32 %v7495, %v7655
      %v7657 = vpop.f32.mrf.mxu0
      %7658 = vmatprep.mubr.bf16.mxu0 %v6313
      %7659 = vmatmul.mubr.bf16.gmra.mxu0 %v6435
      %v7660 = vpop.f32.mrf.mxu0
      %v7661 = vadd.f32 %v7500, %v7660
      %v7662 = vpop.f32.mrf.mxu0
      %v7663 = vpop.f32.mrf.mxu0
      %v7664 = vadd.f32 %v7503, %v7663
      %v7665 = vpop.f32.mrf.mxu0
      %7666 = vmatprep.mubr.bf16.mxu0 %v6314
      %7667 = vmatmul.mubr.bf16.gmra.mxu0 %v6436
      %v7668 = vpop.f32.mrf.mxu0
      %v7669 = vadd.f32 %v7508, %v7668
      %v7670 = vpop.f32.mrf.mxu0
      %v7671 = vpop.f32.mrf.mxu0
      %v7672 = vadd.f32 %v7511, %v7671
      %v7673 = vpop.f32.mrf.mxu0
      %7674 = vmatprep.mubr.bf16.mxu0 %v6315
      %7675 = vmatmul.mubr.bf16.gmra.mxu0 %v6437
      %v7676 = vpop.f32.mrf.mxu0
      %v7677 = vadd.f32 %v7516, %v7676
      %v7678 = vpop.f32.mrf.mxu0
      %v7679 = vpop.f32.mrf.mxu0
      %v7680 = vadd.f32 %v7519, %v7679
      %v7681 = vpop.f32.mrf.mxu0
      %7682 = vmatprep.mubr.bf16.mxu0 %v6316
      %7683 = vmatmul.mubr.bf16.gmra.mxu0 %v6438
      %v7684 = vpop.f32.mrf.mxu0
      %v7685 = vadd.f32 %v7524, %v7684
      %v7686 = vpop.f32.mrf.mxu0
      %v7687 = vpop.f32.mrf.mxu0
      %v7688 = vadd.f32 %v7527, %v7687
      %v7689 = vpop.f32.mrf.mxu0
      %7690 = vmatprep.mubr.bf16.mxu0 %v6317
      %7691 = vmatmul.mubr.bf16.gmra.mxu0 %v6439
      %v7692 = vpop.f32.mrf.mxu0
      %v7693 = vadd.f32 %v7532, %v7692
      %v7694 = vpop.f32.mrf.mxu0
      %v7695 = vpop.f32.mrf.mxu0
      %v7696 = vadd.f32 %v7535, %v7695
      %v7697 = vpop.f32.mrf.mxu0
      %7698 = vmatprep.mubr.bf16.mxu0 %v6318
      %7699 = vmatmul.mubr.bf16.gmra.mxu0 %v6440
      %v7700 = vpop.f32.mrf.mxu0
      %v7701 = vadd.f32 %v7540, %v7700
      %v7702 = vpop.f32.mrf.mxu0
      %v7703 = vpop.f32.mrf.mxu0
      %v7704 = vadd.f32 %v7543, %v7703
      %v7705 = vpop.f32.mrf.mxu0
      %7706 = vmatprep.mubr.bf16.mxu0 %v6319
      %7707 = vmatmul.mubr.bf16.gmra.mxu0 %v6441
      %v7708 = vpop.f32.mrf.mxu0
      %v7709 = vadd.f32 %v7548, %v7708
      %v7710 = vpop.f32.mrf.mxu0
      %v7711 = vpop.f32.mrf.mxu0
      %v7712 = vadd.f32 %v7551, %v7711
      %v7713 = vpop.f32.mrf.mxu0
      %7714 = vmatprep.mubr.bf16.mxu0 %v6320
      %7715 = vmatmul.mubr.bf16.gmra.mxu0 %v6442
      %v7716 = vpop.f32.mrf.mxu0
      %v7717 = vadd.f32 %v7556, %v7716
      %v7718 = vpop.f32.mrf.mxu0
      %v7719 = vpop.f32.mrf.mxu0
      %v7720 = vadd.f32 %v7559, %v7719
      %v7721 = vpop.f32.mrf.mxu0
      %7722 = vmatprep.mubr.bf16.mxu0 %v6406
      %7723 = vmatmul.mubr.bf16.gmra.mxu0 %v6443
      %v7724 = vpop.f32.mrf.mxu0
      %v7725 = vadd.f32 %v7564, %v7724
      %v7726 = vpop.f32.mrf.mxu0
      %v7727 = vpop.f32.mrf.mxu0
      %v7728 = vadd.f32 %v7567, %v7727
      %v7729 = vpop.f32.mrf.mxu0
      %7730 = vmatprep.mubr.bf16.mxu0 %v6447
      %7731 = vmatmul.mubr.bf16.gmra.mxu0 %v6444
      %v7732 = vpop.f32.mrf.mxu0
      %v7733 = vadd.f32 %v7572, %v7732
      %v7734 = vpop.f32.mrf.mxu0
      %v7735 = vpop.f32.mrf.mxu0
      %v7736 = vadd.f32 %v7575, %v7735
      %v7737 = vpop.f32.mrf.mxu0
      %7738 = vdwg.mxu0
      %7739 = vmatprep.subr.bf16.mxu0 0
      %7740 = vmatpush1.bf16.msra.mxu0 %v7022
      %7741 = vmatprep.subr.bf16.mxu0 0
      %7742 = vmatpush1.bf16.msra.mxu0 %v7021
      %7743 = vmatprep.subr.bf16.mxu0 0
      %7744 = vmatpush1.bf16.msra.mxu0 %v7020
      %7745 = vmatprep.subr.bf16.mxu0 0
      %7746 = vmatpush1.bf16.msra.mxu0 %v7019
      %7747 = vmatprep.subr.bf16.mxu0 0
      %7748 = vmatpush1.bf16.msra.mxu0 %v7018
      %7749 = vmatprep.subr.bf16.mxu0 0
      %7750 = vmatpush1.bf16.msra.mxu0 %v7017
      %7751 = vmatprep.subr.bf16.mxu0 0
      %7752 = vmatpush1.bf16.msra.mxu0 %v7016
      %7753 = vmatprep.subr.bf16.mxu0 0
      %7754 = vmatpush1.bf16.msra.mxu0 %v7015
      %7755 = vmatprep.subr.bf16.mxu0 0
      %7756 = vmatpush2.bf16.msra.mxu0 0
      %7757 = vmatprep.subr.bf16.mxu0 0
      %7758 = vmatpush2.bf16.msra.mxu0 0
      %7759 = vmatprep.subr.bf16.mxu0 0
      %7760 = vmatpush2.bf16.msra.mxu0 0
      %7761 = vmatprep.subr.bf16.mxu0 0
      %7762 = vmatpush2.bf16.msra.mxu0 0
      %7763 = vmatprep.subr.bf16.mxu0 0
      %7764 = vmatpush2.bf16.msra.mxu0 0
      %7765 = vmatprep.subr.bf16.mxu0 0
      %7766 = vmatpush2.bf16.msra.mxu0 0
      %7767 = vmatprep.subr.bf16.mxu0 0
      %7768 = vmatpush2.bf16.msra.mxu0 0
      %7769 = vmatprep.subr.bf16.mxu0 0
      %7770 = vmatpush2.bf16.msra.mxu0 0
      %7771 = vmatprep.mubr.bf16.mxu0 0
      %7772 = vmatmul.mubr.bf16.gmra.mxu0 %v6496
      %v7773 = vpop.f32.mrf.mxu0
      %v7774 = vadd.f32 %v7613, %v7773
      %v7775 = vpop.f32.mrf.mxu0
      %v7776 = vpop.f32.mrf.mxu0
      %v7777 = vadd.f32 %v7616, %v7776
      %v7778 = vpop.f32.mrf.mxu0
      %7779 = vmatprep.mubr.bf16.mxu0 0
      %7780 = vmatmul.mubr.bf16.gmra.mxu0 %v6497
      %v7781 = vpop.f32.mrf.mxu0
      %v7782 = vadd.f32 %v7621, %v7781
      %v7783 = vpop.f32.mrf.mxu0
      %v7784 = vpop.f32.mrf.mxu0
      %v7785 = vadd.f32 %v7624, %v7784
      %v7786 = vpop.f32.mrf.mxu0
      %7787 = vmatprep.mubr.bf16.mxu0 0
      %7788 = vmatmul.mubr.bf16.gmra.mxu0 %v6498
      %v7789 = vpop.f32.mrf.mxu0
      %v7790 = vadd.f32 %v7629, %v7789
      %v7791 = vpop.f32.mrf.mxu0
      %v7792 = vpop.f32.mrf.mxu0
      %v7793 = vadd.f32 %v7632, %v7792
      %v7794 = vpop.f32.mrf.mxu0
      %7795 = vmatprep.mubr.bf16.mxu0 0
      %7796 = vmatmul.mubr.bf16.gmra.mxu0 %v6499
      %v7797 = vpop.f32.mrf.mxu0
      %v7798 = vadd.f32 %v7637, %v7797
      %v7799 = vpop.f32.mrf.mxu0
      %v7800 = vpop.f32.mrf.mxu0
      %v7801 = vadd.f32 %v7640, %v7800
      %v7802 = vpop.f32.mrf.mxu0
      %7803 = vmatprep.mubr.bf16.mxu0 0
      %7804 = vmatmul.mubr.bf16.gmra.mxu0 %v6500
      %v7805 = vpop.f32.mrf.mxu0
      %v7806 = vadd.f32 %v7645, %v7805
      %v7807 = vpop.f32.mrf.mxu0
      %v7808 = vpop.f32.mrf.mxu0
      %v7809 = vadd.f32 %v7648, %v7808
      %v7810 = vpop.f32.mrf.mxu0
      %7811 = vmatprep.mubr.bf16.mxu0 0
      %7812 = vmatmul.mubr.bf16.gmra.mxu0 %v6501
      %v7813 = vpop.f32.mrf.mxu0
      %v7814 = vadd.f32 %v7653, %v7813
      %v7815 = vpop.f32.mrf.mxu0
      %v7816 = vpop.f32.mrf.mxu0
      %v7817 = vadd.f32 %v7656, %v7816
      %v7818 = vpop.f32.mrf.mxu0
      %7819 = vmatprep.mubr.bf16.mxu0 0
      %7820 = vmatmul.mubr.bf16.gmra.mxu0 %v6502
      %v7821 = vpop.f32.mrf.mxu0
      %v7822 = vadd.f32 %v7661, %v7821
      %v7823 = vpop.f32.mrf.mxu0
      %v7824 = vpop.f32.mrf.mxu0
      %v7825 = vadd.f32 %v7664, %v7824
      %v7826 = vpop.f32.mrf.mxu0
      %7827 = vmatprep.mubr.bf16.mxu0 0
      %7828 = vmatmul.mubr.bf16.gmra.mxu0 %v6503
      %v7829 = vpop.f32.mrf.mxu0
      %v7830 = vadd.f32 %v7669, %v7829
      %v7831 = vpop.f32.mrf.mxu0
      %v7832 = vpop.f32.mrf.mxu0
      %v7833 = vadd.f32 %v7672, %v7832
      %v7834 = vpop.f32.mrf.mxu0
      %7835 = vmatprep.mubr.bf16.mxu0 0
      %7836 = vmatmul.mubr.bf16.gmra.mxu0 %v6504
      %v7837 = vpop.f32.mrf.mxu0
      %v7838 = vadd.f32 %v7677, %v7837
      %v7839 = vpop.f32.mrf.mxu0
      %v7840 = vpop.f32.mrf.mxu0
      %v7841 = vadd.f32 %v7680, %v7840
      %v7842 = vpop.f32.mrf.mxu0
      %7843 = vmatprep.mubr.bf16.mxu0 0
      %7844 = vmatmul.mubr.bf16.gmra.mxu0 %v6505
      %v7845 = vpop.f32.mrf.mxu0
      %v7846 = vadd.f32 %v7685, %v7845
      %v7847 = vpop.f32.mrf.mxu0
      %v7848 = vpop.f32.mrf.mxu0
      %v7849 = vadd.f32 %v7688, %v7848
      %v7850 = vpop.f32.mrf.mxu0
      %7851 = vmatprep.mubr.bf16.mxu0 0
      %7852 = vmatmul.mubr.bf16.gmra.mxu0 %v6506
      %v7853 = vpop.f32.mrf.mxu0
      %v7854 = vadd.f32 %v7693, %v7853
      %v7855 = vpop.f32.mrf.mxu0
      %v7856 = vpop.f32.mrf.mxu0
      %v7857 = vadd.f32 %v7696, %v7856
      %v7858 = vpop.f32.mrf.mxu0
      %7859 = vmatprep.mubr.bf16.mxu0 0
      %7860 = vmatmul.mubr.bf16.gmra.mxu0 %v6507
      %v7861 = vpop.f32.mrf.mxu0
      %v7862 = vadd.f32 %v7701, %v7861
      %v7863 = vpop.f32.mrf.mxu0
      %v7864 = vpop.f32.mrf.mxu0
      %v7865 = vadd.f32 %v7704, %v7864
      %v7866 = vpop.f32.mrf.mxu0
      %7867 = vmatprep.mubr.bf16.mxu0 0
      %7868 = vmatmul.mubr.bf16.gmra.mxu0 %v6508
      %v7869 = vpop.f32.mrf.mxu0
      %v7870 = vadd.f32 %v7709, %v7869
      %v7871 = vpop.f32.mrf.mxu0
      %v7872 = vpop.f32.mrf.mxu0
      %v7873 = vadd.f32 %v7712, %v7872
      %v7874 = vpop.f32.mrf.mxu0
      %7875 = vmatprep.mubr.bf16.mxu0 0
      %7876 = vmatmul.mubr.bf16.gmra.mxu0 %v6509
      %v7877 = vpop.f32.mrf.mxu0
      %v7878 = vadd.f32 %v7717, %v7877
      %v7879 = vpop.f32.mrf.mxu0
      %v7880 = vpop.f32.mrf.mxu0
      %v7881 = vadd.f32 %v7720, %v7880
      %v7882 = vpop.f32.mrf.mxu0
      %7883 = vmatprep.mubr.bf16.mxu0 0
      %7884 = vmatmul.mubr.bf16.gmra.mxu0 %v6510
      %v7885 = vpop.f32.mrf.mxu0
      %v7886 = vadd.f32 %v7725, %v7885
      %v7887 = vpop.f32.mrf.mxu0
      %v7888 = vpop.f32.mrf.mxu0
      %v7889 = vadd.f32 %v7728, %v7888
      %v7890 = vpop.f32.mrf.mxu0
      %7891 = vmatprep.mubr.bf16.mxu0 0
      %7892 = vmatmul.mubr.bf16.gmra.mxu0 %v6511
      %v7893 = vpop.f32.mrf.mxu0
      %v7894 = vadd.f32 %v7733, %v7893
      %v7895 = vpop.f32.mrf.mxu0
      %v7896 = vpop.f32.mrf.mxu0
      %v7897 = vadd.f32 %v7736, %v7896
      %v7898 = vpop.f32.mrf.mxu0
      %7899 = vdwg.mxu0
      %v7900 = vsub.f32 0.0, %v7774
      %v7901 = vsub.f32 0.0, %v7777
      %v7902 = vsub.f32 0.0, %v7782
      %v7903 = vsub.f32 0.0, %v7785
      %v7904 = vsub.f32 0.0, %v7790
      %v7905 = vsub.f32 0.0, %v7793
      %v7906 = vsub.f32 0.0, %v7798
      %v7907 = vsub.f32 0.0, %v7801
      %v7908 = vsub.f32 0.0, %v7806
      %v7909 = vsub.f32 0.0, %v7809
      %v7910 = vsub.f32 0.0, %v7814
      %v7911 = vsub.f32 0.0, %v7817
      %v7912 = vsub.f32 0.0, %v7822
      %v7913 = vsub.f32 0.0, %v7825
      %v7914 = vsub.f32 0.0, %v7830
      %v7915 = vsub.f32 0.0, %v7833
      %v7916 = vsub.f32 0.0, %v7838
      %v7917 = vsub.f32 0.0, %v7841
      %v7918 = vsub.f32 0.0, %v7846
      %v7919 = vsub.f32 0.0, %v7849
      %v7920 = vsub.f32 0.0, %v7854
      %v7921 = vsub.f32 0.0, %v7857
      %v7922 = vsub.f32 0.0, %v7862
      %v7923 = vsub.f32 0.0, %v7865
      %v7924 = vsub.f32 0.0, %v7870
      %v7925 = vsub.f32 0.0, %v7873
      %v7926 = vsub.f32 0.0, %v7878
      %v7927 = vsub.f32 0.0, %v7881
      %v7928 = vsub.f32 0.0, %v7886
      %v7929 = vsub.f32 0.0, %v7889
      %v7930 = vsub.f32 0.0, %v7894
      %v7931 = vsub.f32 0.0, %v7897
      %v7932 = vmul.f32 %v7900, 1.442695
      %v7933 = vpow.pop %v7932
      %v7934 = vmul.f32 %v7901, 1.442695
      %v7935 = vpow.pop %v7934
      %v7936 = vmul.f32 %v7902, 1.442695
      %v7937 = vpow.pop %v7936
      %v7938 = vmul.f32 %v7903, 1.442695
      %v7939 = vpow.pop %v7938
      %v7940 = vmul.f32 %v7904, 1.442695
      %v7941 = vpow.pop %v7940
      %v7942 = vmul.f32 %v7905, 1.442695
      %v7943 = vpow.pop %v7942
      %v7944 = vmul.f32 %v7906, 1.442695
      %v7945 = vpow.pop %v7944
      %v7946 = vmul.f32 %v7907, 1.442695
      %v7947 = vpow.pop %v7946
      %v7948 = vmul.f32 %v7908, 1.442695
      %v7949 = vpow.pop %v7948
      %v7950 = vmul.f32 %v7909, 1.442695
      %v7951 = vpow.pop %v7950
      %v7952 = vmul.f32 %v7910, 1.442695
      %v7953 = vpow.pop %v7952
      %v7954 = vmul.f32 %v7911, 1.442695
      %v7955 = vpow.pop %v7954
      %v7956 = vmul.f32 %v7912, 1.442695
      %v7957 = vpow.pop %v7956
      %v7958 = vmul.f32 %v7913, 1.442695
      %v7959 = vpow.pop %v7958
      %v7960 = vmul.f32 %v7914, 1.442695
      %v7961 = vpow.pop %v7960
      %v7962 = vmul.f32 %v7915, 1.442695
      %v7963 = vpow.pop %v7962
      %v7964 = vmul.f32 %v7916, 1.442695
      %v7965 = vpow.pop %v7964
      %v7966 = vmul.f32 %v7917, 1.442695
      %v7967 = vpow.pop %v7966
      %v7968 = vmul.f32 %v7918, 1.442695
      %v7969 = vpow.pop %v7968
      %v7970 = vmul.f32 %v7919, 1.442695
      %v7971 = vpow.pop %v7970
      %v7972 = vmul.f32 %v7920, 1.442695
      %v7973 = vpow.pop %v7972
      %v7974 = vmul.f32 %v7921, 1.442695
      %v7975 = vpow.pop %v7974
      %v7976 = vmul.f32 %v7922, 1.442695
      %v7977 = vpow.pop %v7976
      %v7978 = vmul.f32 %v7923, 1.442695
      %v7979 = vpow.pop %v7978
      %v7980 = vmul.f32 %v7924, 1.442695
      %v7981 = vpow.pop %v7980
      %v7982 = vmul.f32 %v7925, 1.442695
      %v7983 = vpow.pop %v7982
      %v7984 = vmul.f32 %v7926, 1.442695
      %v7985 = vpow.pop %v7984
      %v7986 = vmul.f32 %v7927, 1.442695
      %v7987 = vpow.pop %v7986
      %v7988 = vmul.f32 %v7928, 1.442695
      %v7989 = vpow.pop %v7988
      %v7990 = vmul.f32 %v7929, 1.442695
      %v7991 = vpow.pop %v7990
      %v7992 = vmul.f32 %v7930, 1.442695
      %v7993 = vpow.pop %v7992
      %v7994 = vmul.f32 %v7931, 1.442695
      %v7995 = vpow.pop %v7994
      %v7996 = vadd.f32 %v7933, 1.0
      %v7997 = vadd.f32 %v7935, 1.0
      %v7998 = vadd.f32 %v7937, 1.0
      %v7999 = vadd.f32 %v7939, 1.0
      %v8000 = vadd.f32 %v7941, 1.0
      %v8001 = vadd.f32 %v7943, 1.0
      %v8002 = vadd.f32 %v7945, 1.0
      %v8003 = vadd.f32 %v7947, 1.0
      %v8004 = vadd.f32 %v7949, 1.0
      %v8005 = vadd.f32 %v7951, 1.0
      %v8006 = vadd.f32 %v7953, 1.0
      %v8007 = vadd.f32 %v7955, 1.0
      %v8008 = vadd.f32 %v7957, 1.0
      %v8009 = vadd.f32 %v7959, 1.0
      %v8010 = vadd.f32 %v7961, 1.0
      %v8011 = vadd.f32 %v7963, 1.0
      %v8012 = vadd.f32 %v7965, 1.0
      %v8013 = vadd.f32 %v7967, 1.0
      %v8014 = vadd.f32 %v7969, 1.0
      %v8015 = vadd.f32 %v7971, 1.0
      %v8016 = vadd.f32 %v7973, 1.0
      %v8017 = vadd.f32 %v7975, 1.0
      %v8018 = vadd.f32 %v7977, 1.0
      %v8019 = vadd.f32 %v7979, 1.0
      %v8020 = vadd.f32 %v7981, 1.0
      %v8021 = vadd.f32 %v7983, 1.0
      %v8022 = vadd.f32 %v7985, 1.0
      %v8023 = vadd.f32 %v7987, 1.0
      %v8024 = vadd.f32 %v7989, 1.0
      %v8025 = vadd.f32 %v7991, 1.0
      %v8026 = vadd.f32 %v7993, 1.0
      %v8027 = vadd.f32 %v7995, 1.0
      %v8028 = vrcp.pop %v7996
      %v8029 = vmul.f32 1.0, %v8028
      %v8030 = vrcp.pop %v7997
      %v8031 = vmul.f32 1.0, %v8030
      %v8032 = vrcp.pop %v7998
      %v8033 = vmul.f32 1.0, %v8032
      %v8034 = vrcp.pop %v7999
      %v8035 = vmul.f32 1.0, %v8034
      %v8036 = vrcp.pop %v8000
      %v8037 = vmul.f32 1.0, %v8036
      %v8038 = vrcp.pop %v8001
      %v8039 = vmul.f32 1.0, %v8038
      %v8040 = vrcp.pop %v8002
      %v8041 = vmul.f32 1.0, %v8040
      %v8042 = vrcp.pop %v8003
      %v8043 = vmul.f32 1.0, %v8042
      %v8044 = vrcp.pop %v8004
      %v8045 = vmul.f32 1.0, %v8044
      %v8046 = vrcp.pop %v8005
      %v8047 = vmul.f32 1.0, %v8046
      %v8048 = vrcp.pop %v8006
      %v8049 = vmul.f32 1.0, %v8048
      %v8050 = vrcp.pop %v8007
      %v8051 = vmul.f32 1.0, %v8050
      %v8052 = vrcp.pop %v8008
      %v8053 = vmul.f32 1.0, %v8052
      %v8054 = vrcp.pop %v8009
      %v8055 = vmul.f32 1.0, %v8054
      %v8056 = vrcp.pop %v8010
      %v8057 = vmul.f32 1.0, %v8056
      %v8058 = vrcp.pop %v8011
      %v8059 = vmul.f32 1.0, %v8058
      %v8060 = vrcp.pop %v8012
      %v8061 = vmul.f32 1.0, %v8060
      %v8062 = vrcp.pop %v8013
      %v8063 = vmul.f32 1.0, %v8062
      %v8064 = vrcp.pop %v8014
      %v8065 = vmul.f32 1.0, %v8064
      %v8066 = vrcp.pop %v8015
      %v8067 = vmul.f32 1.0, %v8066
      %v8068 = vrcp.pop %v8016
      %v8069 = vmul.f32 1.0, %v8068
      %v8070 = vrcp.pop %v8017
      %v8071 = vmul.f32 1.0, %v8070
      %v8072 = vrcp.pop %v8018
      %v8073 = vmul.f32 1.0, %v8072
      %v8074 = vrcp.pop %v8019
      %v8075 = vmul.f32 1.0, %v8074
      %v8076 = vrcp.pop %v8020
      %v8077 = vmul.f32 1.0, %v8076
      %v8078 = vrcp.pop %v8021
      %v8079 = vmul.f32 1.0, %v8078
      %v8080 = vrcp.pop %v8022
      %v8081 = vmul.f32 1.0, %v8080
      %v8082 = vrcp.pop %v8023
      %v8083 = vmul.f32 1.0, %v8082
      %v8084 = vrcp.pop %v8024
      %v8085 = vmul.f32 1.0, %v8084
      %v8086 = vrcp.pop %v8025
      %v8087 = vmul.f32 1.0, %v8086
      %v8088 = vrcp.pop %v8026
      %v8089 = vmul.f32 1.0, %v8088
      %v8090 = vrcp.pop %v8027
      %v8091 = vmul.f32 1.0, %v8090
      %8092 = vst.msk [vmem:[%s656] sm:$0xff] %vm692, %v8029
      %8093 = vst.msk [vmem:[%s656 + $0x8] sm:$0xff] %vm692, %v8031
      %8094 = vst.msk [vmem:[%s656 + $0x10] sm:$0xff] %vm692, %v8033
      %8095 = vst.msk [vmem:[%s656 + $0x18] sm:$0xff] %vm692, %v8035
      %8096 = vst.msk [vmem:[%s656 + $0x20] sm:$0xff] %vm692, %v8037
      %8097 = vst.msk [vmem:[%s656 + $0x28] sm:$0xff] %vm692, %v8039
      %8098 = vst.msk [vmem:[%s656 + $0x30] sm:$0xff] %vm692, %v8041
      %8099 = vst.msk [vmem:[%s656 + $0x38] sm:$0xff] %vm692, %v8043
      %8100 = vst.msk [vmem:[%s656 + $0x40] sm:$0xff] %vm692, %v8045
      %8101 = vst.msk [vmem:[%s656 + $0x48] sm:$0xff] %vm692, %v8047
      %8102 = vst.msk [vmem:[%s656 + $0x50] sm:$0xff] %vm692, %v8049
      %8103 = vst.msk [vmem:[%s656 + $0x58] sm:$0xff] %vm692, %v8051
      %8104 = vst.msk [vmem:[%s656 + $0x60] sm:$0xff] %vm692, %v8053
      %8105 = vst.msk [vmem:[%s656 + $0x68] sm:$0xff] %vm692, %v8055
      %8106 = vst.msk [vmem:[%s656 + $0x70] sm:$0xff] %vm692, %v8057
      %8107 = vst.msk [vmem:[%s656 + $0x78] sm:$0xff] %vm692, %v8059
      %8108 = vst.msk [vmem:[%s656 + $0x80] sm:$0xff] %vm692, %v8061
      %8109 = vst.msk [vmem:[%s656 + $0x88] sm:$0xff] %vm692, %v8063
      %8110 = vst.msk [vmem:[%s656 + $0x90] sm:$0xff] %vm692, %v8065
      %8111 = vst.msk [vmem:[%s656 + $0x98] sm:$0xff] %vm692, %v8067
      %8112 = vst.msk [vmem:[%s656 + $0xa0] sm:$0xff] %vm692, %v8069
      %8113 = vst.msk [vmem:[%s656 + $0xa8] sm:$0xff] %vm692, %v8071
      %8114 = vst.msk [vmem:[%s656 + $0xb0] sm:$0xff] %vm692, %v8073
      %8115 = vst.msk [vmem:[%s656 + $0xb8] sm:$0xff] %vm692, %v8075
      %8116 = vst.msk [vmem:[%s656 + $0xc0] sm:$0xff] %vm692, %v8077
      %8117 = vst.msk [vmem:[%s656 + $0xc8] sm:$0xff] %vm692, %v8079
      %8118 = vst.msk [vmem:[%s656 + $0xd0] sm:$0xff] %vm692, %v8081
      %8119 = vst.msk [vmem:[%s656 + $0xd8] sm:$0xff] %vm692, %v8083
      %8120 = vst.msk [vmem:[%s656 + $0xe0] sm:$0xff] %vm692, %v8085
      %8121 = vst.msk [vmem:[%s656 + $0xe8] sm:$0xff] %vm692, %v8087
      %8122 = vst.msk [vmem:[%s656 + $0xf0] sm:$0xff] %vm692, %v8089
      %8123 = vst.msk [vmem:[%s656 + $0xf8] sm:$0xff] %vm692, %v8091
      %p8124 = scmp.lt.s32.totalorder %s32, 1
      %s8125 = scalar_select %p8124, %s32, 1
      %s8126 = smul.addr %s8125, 32
      %s8127 = smul.addr %s8126, 8
      %s8128 = scalar_lea.vmem %s21, %s8127
      // Predicated region
      $region105: #{celeba_cae_forward.1} parent=103 // pred_check
        %p8129 = pneg %p496
      $region106: #{celeba_cae_forward.1} parent=103 // pred_check_branch
        %8131 = sbr.rel (%p8129) target = $region108
      $region107: #{celeba_cae_forward.1} parent=103 // pred_region
        _
      $region108: #{celeba_cae_forward.1} parent=103 // pred_fallthru
        _
    $region104: #{celeba_cae_forward.1} parent=5 // pred_fallthru
      _
    %p8132 = scmp.le.s32.totalorder 2, %s27
    // Predicated region
    $region109: #{celeba_cae_forward.1} parent=5 // pred_check
      %p8133 = pneg %p8132
    $region110: #{celeba_cae_forward.1} parent=5 // pred_check_branch
      %8135 = sbr.rel (%p8133) target = $region112
    $region111: #{celeba_cae_forward.1} parent=5 // pred_region
      %s8136 = ssub.s32 %s27, 2
      // Predicated region
      $region113: #{celeba_cae_forward.1} parent=111 // pred_check
        %p8137 = pneg %p502
      $region114: #{celeba_cae_forward.1} parent=111 // pred_check_branch
        %8139 = sbr.rel (%p8137) target = $region116
      $region115: #{celeba_cae_forward.1} parent=111 // pred_region
        %p8140 = scmp.lt.s32.totalorder %s33, 1
        %s8141 = scalar_select %p8140, %s33, 1
        %s8142 = smul.addr %s8141, 32
        %s8143 = smul.addr %s8142, 8
        %s8144 = scalar_lea.vmem %s21, %s8143
      $region116: #{celeba_cae_forward.1} parent=111 // pred_fallthru
        _
    $region112: #{celeba_cae_forward.1} parent=5 // pred_fallthru
      _
  $region6: #{celeba_cae_forward.1} parent=0 // loop_footer
    %s31 = sadd.s32 1, %s27
  $region7: #{celeba_cae_forward.1} parent=0 // loop_footer_branch
    %26 = sbr.rel target = $region3
  $region8: #{celeba_cae_forward.1} parent=0 // loop_exit
    _

</llo_original>
